<compile_context>
chip_gen: v5e
topology: v5e:2x2
jax: 0.10.0
libtpu: 0.0.40
codegen_flags: <defaults>
</compile_context>

<pallas_src>
import functools

import jax
import jax.numpy as jnp
from jax.experimental import pallas as pl
from jax.experimental.pallas import tpu as pltpu


# ------------------------------ Pallas kernels ------------------------------

def _conv_kernel(*refs, B, Wp, M, relu_in, residual):
    """Fused (input-affine [+residual] [+ReLU]) -> 3x3 conv, one Cout tile.

    Inputs (stacked layout, see module docstring):
      x_ref   : (R, Cin)  activation produced by the previous conv (or pooled x)
      r_ref   : (R, Cin)  optional residual term (added raw, before ReLU)
      w_ref   : (9, Cin, TN) bf16 conv weights for this Cout tile (tap-major)
      sc_ref  : (1, Cin)  folded BN scale of the producer (ones for raw input)
      sh_ref  : (1, Cin)  folded BN shift of the producer (zeros for raw input)
      m_ref   : (R, 1)    1.0 on interior pixels, 0.0 on padding/guard rows
      o_ref   : (R, TN)   output stripe, stacked layout, zero outside interior
      xs_ref  : (R, Cin)  VMEM scratch holding the transformed input
    """
    if residual:
        x_ref, r_ref, w_ref, sc_ref, sh_ref, m_ref, o_ref, xs_ref = refs
    else:
        x_ref, w_ref, sc_ref, sh_ref, m_ref, o_ref, xs_ref = refs
        r_ref = None
    tn = o_ref.shape[-1]

    mask = m_ref[...]                                   # (R, 1)
    xin = x_ref[...] * sc_ref[...] + sh_ref[...]        # producer's BN folded in
    if residual:
        xin = xin + r_ref[...]
    if relu_in:
        xin = jnp.maximum(xin, 0.0)
    # Keep the zero conv-padding ring exact even after the affine/ReLU/residual.
    xs_ref[...] = xin * mask

    acc = jnp.zeros((M, tn), jnp.float32)
    for tap in range(9):
        ky, kx = divmod(tap, 3)
        off = B + (ky - 1) * Wp + (kx - 1)              # static row offset
        a = xs_ref[off:off + M, :].astype(jnp.bfloat16)  # in-kernel "im2col"
        acc = acc + jnp.dot(a, w_ref[tap], preferred_element_type=jnp.float32)

    acc = acc * m_ref[B:B + M, :]                       # zero border/garbage rows

    zeros_blk = jnp.zeros((B, tn), o_ref.dtype)
    o_ref[0:B, :] = zeros_blk                           # leading guard block
    o_ref[B:B + M, :] = acc.astype(o_ref.dtype)
    o_ref[B + M:B + M + B, :] = zeros_blk               # trailing guard block


def _bn_emb_kernel(y_ref, sc_ref, sh_ref, e_ref, o_ref):
    """Final BN-apply + broadcast add of ReLU(Linear(t)), one batch element."""
    o_ref[...] = y_ref[...] * sc_ref[...] + sh_ref[...] + e_ref[0]


# ------------------------------ Pallas wrappers ------------------------------

def conv3x3_fused(x_s, w9, scale, shift, mask, *, B, Wp, relu_in, res_s=None):
    """3x3 conv (stride 1, zero padding 1) on the stacked (R, Cin) layout."""
    R, cin_p = x_s.shape
    cout_p = w9.shape[-1]
    M = R - 2 * B
    TN = 256 if cout_p % 256 == 0 else 128              # 256-wide N tiles on v6e+
    residual = res_s is not None

    kern = functools.partial(_conv_kernel, B=B, Wp=Wp, M=M,
                             relu_in=relu_in, residual=residual)

    in_specs = [pl.BlockSpec((R, cin_p), lambda j: (0, 0))]
    args = [x_s]
    if residual:
        in_specs.append(pl.BlockSpec((R, cin_p), lambda j: (0, 0)))
        args.append(res_s)
    in_specs += [
        pl.BlockSpec((9, cin_p, TN), lambda j: (0, 0, j)),
        pl.BlockSpec((1, cin_p), lambda j: (0, 0)),
        pl.BlockSpec((1, cin_p), lambda j: (0, 0)),
        pl.BlockSpec((R, 1), lambda j: (0, 0)),
    ]
    args += [w9, scale, shift, mask]

    return pl.pallas_call(
        kern,
        out_shape=jax.ShapeDtypeStruct((R, cout_p), jnp.float32),
        grid=(cout_p // TN,),
        in_specs=in_specs,
        out_specs=pl.BlockSpec((R, TN), lambda j: (0, j)),
        scratch_shapes=[pltpu.VMEM((R, cin_p), jnp.float32)],
        compiler_params=pltpu.CompilerParams(
            dimension_semantics=("parallel",),
            vmem_limit_bytes=48 * 1024 * 1024),
    )(*args)


def bn_emb_apply(y_s, scale, shift, e, *, N, B):
    """out[n] = BN4(y4[n]) + e[n] (broadcast over pixels), stacked layout."""
    R, C = y_s.shape
    return pl.pallas_call(
        _bn_emb_kernel,
        out_shape=jax.ShapeDtypeStruct((N * B, C), jnp.float32),
        grid=(N,),
        in_specs=[
            pl.BlockSpec((B, C), lambda n: (n + 1, 0)),   # skip leading guard block
            pl.BlockSpec((1, C), lambda n: (0, 0)),
            pl.BlockSpec((1, C), lambda n: (0, 0)),
            pl.BlockSpec((1, 1, C), lambda n: (n, 0, 0)),
        ],
        out_specs=pl.BlockSpec((B, C), lambda n: (n, 0)),
        compiler_params=pltpu.CompilerParams(
            dimension_semantics=("parallel",),
            vmem_limit_bytes=48 * 1024 * 1024),
    )(y_s, scale, shift, e)


# ------------------------------ JAX glue ------------------------------------

def _rup(x, m):
    return ((x + m - 1) // m) * m


def _pad_conv_w(w, cin_p, cout_p):
    kh, kw, cin, cout = w.shape
    w = jnp.pad(w, ((0, 0), (0, 0), (0, cin_p - cin), (0, cout_p - cout)))
    return w.reshape(kh * kw, cin_p, cout_p).astype(jnp.bfloat16)


def _pad_gamma(g, cp):
    return jnp.pad(g, (0, cp - g.shape[0]), constant_values=1.0).astype(jnp.float32)


def _pad_beta(b, cp):
    return jnp.pad(b, (0, cp - b.shape[0])).astype(jnp.float32)


def _bn_fold(y_s, gamma_p, beta_p, count, eps=1e-5):
    """Fold PyTorch training-mode BN into per-channel scale/shift.

    Non-interior rows of y_s are exact zeros, so full-array sums == interior sums.
    """
    s1 = jnp.sum(y_s, axis=0)
    s2 = jnp.sum(y_s * y_s, axis=0)
    mean = s1 / count
    var = jnp.maximum(s2 / count - mean * mean, 0.0)    # biased variance
    scale = gamma_p * jax.lax.rsqrt(var + eps)
    shift = beta_p - mean * scale
    return scale.reshape(1, -1), shift.reshape(1, -1)


def downsample_forward(params, x_nchw, t):
    N, in_ch, H2, W2 = x_nchw.shape
    out_ch = params["emb_w"].shape[1]
    H, W = H2 // 2, W2 // 2                             # post-pool spatial size
    Hp, Wp = H + 2, W + 2
    HpWp = Hp * Wp
    B = _rup(HpWp, 8)                                   # per-image block (rows)
    cin_p = _rup(in_ch, 128)                            # lane-dense channels
    cout_p = _rup(out_ch, 128)
    count = float(N * H * W)

    # --- prologue (XLA layout glue): NCHW->NHWC, 2x2 maxpool, channel pad,
    #     stack into the (R, C) padded layout with guard blocks. -------------
    x = jnp.transpose(x_nchw, (0, 2, 3, 1))
    x = x.reshape(N, H, 2, W, 2, in_ch).max(axis=(2, 4))        # MaxPool2d(2)
    x = jnp.pad(x, ((0, 0), (0, 0), (0, 0), (0, cin_p - in_ch)))
    xs = jnp.pad(x, ((1, 1), (1, 1), (1, 1), (0, 0)))           # guard blocks + ring
    xs = xs.reshape(N + 2, HpWp, cin_p)
    xs = jnp.pad(xs, ((0, 0), (0, B - HpWp), (0, 0)))
    x_s = xs.reshape((N + 2) * B, cin_p)                        # (R, cin_p)

    # interior-pixel mask in the stacked layout (trace-time constant)
    j = jnp.arange(B)
    yy, xx = j // Wp, j % Wp
    mb = ((j < HpWp) & (yy >= 1) & (yy <= H) & (xx >= 1) & (xx <= W))
    mb = mb.astype(jnp.float32)
    mask = jnp.concatenate(
        [jnp.zeros((B,), jnp.float32), jnp.tile(mb, N), jnp.zeros((B,), jnp.float32)])
    mask = mask.reshape((N + 2) * B, 1)

    ones_in = jnp.ones((1, cin_p), jnp.float32)
    zeros_in = jnp.zeros((1, cin_p), jnp.float32)

    # --- ConvBlock 1 (residual): relu(x + BN2(conv2(relu(BN1(conv1(x)))))) ---
    w11 = _pad_conv_w(params["cb1"]["w1"], cin_p, cin_p)
    y1 = conv3x3_fused(x_s, w11, ones_in, zeros_in, mask, B=B, Wp=Wp, relu_in=False)
    sc1, sh1 = _bn_fold(y1, _pad_gamma(params["cb1"]["g1"], cin_p),
                        _pad_beta(params["cb1"]["be1"], cin_p), count)

    w12 = _pad_conv_w(params["cb1"]["w2"], cin_p, cin_p)
    y2 = conv3x3_fused(y1, w12, sc1, sh1, mask, B=B, Wp=Wp, relu_in=True)
    sc2, sh2 = _bn_fold(y2, _pad_gamma(params["cb1"]["g2"], cin_p),
                        _pad_beta(params["cb1"]["be2"], cin_p), count)

    # --- ConvBlock 2: BN4(conv4(relu(BN3(conv3( relu(x + BN2(y2)) ))))) -----
    # residual add + BN2 + ReLU fused into conv3's input path
    w21 = _pad_conv_w(params["cb2"]["w1"], cin_p, cout_p)
    y3 = conv3x3_fused(y2, w21, sc2, sh2, mask, B=B, Wp=Wp, relu_in=True, res_s=x_s)
    sc3, sh3 = _bn_fold(y3, _pad_gamma(params["cb2"]["g1"], cout_p),
                        _pad_beta(params["cb2"]["be1"], cout_p), count)

    w22 = _pad_conv_w(params["cb2"]["w2"], cout_p, cout_p)
    y4 = conv3x3_fused(y3, w22, sc3, sh3, mask, B=B, Wp=Wp, relu_in=True)
    sc4, sh4 = _bn_fold(y4, _pad_gamma(params["cb2"]["g2"], cout_p),
                        _pad_beta(params["cb2"]["be2"], cout_p), count)

    # --- time embedding: ReLU(Linear(t)) (tiny XLA matmul), fused add -------
    ew = jnp.pad(params["emb_w"], ((0, 0), (0, cout_p - out_ch)))
    eb = jnp.pad(params["emb_b"], (0, cout_p - out_ch))
    e = jax.nn.relu(t @ ew + eb).reshape(N, 1, cout_p)
    out_s = bn_emb_apply(y4, sc4, sh4, e, N=N, B=B)             # (N*B, cout_p)

    # --- epilogue: un-pad interior, drop channel padding, back to NCHW ------
    out = out_s.reshape(N, B, cout_p)[:, :HpWp, :].reshape(N, Hp, Wp, cout_p)
    out = out[:, 1:H + 1, 1:W + 1, :out_ch]
    return jnp.transpose(out, (0, 3, 1, 2))


# ------------------------------ parameter init ------------------------------

def init_params(key, in_ch, out_ch, t_dim):
    # Conv biases are intentionally omitted: each conv is immediately followed
    # by a training-mode BatchNorm whose mean subtraction cancels them exactly.
    ks = jax.random.split(key, 6)

    def conv_w(k, cin, cout):
        bound = 1.0 / (cin * 9) ** 0.5
        return jax.random.uniform(k, (3, 3, cin, cout), jnp.float32, -bound, bound)

    lb = 1.0 / t_dim ** 0.5
    return {
        "cb1": {"w1": conv_w(ks[0], in_ch, in_ch),
                "g1": jnp.ones(in_ch), "be1": jnp.zeros(in_ch),
                "w2": conv_w(ks[1], in_ch, in_ch),
                "g2": jnp.ones(in_ch), "be2": jnp.zeros(in_ch)},
        "cb2": {"w1": conv_w(ks[2], in_ch, out_ch),
                "g1": jnp.ones(out_ch), "be1": jnp.zeros(out_ch),
                "w2": conv_w(ks[3], out_ch, out_ch),
                "g2": jnp.ones(out_ch), "be2": jnp.zeros(out_ch)},
        "emb_w": jax.random.uniform(ks[4], (t_dim, out_ch), jnp.float32, -lb, lb),
        "emb_b": jax.random.uniform(ks[5], (out_ch,), jnp.float32, -lb, lb),
    }


if __name__ == "__main__":
    in_ch, out_ch, t_dim = 4, 8, 32
    N, H, W = 2, 16, 16

    key = jax.random.PRNGKey(0)
    kp, kx, kt = jax.random.split(key, 3)
    params = init_params(kp, in_ch, out_ch, t_dim)
    x = jax.random.normal(kx, (N, in_ch, H, W), jnp.float32)
    t = jax.random.normal(kt, (N, t_dim), jnp.float32)

    fwd = jax.jit(downsample_forward)
    out = jax.block_until_ready(fwd(params, x, t))
    assert out.shape == (N, out_ch, H // 2, W // 2), out.shape
    assert bool(jnp.isfinite(out).all())
    print("KERNEL_OK")
</pallas_src>

<mosaic_0001>
module attributes {stable_mosaic.version = 11 : i64} {
  func.func @_conv_kernel(%arg0: i32, %arg1: memref<416x128xf32, #tpu.memory_space<vmem>>, %arg2: memref<9x128x128xbf16, #tpu.memory_space<vmem>>, %arg3: memref<1x128xf32, #tpu.memory_space<vmem>>, %arg4: memref<1x128xf32, #tpu.memory_space<vmem>>, %arg5: memref<416x1xf32, #tpu.memory_space<vmem>>, %arg6: memref<416x128xf32, #tpu.memory_space<vmem>>, %arg7: memref<416x128xf32, #tpu.memory_space<vmem>>) attributes {dimension_semantics = [#tpu.dimension_semantics<parallel>], iteration_bounds = array<i64: 1>, scalar_prefetch = 0 : i64, scratch_operands = 1 : i64, tpu.core_type = #tpu.core_type<tc>, window_params = [{pipeline_mode = #tpu.pipeline_mode<synchronous>, transform_indices = @transform_0, window_bounds = array<i64: 416, 128>}, {transform_indices = @transform_1, window_bounds = array<i64: 9, 128, 128>}, {pipeline_mode = #tpu.pipeline_mode<synchronous>, transform_indices = @transform_2, window_bounds = array<i64: 1, 128>}, {pipeline_mode = #tpu.pipeline_mode<synchronous>, transform_indices = @transform_3, window_bounds = array<i64: 1, 128>}, {pipeline_mode = #tpu.pipeline_mode<synchronous>, transform_indices = @transform_4, window_bounds = array<i64: 416, 1>}, {transform_indices = @transform_5, window_bounds = array<i64: 416, 128>}]} {
    %c0 = arith.constant 0 : index
    %c0_0 = arith.constant 0 : index
    %0 = vector.load %arg5[%c0, %c0_0] : memref<416x1xf32, #tpu.memory_space<vmem>>, vector<416x1xf32>
    %c0_1 = arith.constant 0 : index
    %c0_2 = arith.constant 0 : index
    %1 = vector.load %arg1[%c0_1, %c0_2] : memref<416x128xf32, #tpu.memory_space<vmem>>, vector<416x128xf32>
    %c0_3 = arith.constant 0 : index
    %c0_4 = arith.constant 0 : index
    %2 = vector.load %arg3[%c0_3, %c0_4] : memref<1x128xf32, #tpu.memory_space<vmem>>, vector<1x128xf32>
    %3 = vector.broadcast %2 : vector<1x128xf32> to vector<416x128xf32>
    %4 = arith.mulf %1, %3 : vector<416x128xf32>
    %c0_5 = arith.constant 0 : index
    %c0_6 = arith.constant 0 : index
    %5 = vector.load %arg4[%c0_5, %c0_6] : memref<1x128xf32, #tpu.memory_space<vmem>>, vector<1x128xf32>
    %6 = vector.broadcast %5 : vector<1x128xf32> to vector<416x128xf32>
    %7 = arith.addf %4, %6 : vector<416x128xf32>
    %8 = vector.broadcast %0 : vector<416x1xf32> to vector<416x128xf32>
    %9 = arith.mulf %7, %8 : vector<416x128xf32>
    %c0_7 = arith.constant 0 : index
    %c0_8 = arith.constant 0 : index
    %10 = vector.load %arg7[%c0_7, %c0_8] : memref<416x128xf32, #tpu.memory_space<vmem>>, vector<416x128xf32>
    tpu.vector_store %arg7[%c0_7, %c0_8], %9 {strides = array<i32>} : memref<416x128xf32, #tpu.memory_space<vmem>>, vector<416x128xf32>,
    %cst = arith.constant 0.000000e+00 : f32
    %11 = vector.broadcast %cst : f32 to vector<208x128xf32>
    %c93 = arith.constant 93 : index
    %c0_9 = arith.constant 0 : index
    %12 = vector.load %arg7[%c93, %c0_9] : memref<416x128xf32, #tpu.memory_space<vmem>>, vector<208x128xf32>
    %13 = arith.truncf %12 : vector<208x128xf32> to vector<208x128xbf16>
    %c0_10 = arith.constant 0 : index
    %c0_11 = arith.constant 0 : index
    %c0_12 = arith.constant 0 : index
    %14 = vector.load %arg2[%c0_10, %c0_11, %c0_12] : memref<9x128x128xbf16, #tpu.memory_space<vmem>>, vector<1x128x128xbf16>
    %15 = vector.shape_cast %14 : vector<1x128x128xbf16> to vector<128x128xbf16>
    %cst_13 = arith.constant dense<0.000000e+00> : vector<208x128xf32>
    %16 = tpu.matmul %13, %15, %cst_13 {dimension_numbers = #tpu.dot_dimension_numbers<[1], [0], [0], [1], [0, 0, 1, 1], [], []>} : vector<208x128xbf16>, vector<128x128xbf16>, vector<208x128xf32> -> vector<208x128xf32>
    %17 = arith.addf %11, %16 : vector<208x128xf32>
    %c94 = arith.constant 94 : index
    %c0_14 = arith.constant 0 : index
    %18 = vector.load %arg7[%c94, %c0_14] : memref<416x128xf32, #tpu.memory_space<vmem>>, vector<208x128xf32>
    %19 = arith.truncf %18 : vector<208x128xf32> to vector<208x128xbf16>
    %c1 = arith.constant 1 : index
    %c0_15 = arith.constant 0 : index
    %c0_16 = arith.constant 0 : index
    %20 = vector.load %arg2[%c1, %c0_15, %c0_16] : memref<9x128x128xbf16, #tpu.memory_space<vmem>>, vector<1x128x128xbf16>
    %21 = vector.shape_cast %20 : vector<1x128x128xbf16> to vector<128x128xbf16>
    %cst_17 = arith.constant dense<0.000000e+00> : vector<208x128xf32>
    %22 = tpu.matmul %19, %21, %cst_17 {dimension_numbers = #tpu.dot_dimension_numbers<[1], [0], [0], [1], [0, 0, 1, 1], [], []>} : vector<208x128xbf16>, vector<128x128xbf16>, vector<208x128xf32> -> vector<208x128xf32>
    %23 = arith.addf %17, %22 : vector<208x128xf32>
    %c95 = arith.constant 95 : index
    %c0_18 = arith.constant 0 : index
    %24 = vector.load %arg7[%c95, %c0_18] : memref<416x128xf32, #tpu.memory_space<vmem>>, vector<208x128xf32>
    %25 = arith.truncf %24 : vector<208x128xf32> to vector<208x128xbf16>
    %c2 = arith.constant 2 : index
    %c0_19 = arith.constant 0 : index
    %c0_20 = arith.constant 0 : index
    %26 = vector.load %arg2[%c2, %c0_19, %c0_20] : memref<9x128x128xbf16, #tpu.memory_space<vmem>>, vector<1x128x128xbf16>
    %27 = vector.shape_cast %26 : vector<1x128x128xbf16> to vector<128x128xbf16>
    %cst_21 = arith.constant dense<0.000000e+00> : vector<208x128xf32>
    %28 = tpu.matmul %25, %27, %cst_21 {dimension_numbers = #tpu.dot_dimension_numbers<[1], [0], [0], [1], [0, 0, 1, 1], [], []>} : vector<208x128xbf16>, vector<128x128xbf16>, vector<208x128xf32> -> vector<208x128xf32>
    %29 = arith.addf %23, %28 : vector<208x128xf32>
    %c103 = arith.constant 103 : index
    %c0_22 = arith.constant 0 : index
    %30 = vector.load %arg7[%c103, %c0_22] : memref<416x128xf32, #tpu.memory_space<vmem>>, vector<208x128xf32>
    %31 = arith.truncf %30 : vector<208x128xf32> to vector<208x128xbf16>
    %c3 = arith.constant 3 : index
    %c0_23 = arith.constant 0 : index
    %c0_24 = arith.constant 0 : index
    %32 = vector.load %arg2[%c3, %c0_23, %c0_24] : memref<9x128x128xbf16, #tpu.memory_space<vmem>>, vector<1x128x128xbf16>
    %33 = vector.shape_cast %32 : vector<1x128x128xbf16> to vector<128x128xbf16>
    %cst_25 = arith.constant dense<0.000000e+00> : vector<208x128xf32>
    %34 = tpu.matmul %31, %33, %cst_25 {dimension_numbers = #tpu.dot_dimension_numbers<[1], [0], [0], [1], [0, 0, 1, 1], [], []>} : vector<208x128xbf16>, vector<128x128xbf16>, vector<208x128xf32> -> vector<208x128xf32>
    %35 = arith.addf %29, %34 : vector<208x128xf32>
    %c104 = arith.constant 104 : index
    %c0_26 = arith.constant 0 : index
    %36 = vector.load %arg7[%c104, %c0_26] : memref<416x128xf32, #tpu.memory_space<vmem>>, vector<208x128xf32>
    %37 = arith.truncf %36 : vector<208x128xf32> to vector<208x128xbf16>
    %c4 = arith.constant 4 : index
    %c0_27 = arith.constant 0 : index
    %c0_28 = arith.constant 0 : index
    %38 = vector.load %arg2[%c4, %c0_27, %c0_28] : memref<9x128x128xbf16, #tpu.memory_space<vmem>>, vector<1x128x128xbf16>
    %39 = vector.shape_cast %38 : vector<1x128x128xbf16> to vector<128x128xbf16>
    %cst_29 = arith.constant dense<0.000000e+00> : vector<208x128xf32>
    %40 = tpu.matmul %37, %39, %cst_29 {dimension_numbers = #tpu.dot_dimension_numbers<[1], [0], [0], [1], [0, 0, 1, 1], [], []>} : vector<208x128xbf16>, vector<128x128xbf16>, vector<208x128xf32> -> vector<208x128xf32>
    %41 = arith.addf %35, %40 : vector<208x128xf32>
    %c105 = arith.constant 105 : index
    %c0_30 = arith.constant 0 : index
    %42 = vector.load %arg7[%c105, %c0_30] : memref<416x128xf32, #tpu.memory_space<vmem>>, vector<208x128xf32>
    %43 = arith.truncf %42 : vector<208x128xf32> to vector<208x128xbf16>
    %c5 = arith.constant 5 : index
    %c0_31 = arith.constant 0 : index
    %c0_32 = arith.constant 0 : index
    %44 = vector.load %arg2[%c5, %c0_31, %c0_32] : memref<9x128x128xbf16, #tpu.memory_space<vmem>>, vector<1x128x128xbf16>
    %45 = vector.shape_cast %44 : vector<1x128x128xbf16> to vector<128x128xbf16>
    %cst_33 = arith.constant dense<0.000000e+00> : vector<208x128xf32>
    %46 = tpu.matmul %43, %45, %cst_33 {dimension_numbers = #tpu.dot_dimension_numbers<[1], [0], [0], [1], [0, 0, 1, 1], [], []>} : vector<208x128xbf16>, vector<128x128xbf16>, vector<208x128xf32> -> vector<208x128xf32>
    %47 = arith.addf %41, %46 : vector<208x128xf32>
    %c113 = arith.constant 113 : index
    %c0_34 = arith.constant 0 : index
    %48 = vector.load %arg7[%c113, %c0_34] : memref<416x128xf32, #tpu.memory_space<vmem>>, vector<208x128xf32>
    %49 = arith.truncf %48 : vector<208x128xf32> to vector<208x128xbf16>
    %c6 = arith.constant 6 : index
    %c0_35 = arith.constant 0 : index
    %c0_36 = arith.constant 0 : index
    %50 = vector.load %arg2[%c6, %c0_35, %c0_36] : memref<9x128x128xbf16, #tpu.memory_space<vmem>>, vector<1x128x128xbf16>
    %51 = vector.shape_cast %50 : vector<1x128x128xbf16> to vector<128x128xbf16>
    %cst_37 = arith.constant dense<0.000000e+00> : vector<208x128xf32>
    %52 = tpu.matmul %49, %51, %cst_37 {dimension_numbers = #tpu.dot_dimension_numbers<[1], [0], [0], [1], [0, 0, 1, 1], [], []>} : vector<208x128xbf16>, vector<128x128xbf16>, vector<208x128xf32> -> vector<208x128xf32>
    %53 = arith.addf %47, %52 : vector<208x128xf32>
    %c114 = arith.constant 114 : index
    %c0_38 = arith.constant 0 : index
    %54 = vector.load %arg7[%c114, %c0_38] : memref<416x128xf32, #tpu.memory_space<vmem>>, vector<208x128xf32>
    %55 = arith.truncf %54 : vector<208x128xf32> to vector<208x128xbf16>
    %c7 = arith.constant 7 : index
    %c0_39 = arith.constant 0 : index
    %c0_40 = arith.constant 0 : index
    %56 = vector.load %arg2[%c7, %c0_39, %c0_40] : memref<9x128x128xbf16, #tpu.memory_space<vmem>>, vector<1x128x128xbf16>
    %57 = vector.shape_cast %56 : vector<1x128x128xbf16> to vector<128x128xbf16>
    %cst_41 = arith.constant dense<0.000000e+00> : vector<208x128xf32>
    %58 = tpu.matmul %55, %57, %cst_41 {dimension_numbers = #tpu.dot_dimension_numbers<[1], [0], [0], [1], [0, 0, 1, 1], [], []>} : vector<208x128xbf16>, vector<128x128xbf16>, vector<208x128xf32> -> vector<208x128xf32>
    %59 = arith.addf %53, %58 : vector<208x128xf32>
    %c115 = arith.constant 115 : index
    %c0_42 = arith.constant 0 : index
    %60 = vector.load %arg7[%c115, %c0_42] : memref<416x128xf32, #tpu.memory_space<vmem>>, vector<208x128xf32>
    %61 = arith.truncf %60 : vector<208x128xf32> to vector<208x128xbf16>
    %c8 = arith.constant 8 : index
    %c0_43 = arith.constant 0 : index
    %c0_44 = arith.constant 0 : index
    %62 = vector.load %arg2[%c8, %c0_43, %c0_44] : memref<9x128x128xbf16, #tpu.memory_space<vmem>>, vector<1x128x128xbf16>
    %63 = vector.shape_cast %62 : vector<1x128x128xbf16> to vector<128x128xbf16>
    %cst_45 = arith.constant dense<0.000000e+00> : vector<208x128xf32>
    %64 = tpu.matmul %61, %63, %cst_45 {dimension_numbers = #tpu.dot_dimension_numbers<[1], [0], [0], [1], [0, 0, 1, 1], [], []>} : vector<208x128xbf16>, vector<128x128xbf16>, vector<208x128xf32> -> vector<208x128xf32>
    %65 = arith.addf %59, %64 : vector<208x128xf32>
    %c104_46 = arith.constant 104 : index
    %c0_47 = arith.constant 0 : index
    %66 = vector.load %arg5[%c104_46, %c0_47] : memref<416x1xf32, #tpu.memory_space<vmem>>, vector<208x1xf32>
    %67 = vector.broadcast %66 : vector<208x1xf32> to vector<208x128xf32>
    %68 = arith.mulf %65, %67 : vector<208x128xf32>
    %cst_48 = arith.constant 0.000000e+00 : f32
    %69 = vector.broadcast %cst_48 : f32 to vector<104x128xf32>
    %c0_49 = arith.constant 0 : index
    %c0_50 = arith.constant 0 : index
    %70 = vector.load %arg6[%c0_49, %c0_50] : memref<416x128xf32, #tpu.memory_space<vmem>>, vector<104x128xf32>
    tpu.vector_store %arg6[%c0_49, %c0_50], %69 {strides = array<i32>} : memref<416x128xf32, #tpu.memory_space<vmem>>, vector<104x128xf32>,
    %c104_51 = arith.constant 104 : index
    %c0_52 = arith.constant 0 : index
    %71 = vector.load %arg6[%c104_51, %c0_52] : memref<416x128xf32, #tpu.memory_space<vmem>>, vector<208x128xf32>
    tpu.vector_store %arg6[%c104_51, %c0_52], %68 {strides = array<i32>} : memref<416x128xf32, #tpu.memory_space<vmem>>, vector<208x128xf32>,
    %c312 = arith.constant 312 : index
    %c0_53 = arith.constant 0 : index
    %72 = vector.load %arg6[%c312, %c0_53] : memref<416x128xf32, #tpu.memory_space<vmem>>, vector<104x128xf32>
    tpu.vector_store %arg6[%c312, %c0_53], %69 {strides = array<i32>} : memref<416x128xf32, #tpu.memory_space<vmem>>, vector<104x128xf32>,
    return
  }
  func.func @transform_0(%arg0: i32) -> (i32, i32) {
    %c0_i32 = arith.constant 0 : i32
    %c0_i32_0 = arith.constant 0 : i32
    %c0_i32_1 = arith.constant 0 : i32
    return %c0_i32, %c0_i32_0 : i32, i32
  }
  func.func @transform_1(%arg0: i32) -> (i32, i32, i32) {
    %c0_i32 = arith.constant 0 : i32
    %c0_i32_0 = arith.constant 0 : i32
    %c0_i32_1 = arith.constant 0 : i32
    return %c0_i32, %c0_i32_0, %arg0 : i32, i32, i32
  }
  func.func @transform_2(%arg0: i32) -> (i32, i32) {
    %c0_i32 = arith.constant 0 : i32
    %c0_i32_0 = arith.constant 0 : i32
    %c0_i32_1 = arith.constant 0 : i32
    return %c0_i32, %c0_i32_0 : i32, i32
  }
  func.func @transform_3(%arg0: i32) -> (i32, i32) {
    %c0_i32 = arith.constant 0 : i32
    %c0_i32_0 = arith.constant 0 : i32
    %c0_i32_1 = arith.constant 0 : i32
    return %c0_i32, %c0_i32_0 : i32, i32
  }
  func.func @transform_4(%arg0: i32) -> (i32, i32) {
    %c0_i32 = arith.constant 0 : i32
    %c0_i32_0 = arith.constant 0 : i32
    %c0_i32_1 = arith.constant 0 : i32
    return %c0_i32, %c0_i32_0 : i32, i32
  }
  func.func @transform_5(%arg0: i32) -> (i32, i32) {
    %c0_i32 = arith.constant 0 : i32
    %c0_i32_0 = arith.constant 0 : i32
    return %c0_i32, %arg0 : i32, i32
  }
}

module attributes {stable_mosaic.version = 11 : i64} {
  func.func @_conv_kernel(%arg0: i32, %arg1: memref<416x128xf32, #tpu.memory_space<vmem>>, %arg2: memref<9x128x128xbf16, #tpu.memory_space<vmem>>, %arg3: memref<1x128xf32, #tpu.memory_space<vmem>>, %arg4: memref<1x128xf32, #tpu.memory_space<vmem>>, %arg5: memref<416x1xf32, #tpu.memory_space<vmem>>, %arg6: memref<416x128xf32, #tpu.memory_space<vmem>>, %arg7: memref<416x128xf32, #tpu.memory_space<vmem>>) attributes {dimension_semantics = [#tpu.dimension_semantics<parallel>], iteration_bounds = array<i64: 1>, scalar_prefetch = 0 : i64, scratch_operands = 1 : i64, tpu.core_type = #tpu.core_type<tc>, window_params = [{pipeline_mode = #tpu.pipeline_mode<synchronous>, transform_indices = @transform_0, window_bounds = array<i64: 416, 128>}, {transform_indices = @transform_1, window_bounds = array<i64: 9, 128, 128>}, {pipeline_mode = #tpu.pipeline_mode<synchronous>, transform_indices = @transform_2, window_bounds = array<i64: 1, 128>}, {pipeline_mode = #tpu.pipeline_mode<synchronous>, transform_indices = @transform_3, window_bounds = array<i64: 1, 128>}, {pipeline_mode = #tpu.pipeline_mode<synchronous>, transform_indices = @transform_4, window_bounds = array<i64: 416, 1>}, {transform_indices = @transform_5, window_bounds = array<i64: 416, 128>}]} {
    %c0 = arith.constant 0 : index
    %c0_0 = arith.constant 0 : index
    %0 = vector.load %arg5[%c0, %c0_0] : memref<416x1xf32, #tpu.memory_space<vmem>>, vector<416x1xf32>
    %c0_1 = arith.constant 0 : index
    %c0_2 = arith.constant 0 : index
    %1 = vector.load %arg1[%c0_1, %c0_2] : memref<416x128xf32, #tpu.memory_space<vmem>>, vector<416x128xf32>
    %c0_3 = arith.constant 0 : index
    %c0_4 = arith.constant 0 : index
    %2 = vector.load %arg3[%c0_3, %c0_4] : memref<1x128xf32, #tpu.memory_space<vmem>>, vector<1x128xf32>
    %3 = vector.broadcast %2 : vector<1x128xf32> to vector<416x128xf32>
    %4 = arith.mulf %1, %3 : vector<416x128xf32>
    %c0_5 = arith.constant 0 : index
    %c0_6 = arith.constant 0 : index
    %5 = vector.load %arg4[%c0_5, %c0_6] : memref<1x128xf32, #tpu.memory_space<vmem>>, vector<1x128xf32>
    %6 = vector.broadcast %5 : vector<1x128xf32> to vector<416x128xf32>
    %7 = arith.addf %4, %6 : vector<416x128xf32>
    %cst = arith.constant 0.000000e+00 : f32
    %8 = vector.broadcast %cst : f32 to vector<416x128xf32>
    %9 = arith.maximumf %7, %8 : vector<416x128xf32>
    %10 = vector.broadcast %0 : vector<416x1xf32> to vector<416x128xf32>
    %11 = arith.mulf %9, %10 : vector<416x128xf32>
    %c0_7 = arith.constant 0 : index
    %c0_8 = arith.constant 0 : index
    %12 = vector.load %arg7[%c0_7, %c0_8] : memref<416x128xf32, #tpu.memory_space<vmem>>, vector<416x128xf32>
    tpu.vector_store %arg7[%c0_7, %c0_8], %11 {strides = array<i32>} : memref<416x128xf32, #tpu.memory_space<vmem>>, vector<416x128xf32>,
    %cst_9 = arith.constant 0.000000e+00 : f32
    %13 = vector.broadcast %cst_9 : f32 to vector<208x128xf32>
    %c93 = arith.constant 93 : index
    %c0_10 = arith.constant 0 : index
    %14 = vector.load %arg7[%c93, %c0_10] : memref<416x128xf32, #tpu.memory_space<vmem>>, vector<208x128xf32>
    %15 = arith.truncf %14 : vector<208x128xf32> to vector<208x128xbf16>
    %c0_11 = arith.constant 0 : index
    %c0_12 = arith.constant 0 : index
    %c0_13 = arith.constant 0 : index
    %16 = vector.load %arg2[%c0_11, %c0_12, %c0_13] : memref<9x128x128xbf16, #tpu.memory_space<vmem>>, vector<1x128x128xbf16>
    %17 = vector.shape_cast %16 : vector<1x128x128xbf16> to vector<128x128xbf16>
    %cst_14 = arith.constant dense<0.000000e+00> : vector<208x128xf32>
    %18 = tpu.matmul %15, %17, %cst_14 {dimension_numbers = #tpu.dot_dimension_numbers<[1], [0], [0], [1], [0, 0, 1, 1], [], []>} : vector<208x128xbf16>, vector<128x128xbf16>, vector<208x128xf32> -> vector<208x128xf32>
    %19 = arith.addf %13, %18 : vector<208x128xf32>
    %c94 = arith.constant 94 : index
    %c0_15 = arith.constant 0 : index
    %20 = vector.load %arg7[%c94, %c0_15] : memref<416x128xf32, #tpu.memory_space<vmem>>, vector<208x128xf32>
    %21 = arith.truncf %20 : vector<208x128xf32> to vector<208x128xbf16>
    %c1 = arith.constant 1 : index
    %c0_16 = arith.constant 0 : index
    %c0_17 = arith.constant 0 : index
    %22 = vector.load %arg2[%c1, %c0_16, %c0_17] : memref<9x128x128xbf16, #tpu.memory_space<vmem>>, vector<1x128x128xbf16>
    %23 = vector.shape_cast %22 : vector<1x128x128xbf16> to vector<128x128xbf16>
    %cst_18 = arith.constant dense<0.000000e+00> : vector<208x128xf32>
    %24 = tpu.matmul %21, %23, %cst_18 {dimension_numbers = #tpu.dot_dimension_numbers<[1], [0], [0], [1], [0, 0, 1, 1], [], []>} : vector<208x128xbf16>, vector<128x128xbf16>, vector<208x128xf32> -> vector<208x128xf32>
    %25 = arith.addf %19, %24 : vector<208x128xf32>
    %c95 = arith.constant 95 : index
    %c0_19 = arith.constant 0 : index
    %26 = vector.load %arg7[%c95, %c0_19] : memref<416x128xf32, #tpu.memory_space<vmem>>, vector<208x128xf32>
    %27 = arith.truncf %26 : vector<208x128xf32> to vector<208x128xbf16>
    %c2 = arith.constant 2 : index
    %c0_20 = arith.constant 0 : index
    %c0_21 = arith.constant 0 : index
    %28 = vector.load %arg2[%c2, %c0_20, %c0_21] : memref<9x128x128xbf16, #tpu.memory_space<vmem>>, vector<1x128x128xbf16>
    %29 = vector.shape_cast %28 : vector<1x128x128xbf16> to vector<128x128xbf16>
    %cst_22 = arith.constant dense<0.000000e+00> : vector<208x128xf32>
    %30 = tpu.matmul %27, %29, %cst_22 {dimension_numbers = #tpu.dot_dimension_numbers<[1], [0], [0], [1], [0, 0, 1, 1], [], []>} : vector<208x128xbf16>, vector<128x128xbf16>, vector<208x128xf32> -> vector<208x128xf32>
    %31 = arith.addf %25, %30 : vector<208x128xf32>
    %c103 = arith.constant 103 : index
    %c0_23 = arith.constant 0 : index
    %32 = vector.load %arg7[%c103, %c0_23] : memref<416x128xf32, #tpu.memory_space<vmem>>, vector<208x128xf32>
    %33 = arith.truncf %32 : vector<208x128xf32> to vector<208x128xbf16>
    %c3 = arith.constant 3 : index
    %c0_24 = arith.constant 0 : index
    %c0_25 = arith.constant 0 : index
    %34 = vector.load %arg2[%c3, %c0_24, %c0_25] : memref<9x128x128xbf16, #tpu.memory_space<vmem>>, vector<1x128x128xbf16>
    %35 = vector.shape_cast %34 : vector<1x128x128xbf16> to vector<128x128xbf16>
    %cst_26 = arith.constant dense<0.000000e+00> : vector<208x128xf32>
    %36 = tpu.matmul %33, %35, %cst_26 {dimension_numbers = #tpu.dot_dimension_numbers<[1], [0], [0], [1], [0, 0, 1, 1], [], []>} : vector<208x128xbf16>, vector<128x128xbf16>, vector<208x128xf32> -> vector<208x128xf32>
    %37 = arith.addf %31, %36 : vector<208x128xf32>
    %c104 = arith.constant 104 : index
    %c0_27 = arith.constant 0 : index
    %38 = vector.load %arg7[%c104, %c0_27] : memref<416x128xf32, #tpu.memory_space<vmem>>, vector<208x128xf32>
    %39 = arith.truncf %38 : vector<208x128xf32> to vector<208x128xbf16>
    %c4 = arith.constant 4 : index
    %c0_28 = arith.constant 0 : index
    %c0_29 = arith.constant 0 : index
    %40 = vector.load %arg2[%c4, %c0_28, %c0_29] : memref<9x128x128xbf16, #tpu.memory_space<vmem>>, vector<1x128x128xbf16>
    %41 = vector.shape_cast %40 : vector<1x128x128xbf16> to vector<128x128xbf16>
    %cst_30 = arith.constant dense<0.000000e+00> : vector<208x128xf32>
    %42 = tpu.matmul %39, %41, %cst_30 {dimension_numbers = #tpu.dot_dimension_numbers<[1], [0], [0], [1], [0, 0, 1, 1], [], []>} : vector<208x128xbf16>, vector<128x128xbf16>, vector<208x128xf32> -> vector<208x128xf32>
    %43 = arith.addf %37, %42 : vector<208x128xf32>
    %c105 = arith.constant 105 : index
    %c0_31 = arith.constant 0 : index
    %44 = vector.load %arg7[%c105, %c0_31] : memref<416x128xf32, #tpu.memory_space<vmem>>, vector<208x128xf32>
    %45 = arith.truncf %44 : vector<208x128xf32> to vector<208x128xbf16>
    %c5 = arith.constant 5 : index
    %c0_32 = arith.constant 0 : index
    %c0_33 = arith.constant 0 : index
    %46 = vector.load %arg2[%c5, %c0_32, %c0_33] : memref<9x128x128xbf16, #tpu.memory_space<vmem>>, vector<1x128x128xbf16>
    %47 = vector.shape_cast %46 : vector<1x128x128xbf16> to vector<128x128xbf16>
    %cst_34 = arith.constant dense<0.000000e+00> : vector<208x128xf32>
    %48 = tpu.matmul %45, %47, %cst_34 {dimension_numbers = #tpu.dot_dimension_numbers<[1], [0], [0], [1], [0, 0, 1, 1], [], []>} : vector<208x128xbf16>, vector<128x128xbf16>, vector<208x128xf32> -> vector<208x128xf32>
    %49 = arith.addf %43, %48 : vector<208x128xf32>
    %c113 = arith.constant 113 : index
    %c0_35 = arith.constant 0 : index
    %50 = vector.load %arg7[%c113, %c0_35] : memref<416x128xf32, #tpu.memory_space<vmem>>, vector<208x128xf32>
    %51 = arith.truncf %50 : vector<208x128xf32> to vector<208x128xbf16>
    %c6 = arith.constant 6 : index
    %c0_36 = arith.constant 0 : index
    %c0_37 = arith.constant 0 : index
    %52 = vector.load %arg2[%c6, %c0_36, %c0_37] : memref<9x128x128xbf16, #tpu.memory_space<vmem>>, vector<1x128x128xbf16>
    %53 = vector.shape_cast %52 : vector<1x128x128xbf16> to vector<128x128xbf16>
    %cst_38 = arith.constant dense<0.000000e+00> : vector<208x128xf32>
    %54 = tpu.matmul %51, %53, %cst_38 {dimension_numbers = #tpu.dot_dimension_numbers<[1], [0], [0], [1], [0, 0, 1, 1], [], []>} : vector<208x128xbf16>, vector<128x128xbf16>, vector<208x128xf32> -> vector<208x128xf32>
    %55 = arith.addf %49, %54 : vector<208x128xf32>
    %c114 = arith.constant 114 : index
    %c0_39 = arith.constant 0 : index
    %56 = vector.load %arg7[%c114, %c0_39] : memref<416x128xf32, #tpu.memory_space<vmem>>, vector<208x128xf32>
    %57 = arith.truncf %56 : vector<208x128xf32> to vector<208x128xbf16>
    %c7 = arith.constant 7 : index
    %c0_40 = arith.constant 0 : index
    %c0_41 = arith.constant 0 : index
    %58 = vector.load %arg2[%c7, %c0_40, %c0_41] : memref<9x128x128xbf16, #tpu.memory_space<vmem>>, vector<1x128x128xbf16>
    %59 = vector.shape_cast %58 : vector<1x128x128xbf16> to vector<128x128xbf16>
    %cst_42 = arith.constant dense<0.000000e+00> : vector<208x128xf32>
    %60 = tpu.matmul %57, %59, %cst_42 {dimension_numbers = #tpu.dot_dimension_numbers<[1], [0], [0], [1], [0, 0, 1, 1], [], []>} : vector<208x128xbf16>, vector<128x128xbf16>, vector<208x128xf32> -> vector<208x128xf32>
    %61 = arith.addf %55, %60 : vector<208x128xf32>
    %c115 = arith.constant 115 : index
    %c0_43 = arith.constant 0 : index
    %62 = vector.load %arg7[%c115, %c0_43] : memref<416x128xf32, #tpu.memory_space<vmem>>, vector<208x128xf32>
    %63 = arith.truncf %62 : vector<208x128xf32> to vector<208x128xbf16>
    %c8 = arith.constant 8 : index
    %c0_44 = arith.constant 0 : index
    %c0_45 = arith.constant 0 : index
    %64 = vector.load %arg2[%c8, %c0_44, %c0_45] : memref<9x128x128xbf16, #tpu.memory_space<vmem>>, vector<1x128x128xbf16>
    %65 = vector.shape_cast %64 : vector<1x128x128xbf16> to vector<128x128xbf16>
    %cst_46 = arith.constant dense<0.000000e+00> : vector<208x128xf32>
    %66 = tpu.matmul %63, %65, %cst_46 {dimension_numbers = #tpu.dot_dimension_numbers<[1], [0], [0], [1], [0, 0, 1, 1], [], []>} : vector<208x128xbf16>, vector<128x128xbf16>, vector<208x128xf32> -> vector<208x128xf32>
    %67 = arith.addf %61, %66 : vector<208x128xf32>
    %c104_47 = arith.constant 104 : index
    %c0_48 = arith.constant 0 : index
    %68 = vector.load %arg5[%c104_47, %c0_48] : memref<416x1xf32, #tpu.memory_space<vmem>>, vector<208x1xf32>
    %69 = vector.broadcast %68 : vector<208x1xf32> to vector<208x128xf32>
    %70 = arith.mulf %67, %69 : vector<208x128xf32>
    %cst_49 = arith.constant 0.000000e+00 : f32
    %71 = vector.broadcast %cst_49 : f32 to vector<104x128xf32>
    %c0_50 = arith.constant 0 : index
    %c0_51 = arith.constant 0 : index
    %72 = vector.load %arg6[%c0_50, %c0_51] : memref<416x128xf32, #tpu.memory_space<vmem>>, vector<104x128xf32>
    tpu.vector_store %arg6[%c0_50, %c0_51], %71 {strides = array<i32>} : memref<416x128xf32, #tpu.memory_space<vmem>>, vector<104x128xf32>,
    %c104_52 = arith.constant 104 : index
    %c0_53 = arith.constant 0 : index
    %73 = vector.load %arg6[%c104_52, %c0_53] : memref<416x128xf32, #tpu.memory_space<vmem>>, vector<208x128xf32>
    tpu.vector_store %arg6[%c104_52, %c0_53], %70 {strides = array<i32>} : memref<416x128xf32, #tpu.memory_space<vmem>>, vector<208x128xf32>,
    %c312 = arith.constant 312 : index
    %c0_54 = arith.constant 0 : index
    %74 = vector.load %arg6[%c312, %c0_54] : memref<416x128xf32, #tpu.memory_space<vmem>>, vector<104x128xf32>
    tpu.vector_store %arg6[%c312, %c0_54], %71 {strides = array<i32>} : memref<416x128xf32, #tpu.memory_space<vmem>>, vector<104x128xf32>,
    return
  }
  func.func @transform_0(%arg0: i32) -> (i32, i32) {
    %c0_i32 = arith.constant 0 : i32
    %c0_i32_0 = arith.constant 0 : i32
    %c0_i32_1 = arith.constant 0 : i32
    return %c0_i32, %c0_i32_0 : i32, i32
  }
  func.func @transform_1(%arg0: i32) -> (i32, i32, i32) {
    %c0_i32 = arith.constant 0 : i32
    %c0_i32_0 = arith.constant 0 : i32
    %c0_i32_1 = arith.constant 0 : i32
    return %c0_i32, %c0_i32_0, %arg0 : i32, i32, i32
  }
  func.func @transform_2(%arg0: i32) -> (i32, i32) {
    %c0_i32 = arith.constant 0 : i32
    %c0_i32_0 = arith.constant 0 : i32
    %c0_i32_1 = arith.constant 0 : i32
    return %c0_i32, %c0_i32_0 : i32, i32
  }
  func.func @transform_3(%arg0: i32) -> (i32, i32) {
    %c0_i32 = arith.constant 0 : i32
    %c0_i32_0 = arith.constant 0 : i32
    %c0_i32_1 = arith.constant 0 : i32
    return %c0_i32, %c0_i32_0 : i32, i32
  }
  func.func @transform_4(%arg0: i32) -> (i32, i32) {
    %c0_i32 = arith.constant 0 : i32
    %c0_i32_0 = arith.constant 0 : i32
    %c0_i32_1 = arith.constant 0 : i32
    return %c0_i32, %c0_i32_0 : i32, i32
  }
  func.func @transform_5(%arg0: i32) -> (i32, i32) {
    %c0_i32 = arith.constant 0 : i32
    %c0_i32_0 = arith.constant 0 : i32
    return %c0_i32, %arg0 : i32, i32
  }
}

module attributes {stable_mosaic.version = 11 : i64} {
  func.func @_conv_kernel(%arg0: i32, %arg1: memref<416x128xf32, #tpu.memory_space<vmem>>, %arg2: memref<416x128xf32, #tpu.memory_space<vmem>>, %arg3: memref<9x128x128xbf16, #tpu.memory_space<vmem>>, %arg4: memref<1x128xf32, #tpu.memory_space<vmem>>, %arg5: memref<1x128xf32, #tpu.memory_space<vmem>>, %arg6: memref<416x1xf32, #tpu.memory_space<vmem>>, %arg7: memref<416x128xf32, #tpu.memory_space<vmem>>, %arg8: memref<416x128xf32, #tpu.memory_space<vmem>>) attributes {dimension_semantics = [#tpu.dimension_semantics<parallel>], iteration_bounds = array<i64: 1>, scalar_prefetch = 0 : i64, scratch_operands = 1 : i64, tpu.core_type = #tpu.core_type<tc>, window_params = [{pipeline_mode = #tpu.pipeline_mode<synchronous>, transform_indices = @transform_0, window_bounds = array<i64: 416, 128>}, {pipeline_mode = #tpu.pipeline_mode<synchronous>, transform_indices = @transform_1, window_bounds = array<i64: 416, 128>}, {transform_indices = @transform_2, window_bounds = array<i64: 9, 128, 128>}, {pipeline_mode = #tpu.pipeline_mode<synchronous>, transform_indices = @transform_3, window_bounds = array<i64: 1, 128>}, {pipeline_mode = #tpu.pipeline_mode<synchronous>, transform_indices = @transform_4, window_bounds = array<i64: 1, 128>}, {pipeline_mode = #tpu.pipeline_mode<synchronous>, transform_indices = @transform_5, window_bounds = array<i64: 416, 1>}, {transform_indices = @transform_6, window_bounds = array<i64: 416, 128>}]} {
    %c0 = arith.constant 0 : index
    %c0_0 = arith.constant 0 : index
    %0 = vector.load %arg6[%c0, %c0_0] : memref<416x1xf32, #tpu.memory_space<vmem>>, vector<416x1xf32>
    %c0_1 = arith.constant 0 : index
    %c0_2 = arith.constant 0 : index
    %1 = vector.load %arg1[%c0_1, %c0_2] : memref<416x128xf32, #tpu.memory_space<vmem>>, vector<416x128xf32>
    %c0_3 = arith.constant 0 : index
    %c0_4 = arith.constant 0 : index
    %2 = vector.load %arg4[%c0_3, %c0_4] : memref<1x128xf32, #tpu.memory_space<vmem>>, vector<1x128xf32>
    %3 = vector.broadcast %2 : vector<1x128xf32> to vector<416x128xf32>
    %4 = arith.mulf %1, %3 : vector<416x128xf32>
    %c0_5 = arith.constant 0 : index
    %c0_6 = arith.constant 0 : index
    %5 = vector.load %arg5[%c0_5, %c0_6] : memref<1x128xf32, #tpu.memory_space<vmem>>, vector<1x128xf32>
    %6 = vector.broadcast %5 : vector<1x128xf32> to vector<416x128xf32>
    %7 = arith.addf %4, %6 : vector<416x128xf32>
    %c0_7 = arith.constant 0 : index
    %c0_8 = arith.constant 0 : index
    %8 = vector.load %arg2[%c0_7, %c0_8] : memref<416x128xf32, #tpu.memory_space<vmem>>, vector<416x128xf32>
    %9 = arith.addf %7, %8 : vector<416x128xf32>
    %cst = arith.constant 0.000000e+00 : f32
    %10 = vector.broadcast %cst : f32 to vector<416x128xf32>
    %11 = arith.maximumf %9, %10 : vector<416x128xf32>
    %12 = vector.broadcast %0 : vector<416x1xf32> to vector<416x128xf32>
    %13 = arith.mulf %11, %12 : vector<416x128xf32>
    %c0_9 = arith.constant 0 : index
    %c0_10 = arith.constant 0 : index
    %14 = vector.load %arg8[%c0_9, %c0_10] : memref<416x128xf32, #tpu.memory_space<vmem>>, vector<416x128xf32>
    tpu.vector_store %arg8[%c0_9, %c0_10], %13 {strides = array<i32>} : memref<416x128xf32, #tpu.memory_space<vmem>>, vector<416x128xf32>,
    %cst_11 = arith.constant 0.000000e+00 : f32
    %15 = vector.broadcast %cst_11 : f32 to vector<208x128xf32>
    %c93 = arith.constant 93 : index
    %c0_12 = arith.constant 0 : index
    %16 = vector.load %arg8[%c93, %c0_12] : memref<416x128xf32, #tpu.memory_space<vmem>>, vector<208x128xf32>
    %17 = arith.truncf %16 : vector<208x128xf32> to vector<208x128xbf16>
    %c0_13 = arith.constant 0 : index
    %c0_14 = arith.constant 0 : index
    %c0_15 = arith.constant 0 : index
    %18 = vector.load %arg3[%c0_13, %c0_14, %c0_15] : memref<9x128x128xbf16, #tpu.memory_space<vmem>>, vector<1x128x128xbf16>
    %19 = vector.shape_cast %18 : vector<1x128x128xbf16> to vector<128x128xbf16>
    %cst_16 = arith.constant dense<0.000000e+00> : vector<208x128xf32>
    %20 = tpu.matmul %17, %19, %cst_16 {dimension_numbers = #tpu.dot_dimension_numbers<[1], [0], [0], [1], [0, 0, 1, 1], [], []>} : vector<208x128xbf16>, vector<128x128xbf16>, vector<208x128xf32> -> vector<208x128xf32>
    %21 = arith.addf %15, %20 : vector<208x128xf32>
    %c94 = arith.constant 94 : index
    %c0_17 = arith.constant 0 : index
    %22 = vector.load %arg8[%c94, %c0_17] : memref<416x128xf32, #tpu.memory_space<vmem>>, vector<208x128xf32>
    %23 = arith.truncf %22 : vector<208x128xf32> to vector<208x128xbf16>
    %c1 = arith.constant 1 : index
    %c0_18 = arith.constant 0 : index
    %c0_19 = arith.constant 0 : index
    %24 = vector.load %arg3[%c1, %c0_18, %c0_19] : memref<9x128x128xbf16, #tpu.memory_space<vmem>>, vector<1x128x128xbf16>
    %25 = vector.shape_cast %24 : vector<1x128x128xbf16> to vector<128x128xbf16>
    %cst_20 = arith.constant dense<0.000000e+00> : vector<208x128xf32>
    %26 = tpu.matmul %23, %25, %cst_20 {dimension_numbers = #tpu.dot_dimension_numbers<[1], [0], [0], [1], [0, 0, 1, 1], [], []>} : vector<208x128xbf16>, vector<128x128xbf16>, vector<208x128xf32> -> vector<208x128xf32>
    %27 = arith.addf %21, %26 : vector<208x128xf32>
    %c95 = arith.constant 95 : index
    %c0_21 = arith.constant 0 : index
    %28 = vector.load %arg8[%c95, %c0_21] : memref<416x128xf32, #tpu.memory_space<vmem>>, vector<208x128xf32>
    %29 = arith.truncf %28 : vector<208x128xf32> to vector<208x128xbf16>
    %c2 = arith.constant 2 : index
    %c0_22 = arith.constant 0 : index
    %c0_23 = arith.constant 0 : index
    %30 = vector.load %arg3[%c2, %c0_22, %c0_23] : memref<9x128x128xbf16, #tpu.memory_space<vmem>>, vector<1x128x128xbf16>
    %31 = vector.shape_cast %30 : vector<1x128x128xbf16> to vector<128x128xbf16>
    %cst_24 = arith.constant dense<0.000000e+00> : vector<208x128xf32>
    %32 = tpu.matmul %29, %31, %cst_24 {dimension_numbers = #tpu.dot_dimension_numbers<[1], [0], [0], [1], [0, 0, 1, 1], [], []>} : vector<208x128xbf16>, vector<128x128xbf16>, vector<208x128xf32> -> vector<208x128xf32>
    %33 = arith.addf %27, %32 : vector<208x128xf32>
    %c103 = arith.constant 103 : index
    %c0_25 = arith.constant 0 : index
    %34 = vector.load %arg8[%c103, %c0_25] : memref<416x128xf32, #tpu.memory_space<vmem>>, vector<208x128xf32>
    %35 = arith.truncf %34 : vector<208x128xf32> to vector<208x128xbf16>
    %c3 = arith.constant 3 : index
    %c0_26 = arith.constant 0 : index
    %c0_27 = arith.constant 0 : index
    %36 = vector.load %arg3[%c3, %c0_26, %c0_27] : memref<9x128x128xbf16, #tpu.memory_space<vmem>>, vector<1x128x128xbf16>
    %37 = vector.shape_cast %36 : vector<1x128x128xbf16> to vector<128x128xbf16>
    %cst_28 = arith.constant dense<0.000000e+00> : vector<208x128xf32>
    %38 = tpu.matmul %35, %37, %cst_28 {dimension_numbers = #tpu.dot_dimension_numbers<[1], [0], [0], [1], [0, 0, 1, 1], [], []>} : vector<208x128xbf16>, vector<128x128xbf16>, vector<208x128xf32> -> vector<208x128xf32>
    %39 = arith.addf %33, %38 : vector<208x128xf32>
    %c104 = arith.constant 104 : index
    %c0_29 = arith.constant 0 : index
    %40 = vector.load %arg8[%c104, %c0_29] : memref<416x128xf32, #tpu.memory_space<vmem>>, vector<208x128xf32>
    %41 = arith.truncf %40 : vector<208x128xf32> to vector<208x128xbf16>
    %c4 = arith.constant 4 : index
    %c0_30 = arith.constant 0 : index
    %c0_31 = arith.constant 0 : index
    %42 = vector.load %arg3[%c4, %c0_30, %c0_31] : memref<9x128x128xbf16, #tpu.memory_space<vmem>>, vector<1x128x128xbf16>
    %43 = vector.shape_cast %42 : vector<1x128x128xbf16> to vector<128x128xbf16>
    %cst_32 = arith.constant dense<0.000000e+00> : vector<208x128xf32>
    %44 = tpu.matmul %41, %43, %cst_32 {dimension_numbers = #tpu.dot_dimension_numbers<[1], [0], [0], [1], [0, 0, 1, 1], [], []>} : vector<208x128xbf16>, vector<128x128xbf16>, vector<208x128xf32> -> vector<208x128xf32>
    %45 = arith.addf %39, %44 : vector<208x128xf32>
    %c105 = arith.constant 105 : index
    %c0_33 = arith.constant 0 : index
    %46 = vector.load %arg8[%c105, %c0_33] : memref<416x128xf32, #tpu.memory_space<vmem>>, vector<208x128xf32>
    %47 = arith.truncf %46 : vector<208x128xf32> to vector<208x128xbf16>
    %c5 = arith.constant 5 : index
    %c0_34 = arith.constant 0 : index
    %c0_35 = arith.constant 0 : index
    %48 = vector.load %arg3[%c5, %c0_34, %c0_35] : memref<9x128x128xbf16, #tpu.memory_space<vmem>>, vector<1x128x128xbf16>
    %49 = vector.shape_cast %48 : vector<1x128x128xbf16> to vector<128x128xbf16>
    %cst_36 = arith.constant dense<0.000000e+00> : vector<208x128xf32>
    %50 = tpu.matmul %47, %49, %cst_36 {dimension_numbers = #tpu.dot_dimension_numbers<[1], [0], [0], [1], [0, 0, 1, 1], [], []>} : vector<208x128xbf16>, vector<128x128xbf16>, vector<208x128xf32> -> vector<208x128xf32>
    %51 = arith.addf %45, %50 : vector<208x128xf32>
    %c113 = arith.constant 113 : index
    %c0_37 = arith.constant 0 : index
    %52 = vector.load %arg8[%c113, %c0_37] : memref<416x128xf32, #tpu.memory_space<vmem>>, vector<208x128xf32>
    %53 = arith.truncf %52 : vector<208x128xf32> to vector<208x128xbf16>
    %c6 = arith.constant 6 : index
    %c0_38 = arith.constant 0 : index
    %c0_39 = arith.constant 0 : index
    %54 = vector.load %arg3[%c6, %c0_38, %c0_39] : memref<9x128x128xbf16, #tpu.memory_space<vmem>>, vector<1x128x128xbf16>
    %55 = vector.shape_cast %54 : vector<1x128x128xbf16> to vector<128x128xbf16>
    %cst_40 = arith.constant dense<0.000000e+00> : vector<208x128xf32>
    %56 = tpu.matmul %53, %55, %cst_40 {dimension_numbers = #tpu.dot_dimension_numbers<[1], [0], [0], [1], [0, 0, 1, 1], [], []>} : vector<208x128xbf16>, vector<128x128xbf16>, vector<208x128xf32> -> vector<208x128xf32>
    %57 = arith.addf %51, %56 : vector<208x128xf32>
    %c114 = arith.constant 114 : index
    %c0_41 = arith.constant 0 : index
    %58 = vector.load %arg8[%c114, %c0_41] : memref<416x128xf32, #tpu.memory_space<vmem>>, vector<208x128xf32>
    %59 = arith.truncf %58 : vector<208x128xf32> to vector<208x128xbf16>
    %c7 = arith.constant 7 : index
    %c0_42 = arith.constant 0 : index
    %c0_43 = arith.constant 0 : index
    %60 = vector.load %arg3[%c7, %c0_42, %c0_43] : memref<9x128x128xbf16, #tpu.memory_space<vmem>>, vector<1x128x128xbf16>
    %61 = vector.shape_cast %60 : vector<1x128x128xbf16> to vector<128x128xbf16>
    %cst_44 = arith.constant dense<0.000000e+00> : vector<208x128xf32>
    %62 = tpu.matmul %59, %61, %cst_44 {dimension_numbers = #tpu.dot_dimension_numbers<[1], [0], [0], [1], [0, 0, 1, 1], [], []>} : vector<208x128xbf16>, vector<128x128xbf16>, vector<208x128xf32> -> vector<208x128xf32>
    %63 = arith.addf %57, %62 : vector<208x128xf32>
    %c115 = arith.constant 115 : index
    %c0_45 = arith.constant 0 : index
    %64 = vector.load %arg8[%c115, %c0_45] : memref<416x128xf32, #tpu.memory_space<vmem>>, vector<208x128xf32>
    %65 = arith.truncf %64 : vector<208x128xf32> to vector<208x128xbf16>
    %c8 = arith.constant 8 : index
    %c0_46 = arith.constant 0 : index
    %c0_47 = arith.constant 0 : index
    %66 = vector.load %arg3[%c8, %c0_46, %c0_47] : memref<9x128x128xbf16, #tpu.memory_space<vmem>>, vector<1x128x128xbf16>
    %67 = vector.shape_cast %66 : vector<1x128x128xbf16> to vector<128x128xbf16>
    %cst_48 = arith.constant dense<0.000000e+00> : vector<208x128xf32>
    %68 = tpu.matmul %65, %67, %cst_48 {dimension_numbers = #tpu.dot_dimension_numbers<[1], [0], [0], [1], [0, 0, 1, 1], [], []>} : vector<208x128xbf16>, vector<128x128xbf16>, vector<208x128xf32> -> vector<208x128xf32>
    %69 = arith.addf %63, %68 : vector<208x128xf32>
    %c104_49 = arith.constant 104 : index
    %c0_50 = arith.constant 0 : index
    %70 = vector.load %arg6[%c104_49, %c0_50] : memref<416x1xf32, #tpu.memory_space<vmem>>, vector<208x1xf32>
    %71 = vector.broadcast %70 : vector<208x1xf32> to vector<208x128xf32>
    %72 = arith.mulf %69, %71 : vector<208x128xf32>
    %cst_51 = arith.constant 0.000000e+00 : f32
    %73 = vector.broadcast %cst_51 : f32 to vector<104x128xf32>
    %c0_52 = arith.constant 0 : index
    %c0_53 = arith.constant 0 : index
    %74 = vector.load %arg7[%c0_52, %c0_53] : memref<416x128xf32, #tpu.memory_space<vmem>>, vector<104x128xf32>
    tpu.vector_store %arg7[%c0_52, %c0_53], %73 {strides = array<i32>} : memref<416x128xf32, #tpu.memory_space<vmem>>, vector<104x128xf32>,
    %c104_54 = arith.constant 104 : index
    %c0_55 = arith.constant 0 : index
    %75 = vector.load %arg7[%c104_54, %c0_55] : memref<416x128xf32, #tpu.memory_space<vmem>>, vector<208x128xf32>
    tpu.vector_store %arg7[%c104_54, %c0_55], %72 {strides = array<i32>} : memref<416x128xf32, #tpu.memory_space<vmem>>, vector<208x128xf32>,
    %c312 = arith.constant 312 : index
    %c0_56 = arith.constant 0 : index
    %76 = vector.load %arg7[%c312, %c0_56] : memref<416x128xf32, #tpu.memory_space<vmem>>, vector<104x128xf32>
    tpu.vector_store %arg7[%c312, %c0_56], %73 {strides = array<i32>} : memref<416x128xf32, #tpu.memory_space<vmem>>, vector<104x128xf32>,
    return
  }
  func.func @transform_0(%arg0: i32) -> (i32, i32) {
    %c0_i32 = arith.constant 0 : i32
    %c0_i32_0 = arith.constant 0 : i32
    %c0_i32_1 = arith.constant 0 : i32
    return %c0_i32, %c0_i32_0 : i32, i32
  }
  func.func @transform_1(%arg0: i32) -> (i32, i32) {
    %c0_i32 = arith.constant 0 : i32
    %c0_i32_0 = arith.constant 0 : i32
    %c0_i32_1 = arith.constant 0 : i32
    return %c0_i32, %c0_i32_0 : i32, i32
  }
  func.func @transform_2(%arg0: i32) -> (i32, i32, i32) {
    %c0_i32 = arith.constant 0 : i32
    %c0_i32_0 = arith.constant 0 : i32
    %c0_i32_1 = arith.constant 0 : i32
    return %c0_i32, %c0_i32_0, %arg0 : i32, i32, i32
  }
  func.func @transform_3(%arg0: i32) -> (i32, i32) {
    %c0_i32 = arith.constant 0 : i32
    %c0_i32_0 = arith.constant 0 : i32
    %c0_i32_1 = arith.constant 0 : i32
    return %c0_i32, %c0_i32_0 : i32, i32
  }
  func.func @transform_4(%arg0: i32) -> (i32, i32) {
    %c0_i32 = arith.constant 0 : i32
    %c0_i32_0 = arith.constant 0 : i32
    %c0_i32_1 = arith.constant 0 : i32
    return %c0_i32, %c0_i32_0 : i32, i32
  }
  func.func @transform_5(%arg0: i32) -> (i32, i32) {
    %c0_i32 = arith.constant 0 : i32
    %c0_i32_0 = arith.constant 0 : i32
    %c0_i32_1 = arith.constant 0 : i32
    return %c0_i32, %c0_i32_0 : i32, i32
  }
  func.func @transform_6(%arg0: i32) -> (i32, i32) {
    %c0_i32 = arith.constant 0 : i32
    %c0_i32_0 = arith.constant 0 : i32
    return %c0_i32, %arg0 : i32, i32
  }
}

module attributes {stable_mosaic.version = 11 : i64} {
  func.func @_bn_emb_kernel(%arg0: i32, %arg1: memref<104x128xf32, #tpu.memory_space<vmem>>, %arg2: memref<1x128xf32, #tpu.memory_space<vmem>>, %arg3: memref<1x128xf32, #tpu.memory_space<vmem>>, %arg4: memref<1x1x128xf32, #tpu.memory_space<vmem>>, %arg5: memref<104x128xf32, #tpu.memory_space<vmem>>) attributes {dimension_semantics = [#tpu.dimension_semantics<parallel>], iteration_bounds = array<i64: 2>, scalar_prefetch = 0 : i64, scratch_operands = 0 : i64, tpu.core_type = #tpu.core_type<tc>, window_params = [{transform_indices = @transform_0, window_bounds = array<i64: 104, 128>}, {pipeline_mode = #tpu.pipeline_mode<synchronous>, transform_indices = @transform_1, window_bounds = array<i64: 1, 128>}, {pipeline_mode = #tpu.pipeline_mode<synchronous>, transform_indices = @transform_2, window_bounds = array<i64: 1, 128>}, {transform_indices = @transform_3, window_bounds = array<i64: 1, 1, 128>}, {transform_indices = @transform_4, window_bounds = array<i64: 104, 128>}]} {
    %c0 = arith.constant 0 : index
    %c0_0 = arith.constant 0 : index
    %0 = vector.load %arg1[%c0, %c0_0] : memref<104x128xf32, #tpu.memory_space<vmem>>, vector<104x128xf32>
    %c0_1 = arith.constant 0 : index
    %c0_2 = arith.constant 0 : index
    %1 = vector.load %arg2[%c0_1, %c0_2] : memref<1x128xf32, #tpu.memory_space<vmem>>, vector<1x128xf32>
    %2 = vector.broadcast %1 : vector<1x128xf32> to vector<104x128xf32>
    %3 = arith.mulf %0, %2 : vector<104x128xf32>
    %c0_3 = arith.constant 0 : index
    %c0_4 = arith.constant 0 : index
    %4 = vector.load %arg3[%c0_3, %c0_4] : memref<1x128xf32, #tpu.memory_space<vmem>>, vector<1x128xf32>
    %5 = vector.broadcast %4 : vector<1x128xf32> to vector<104x128xf32>
    %6 = arith.addf %3, %5 : vector<104x128xf32>
    %c0_5 = arith.constant 0 : index
    %c0_6 = arith.constant 0 : index
    %c0_7 = arith.constant 0 : index
    %7 = vector.load %arg4[%c0_5, %c0_6, %c0_7] : memref<1x1x128xf32, #tpu.memory_space<vmem>>, vector<1x1x128xf32>
    %8 = vector.shape_cast %7 : vector<1x1x128xf32> to vector<1x128xf32>
    %9 = vector.broadcast %8 : vector<1x128xf32> to vector<104x128xf32>
    %10 = arith.addf %6, %9 : vector<104x128xf32>
    %c0_8 = arith.constant 0 : index
    %c0_9 = arith.constant 0 : index
    %11 = vector.load %arg5[%c0_8, %c0_9] : memref<104x128xf32, #tpu.memory_space<vmem>>, vector<104x128xf32>
    tpu.vector_store %arg5[%c0_8, %c0_9], %10 {strides = array<i32>} : memref<104x128xf32, #tpu.memory_space<vmem>>, vector<104x128xf32>,
    return
  }
  func.func @transform_0(%arg0: i32) -> (i32, i32) {
    %c1_i32 = arith.constant 1 : i32
    %0 = arith.addi %arg0, %c1_i32 : i32
    %c0_i32 = arith.constant 0 : i32
    %c0_i32_0 = arith.constant 0 : i32
    return %0, %c0_i32 : i32, i32
  }
  func.func @transform_1(%arg0: i32) -> (i32, i32) {
    %c0_i32 = arith.constant 0 : i32
    %c0_i32_0 = arith.constant 0 : i32
    %c0_i32_1 = arith.constant 0 : i32
    return %c0_i32, %c0_i32_0 : i32, i32
  }
  func.func @transform_2(%arg0: i32) -> (i32, i32) {
    %c0_i32 = arith.constant 0 : i32
    %c0_i32_0 = arith.constant 0 : i32
    %c0_i32_1 = arith.constant 0 : i32
    return %c0_i32, %c0_i32_0 : i32, i32
  }
  func.func @transform_3(%arg0: i32) -> (i32, i32, i32) {
    %c0_i32 = arith.constant 0 : i32
    %c0_i32_0 = arith.constant 0 : i32
    %c0_i32_1 = arith.constant 0 : i32
    return %arg0, %c0_i32, %c0_i32_0 : i32, i32, i32
  }
  func.func @transform_4(%arg0: i32) -> (i32, i32) {
    %c0_i32 = arith.constant 0 : i32
    %c0_i32_0 = arith.constant 0 : i32
    return %arg0, %c0_i32 : i32, i32
  }
}

</mosaic_0001>

<llo_original>
// kernel: tile.8
$region0: #{tile.8}
  #allocation0 [shape = 's32[1]{0}', space=sflag, size = 0x4, scoped, tag = 'scoped memory for tile.8']
  %s0 = inlined_call_operand.vmem [shape: f32[104], index: 0, kind: input, shape index: {}]
  %s1 = inlined_call_operand.vmem [shape: f32[2,104], index: 1, kind: output, shape index: {}]
  // Predicated region
  $region2: #{tile.8} parent=0 // pred_check
    _
  $region3: #{tile.8} parent=0 // pred_check_branch
    %3 = sbr.rel (0) target = $region5
  $region4: #{tile.8} parent=0 // pred_region
    _
  $region5: #{tile.8} parent=0 // pred_fallthru
    _
  %v4 = vld [vmem:[%s0] ss:$0 sm:$0xff]
  %5 = vst [vmem:[%s1] sm:$0x3] %v4

// kernel: tile.9
$region0: #{tile.9}
  %s0 = inlined_call_operand.vmem [shape: f32[2,104], index: 0, kind: input, shape index: {}]
  %s1 = inlined_call_operand.vmem [shape: f32[208], index: 1, kind: output, shape index: {}]
  $region1: #{tile.9} parent=0
    #allocation0 [shape = 'u8[4096]{0}', space=vmem, size = 0x1000, scoped, tag = 'scoped mem for output reshape']
    #allocation1 [shape = 'u8[4096]{0}', space=vmem, size = 0x1000, scoped, tag = 'scoped mem for input reshape']
    %s3 = ssub.s32 4, 1
    %v4 = vld [vmem:[%s0] sm:%s3]
    %5 = vst [vmem:[#allocation1] sm:%s3] %v4
    %v6 = vld [vmem:[#allocation1] sm:$0x1]
    %vm7 = vcmask 850944
    %8 = vst.msk [vmem:[#allocation0] sm:$0x1] %vm7, %v6
    %s9 = scalar_lea.vmem [#allocation1], 1
    %v10 = vld [vmem:[%s9] sm:$0x1]
    %s11 = scalar_lea.vmem [#allocation1], 1
    %v12 = vld [vmem:[%s11] sm:$0x1]
    %vm13 = vcmask 195584
    %v14 = vsel %vm13, %v12, %v10
    %15 = vrot.lane.b32.xlu0 %v14, 104
    %v16 = vpop.permute.xlu0 %15
    %vm17 = vcmask 654336
    %s18 = scalar_lea.vmem [#allocation0], 1
    %19 = vst.msk [vmem:[%s18] sm:$0x1] %vm17, %v16
    %vm20 = vcmask 1048384
    %21 = vst.msk [vmem:[#allocation0] sm:$0x1] %vm20, %v16
    %s23 = ssub.s32 4, 1
    %v24 = vld [vmem:[#allocation0] sm:%s23]
    %s26 = ssub.s32 4, 1
    %27 = vst [vmem:[%s1] sm:%s26] %v24

// kernel: downsample_forward.9
$region0: #{downsample_forward.9}
  #allocation0 [shape = 'u32[]', space=smem, size = 0x4, offset = 0x4, fixed_abs, tag = 'smem constant byte address 0x4 - core index']
  #allocation1 [shape = 'u32[72,128]{1,0:T(1,128)}', space=vmem, size = 0x9000, scoped, tag = 'internal scratch']
  %s0 = inlined_call_operand.vmem [shape: f32[416,128], index: 0, kind: input, shape index: {}]
  %s1 = inlined_call_operand.vmem [shape: f32[1,128], index: 1, kind: input, shape index: {}]
  %s2 = inlined_call_operand.vmem [shape: f32[1,128], index: 2, kind: input, shape index: {}]
  %s3 = inlined_call_operand.vmem [shape: f32[2,1,128], index: 3, kind: input, shape index: {}]
  %s4 = inlined_call_operand.vmem [shape: f32[208,128], index: 4, kind: output, shape index: {}]
  %s5 = sld [smem:[#allocation0]]
  $region49: #{downsample_forward.9} parent=0
    _
  %s7 = ssub.s32 1, %s5
  %s8 = scalar_select 0, %s7, %s5
  loop: start=0, step=1, limit=4
  $region2: #{downsample_forward.9} parent=0 // loop_pre_header
    _
  $region3: #{downsample_forward.9} parent=0 // loop_header
    %s10 = sphi 0, %s14
    %p11 = scmp.ge.s32.totalorder %s10, 4
    %s22 = sphi 0, %s24
    %s25 = sphi 0, %s22
    %s26 = sphi 0, %s25
    %s42 = sphi 0, %s26
    %s46 = sphi 0, %s46
    %s48 = sphi 0, %s46
    %s49 = sphi 0, %s48
    %s63 = sphi 0, %s49
    %s67 = sphi 0, %s67
    %s69 = sphi 0, %s67
    %s70 = sphi 0, %s69
    %s84 = sphi 0, %s70
    %s90 = sphi 0, %s92
    %s93 = sphi 0, %s90
    %s94 = sphi 0, %s93
    %s110 = sphi 0, %s94
    %s116 = sphi 0, %s118
    %s119 = sphi 0, %s116
    %s120 = sphi 0, %s119
    %s136 = sphi 0, %s120
  $region4: #{downsample_forward.9} parent=0 // loop_header_branch
    %13 = sbr.rel (%p11) target = $region8
  $region5: #{downsample_forward.9} parent=0 // loop_body
    %s15 = ssub.s32 %s10, 1
    %s16 = ssub.s32 %s10, 2
    %s17 = sadd.s32 %s10, 1
    %s18 = sadd.s32 %s10, 1
    %s19 = sadd.s32 %s17, 1
    %s20 = ssub.s32 %s18, %s19
    %p21 = scmp.eq.s32.totalorder %s20, 0
    %s23 = sadd.s32 %s22, 1
    %s24 = scalar_select %p21, %s22, %s23
    %p27 = pneg %p21
    %p28 = scmp.eq.s32.totalorder %s10, 1
    %p29 = por %p27, %p28
    %p30 = scmp.ne.s32.totalorder %s22, %s25
    %p31 = scmp.eq.s32.totalorder %s10, 0
    %p32 = por %p30, %p31
    %p33 = scmp.ne.s32.totalorder %s22, %s25
    %p34 = scmp.eq.s32.totalorder %s15, 1
    %p35 = por %p33, %p34
    %p36 = scmp.ne.s32.totalorder %s25, %s26
    %p37 = scmp.eq.s32.totalorder %s15, 0
    %p38 = por %p36, %p37
    %p39 = scmp.ne.s32.totalorder %s25, %s26
    %p40 = scmp.eq.s32.totalorder %s16, 1
    %p41 = por %p39, %p40
    %p43 = scmp.ne.s32.totalorder %s26, %s42
    %p44 = scmp.eq.s32.totalorder %s16, 0
    %p45 = por %p43, %p44
    %s47 = sadd.s32 %s46, 1
    %p50 = scmp.eq.s32.totalorder %s10, 1
    %p51 = scmp.ne.s32.totalorder %s46, %s48
    %p52 = scmp.eq.s32.totalorder %s10, 0
    %p53 = por %p51, %p52
    %p54 = scmp.ne.s32.totalorder %s46, %s48
    %p55 = scmp.eq.s32.totalorder %s15, 1
    %p56 = por %p54, %p55
    %p57 = scmp.ne.s32.totalorder %s48, %s49
    %p58 = scmp.eq.s32.totalorder %s15, 0
    %p59 = por %p57, %p58
    %p60 = scmp.ne.s32.totalorder %s48, %s49
    %p61 = scmp.eq.s32.totalorder %s16, 1
    %p62 = por %p60, %p61
    %p64 = scmp.ne.s32.totalorder %s49, %s63
    %p65 = scmp.eq.s32.totalorder %s16, 0
    %p66 = por %p64, %p65
    %s68 = sadd.s32 %s67, 1
    %p71 = scmp.eq.s32.totalorder %s10, 1
    %p72 = scmp.ne.s32.totalorder %s67, %s69
    %p73 = scmp.eq.s32.totalorder %s10, 0
    %p74 = por %p72, %p73
    %p75 = scmp.ne.s32.totalorder %s67, %s69
    %p76 = scmp.eq.s32.totalorder %s15, 1
    %p77 = por %p75, %p76
    %p78 = scmp.ne.s32.totalorder %s69, %s70
    %p79 = scmp.eq.s32.totalorder %s15, 0
    %p80 = por %p78, %p79
    %p81 = scmp.ne.s32.totalorder %s69, %s70
    %p82 = scmp.eq.s32.totalorder %s16, 1
    %p83 = por %p81, %p82
    %p85 = scmp.ne.s32.totalorder %s70, %s84
    %p86 = scmp.eq.s32.totalorder %s16, 0
    %p87 = por %p85, %p86
    %s88 = ssub.s32 %s10, %s17
    %p89 = scmp.eq.s32.totalorder %s88, 0
    %s91 = sadd.s32 %s90, 1
    %s92 = scalar_select %p89, %s90, %s91
    %p95 = pneg %p89
    %p96 = scmp.eq.s32.totalorder %s10, 1
    %p97 = por %p95, %p96
    %p98 = scmp.ne.s32.totalorder %s90, %s93
    %p99 = scmp.eq.s32.totalorder %s10, 0
    %p100 = por %p98, %p99
    %p101 = scmp.ne.s32.totalorder %s90, %s93
    %p102 = scmp.eq.s32.totalorder %s15, 1
    %p103 = por %p101, %p102
    %p104 = scmp.ne.s32.totalorder %s93, %s94
    %p105 = scmp.eq.s32.totalorder %s15, 0
    %p106 = por %p104, %p105
    %p107 = scmp.ne.s32.totalorder %s93, %s94
    %p108 = scmp.eq.s32.totalorder %s16, 1
    %p109 = por %p107, %p108
    %p111 = scmp.ne.s32.totalorder %s94, %s110
    %p112 = scmp.eq.s32.totalorder %s16, 0
    %p113 = por %p111, %p112
    %s114 = ssub.s32 %s10, %s17
    %p115 = scmp.eq.s32.totalorder %s114, 0
    %s117 = sadd.s32 %s116, 1
    %s118 = scalar_select %p115, %s116, %s117
    %p121 = pneg %p115
    %p122 = scmp.eq.s32.totalorder %s10, 1
    %p123 = por %p121, %p122
    %p124 = scmp.ne.s32.totalorder %s116, %s119
    %p125 = scmp.eq.s32.totalorder %s10, 0
    %p126 = por %p124, %p125
    %p127 = scmp.ne.s32.totalorder %s116, %s119
    %p128 = scmp.eq.s32.totalorder %s15, 1
    %p129 = por %p127, %p128
    %p130 = scmp.ne.s32.totalorder %s119, %s120
    %p131 = scmp.eq.s32.totalorder %s15, 0
    %p132 = por %p130, %p131
    %p133 = scmp.ne.s32.totalorder %s119, %s120
    %p134 = scmp.eq.s32.totalorder %s16, 1
    %p135 = por %p133, %p134
    %p137 = scmp.ne.s32.totalorder %s120, %s136
    %p138 = scmp.eq.s32.totalorder %s16, 0
    %p139 = por %p137, %p138
    %p140 = scmp.le.s32.totalorder 1, %s10
    %p141 = scmp.lt.s32.totalorder %s10, 3
    %p142 = pnand %p140, %p141
    %p143 = pneg %p142
    // Predicated region
    $region9: #{downsample_forward.9} parent=5 // pred_check
      _
    $region10: #{downsample_forward.9} parent=5 // pred_check_branch
      %145 = sbr.rel (%p142) target = $region12
    $region11: #{downsample_forward.9} parent=5 // pred_region
      %s146 = ssub.s32 %s10, 1
      // Predicated region
      $region13: #{downsample_forward.9} parent=11 // pred_check
        %p147 = pneg %p59
      $region14: #{downsample_forward.9} parent=11 // pred_check_branch
        %149 = sbr.rel (%p147) target = $region16
      $region15: #{downsample_forward.9} parent=11 // pred_region
        _
      $region16: #{downsample_forward.9} parent=11 // pred_fallthru
        _
      // Predicated region
      $region17: #{downsample_forward.9} parent=11 // pred_check
        %p150 = pneg %p80
      $region18: #{downsample_forward.9} parent=11 // pred_check_branch
        %152 = sbr.rel (%p150) target = $region20
      $region19: #{downsample_forward.9} parent=11 // pred_region
        _
      $region20: #{downsample_forward.9} parent=11 // pred_fallthru
        _
    $region12: #{downsample_forward.9} parent=5 // pred_fallthru
      _
    %p153 = scmp.lt.s32.totalorder %s10, 2
    // Predicated region
    $region21: #{downsample_forward.9} parent=5 // pred_check
      %p154 = pneg %p153
    $region22: #{downsample_forward.9} parent=5 // pred_check_branch
      %156 = sbr.rel (%p154) target = $region24
    $region23: #{downsample_forward.9} parent=5 // pred_region
      // Predicated region
      $region25: #{downsample_forward.9} parent=23 // pred_check
        %p157 = pneg %p32
      $region26: #{downsample_forward.9} parent=23 // pred_check_branch
        %159 = sbr.rel (%p157) target = $region28
      $region27: #{downsample_forward.9} parent=23 // pred_region
        %s160 = sadd.s32 %s10, 1
        %s161 = smul.u32 13, %s160
        %p162 = scmp.lt.s32.totalorder %s161, 51
        %s163 = scalar_select %p162, %s161, 51
        %s164 = smul.addr %s163, 8
        %s165 = scalar_lea.vmem %s0, %s164
        %s166 = sadd.s32 %s10, 1
        %s167 = smul.u32 13, %s166
      $region28: #{downsample_forward.9} parent=23 // pred_fallthru
        _
      // Predicated region
      $region29: #{downsample_forward.9} parent=23 // pred_check
        %p168 = pneg %p100
      $region30: #{downsample_forward.9} parent=23 // pred_check_branch
        %170 = sbr.rel (%p168) target = $region32
      $region31: #{downsample_forward.9} parent=23 // pred_region
        %p171 = scmp.lt.s32.totalorder %s10, 1
        %s172 = scalar_select %p171, %s10, 1
        %s173 = scalar_lea.vmem %s3, %s172
      $region32: #{downsample_forward.9} parent=23 // pred_fallthru
        _
    $region24: #{downsample_forward.9} parent=5 // pred_fallthru
      _
    %p174 = scmp.le.s32.totalorder 1, %s10
    %p175 = scmp.lt.s32.totalorder %s10, 3
    %p176 = pnand %p174, %p175
    %p177 = pneg %p176
    // Predicated region
    $region33: #{downsample_forward.9} parent=5 // pred_check
      _
    $region34: #{downsample_forward.9} parent=5 // pred_check_branch
      %179 = sbr.rel (%p176) target = $region36
    $region35: #{downsample_forward.9} parent=5 // pred_region
      %s180 = ssub.s32 %s10, 1
      %s181 = sadd.s32 %s15, 1
      %s182 = smul.u32 13, %s181
      %p183 = scmp.lt.s32.totalorder %s182, 51
      %s184 = scalar_select %p183, %s182, 51
      %s185 = smul.addr %s184, 8
      %s186 = scalar_lea.vmem %s0, %s185
      %p187 = pneg %p38
      %p188 = pneg %p35
      %p189 = pneg %p59
      %p190 = pneg %p56
      %p191 = pneg %p80
      %p192 = pneg %p77
      %p193 = scmp.lt.s32.totalorder %s15, 1
      %s194 = scalar_select %p193, %s15, 1
      %s195 = scalar_lea.vmem %s3, %s194
      %p196 = pneg %p106
      %p197 = pneg %p103
      %p198 = pneg %p132
      %p199 = pneg %p129
      %s200 = smul.u32 13, %s15
      %p201 = scmp.lt.s32.totalorder %s200, 25
      %s202 = scalar_select %p201, %s200, 25
      %s203 = smul.addr %s202, 8
      %s204 = scalar_lea.vmem %s4, %s203
      %s205 = sadd.s32 %s15, 1
      %s206 = smul.u32 13, %s205
      %p207 = scmp.lt.s32.totalorder %s206, 51
      %s208 = scalar_select %p207, %s206, 51
      %s209 = smul.addr %s208, 8
      %s210 = scalar_lea.vmem %s0, %s209
      %s211 = sadd.s32 %s15, 1
      %s212 = smul.u32 13, %s211
      %p213 = scmp.lt.s32.totalorder %s15, 1
      %s214 = scalar_select %p213, %s15, 1
      %s215 = scalar_lea.vmem %s3, %s214
      %s216 = smul.u32 13, %s15
      %p217 = scmp.lt.s32.totalorder %s216, 25
      %s218 = scalar_select %p217, %s216, 25
      %s219 = smul.addr %s218, 8
      %s220 = scalar_lea.vmem %s4, %s219
      %s221 = smul.u32 13, %s15
      %v222 = vld [vmem:[%s210] sm:$0xff]
      %v223 = vld [vmem:[%s210 + $0x8] sm:$0xff]
      %v224 = vld [vmem:[%s210 + $0x10] sm:$0xff]
      %v225 = vld [vmem:[%s210 + $0x18] sm:$0xff]
      %v226 = vld [vmem:[%s210 + $0x20] sm:$0xff]
      %v227 = vld [vmem:[%s210 + $0x28] sm:$0xff]
      %v228 = vld [vmem:[%s210 + $0x30] sm:$0xff]
      %v229 = vld [vmem:[%s210 + $0x38] sm:$0xff]
      %v230 = vld [vmem:[%s210 + $0x40] sm:$0xff]
      %v231 = vld [vmem:[%s210 + $0x48] sm:$0xff]
      %v232 = vld [vmem:[%s210 + $0x50] sm:$0xff]
      %v233 = vld [vmem:[%s210 + $0x58] sm:$0xff]
      %v234 = vld [vmem:[%s210 + $0x60] sm:$0xff]
      %v235 = vld [vmem:[%s1] sm:$0x1]
      %v237 = vperm.slane %v235, 0
      %v239 = vmul.f32 %v222, %v237
      %v240 = vmul.f32 %v223, %v237
      %v241 = vmul.f32 %v224, %v237
      %v242 = vmul.f32 %v225, %v237
      %v243 = vmul.f32 %v226, %v237
      %v244 = vmul.f32 %v227, %v237
      %v245 = vmul.f32 %v228, %v237
      %v246 = vmul.f32 %v229, %v237
      %v247 = vmul.f32 %v230, %v237
      %v248 = vmul.f32 %v231, %v237
      %v249 = vmul.f32 %v232, %v237
      %v250 = vmul.f32 %v233, %v237
      %v251 = vmul.f32 %v234, %v237
      %v252 = vld [vmem:[%s2] sm:$0x1]
      %v254 = vperm.slane %v252, 0
      %v256 = vadd.f32 %v239, %v254
      %v257 = vadd.f32 %v240, %v254
      %v258 = vadd.f32 %v241, %v254
      %v259 = vadd.f32 %v242, %v254
      %v260 = vadd.f32 %v243, %v254
      %v261 = vadd.f32 %v244, %v254
      %v262 = vadd.f32 %v245, %v254
      %v263 = vadd.f32 %v246, %v254
      %v264 = vadd.f32 %v247, %v254
      %v265 = vadd.f32 %v248, %v254
      %v266 = vadd.f32 %v249, %v254
      %v267 = vadd.f32 %v250, %v254
      %v268 = vadd.f32 %v251, %v254
      %v269 = vld [vmem:[%s215] sm:$0x1]
      %v271 = vperm.slane %v269, 0
      %v273 = vadd.f32 %v256, %v271
      %v274 = vadd.f32 %v257, %v271
      %v275 = vadd.f32 %v258, %v271
      %v276 = vadd.f32 %v259, %v271
      %v277 = vadd.f32 %v260, %v271
      %v278 = vadd.f32 %v261, %v271
      %v279 = vadd.f32 %v262, %v271
      %v280 = vadd.f32 %v263, %v271
      %v281 = vadd.f32 %v264, %v271
      %v282 = vadd.f32 %v265, %v271
      %v283 = vadd.f32 %v266, %v271
      %v284 = vadd.f32 %v267, %v271
      %v285 = vadd.f32 %v268, %v271
      %286 = vst [vmem:[%s220] sm:$0xff] %v273
      %287 = vst [vmem:[%s220 + $0x8] sm:$0xff] %v274
      %288 = vst [vmem:[%s220 + $0x10] sm:$0xff] %v275
      %289 = vst [vmem:[%s220 + $0x18] sm:$0xff] %v276
      %290 = vst [vmem:[%s220 + $0x20] sm:$0xff] %v277
      %291 = vst [vmem:[%s220 + $0x28] sm:$0xff] %v278
      %292 = vst [vmem:[%s220 + $0x30] sm:$0xff] %v279
      %293 = vst [vmem:[%s220 + $0x38] sm:$0xff] %v280
      %294 = vst [vmem:[%s220 + $0x40] sm:$0xff] %v281
      %295 = vst [vmem:[%s220 + $0x48] sm:$0xff] %v282
      %296 = vst [vmem:[%s220 + $0x50] sm:$0xff] %v283
      %297 = vst [vmem:[%s220 + $0x58] sm:$0xff] %v284
      %298 = vst [vmem:[%s220 + $0x60] sm:$0xff] %v285
      %s299 = smul.u32 13, %s15
      %p300 = scmp.lt.s32.totalorder %s299, 25
      %s301 = scalar_select %p300, %s299, 25
      %s302 = smul.addr %s301, 8
      %s303 = scalar_lea.vmem %s4, %s302
      // Predicated region
      $region37: #{downsample_forward.9} parent=35 // pred_check
        %p304 = pneg %p129
      $region38: #{downsample_forward.9} parent=35 // pred_check_branch
        %306 = sbr.rel (%p304) target = $region40
      $region39: #{downsample_forward.9} parent=35 // pred_region
        %s307 = smul.u32 13, %s15
      $region40: #{downsample_forward.9} parent=35 // pred_fallthru
        _
    $region36: #{downsample_forward.9} parent=5 // pred_fallthru
      _
    %p308 = scmp.le.s32.totalorder 2, %s10
    // Predicated region
    $region41: #{downsample_forward.9} parent=5 // pred_check
      %p309 = pneg %p308
    $region42: #{downsample_forward.9} parent=5 // pred_check_branch
      %311 = sbr.rel (%p309) target = $region44
    $region43: #{downsample_forward.9} parent=5 // pred_region
      %s312 = ssub.s32 %s10, 2
      // Predicated region
      $region45: #{downsample_forward.9} parent=43 // pred_check
        %p313 = pneg %p135
      $region46: #{downsample_forward.9} parent=43 // pred_check_branch
        %315 = sbr.rel (%p313) target = $region48
      $region47: #{downsample_forward.9} parent=43 // pred_region
        %s316 = smul.u32 13, %s16
        %p317 = scmp.lt.s32.totalorder %s316, 25
        %s318 = scalar_select %p317, %s316, 25
        %s319 = smul.addr %s318, 8
        %s320 = scalar_lea.vmem %s4, %s319
      $region48: #{downsample_forward.9} parent=43 // pred_fallthru
        _
    $region44: #{downsample_forward.9} parent=5 // pred_fallthru
      _
  $region6: #{downsample_forward.9} parent=0 // loop_footer
    %s14 = sadd.s32 1, %s10
  $region7: #{downsample_forward.9} parent=0 // loop_footer_branch
    %9 = sbr.rel target = $region3
  $region8: #{downsample_forward.9} parent=0 // loop_exit
    _

// kernel: downsample_forward.5
$region0: #{downsample_forward.5}
  #allocation0 [shape = 'u32[]', space=smem, size = 0x4, offset = 0x4, fixed_abs, tag = 'smem constant byte address 0x4 - core index']
  #allocation1 [shape = 'u32[72,128]{1,0:T(1,128)}', space=vmem, size = 0x9000, scoped, tag = 'internal scratch']
  #allocation2 [shape = 'f32[416,128]{1,0:T(8,128)}', space=vmem, size = 0x34000, scoped, tag = 'scratch operand']
  %s0 = inlined_call_operand.vmem [shape: f32[416,128], index: 0, kind: input, shape index: {}]
  %s1 = inlined_call_operand.vmem [shape: bf16[9,128,128], index: 1, kind: input, shape index: {}]
  %s2 = inlined_call_operand.vmem [shape: f32[1,128], index: 2, kind: input, shape index: {}]
  %s3 = inlined_call_operand.vmem [shape: f32[1,128], index: 3, kind: input, shape index: {}]
  %s4 = inlined_call_operand.vmem [shape: f32[416,1], index: 4, kind: input, shape index: {}]
  %s5 = inlined_call_operand.vmem [shape: f32[416,128], index: 5, kind: output, shape index: {}]
  %s6 = sld [smem:[#allocation0]]
  $region30: #{downsample_forward.5} parent=0
    _
  %s8 = ssub.s32 1, %s6
  %s9 = scalar_select 0, %s8, %s6
  // Predicated region
  $region2: #{downsample_forward.5} parent=0 // pred_check
    _
  $region3: #{downsample_forward.5} parent=0 // pred_check_branch
    %11 = sbr.rel (0) target = $region5
  $region4: #{downsample_forward.5} parent=0 // pred_region
    _
  $region5: #{downsample_forward.5} parent=0 // pred_fallthru
    _
  // Predicated region
  $region6: #{downsample_forward.5} parent=0 // pred_check
    _
  $region7: #{downsample_forward.5} parent=0 // pred_check_branch
    %13 = sbr.rel (0) target = $region9
  $region8: #{downsample_forward.5} parent=0 // pred_region
    _
  $region9: #{downsample_forward.5} parent=0 // pred_fallthru
    _
  // Predicated region
  $region10: #{downsample_forward.5} parent=0 // pred_check
    _
  $region11: #{downsample_forward.5} parent=0 // pred_check_branch
    %15 = sbr.rel (0) target = $region13
  $region12: #{downsample_forward.5} parent=0 // pred_region
    _
  $region13: #{downsample_forward.5} parent=0 // pred_fallthru
    _
  // Predicated region
  $region14: #{downsample_forward.5} parent=0 // pred_check
    _
  $region15: #{downsample_forward.5} parent=0 // pred_check_branch
    %17 = sbr.rel (0) target = $region17
  $region16: #{downsample_forward.5} parent=0 // pred_region
    _
  $region17: #{downsample_forward.5} parent=0 // pred_fallthru
    _
  // Predicated region
  $region18: #{downsample_forward.5} parent=0 // pred_check
    _
  $region19: #{downsample_forward.5} parent=0 // pred_check_branch
    %19 = sbr.rel (0) target = $region21
  $region20: #{downsample_forward.5} parent=0 // pred_region
    _
  $region21: #{downsample_forward.5} parent=0 // pred_fallthru
    _
  %v20 = vld [vmem:[%s4] sm:$0xff]
  %v21 = vld [vmem:[%s4 + $0x8] sm:$0xff]
  %v22 = vld [vmem:[%s4 + $0x10] sm:$0xff]
  %v23 = vld [vmem:[%s4 + $0x18] sm:$0xff]
  %v24 = vld [vmem:[%s4 + $0x20] sm:$0xff]
  %v25 = vld [vmem:[%s4 + $0x28] sm:$0xff]
  %v26 = vld [vmem:[%s4 + $0x30] sm:$0xff]
  %v27 = vld [vmem:[%s4 + $0x38] sm:$0xff]
  %v28 = vld [vmem:[%s4 + $0x40] sm:$0xff]
  %v29 = vld [vmem:[%s4 + $0x48] sm:$0xff]
  %v30 = vld [vmem:[%s4 + $0x50] sm:$0xff]
  %v31 = vld [vmem:[%s4 + $0x58] sm:$0xff]
  %v32 = vld [vmem:[%s4 + $0x60] sm:$0xff]
  %v33 = vld [vmem:[%s4 + $0x68] sm:$0xff]
  %v34 = vld [vmem:[%s4 + $0x70] sm:$0xff]
  %v35 = vld [vmem:[%s4 + $0x78] sm:$0xff]
  %v36 = vld [vmem:[%s4 + $0x80] sm:$0xff]
  %v37 = vld [vmem:[%s4 + $0x88] sm:$0xff]
  %v38 = vld [vmem:[%s4 + $0x90] sm:$0xff]
  %v39 = vld [vmem:[%s4 + $0x98] sm:$0xff]
  %v40 = vld [vmem:[%s4 + $0xa0] sm:$0xff]
  %v41 = vld [vmem:[%s4 + $0xa8] sm:$0xff]
  %v42 = vld [vmem:[%s4 + $0xb0] sm:$0xff]
  %v43 = vld [vmem:[%s4 + $0xb8] sm:$0xff]
  %v44 = vld [vmem:[%s4 + $0xc0] sm:$0xff]
  %v45 = vld [vmem:[%s4 + $0xc8] sm:$0xff]
  %v46 = vld [vmem:[%s4 + $0xd0] sm:$0xff]
  %v47 = vld [vmem:[%s4 + $0xd8] sm:$0xff]
  %v48 = vld [vmem:[%s4 + $0xe0] sm:$0xff]
  %v49 = vld [vmem:[%s4 + $0xe8] sm:$0xff]
  %v50 = vld [vmem:[%s4 + $0xf0] sm:$0xff]
  %v51 = vld [vmem:[%s4 + $0xf8] sm:$0xff]
  %v52 = vld [vmem:[%s4 + $0x100] sm:$0xff]
  %v53 = vld [vmem:[%s4 + $0x108] sm:$0xff]
  %v54 = vld [vmem:[%s4 + $0x110] sm:$0xff]
  %v55 = vld [vmem:[%s4 + $0x118] sm:$0xff]
  %v56 = vld [vmem:[%s4 + $0x120] sm:$0xff]
  %v57 = vld [vmem:[%s4 + $0x128] sm:$0xff]
  %v58 = vld [vmem:[%s4 + $0x130] sm:$0xff]
  %v59 = vld [vmem:[%s4 + $0x138] sm:$0xff]
  %v60 = vld [vmem:[%s4 + $0x140] sm:$0xff]
  %v61 = vld [vmem:[%s4 + $0x148] sm:$0xff]
  %v62 = vld [vmem:[%s4 + $0x150] sm:$0xff]
  %v63 = vld [vmem:[%s4 + $0x158] sm:$0xff]
  %v64 = vld [vmem:[%s4 + $0x160] sm:$0xff]
  %v65 = vld [vmem:[%s4 + $0x168] sm:$0xff]
  %v66 = vld [vmem:[%s4 + $0x170] sm:$0xff]
  %v67 = vld [vmem:[%s4 + $0x178] sm:$0xff]
  %v68 = vld [vmem:[%s4 + $0x180] sm:$0xff]
  %v69 = vld [vmem:[%s4 + $0x188] sm:$0xff]
  %v70 = vld [vmem:[%s4 + $0x190] sm:$0xff]
  %v71 = vld [vmem:[%s4 + $0x198] sm:$0xff]
  %v72 = vld [vmem:[%s0] sm:$0xff]
  %v73 = vld [vmem:[%s0 + $0x8] sm:$0xff]
  %v74 = vld [vmem:[%s0 + $0x10] sm:$0xff]
  %v75 = vld [vmem:[%s0 + $0x18] sm:$0xff]
  %v76 = vld [vmem:[%s0 + $0x20] sm:$0xff]
  %v77 = vld [vmem:[%s0 + $0x28] sm:$0xff]
  %v78 = vld [vmem:[%s0 + $0x30] sm:$0xff]
  %v79 = vld [vmem:[%s0 + $0x38] sm:$0xff]
  %v80 = vld [vmem:[%s0 + $0x40] sm:$0xff]
  %v81 = vld [vmem:[%s0 + $0x48] sm:$0xff]
  %v82 = vld [vmem:[%s0 + $0x50] sm:$0xff]
  %v83 = vld [vmem:[%s0 + $0x58] sm:$0xff]
  %v84 = vld [vmem:[%s0 + $0x60] sm:$0xff]
  %v85 = vld [vmem:[%s0 + $0x68] sm:$0xff]
  %v86 = vld [vmem:[%s0 + $0x70] sm:$0xff]
  %v87 = vld [vmem:[%s0 + $0x78] sm:$0xff]
  %v88 = vld [vmem:[%s0 + $0x80] sm:$0xff]
  %v89 = vld [vmem:[%s0 + $0x88] sm:$0xff]
  %v90 = vld [vmem:[%s0 + $0x90] sm:$0xff]
  %v91 = vld [vmem:[%s0 + $0x98] sm:$0xff]
  %v92 = vld [vmem:[%s0 + $0xa0] sm:$0xff]
  %v93 = vld [vmem:[%s0 + $0xa8] sm:$0xff]
  %v94 = vld [vmem:[%s0 + $0xb0] sm:$0xff]
  %v95 = vld [vmem:[%s0 + $0xb8] sm:$0xff]
  %v96 = vld [vmem:[%s0 + $0xc0] sm:$0xff]
  %v97 = vld [vmem:[%s0 + $0xc8] sm:$0xff]
  %v98 = vld [vmem:[%s0 + $0xd0] sm:$0xff]
  %v99 = vld [vmem:[%s0 + $0xd8] sm:$0xff]
  %v100 = vld [vmem:[%s0 + $0xe0] sm:$0xff]
  %v101 = vld [vmem:[%s0 + $0xe8] sm:$0xff]
  %v102 = vld [vmem:[%s0 + $0xf0] sm:$0xff]
  %v103 = vld [vmem:[%s0 + $0xf8] sm:$0xff]
  %v104 = vld [vmem:[%s0 + $0x100] sm:$0xff]
  %v105 = vld [vmem:[%s0 + $0x108] sm:$0xff]
  %v106 = vld [vmem:[%s0 + $0x110] sm:$0xff]
  %v107 = vld [vmem:[%s0 + $0x118] sm:$0xff]
  %v108 = vld [vmem:[%s0 + $0x120] sm:$0xff]
  %v109 = vld [vmem:[%s0 + $0x128] sm:$0xff]
  %v110 = vld [vmem:[%s0 + $0x130] sm:$0xff]
  %v111 = vld [vmem:[%s0 + $0x138] sm:$0xff]
  %v112 = vld [vmem:[%s0 + $0x140] sm:$0xff]
  %v113 = vld [vmem:[%s0 + $0x148] sm:$0xff]
  %v114 = vld [vmem:[%s0 + $0x150] sm:$0xff]
  %v115 = vld [vmem:[%s0 + $0x158] sm:$0xff]
  %v116 = vld [vmem:[%s0 + $0x160] sm:$0xff]
  %v117 = vld [vmem:[%s0 + $0x168] sm:$0xff]
  %v118 = vld [vmem:[%s0 + $0x170] sm:$0xff]
  %v119 = vld [vmem:[%s0 + $0x178] sm:$0xff]
  %v120 = vld [vmem:[%s0 + $0x180] sm:$0xff]
  %v121 = vld [vmem:[%s0 + $0x188] sm:$0xff]
  %v122 = vld [vmem:[%s0 + $0x190] sm:$0xff]
  %v123 = vld [vmem:[%s0 + $0x198] sm:$0xff]
  %v124 = vld [vmem:[%s2] sm:$0x1]
  %v126 = vperm.slane %v124, 0
  %v128 = vmul.f32 %v72, %v126
  %v129 = vmul.f32 %v73, %v126
  %v130 = vmul.f32 %v74, %v126
  %v131 = vmul.f32 %v75, %v126
  %v132 = vmul.f32 %v76, %v126
  %v133 = vmul.f32 %v77, %v126
  %v134 = vmul.f32 %v78, %v126
  %v135 = vmul.f32 %v79, %v126
  %v136 = vmul.f32 %v80, %v126
  %v137 = vmul.f32 %v81, %v126
  %v138 = vmul.f32 %v82, %v126
  %v139 = vmul.f32 %v83, %v126
  %v140 = vmul.f32 %v84, %v126
  %v141 = vmul.f32 %v85, %v126
  %v142 = vmul.f32 %v86, %v126
  %v143 = vmul.f32 %v87, %v126
  %v144 = vmul.f32 %v88, %v126
  %v145 = vmul.f32 %v89, %v126
  %v146 = vmul.f32 %v90, %v126
  %v147 = vmul.f32 %v91, %v126
  %v148 = vmul.f32 %v92, %v126
  %v149 = vmul.f32 %v93, %v126
  %v150 = vmul.f32 %v94, %v126
  %v151 = vmul.f32 %v95, %v126
  %v152 = vmul.f32 %v96, %v126
  %v153 = vmul.f32 %v97, %v126
  %v154 = vmul.f32 %v98, %v126
  %v155 = vmul.f32 %v99, %v126
  %v156 = vmul.f32 %v100, %v126
  %v157 = vmul.f32 %v101, %v126
  %v158 = vmul.f32 %v102, %v126
  %v159 = vmul.f32 %v103, %v126
  %v160 = vmul.f32 %v104, %v126
  %v161 = vmul.f32 %v105, %v126
  %v162 = vmul.f32 %v106, %v126
  %v163 = vmul.f32 %v107, %v126
  %v164 = vmul.f32 %v108, %v126
  %v165 = vmul.f32 %v109, %v126
  %v166 = vmul.f32 %v110, %v126
  %v167 = vmul.f32 %v111, %v126
  %v168 = vmul.f32 %v112, %v126
  %v169 = vmul.f32 %v113, %v126
  %v170 = vmul.f32 %v114, %v126
  %v171 = vmul.f32 %v115, %v126
  %v172 = vmul.f32 %v116, %v126
  %v173 = vmul.f32 %v117, %v126
  %v174 = vmul.f32 %v118, %v126
  %v175 = vmul.f32 %v119, %v126
  %v176 = vmul.f32 %v120, %v126
  %v177 = vmul.f32 %v121, %v126
  %v178 = vmul.f32 %v122, %v126
  %v179 = vmul.f32 %v123, %v126
  %v180 = vld [vmem:[%s3] sm:$0x1]
  %v182 = vperm.slane %v180, 0
  %v184 = vadd.f32 %v128, %v182
  %v185 = vadd.f32 %v129, %v182
  %v186 = vadd.f32 %v130, %v182
  %v187 = vadd.f32 %v131, %v182
  %v188 = vadd.f32 %v132, %v182
  %v189 = vadd.f32 %v133, %v182
  %v190 = vadd.f32 %v134, %v182
  %v191 = vadd.f32 %v135, %v182
  %v192 = vadd.f32 %v136, %v182
  %v193 = vadd.f32 %v137, %v182
  %v194 = vadd.f32 %v138, %v182
  %v195 = vadd.f32 %v139, %v182
  %v196 = vadd.f32 %v140, %v182
  %v197 = vadd.f32 %v141, %v182
  %v198 = vadd.f32 %v142, %v182
  %v199 = vadd.f32 %v143, %v182
  %v200 = vadd.f32 %v144, %v182
  %v201 = vadd.f32 %v145, %v182
  %v202 = vadd.f32 %v146, %v182
  %v203 = vadd.f32 %v147, %v182
  %v204 = vadd.f32 %v148, %v182
  %v205 = vadd.f32 %v149, %v182
  %v206 = vadd.f32 %v150, %v182
  %v207 = vadd.f32 %v151, %v182
  %v208 = vadd.f32 %v152, %v182
  %v209 = vadd.f32 %v153, %v182
  %v210 = vadd.f32 %v154, %v182
  %v211 = vadd.f32 %v155, %v182
  %v212 = vadd.f32 %v156, %v182
  %v213 = vadd.f32 %v157, %v182
  %v214 = vadd.f32 %v158, %v182
  %v215 = vadd.f32 %v159, %v182
  %v216 = vadd.f32 %v160, %v182
  %v217 = vadd.f32 %v161, %v182
  %v218 = vadd.f32 %v162, %v182
  %v219 = vadd.f32 %v163, %v182
  %v220 = vadd.f32 %v164, %v182
  %v221 = vadd.f32 %v165, %v182
  %v222 = vadd.f32 %v166, %v182
  %v223 = vadd.f32 %v167, %v182
  %v224 = vadd.f32 %v168, %v182
  %v225 = vadd.f32 %v169, %v182
  %v226 = vadd.f32 %v170, %v182
  %v227 = vadd.f32 %v171, %v182
  %v228 = vadd.f32 %v172, %v182
  %v229 = vadd.f32 %v173, %v182
  %v230 = vadd.f32 %v174, %v182
  %v231 = vadd.f32 %v175, %v182
  %v232 = vadd.f32 %v176, %v182
  %v233 = vadd.f32 %v177, %v182
  %v234 = vadd.f32 %v178, %v182
  %v235 = vadd.f32 %v179, %v182
  %237 = vset.pattern.permute.xlu0 0
  %238 = vperm.xlu0 %237, %v20
  %v239 = vpop.permute.xlu0 %238
  %242 = vset.pattern.permute.xlu0 0
  %243 = vperm.xlu0 %242, %v21
  %v244 = vpop.permute.xlu0 %243
  %247 = vset.pattern.permute.xlu0 0
  %248 = vperm.xlu0 %247, %v22
  %v249 = vpop.permute.xlu0 %248
  %252 = vset.pattern.permute.xlu0 0
  %253 = vperm.xlu0 %252, %v23
  %v254 = vpop.permute.xlu0 %253
  %257 = vset.pattern.permute.xlu0 0
  %258 = vperm.xlu0 %257, %v24
  %v259 = vpop.permute.xlu0 %258
  %262 = vset.pattern.permute.xlu0 0
  %263 = vperm.xlu0 %262, %v25
  %v264 = vpop.permute.xlu0 %263
  %267 = vset.pattern.permute.xlu0 0
  %268 = vperm.xlu0 %267, %v26
  %v269 = vpop.permute.xlu0 %268
  %272 = vset.pattern.permute.xlu0 0
  %273 = vperm.xlu0 %272, %v27
  %v274 = vpop.permute.xlu0 %273
  %277 = vset.pattern.permute.xlu0 0
  %278 = vperm.xlu0 %277, %v28
  %v279 = vpop.permute.xlu0 %278
  %282 = vset.pattern.permute.xlu0 0
  %283 = vperm.xlu0 %282, %v29
  %v284 = vpop.permute.xlu0 %283
  %287 = vset.pattern.permute.xlu0 0
  %288 = vperm.xlu0 %287, %v30
  %v289 = vpop.permute.xlu0 %288
  %292 = vset.pattern.permute.xlu0 0
  %293 = vperm.xlu0 %292, %v31
  %v294 = vpop.permute.xlu0 %293
  %297 = vset.pattern.permute.xlu0 0
  %298 = vperm.xlu0 %297, %v32
  %v299 = vpop.permute.xlu0 %298
  %302 = vset.pattern.permute.xlu0 0
  %303 = vperm.xlu0 %302, %v33
  %v304 = vpop.permute.xlu0 %303
  %307 = vset.pattern.permute.xlu0 0
  %308 = vperm.xlu0 %307, %v34
  %v309 = vpop.permute.xlu0 %308
  %312 = vset.pattern.permute.xlu0 0
  %313 = vperm.xlu0 %312, %v35
  %v314 = vpop.permute.xlu0 %313
  %317 = vset.pattern.permute.xlu0 0
  %318 = vperm.xlu0 %317, %v36
  %v319 = vpop.permute.xlu0 %318
  %322 = vset.pattern.permute.xlu0 0
  %323 = vperm.xlu0 %322, %v37
  %v324 = vpop.permute.xlu0 %323
  %327 = vset.pattern.permute.xlu0 0
  %328 = vperm.xlu0 %327, %v38
  %v329 = vpop.permute.xlu0 %328
  %332 = vset.pattern.permute.xlu0 0
  %333 = vperm.xlu0 %332, %v39
  %v334 = vpop.permute.xlu0 %333
  %337 = vset.pattern.permute.xlu0 0
  %338 = vperm.xlu0 %337, %v40
  %v339 = vpop.permute.xlu0 %338
  %342 = vset.pattern.permute.xlu0 0
  %343 = vperm.xlu0 %342, %v41
  %v344 = vpop.permute.xlu0 %343
  %347 = vset.pattern.permute.xlu0 0
  %348 = vperm.xlu0 %347, %v42
  %v349 = vpop.permute.xlu0 %348
  %352 = vset.pattern.permute.xlu0 0
  %353 = vperm.xlu0 %352, %v43
  %v354 = vpop.permute.xlu0 %353
  %357 = vset.pattern.permute.xlu0 0
  %358 = vperm.xlu0 %357, %v44
  %v359 = vpop.permute.xlu0 %358
  %362 = vset.pattern.permute.xlu0 0
  %363 = vperm.xlu0 %362, %v45
  %v364 = vpop.permute.xlu0 %363
  %367 = vset.pattern.permute.xlu0 0
  %368 = vperm.xlu0 %367, %v46
  %v369 = vpop.permute.xlu0 %368
  %372 = vset.pattern.permute.xlu0 0
  %373 = vperm.xlu0 %372, %v47
  %v374 = vpop.permute.xlu0 %373
  %377 = vset.pattern.permute.xlu0 0
  %378 = vperm.xlu0 %377, %v48
  %v379 = vpop.permute.xlu0 %378
  %382 = vset.pattern.permute.xlu0 0
  %383 = vperm.xlu0 %382, %v49
  %v384 = vpop.permute.xlu0 %383
  %387 = vset.pattern.permute.xlu0 0
  %388 = vperm.xlu0 %387, %v50
  %v389 = vpop.permute.xlu0 %388
  %392 = vset.pattern.permute.xlu0 0
  %393 = vperm.xlu0 %392, %v51
  %v394 = vpop.permute.xlu0 %393
  %397 = vset.pattern.permute.xlu0 0
  %398 = vperm.xlu0 %397, %v52
  %v399 = vpop.permute.xlu0 %398
  %402 = vset.pattern.permute.xlu0 0
  %403 = vperm.xlu0 %402, %v53
  %v404 = vpop.permute.xlu0 %403
  %407 = vset.pattern.permute.xlu0 0
  %408 = vperm.xlu0 %407, %v54
  %v409 = vpop.permute.xlu0 %408
  %412 = vset.pattern.permute.xlu0 0
  %413 = vperm.xlu0 %412, %v55
  %v414 = vpop.permute.xlu0 %413
  %417 = vset.pattern.permute.xlu0 0
  %418 = vperm.xlu0 %417, %v56
  %v419 = vpop.permute.xlu0 %418
  %422 = vset.pattern.permute.xlu0 0
  %423 = vperm.xlu0 %422, %v57
  %v424 = vpop.permute.xlu0 %423
  %427 = vset.pattern.permute.xlu0 0
  %428 = vperm.xlu0 %427, %v58
  %v429 = vpop.permute.xlu0 %428
  %432 = vset.pattern.permute.xlu0 0
  %433 = vperm.xlu0 %432, %v59
  %v434 = vpop.permute.xlu0 %433
  %437 = vset.pattern.permute.xlu0 0
  %438 = vperm.xlu0 %437, %v60
  %v439 = vpop.permute.xlu0 %438
  %442 = vset.pattern.permute.xlu0 0
  %443 = vperm.xlu0 %442, %v61
  %v444 = vpop.permute.xlu0 %443
  %447 = vset.pattern.permute.xlu0 0
  %448 = vperm.xlu0 %447, %v62
  %v449 = vpop.permute.xlu0 %448
  %452 = vset.pattern.permute.xlu0 0
  %453 = vperm.xlu0 %452, %v63
  %v454 = vpop.permute.xlu0 %453
  %457 = vset.pattern.permute.xlu0 0
  %458 = vperm.xlu0 %457, %v64
  %v459 = vpop.permute.xlu0 %458
  %462 = vset.pattern.permute.xlu0 0
  %463 = vperm.xlu0 %462, %v65
  %v464 = vpop.permute.xlu0 %463
  %467 = vset.pattern.permute.xlu0 0
  %468 = vperm.xlu0 %467, %v66
  %v469 = vpop.permute.xlu0 %468
  %472 = vset.pattern.permute.xlu0 0
  %473 = vperm.xlu0 %472, %v67
  %v474 = vpop.permute.xlu0 %473
  %477 = vset.pattern.permute.xlu0 0
  %478 = vperm.xlu0 %477, %v68
  %v479 = vpop.permute.xlu0 %478
  %482 = vset.pattern.permute.xlu0 0
  %483 = vperm.xlu0 %482, %v69
  %v484 = vpop.permute.xlu0 %483
  %487 = vset.pattern.permute.xlu0 0
  %488 = vperm.xlu0 %487, %v70
  %v489 = vpop.permute.xlu0 %488
  %492 = vset.pattern.permute.xlu0 0
  %493 = vperm.xlu0 %492, %v71
  %v494 = vpop.permute.xlu0 %493
  %v496 = vmul.f32 %v184, %v239
  %v497 = vmul.f32 %v185, %v244
  %v498 = vmul.f32 %v186, %v249
  %v499 = vmul.f32 %v187, %v254
  %v500 = vmul.f32 %v188, %v259
  %v501 = vmul.f32 %v189, %v264
  %v502 = vmul.f32 %v190, %v269
  %v503 = vmul.f32 %v191, %v274
  %v504 = vmul.f32 %v192, %v279
  %v505 = vmul.f32 %v193, %v284
  %v506 = vmul.f32 %v194, %v289
  %v507 = vmul.f32 %v195, %v294
  %v508 = vmul.f32 %v196, %v299
  %v509 = vmul.f32 %v197, %v304
  %v510 = vmul.f32 %v198, %v309
  %v511 = vmul.f32 %v199, %v314
  %v512 = vmul.f32 %v200, %v319
  %v513 = vmul.f32 %v201, %v324
  %v514 = vmul.f32 %v202, %v329
  %v515 = vmul.f32 %v203, %v334
  %v516 = vmul.f32 %v204, %v339
  %v517 = vmul.f32 %v205, %v344
  %v518 = vmul.f32 %v206, %v349
  %v519 = vmul.f32 %v207, %v354
  %v520 = vmul.f32 %v208, %v359
  %v521 = vmul.f32 %v209, %v364
  %v522 = vmul.f32 %v210, %v369
  %v523 = vmul.f32 %v211, %v374
  %v524 = vmul.f32 %v212, %v379
  %v525 = vmul.f32 %v213, %v384
  %v526 = vmul.f32 %v214, %v389
  %v527 = vmul.f32 %v215, %v394
  %v528 = vmul.f32 %v216, %v399
  %v529 = vmul.f32 %v217, %v404
  %v530 = vmul.f32 %v218, %v409
  %v531 = vmul.f32 %v219, %v414
  %v532 = vmul.f32 %v220, %v419
  %v533 = vmul.f32 %v221, %v424
  %v534 = vmul.f32 %v222, %v429
  %v535 = vmul.f32 %v223, %v434
  %v536 = vmul.f32 %v224, %v439
  %v537 = vmul.f32 %v225, %v444
  %v538 = vmul.f32 %v226, %v449
  %v539 = vmul.f32 %v227, %v454
  %v540 = vmul.f32 %v228, %v459
  %v541 = vmul.f32 %v229, %v464
  %v542 = vmul.f32 %v230, %v469
  %v543 = vmul.f32 %v231, %v474
  %v544 = vmul.f32 %v232, %v479
  %v545 = vmul.f32 %v233, %v484
  %v546 = vmul.f32 %v234, %v489
  %v547 = vmul.f32 %v235, %v494
  %548 = vst [vmem:[#allocation2] sm:$0xff] %v496
  %549 = vst [vmem:[#allocation2 + $0x8] sm:$0xff] %v497
  %550 = vst [vmem:[#allocation2 + $0x10] sm:$0xff] %v498
  %551 = vst [vmem:[#allocation2 + $0x18] sm:$0xff] %v499
  %552 = vst [vmem:[#allocation2 + $0x20] sm:$0xff] %v500
  %553 = vst [vmem:[#allocation2 + $0x28] sm:$0xff] %v501
  %554 = vst [vmem:[#allocation2 + $0x30] sm:$0xff] %v502
  %555 = vst [vmem:[#allocation2 + $0x38] sm:$0xff] %v503
  %556 = vst [vmem:[#allocation2 + $0x40] sm:$0xff] %v504
  %557 = vst [vmem:[#allocation2 + $0x48] sm:$0xff] %v505
  %558 = vst [vmem:[#allocation2 + $0x50] sm:$0xff] %v506
  %559 = vst [vmem:[#allocation2 + $0x58] sm:$0xff] %v507
  %560 = vst [vmem:[#allocation2 + $0x60] sm:$0xff] %v508
  %561 = vst [vmem:[#allocation2 + $0x68] sm:$0xff] %v509
  %562 = vst [vmem:[#allocation2 + $0x70] sm:$0xff] %v510
  %563 = vst [vmem:[#allocation2 + $0x78] sm:$0xff] %v511
  %564 = vst [vmem:[#allocation2 + $0x80] sm:$0xff] %v512
  %565 = vst [vmem:[#allocation2 + $0x88] sm:$0xff] %v513
  %566 = vst [vmem:[#allocation2 + $0x90] sm:$0xff] %v514
  %567 = vst [vmem:[#allocation2 + $0x98] sm:$0xff] %v515
  %568 = vst [vmem:[#allocation2 + $0xa0] sm:$0xff] %v516
  %569 = vst [vmem:[#allocation2 + $0xa8] sm:$0xff] %v517
  %570 = vst [vmem:[#allocation2 + $0xb0] sm:$0xff] %v518
  %571 = vst [vmem:[#allocation2 + $0xb8] sm:$0xff] %v519
  %572 = vst [vmem:[#allocation2 + $0xc0] sm:$0xff] %v520
  %573 = vst [vmem:[#allocation2 + $0xc8] sm:$0xff] %v521
  %574 = vst [vmem:[#allocation2 + $0xd0] sm:$0xff] %v522
  %575 = vst [vmem:[#allocation2 + $0xd8] sm:$0xff] %v523
  %576 = vst [vmem:[#allocation2 + $0xe0] sm:$0xff] %v524
  %577 = vst [vmem:[#allocation2 + $0xe8] sm:$0xff] %v525
  %578 = vst [vmem:[#allocation2 + $0xf0] sm:$0xff] %v526
  %579 = vst [vmem:[#allocation2 + $0xf8] sm:$0xff] %v527
  %580 = vst [vmem:[#allocation2 + $0x100] sm:$0xff] %v528
  %581 = vst [vmem:[#allocation2 + $0x108] sm:$0xff] %v529
  %582 = vst [vmem:[#allocation2 + $0x110] sm:$0xff] %v530
  %583 = vst [vmem:[#allocation2 + $0x118] sm:$0xff] %v531
  %584 = vst [vmem:[#allocation2 + $0x120] sm:$0xff] %v532
  %585 = vst [vmem:[#allocation2 + $0x128] sm:$0xff] %v533
  %586 = vst [vmem:[#allocation2 + $0x130] sm:$0xff] %v534
  %587 = vst [vmem:[#allocation2 + $0x138] sm:$0xff] %v535
  %588 = vst [vmem:[#allocation2 + $0x140] sm:$0xff] %v536
  %589 = vst [vmem:[#allocation2 + $0x148] sm:$0xff] %v537
  %590 = vst [vmem:[#allocation2 + $0x150] sm:$0xff] %v538
  %591 = vst [vmem:[#allocation2 + $0x158] sm:$0xff] %v539
  %592 = vst [vmem:[#allocation2 + $0x160] sm:$0xff] %v540
  %593 = vst [vmem:[#allocation2 + $0x168] sm:$0xff] %v541
  %594 = vst [vmem:[#allocation2 + $0x170] sm:$0xff] %v542
  %595 = vst [vmem:[#allocation2 + $0x178] sm:$0xff] %v543
  %596 = vst [vmem:[#allocation2 + $0x180] sm:$0xff] %v544
  %597 = vst [vmem:[#allocation2 + $0x188] sm:$0xff] %v545
  %598 = vst [vmem:[#allocation2 + $0x190] sm:$0xff] %v546
  %599 = vst [vmem:[#allocation2 + $0x198] sm:$0xff] %v547
  %v600 = vld [vmem:[#allocation2 + $0x5d] sm:$0xff]
  %v601 = vld [vmem:[#allocation2 + $0x65] sm:$0xff]
  %v602 = vld [vmem:[#allocation2 + $0x6d] sm:$0xff]
  %v603 = vld [vmem:[#allocation2 + $0x75] sm:$0xff]
  %v604 = vld [vmem:[#allocation2 + $0x7d] sm:$0xff]
  %v605 = vld [vmem:[#allocation2 + $0x85] sm:$0xff]
  %v606 = vld [vmem:[#allocation2 + $0x8d] sm:$0xff]
  %v607 = vld [vmem:[#allocation2 + $0x95] sm:$0xff]
  %v608 = vld [vmem:[#allocation2 + $0x9d] sm:$0xff]
  %v609 = vld [vmem:[#allocation2 + $0xa5] sm:$0xff]
  %v610 = vld [vmem:[#allocation2 + $0xad] sm:$0xff]
  %v611 = vld [vmem:[#allocation2 + $0xb5] sm:$0xff]
  %v612 = vld [vmem:[#allocation2 + $0xbd] sm:$0xff]
  %v613 = vld [vmem:[#allocation2 + $0xc5] sm:$0xff]
  %v614 = vld [vmem:[#allocation2 + $0xcd] sm:$0xff]
  %v615 = vld [vmem:[#allocation2 + $0xd5] sm:$0xff]
  %v616 = vld [vmem:[#allocation2 + $0xdd] sm:$0xff]
  %v617 = vld [vmem:[#allocation2 + $0xe5] sm:$0xff]
  %v618 = vld [vmem:[#allocation2 + $0xed] sm:$0xff]
  %v619 = vld [vmem:[#allocation2 + $0xf5] sm:$0xff]
  %v620 = vld [vmem:[#allocation2 + $0xfd] sm:$0xff]
  %v621 = vld [vmem:[#allocation2 + $0x105] sm:$0xff]
  %v622 = vld [vmem:[#allocation2 + $0x10d] sm:$0xff]
  %v623 = vld [vmem:[#allocation2 + $0x115] sm:$0xff]
  %v624 = vld [vmem:[#allocation2 + $0x11d] sm:$0xff]
  %v625 = vld [vmem:[#allocation2 + $0x125] sm:$0xff]
  %v626 = vpack.c.bf16 %v601, %v600
  %v627 = vpack.c.bf16 %v603, %v602
  %v628 = vpack.c.bf16 %v605, %v604
  %v629 = vpack.c.bf16 %v607, %v606
  %v630 = vpack.c.bf16 %v609, %v608
  %v631 = vpack.c.bf16 %v611, %v610
  %v632 = vpack.c.bf16 %v613, %v612
  %v633 = vpack.c.bf16 %v615, %v614
  %v634 = vpack.c.bf16 %v617, %v616
  %v635 = vpack.c.bf16 %v619, %v618
  %v636 = vpack.c.bf16 %v621, %v620
  %v637 = vpack.c.bf16 %v623, %v622
  %v638 = vpack.c.bf16 %v625, %v624
  %v639 = vld [vmem:[%s1] sm:$0xf]
  %v640 = vld [vmem:[%s1 + $0x4] sm:$0xf]
  %v641 = vld [vmem:[%s1 + $0x8] sm:$0xf]
  %v642 = vld [vmem:[%s1 + $0xc] sm:$0xf]
  %v643 = vld [vmem:[%s1 + $0x10] sm:$0xf]
  %v644 = vld [vmem:[%s1 + $0x14] sm:$0xf]
  %v645 = vld [vmem:[%s1 + $0x18] sm:$0xf]
  %v646 = vld [vmem:[%s1 + $0x1c] sm:$0xf]
  %v647 = vld [vmem:[%s1 + $0x20] sm:$0xf]
  %v648 = vld [vmem:[%s1 + $0x24] sm:$0xf]
  %v649 = vld [vmem:[%s1 + $0x28] sm:$0xf]
  %v650 = vld [vmem:[%s1 + $0x2c] sm:$0xf]
  %v651 = vld [vmem:[%s1 + $0x30] sm:$0xf]
  %v652 = vld [vmem:[%s1 + $0x34] sm:$0xf]
  %v653 = vld [vmem:[%s1 + $0x38] sm:$0xf]
  %v654 = vld [vmem:[%s1 + $0x3c] sm:$0xf]
  %v655 = vld [vmem:[#allocation2 + $0x5e] sm:$0xff]
  %v656 = vld [vmem:[#allocation2 + $0x66] sm:$0xff]
  %v657 = vld [vmem:[#allocation2 + $0x6e] sm:$0xff]
  %v658 = vld [vmem:[#allocation2 + $0x76] sm:$0xff]
  %v659 = vld [vmem:[#allocation2 + $0x7e] sm:$0xff]
  %v660 = vld [vmem:[#allocation2 + $0x86] sm:$0xff]
  %v661 = vld [vmem:[#allocation2 + $0x8e] sm:$0xff]
  %v662 = vld [vmem:[#allocation2 + $0x96] sm:$0xff]
  %v663 = vld [vmem:[#allocation2 + $0x9e] sm:$0xff]
  %v664 = vld [vmem:[#allocation2 + $0xa6] sm:$0xff]
  %v665 = vld [vmem:[#allocation2 + $0xae] sm:$0xff]
  %v666 = vld [vmem:[#allocation2 + $0xb6] sm:$0xff]
  %v667 = vld [vmem:[#allocation2 + $0xbe] sm:$0xff]
  %v668 = vld [vmem:[#allocation2 + $0xc6] sm:$0xff]
  %v669 = vld [vmem:[#allocation2 + $0xce] sm:$0xff]
  %v670 = vld [vmem:[#allocation2 + $0xd6] sm:$0xff]
  %v671 = vld [vmem:[#allocation2 + $0xde] sm:$0xff]
  %v672 = vld [vmem:[#allocation2 + $0xe6] sm:$0xff]
  %v673 = vld [vmem:[#allocation2 + $0xee] sm:$0xff]
  %v674 = vld [vmem:[#allocation2 + $0xf6] sm:$0xff]
  %v675 = vld [vmem:[#allocation2 + $0xfe] sm:$0xff]
  %v676 = vld [vmem:[#allocation2 + $0x106] sm:$0xff]
  %v677 = vld [vmem:[#allocation2 + $0x10e] sm:$0xff]
  %v678 = vld [vmem:[#allocation2 + $0x116] sm:$0xff]
  %v679 = vld [vmem:[#allocation2 + $0x11e] sm:$0xff]
  %v680 = vld [vmem:[#allocation2 + $0x126] sm:$0xff]
  %v681 = vpack.c.bf16 %v656, %v655
  %v682 = vpack.c.bf16 %v658, %v657
  %v683 = vpack.c.bf16 %v660, %v659
  %v684 = vpack.c.bf16 %v662, %v661
  %v685 = vpack.c.bf16 %v664, %v663
  %v686 = vpack.c.bf16 %v666, %v665
  %v687 = vpack.c.bf16 %v668, %v667
  %v688 = vpack.c.bf16 %v670, %v669
  %v689 = vpack.c.bf16 %v672, %v671
  %v690 = vpack.c.bf16 %v674, %v673
  %v691 = vpack.c.bf16 %v676, %v675
  %v692 = vpack.c.bf16 %v678, %v677
  %v693 = vpack.c.bf16 %v680, %v679
  %s694 = scalar_lea.vmem %s1, 64
  %v695 = vld [vmem:[%s694] sm:$0xf]
  %v696 = vld [vmem:[%s694 + $0x4] sm:$0xf]
  %v697 = vld [vmem:[%s694 + $0x8] sm:$0xf]
  %v698 = vld [vmem:[%s694 + $0xc] sm:$0xf]
  %v699 = vld [vmem:[%s694 + $0x10] sm:$0xf]
  %v700 = vld [vmem:[%s694 + $0x14] sm:$0xf]
  %v701 = vld [vmem:[%s694 + $0x18] sm:$0xf]
  %v702 = vld [vmem:[%s694 + $0x1c] sm:$0xf]
  %v703 = vld [vmem:[%s694 + $0x20] sm:$0xf]
  %v704 = vld [vmem:[%s694 + $0x24] sm:$0xf]
  %v705 = vld [vmem:[%s694 + $0x28] sm:$0xf]
  %v706 = vld [vmem:[%s694 + $0x2c] sm:$0xf]
  %v707 = vld [vmem:[%s694 + $0x30] sm:$0xf]
  %v708 = vld [vmem:[%s694 + $0x34] sm:$0xf]
  %v709 = vld [vmem:[%s694 + $0x38] sm:$0xf]
  %v710 = vld [vmem:[%s694 + $0x3c] sm:$0xf]
  %v727 = vunpack.c.l.b16 %v695
  %v728 = vunpack.c.l.b16 %v696
  %v729 = vunpack.c.l.b16 %v697
  %v730 = vunpack.c.l.b16 %v698
  %v731 = vunpack.c.l.b16 %v699
  %v732 = vunpack.c.l.b16 %v700
  %v733 = vunpack.c.l.b16 %v701
  %v734 = vunpack.c.l.b16 %v702
  %v735 = vunpack.c.l.b16 %v703
  %v736 = vunpack.c.l.b16 %v704
  %v737 = vunpack.c.l.b16 %v705
  %v738 = vunpack.c.l.b16 %v706
  %v739 = vunpack.c.l.b16 %v707
  %v740 = vunpack.c.l.b16 %v708
  %v741 = vunpack.c.l.b16 %v709
  %v742 = vunpack.c.l.b16 %v710
  %v743 = vpack.c.b16 %v728, %v727
  %v744 = vpack.c.b16 %v730, %v729
  %v745 = vpack.c.b16 %v732, %v731
  %v746 = vpack.c.b16 %v734, %v733
  %v747 = vpack.c.b16 %v736, %v735
  %v748 = vpack.c.b16 %v738, %v737
  %v749 = vpack.c.b16 %v740, %v739
  %v750 = vpack.c.b16 %v742, %v741
  %759 = vmatpush.bf16.msra.mxu0 %v750
  %760 = vmatpush.bf16.msra.mxu0 %v749
  %761 = vmatpush.bf16.msra.mxu0 %v748
  %762 = vmatpush.bf16.msra.mxu0 %v747
  %763 = vmatpush.bf16.msra.mxu0 %v746
  %764 = vmatpush.bf16.msra.mxu0 %v745
  %765 = vmatpush.bf16.msra.mxu0 %v744
  %766 = vmatpush.bf16.msra.mxu0 %v743
  %767 = vmatmul.bf16.gmra.mxu0 %v681
  %v768 = vpop.f32.mrf.mxu0
  %v769 = vadd.f32 0.0, %v768
  %v770 = vpop.f32.mrf.mxu0
  %v771 = vadd.f32 0.0, %v770
  %772 = vmatmul.bf16.gmra.mxu0 %v682
  %v773 = vpop.f32.mrf.mxu0
  %v774 = vadd.f32 0.0, %v773
  %v775 = vpop.f32.mrf.mxu0
  %v776 = vadd.f32 0.0, %v775
  %777 = vmatmul.bf16.gmra.mxu0 %v683
  %v778 = vpop.f32.mrf.mxu0
  %v779 = vadd.f32 0.0, %v778
  %v780 = vpop.f32.mrf.mxu0
  %v781 = vadd.f32 0.0, %v780
  %782 = vmatmul.bf16.gmra.mxu0 %v684
  %v783 = vpop.f32.mrf.mxu0
  %v784 = vadd.f32 0.0, %v783
  %v785 = vpop.f32.mrf.mxu0
  %v786 = vadd.f32 0.0, %v785
  %787 = vmatmul.bf16.gmra.mxu0 %v685
  %v788 = vpop.f32.mrf.mxu0
  %v789 = vadd.f32 0.0, %v788
  %v790 = vpop.f32.mrf.mxu0
  %v791 = vadd.f32 0.0, %v790
  %792 = vmatmul.bf16.gmra.mxu0 %v686
  %v793 = vpop.f32.mrf.mxu0
  %v794 = vadd.f32 0.0, %v793
  %v795 = vpop.f32.mrf.mxu0
  %v796 = vadd.f32 0.0, %v795
  %797 = vmatmul.bf16.gmra.mxu0 %v687
  %v798 = vpop.f32.mrf.mxu0
  %v799 = vadd.f32 0.0, %v798
  %v800 = vpop.f32.mrf.mxu0
  %v801 = vadd.f32 0.0, %v800
  %802 = vmatmul.bf16.gmra.mxu0 %v688
  %v803 = vpop.f32.mrf.mxu0
  %v804 = vadd.f32 0.0, %v803
  %v805 = vpop.f32.mrf.mxu0
  %v806 = vadd.f32 0.0, %v805
  %807 = vmatmul.bf16.gmra.mxu0 %v689
  %v808 = vpop.f32.mrf.mxu0
  %v809 = vadd.f32 0.0, %v808
  %v810 = vpop.f32.mrf.mxu0
  %v811 = vadd.f32 0.0, %v810
  %812 = vmatmul.bf16.gmra.mxu0 %v690
  %v813 = vpop.f32.mrf.mxu0
  %v814 = vadd.f32 0.0, %v813
  %v815 = vpop.f32.mrf.mxu0
  %v816 = vadd.f32 0.0, %v815
  %817 = vmatmul.bf16.gmra.mxu0 %v691
  %v818 = vpop.f32.mrf.mxu0
  %v819 = vadd.f32 0.0, %v818
  %v820 = vpop.f32.mrf.mxu0
  %v821 = vadd.f32 0.0, %v820
  %822 = vmatmul.bf16.gmra.mxu0 %v692
  %v823 = vpop.f32.mrf.mxu0
  %v824 = vadd.f32 0.0, %v823
  %v825 = vpop.f32.mrf.mxu0
  %v826 = vadd.f32 0.0, %v825
  %827 = vmatmul.bf16.gmra.mxu0 %v693
  %v828 = vpop.f32.mrf.mxu0
  %v829 = vadd.f32 0.0, %v828
  %v830 = vpop.f32.mrf.mxu0
  %v831 = vadd.f32 0.0, %v830
  %832 = vdwg.mxu0
  %v849 = vunpack.c.l.b16 %v639
  %v850 = vunpack.c.l.b16 %v640
  %v851 = vunpack.c.l.b16 %v641
  %v852 = vunpack.c.l.b16 %v642
  %v853 = vunpack.c.l.b16 %v643
  %v854 = vunpack.c.l.b16 %v644
  %v855 = vunpack.c.l.b16 %v645
  %v856 = vunpack.c.l.b16 %v646
  %v857 = vunpack.c.l.b16 %v647
  %v858 = vunpack.c.l.b16 %v648
  %v859 = vunpack.c.l.b16 %v649
  %v860 = vunpack.c.l.b16 %v650
  %v861 = vunpack.c.l.b16 %v651
  %v862 = vunpack.c.l.b16 %v652
  %v863 = vunpack.c.l.b16 %v653
  %v864 = vunpack.c.l.b16 %v654
  %v865 = vpack.c.b16 %v850, %v849
  %v866 = vpack.c.b16 %v852, %v851
  %v867 = vpack.c.b16 %v854, %v853
  %v868 = vpack.c.b16 %v856, %v855
  %v869 = vpack.c.b16 %v858, %v857
  %v870 = vpack.c.b16 %v860, %v859
  %v871 = vpack.c.b16 %v862, %v861
  %v872 = vpack.c.b16 %v864, %v863
  %881 = vmatpush.bf16.msra.mxu0 %v872
  %882 = vmatpush.bf16.msra.mxu0 %v871
  %883 = vmatpush.bf16.msra.mxu0 %v870
  %884 = vmatpush.bf16.msra.mxu0 %v869
  %885 = vmatpush.bf16.msra.mxu0 %v868
  %886 = vmatpush.bf16.msra.mxu0 %v867
  %887 = vmatpush.bf16.msra.mxu0 %v866
  %888 = vmatpush.bf16.msra.mxu0 %v865
  %889 = vmatmul.bf16.gmra.mxu0 %v626
  %v890 = vpop.f32.mrf.mxu0
  %v891 = vadd.f32 %v769, %v890
  %v892 = vpop.f32.mrf.mxu0
  %v893 = vadd.f32 %v771, %v892
  %894 = vmatmul.bf16.gmra.mxu0 %v627
  %v895 = vpop.f32.mrf.mxu0
  %v896 = vadd.f32 %v774, %v895
  %v897 = vpop.f32.mrf.mxu0
  %v898 = vadd.f32 %v776, %v897
  %899 = vmatmul.bf16.gmra.mxu0 %v628
  %v900 = vpop.f32.mrf.mxu0
  %v901 = vadd.f32 %v779, %v900
  %v902 = vpop.f32.mrf.mxu0
  %v903 = vadd.f32 %v781, %v902
  %904 = vmatmul.bf16.gmra.mxu0 %v629
  %v905 = vpop.f32.mrf.mxu0
  %v906 = vadd.f32 %v784, %v905
  %v907 = vpop.f32.mrf.mxu0
  %v908 = vadd.f32 %v786, %v907
  %909 = vmatmul.bf16.gmra.mxu0 %v630
  %v910 = vpop.f32.mrf.mxu0
  %v911 = vadd.f32 %v789, %v910
  %v912 = vpop.f32.mrf.mxu0
  %v913 = vadd.f32 %v791, %v912
  %914 = vmatmul.bf16.gmra.mxu0 %v631
  %v915 = vpop.f32.mrf.mxu0
  %v916 = vadd.f32 %v794, %v915
  %v917 = vpop.f32.mrf.mxu0
  %v918 = vadd.f32 %v796, %v917
  %919 = vmatmul.bf16.gmra.mxu0 %v632
  %v920 = vpop.f32.mrf.mxu0
  %v921 = vadd.f32 %v799, %v920
  %v922 = vpop.f32.mrf.mxu0
  %v923 = vadd.f32 %v801, %v922
  %924 = vmatmul.bf16.gmra.mxu0 %v633
  %v925 = vpop.f32.mrf.mxu0
  %v926 = vadd.f32 %v804, %v925
  %v927 = vpop.f32.mrf.mxu0
  %v928 = vadd.f32 %v806, %v927
  %929 = vmatmul.bf16.gmra.mxu0 %v634
  %v930 = vpop.f32.mrf.mxu0
  %v931 = vadd.f32 %v809, %v930
  %v932 = vpop.f32.mrf.mxu0
  %v933 = vadd.f32 %v811, %v932
  %934 = vmatmul.bf16.gmra.mxu0 %v635
  %v935 = vpop.f32.mrf.mxu0
  %v936 = vadd.f32 %v814, %v935
  %v937 = vpop.f32.mrf.mxu0
  %v938 = vadd.f32 %v816, %v937
  %939 = vmatmul.bf16.gmra.mxu0 %v636
  %v940 = vpop.f32.mrf.mxu0
  %v941 = vadd.f32 %v819, %v940
  %v942 = vpop.f32.mrf.mxu0
  %v943 = vadd.f32 %v821, %v942
  %944 = vmatmul.bf16.gmra.mxu0 %v637
  %v945 = vpop.f32.mrf.mxu0
  %v946 = vadd.f32 %v824, %v945
  %v947 = vpop.f32.mrf.mxu0
  %v948 = vadd.f32 %v826, %v947
  %949 = vmatmul.bf16.gmra.mxu0 %v638
  %v950 = vpop.f32.mrf.mxu0
  %v951 = vadd.f32 %v829, %v950
  %v952 = vpop.f32.mrf.mxu0
  %v953 = vadd.f32 %v831, %v952
  %954 = vdwg.mxu0
  %v955 = vld [vmem:[#allocation2 + $0x5f] sm:$0xff]
  %v956 = vld [vmem:[#allocation2 + $0x67] sm:$0xff]
  %v957 = vld [vmem:[#allocation2 + $0x6f] sm:$0xff]
  %v958 = vld [vmem:[#allocation2 + $0x77] sm:$0xff]
  %v959 = vld [vmem:[#allocation2 + $0x7f] sm:$0xff]
  %v960 = vld [vmem:[#allocation2 + $0x87] sm:$0xff]
  %v961 = vld [vmem:[#allocation2 + $0x8f] sm:$0xff]
  %v962 = vld [vmem:[#allocation2 + $0x97] sm:$0xff]
  %v963 = vld [vmem:[#allocation2 + $0x9f] sm:$0xff]
  %v964 = vld [vmem:[#allocation2 + $0xa7] sm:$0xff]
  %v965 = vld [vmem:[#allocation2 + $0xaf] sm:$0xff]
  %v966 = vld [vmem:[#allocation2 + $0xb7] sm:$0xff]
  %v967 = vld [vmem:[#allocation2 + $0xbf] sm:$0xff]
  %v968 = vld [vmem:[#allocation2 + $0xc7] sm:$0xff]
  %v969 = vld [vmem:[#allocation2 + $0xcf] sm:$0xff]
  %v970 = vld [vmem:[#allocation2 + $0xd7] sm:$0xff]
  %v971 = vld [vmem:[#allocation2 + $0xdf] sm:$0xff]
  %v972 = vld [vmem:[#allocation2 + $0xe7] sm:$0xff]
  %v973 = vld [vmem:[#allocation2 + $0xef] sm:$0xff]
  %v974 = vld [vmem:[#allocation2 + $0xf7] sm:$0xff]
  %v975 = vld [vmem:[#allocation2 + $0xff] sm:$0xff]
  %v976 = vld [vmem:[#allocation2 + $0x107] sm:$0xff]
  %v977 = vld [vmem:[#allocation2 + $0x10f] sm:$0xff]
  %v978 = vld [vmem:[#allocation2 + $0x117] sm:$0xff]
  %v979 = vld [vmem:[#allocation2 + $0x11f] sm:$0xff]
  %v980 = vld [vmem:[#allocation2 + $0x127] sm:$0xff]
  %v981 = vpack.c.bf16 %v956, %v955
  %v982 = vpack.c.bf16 %v958, %v957
  %v983 = vpack.c.bf16 %v960, %v959
  %v984 = vpack.c.bf16 %v962, %v961
  %v985 = vpack.c.bf16 %v964, %v963
  %v986 = vpack.c.bf16 %v966, %v965
  %v987 = vpack.c.bf16 %v968, %v967
  %v988 = vpack.c.bf16 %v970, %v969
  %v989 = vpack.c.bf16 %v972, %v971
  %v990 = vpack.c.bf16 %v974, %v973
  %v991 = vpack.c.bf16 %v976, %v975
  %v992 = vpack.c.bf16 %v978, %v977
  %v993 = vpack.c.bf16 %v980, %v979
  %s994 = scalar_lea.vmem %s1, 128
  %v995 = vld [vmem:[%s994] sm:$0xf]
  %v996 = vld [vmem:[%s994 + $0x4] sm:$0xf]
  %v997 = vld [vmem:[%s994 + $0x8] sm:$0xf]
  %v998 = vld [vmem:[%s994 + $0xc] sm:$0xf]
  %v999 = vld [vmem:[%s994 + $0x10] sm:$0xf]
  %v1000 = vld [vmem:[%s994 + $0x14] sm:$0xf]
  %v1001 = vld [vmem:[%s994 + $0x18] sm:$0xf]
  %v1002 = vld [vmem:[%s994 + $0x1c] sm:$0xf]
  %v1003 = vld [vmem:[%s994 + $0x20] sm:$0xf]
  %v1004 = vld [vmem:[%s994 + $0x24] sm:$0xf]
  %v1005 = vld [vmem:[%s994 + $0x28] sm:$0xf]
  %v1006 = vld [vmem:[%s994 + $0x2c] sm:$0xf]
  %v1007 = vld [vmem:[%s994 + $0x30] sm:$0xf]
  %v1008 = vld [vmem:[%s994 + $0x34] sm:$0xf]
  %v1009 = vld [vmem:[%s994 + $0x38] sm:$0xf]
  %v1010 = vld [vmem:[%s994 + $0x3c] sm:$0xf]
  %v1027 = vunpack.c.l.b16 %v995
  %v1028 = vunpack.c.l.b16 %v996
  %v1029 = vunpack.c.l.b16 %v997
  %v1030 = vunpack.c.l.b16 %v998
  %v1031 = vunpack.c.l.b16 %v999
  %v1032 = vunpack.c.l.b16 %v1000
  %v1033 = vunpack.c.l.b16 %v1001
  %v1034 = vunpack.c.l.b16 %v1002
  %v1035 = vunpack.c.l.b16 %v1003
  %v1036 = vunpack.c.l.b16 %v1004
  %v1037 = vunpack.c.l.b16 %v1005
  %v1038 = vunpack.c.l.b16 %v1006
  %v1039 = vunpack.c.l.b16 %v1007
  %v1040 = vunpack.c.l.b16 %v1008
  %v1041 = vunpack.c.l.b16 %v1009
  %v1042 = vunpack.c.l.b16 %v1010
  %v1043 = vpack.c.b16 %v1028, %v1027
  %v1044 = vpack.c.b16 %v1030, %v1029
  %v1045 = vpack.c.b16 %v1032, %v1031
  %v1046 = vpack.c.b16 %v1034, %v1033
  %v1047 = vpack.c.b16 %v1036, %v1035
  %v1048 = vpack.c.b16 %v1038, %v1037
  %v1049 = vpack.c.b16 %v1040, %v1039
  %v1050 = vpack.c.b16 %v1042, %v1041
  %1059 = vmatpush.bf16.msra.mxu0 %v1050
  %1060 = vmatpush.bf16.msra.mxu0 %v1049
  %1061 = vmatpush.bf16.msra.mxu0 %v1048
  %1062 = vmatpush.bf16.msra.mxu0 %v1047
  %1063 = vmatpush.bf16.msra.mxu0 %v1046
  %1064 = vmatpush.bf16.msra.mxu0 %v1045
  %1065 = vmatpush.bf16.msra.mxu0 %v1044
  %1066 = vmatpush.bf16.msra.mxu0 %v1043
  %1067 = vmatmul.bf16.gmra.mxu0 %v981
  %v1068 = vpop.f32.mrf.mxu0
  %v1069 = vadd.f32 0.0, %v1068
  %v1070 = vpop.f32.mrf.mxu0
  %v1071 = vadd.f32 0.0, %v1070
  %1072 = vmatmul.bf16.gmra.mxu0 %v982
  %v1073 = vpop.f32.mrf.mxu0
  %v1074 = vadd.f32 0.0, %v1073
  %v1075 = vpop.f32.mrf.mxu0
  %v1076 = vadd.f32 0.0, %v1075
  %1077 = vmatmul.bf16.gmra.mxu0 %v983
  %v1078 = vpop.f32.mrf.mxu0
  %v1079 = vadd.f32 0.0, %v1078
  %v1080 = vpop.f32.mrf.mxu0
  %v1081 = vadd.f32 0.0, %v1080
  %1082 = vmatmul.bf16.gmra.mxu0 %v984
  %v1083 = vpop.f32.mrf.mxu0
  %v1084 = vadd.f32 0.0, %v1083
  %v1085 = vpop.f32.mrf.mxu0
  %v1086 = vadd.f32 0.0, %v1085
  %1087 = vmatmul.bf16.gmra.mxu0 %v985
  %v1088 = vpop.f32.mrf.mxu0
  %v1089 = vadd.f32 0.0, %v1088
  %v1090 = vpop.f32.mrf.mxu0
  %v1091 = vadd.f32 0.0, %v1090
  %1092 = vmatmul.bf16.gmra.mxu0 %v986
  %v1093 = vpop.f32.mrf.mxu0
  %v1094 = vadd.f32 0.0, %v1093
  %v1095 = vpop.f32.mrf.mxu0
  %v1096 = vadd.f32 0.0, %v1095
  %1097 = vmatmul.bf16.gmra.mxu0 %v987
  %v1098 = vpop.f32.mrf.mxu0
  %v1099 = vadd.f32 0.0, %v1098
  %v1100 = vpop.f32.mrf.mxu0
  %v1101 = vadd.f32 0.0, %v1100
  %1102 = vmatmul.bf16.gmra.mxu0 %v988
  %v1103 = vpop.f32.mrf.mxu0
  %v1104 = vadd.f32 0.0, %v1103
  %v1105 = vpop.f32.mrf.mxu0
  %v1106 = vadd.f32 0.0, %v1105
  %1107 = vmatmul.bf16.gmra.mxu0 %v989
  %v1108 = vpop.f32.mrf.mxu0
  %v1109 = vadd.f32 0.0, %v1108
  %v1110 = vpop.f32.mrf.mxu0
  %v1111 = vadd.f32 0.0, %v1110
  %1112 = vmatmul.bf16.gmra.mxu0 %v990
  %v1113 = vpop.f32.mrf.mxu0
  %v1114 = vadd.f32 0.0, %v1113
  %v1115 = vpop.f32.mrf.mxu0
  %v1116 = vadd.f32 0.0, %v1115
  %1117 = vmatmul.bf16.gmra.mxu0 %v991
  %v1118 = vpop.f32.mrf.mxu0
  %v1119 = vadd.f32 0.0, %v1118
  %v1120 = vpop.f32.mrf.mxu0
  %v1121 = vadd.f32 0.0, %v1120
  %1122 = vmatmul.bf16.gmra.mxu0 %v992
  %v1123 = vpop.f32.mrf.mxu0
  %v1124 = vadd.f32 0.0, %v1123
  %v1125 = vpop.f32.mrf.mxu0
  %v1126 = vadd.f32 0.0, %v1125
  %1127 = vmatmul.bf16.gmra.mxu0 %v993
  %v1128 = vpop.f32.mrf.mxu0
  %v1129 = vadd.f32 0.0, %v1128
  %v1130 = vpop.f32.mrf.mxu0
  %v1131 = vadd.f32 0.0, %v1130
  %1132 = vdwg.mxu0
  %v1133 = vadd.f32 %v891, %v1069
  %v1134 = vadd.f32 %v893, %v1071
  %v1135 = vadd.f32 %v896, %v1074
  %v1136 = vadd.f32 %v898, %v1076
  %v1137 = vadd.f32 %v901, %v1079
  %v1138 = vadd.f32 %v903, %v1081
  %v1139 = vadd.f32 %v906, %v1084
  %v1140 = vadd.f32 %v908, %v1086
  %v1141 = vadd.f32 %v911, %v1089
  %v1142 = vadd.f32 %v913, %v1091
  %v1143 = vadd.f32 %v916, %v1094
  %v1144 = vadd.f32 %v918, %v1096
  %v1145 = vadd.f32 %v921, %v1099
  %v1146 = vadd.f32 %v923, %v1101
  %v1147 = vadd.f32 %v926, %v1104
  %v1148 = vadd.f32 %v928, %v1106
  %v1149 = vadd.f32 %v931, %v1109
  %v1150 = vadd.f32 %v933, %v1111
  %v1151 = vadd.f32 %v936, %v1114
  %v1152 = vadd.f32 %v938, %v1116
  %v1153 = vadd.f32 %v941, %v1119
  %v1154 = vadd.f32 %v943, %v1121
  %v1155 = vadd.f32 %v946, %v1124
  %v1156 = vadd.f32 %v948, %v1126
  %v1157 = vadd.f32 %v951, %v1129
  %v1158 = vadd.f32 %v953, %v1131
  %v1159 = vld [vmem:[#allocation2 + $0x67] sm:$0xff]
  %v1160 = vld [vmem:[#allocation2 + $0x6f] sm:$0xff]
  %v1161 = vld [vmem:[#allocation2 + $0x77] sm:$0xff]
  %v1162 = vld [vmem:[#allocation2 + $0x7f] sm:$0xff]
  %v1163 = vld [vmem:[#allocation2 + $0x87] sm:$0xff]
  %v1164 = vld [vmem:[#allocation2 + $0x8f] sm:$0xff]
  %v1165 = vld [vmem:[#allocation2 + $0x97] sm:$0xff]
  %v1166 = vld [vmem:[#allocation2 + $0x9f] sm:$0xff]
  %v1167 = vld [vmem:[#allocation2 + $0xa7] sm:$0xff]
  %v1168 = vld [vmem:[#allocation2 + $0xaf] sm:$0xff]
  %v1169 = vld [vmem:[#allocation2 + $0xb7] sm:$0xff]
  %v1170 = vld [vmem:[#allocation2 + $0xbf] sm:$0xff]
  %v1171 = vld [vmem:[#allocation2 + $0xc7] sm:$0xff]
  %v1172 = vld [vmem:[#allocation2 + $0xcf] sm:$0xff]
  %v1173 = vld [vmem:[#allocation2 + $0xd7] sm:$0xff]
  %v1174 = vld [vmem:[#allocation2 + $0xdf] sm:$0xff]
  %v1175 = vld [vmem:[#allocation2 + $0xe7] sm:$0xff]
  %v1176 = vld [vmem:[#allocation2 + $0xef] sm:$0xff]
  %v1177 = vld [vmem:[#allocation2 + $0xf7] sm:$0xff]
  %v1178 = vld [vmem:[#allocation2 + $0xff] sm:$0xff]
  %v1179 = vld [vmem:[#allocation2 + $0x107] sm:$0xff]
  %v1180 = vld [vmem:[#allocation2 + $0x10f] sm:$0xff]
  %v1181 = vld [vmem:[#allocation2 + $0x117] sm:$0xff]
  %v1182 = vld [vmem:[#allocation2 + $0x11f] sm:$0xff]
  %v1183 = vld [vmem:[#allocation2 + $0x127] sm:$0xff]
  %v1184 = vld [vmem:[#allocation2 + $0x12f] sm:$0xff]
  %v1185 = vpack.c.bf16 %v1160, %v1159
  %v1186 = vpack.c.bf16 %v1162, %v1161
  %v1187 = vpack.c.bf16 %v1164, %v1163
  %v1188 = vpack.c.bf16 %v1166, %v1165
  %v1189 = vpack.c.bf16 %v1168, %v1167
  %v1190 = vpack.c.bf16 %v1170, %v1169
  %v1191 = vpack.c.bf16 %v1172, %v1171
  %v1192 = vpack.c.bf16 %v1174, %v1173
  %v1193 = vpack.c.bf16 %v1176, %v1175
  %v1194 = vpack.c.bf16 %v1178, %v1177
  %v1195 = vpack.c.bf16 %v1180, %v1179
  %v1196 = vpack.c.bf16 %v1182, %v1181
  %v1197 = vpack.c.bf16 %v1184, %v1183
  %s1198 = scalar_lea.vmem %s1, 192
  %v1199 = vld [vmem:[%s1198] sm:$0xf]
  %v1200 = vld [vmem:[%s1198 + $0x4] sm:$0xf]
  %v1201 = vld [vmem:[%s1198 + $0x8] sm:$0xf]
  %v1202 = vld [vmem:[%s1198 + $0xc] sm:$0xf]
  %v1203 = vld [vmem:[%s1198 + $0x10] sm:$0xf]
  %v1204 = vld [vmem:[%s1198 + $0x14] sm:$0xf]
  %v1205 = vld [vmem:[%s1198 + $0x18] sm:$0xf]
  %v1206 = vld [vmem:[%s1198 + $0x1c] sm:$0xf]
  %v1207 = vld [vmem:[%s1198 + $0x20] sm:$0xf]
  %v1208 = vld [vmem:[%s1198 + $0x24] sm:$0xf]
  %v1209 = vld [vmem:[%s1198 + $0x28] sm:$0xf]
  %v1210 = vld [vmem:[%s1198 + $0x2c] sm:$0xf]
  %v1211 = vld [vmem:[%s1198 + $0x30] sm:$0xf]
  %v1212 = vld [vmem:[%s1198 + $0x34] sm:$0xf]
  %v1213 = vld [vmem:[%s1198 + $0x38] sm:$0xf]
  %v1214 = vld [vmem:[%s1198 + $0x3c] sm:$0xf]
  %v1231 = vunpack.c.l.b16 %v1199
  %v1232 = vunpack.c.l.b16 %v1200
  %v1233 = vunpack.c.l.b16 %v1201
  %v1234 = vunpack.c.l.b16 %v1202
  %v1235 = vunpack.c.l.b16 %v1203
  %v1236 = vunpack.c.l.b16 %v1204
  %v1237 = vunpack.c.l.b16 %v1205
  %v1238 = vunpack.c.l.b16 %v1206
  %v1239 = vunpack.c.l.b16 %v1207
  %v1240 = vunpack.c.l.b16 %v1208
  %v1241 = vunpack.c.l.b16 %v1209
  %v1242 = vunpack.c.l.b16 %v1210
  %v1243 = vunpack.c.l.b16 %v1211
  %v1244 = vunpack.c.l.b16 %v1212
  %v1245 = vunpack.c.l.b16 %v1213
  %v1246 = vunpack.c.l.b16 %v1214
  %v1247 = vpack.c.b16 %v1232, %v1231
  %v1248 = vpack.c.b16 %v1234, %v1233
  %v1249 = vpack.c.b16 %v1236, %v1235
  %v1250 = vpack.c.b16 %v1238, %v1237
  %v1251 = vpack.c.b16 %v1240, %v1239
  %v1252 = vpack.c.b16 %v1242, %v1241
  %v1253 = vpack.c.b16 %v1244, %v1243
  %v1254 = vpack.c.b16 %v1246, %v1245
  %1263 = vmatpush.bf16.msra.mxu0 %v1254
  %1264 = vmatpush.bf16.msra.mxu0 %v1253
  %1265 = vmatpush.bf16.msra.mxu0 %v1252
  %1266 = vmatpush.bf16.msra.mxu0 %v1251
  %1267 = vmatpush.bf16.msra.mxu0 %v1250
  %1268 = vmatpush.bf16.msra.mxu0 %v1249
  %1269 = vmatpush.bf16.msra.mxu0 %v1248
  %1270 = vmatpush.bf16.msra.mxu0 %v1247
  %1271 = vmatmul.bf16.gmra.mxu0 %v1185
  %v1272 = vpop.f32.mrf.mxu0
  %v1273 = vadd.f32 0.0, %v1272
  %v1274 = vpop.f32.mrf.mxu0
  %v1275 = vadd.f32 0.0, %v1274
  %1276 = vmatmul.bf16.gmra.mxu0 %v1186
  %v1277 = vpop.f32.mrf.mxu0
  %v1278 = vadd.f32 0.0, %v1277
  %v1279 = vpop.f32.mrf.mxu0
  %v1280 = vadd.f32 0.0, %v1279
  %1281 = vmatmul.bf16.gmra.mxu0 %v1187
  %v1282 = vpop.f32.mrf.mxu0
  %v1283 = vadd.f32 0.0, %v1282
  %v1284 = vpop.f32.mrf.mxu0
  %v1285 = vadd.f32 0.0, %v1284
  %1286 = vmatmul.bf16.gmra.mxu0 %v1188
  %v1287 = vpop.f32.mrf.mxu0
  %v1288 = vadd.f32 0.0, %v1287
  %v1289 = vpop.f32.mrf.mxu0
  %v1290 = vadd.f32 0.0, %v1289
  %1291 = vmatmul.bf16.gmra.mxu0 %v1189
  %v1292 = vpop.f32.mrf.mxu0
  %v1293 = vadd.f32 0.0, %v1292
  %v1294 = vpop.f32.mrf.mxu0
  %v1295 = vadd.f32 0.0, %v1294
  %1296 = vmatmul.bf16.gmra.mxu0 %v1190
  %v1297 = vpop.f32.mrf.mxu0
  %v1298 = vadd.f32 0.0, %v1297
  %v1299 = vpop.f32.mrf.mxu0
  %v1300 = vadd.f32 0.0, %v1299
  %1301 = vmatmul.bf16.gmra.mxu0 %v1191
  %v1302 = vpop.f32.mrf.mxu0
  %v1303 = vadd.f32 0.0, %v1302
  %v1304 = vpop.f32.mrf.mxu0
  %v1305 = vadd.f32 0.0, %v1304
  %1306 = vmatmul.bf16.gmra.mxu0 %v1192
  %v1307 = vpop.f32.mrf.mxu0
  %v1308 = vadd.f32 0.0, %v1307
  %v1309 = vpop.f32.mrf.mxu0
  %v1310 = vadd.f32 0.0, %v1309
  %1311 = vmatmul.bf16.gmra.mxu0 %v1193
  %v1312 = vpop.f32.mrf.mxu0
  %v1313 = vadd.f32 0.0, %v1312
  %v1314 = vpop.f32.mrf.mxu0
  %v1315 = vadd.f32 0.0, %v1314
  %1316 = vmatmul.bf16.gmra.mxu0 %v1194
  %v1317 = vpop.f32.mrf.mxu0
  %v1318 = vadd.f32 0.0, %v1317
  %v1319 = vpop.f32.mrf.mxu0
  %v1320 = vadd.f32 0.0, %v1319
  %1321 = vmatmul.bf16.gmra.mxu0 %v1195
  %v1322 = vpop.f32.mrf.mxu0
  %v1323 = vadd.f32 0.0, %v1322
  %v1324 = vpop.f32.mrf.mxu0
  %v1325 = vadd.f32 0.0, %v1324
  %1326 = vmatmul.bf16.gmra.mxu0 %v1196
  %v1327 = vpop.f32.mrf.mxu0
  %v1328 = vadd.f32 0.0, %v1327
  %v1329 = vpop.f32.mrf.mxu0
  %v1330 = vadd.f32 0.0, %v1329
  %1331 = vmatmul.bf16.gmra.mxu0 %v1197
  %v1332 = vpop.f32.mrf.mxu0
  %v1333 = vadd.f32 0.0, %v1332
  %v1334 = vpop.f32.mrf.mxu0
  %v1335 = vadd.f32 0.0, %v1334
  %1336 = vdwg.mxu0
  %v1337 = vadd.f32 %v1133, %v1273
  %v1338 = vadd.f32 %v1134, %v1275
  %v1339 = vadd.f32 %v1135, %v1278
  %v1340 = vadd.f32 %v1136, %v1280
  %v1341 = vadd.f32 %v1137, %v1283
  %v1342 = vadd.f32 %v1138, %v1285
  %v1343 = vadd.f32 %v1139, %v1288
  %v1344 = vadd.f32 %v1140, %v1290
  %v1345 = vadd.f32 %v1141, %v1293
  %v1346 = vadd.f32 %v1142, %v1295
  %v1347 = vadd.f32 %v1143, %v1298
  %v1348 = vadd.f32 %v1144, %v1300
  %v1349 = vadd.f32 %v1145, %v1303
  %v1350 = vadd.f32 %v1146, %v1305
  %v1351 = vadd.f32 %v1147, %v1308
  %v1352 = vadd.f32 %v1148, %v1310
  %v1353 = vadd.f32 %v1149, %v1313
  %v1354 = vadd.f32 %v1150, %v1315
  %v1355 = vadd.f32 %v1151, %v1318
  %v1356 = vadd.f32 %v1152, %v1320
  %v1357 = vadd.f32 %v1153, %v1323
  %v1358 = vadd.f32 %v1154, %v1325
  %v1359 = vadd.f32 %v1155, %v1328
  %v1360 = vadd.f32 %v1156, %v1330
  %v1361 = vadd.f32 %v1157, %v1333
  %v1362 = vadd.f32 %v1158, %v1335
  %v1363 = vld [vmem:[#allocation2 + $0x68] sm:$0xff]
  %v1364 = vld [vmem:[#allocation2 + $0x70] sm:$0xff]
  %v1365 = vld [vmem:[#allocation2 + $0x78] sm:$0xff]
  %v1366 = vld [vmem:[#allocation2 + $0x80] sm:$0xff]
  %v1367 = vld [vmem:[#allocation2 + $0x88] sm:$0xff]
  %v1368 = vld [vmem:[#allocation2 + $0x90] sm:$0xff]
  %v1369 = vld [vmem:[#allocation2 + $0x98] sm:$0xff]
  %v1370 = vld [vmem:[#allocation2 + $0xa0] sm:$0xff]
  %v1371 = vld [vmem:[#allocation2 + $0xa8] sm:$0xff]
  %v1372 = vld [vmem:[#allocation2 + $0xb0] sm:$0xff]
  %v1373 = vld [vmem:[#allocation2 + $0xb8] sm:$0xff]
  %v1374 = vld [vmem:[#allocation2 + $0xc0] sm:$0xff]
  %v1375 = vld [vmem:[#allocation2 + $0xc8] sm:$0xff]
  %v1376 = vld [vmem:[#allocation2 + $0xd0] sm:$0xff]
  %v1377 = vld [vmem:[#allocation2 + $0xd8] sm:$0xff]
  %v1378 = vld [vmem:[#allocation2 + $0xe0] sm:$0xff]
  %v1379 = vld [vmem:[#allocation2 + $0xe8] sm:$0xff]
  %v1380 = vld [vmem:[#allocation2 + $0xf0] sm:$0xff]
  %v1381 = vld [vmem:[#allocation2 + $0xf8] sm:$0xff]
  %v1382 = vld [vmem:[#allocation2 + $0x100] sm:$0xff]
  %v1383 = vld [vmem:[#allocation2 + $0x108] sm:$0xff]
  %v1384 = vld [vmem:[#allocation2 + $0x110] sm:$0xff]
  %v1385 = vld [vmem:[#allocation2 + $0x118] sm:$0xff]
  %v1386 = vld [vmem:[#allocation2 + $0x120] sm:$0xff]
  %v1387 = vld [vmem:[#allocation2 + $0x128] sm:$0xff]
  %v1388 = vld [vmem:[#allocation2 + $0x130] sm:$0xff]
  %v1389 = vpack.c.bf16 %v1364, %v1363
  %v1390 = vpack.c.bf16 %v1366, %v1365
  %v1391 = vpack.c.bf16 %v1368, %v1367
  %v1392 = vpack.c.bf16 %v1370, %v1369
  %v1393 = vpack.c.bf16 %v1372, %v1371
  %v1394 = vpack.c.bf16 %v1374, %v1373
  %v1395 = vpack.c.bf16 %v1376, %v1375
  %v1396 = vpack.c.bf16 %v1378, %v1377
  %v1397 = vpack.c.bf16 %v1380, %v1379
  %v1398 = vpack.c.bf16 %v1382, %v1381
  %v1399 = vpack.c.bf16 %v1384, %v1383
  %v1400 = vpack.c.bf16 %v1386, %v1385
  %v1401 = vpack.c.bf16 %v1388, %v1387
  %s1402 = scalar_lea.vmem %s1, 256
  %v1403 = vld [vmem:[%s1402] sm:$0xf]
  %v1404 = vld [vmem:[%s1402 + $0x4] sm:$0xf]
  %v1405 = vld [vmem:[%s1402 + $0x8] sm:$0xf]
  %v1406 = vld [vmem:[%s1402 + $0xc] sm:$0xf]
  %v1407 = vld [vmem:[%s1402 + $0x10] sm:$0xf]
  %v1408 = vld [vmem:[%s1402 + $0x14] sm:$0xf]
  %v1409 = vld [vmem:[%s1402 + $0x18] sm:$0xf]
  %v1410 = vld [vmem:[%s1402 + $0x1c] sm:$0xf]
  %v1411 = vld [vmem:[%s1402 + $0x20] sm:$0xf]
  %v1412 = vld [vmem:[%s1402 + $0x24] sm:$0xf]
  %v1413 = vld [vmem:[%s1402 + $0x28] sm:$0xf]
  %v1414 = vld [vmem:[%s1402 + $0x2c] sm:$0xf]
  %v1415 = vld [vmem:[%s1402 + $0x30] sm:$0xf]
  %v1416 = vld [vmem:[%s1402 + $0x34] sm:$0xf]
  %v1417 = vld [vmem:[%s1402 + $0x38] sm:$0xf]
  %v1418 = vld [vmem:[%s1402 + $0x3c] sm:$0xf]
  %v1435 = vunpack.c.l.b16 %v1403
  %v1436 = vunpack.c.l.b16 %v1404
  %v1437 = vunpack.c.l.b16 %v1405
  %v1438 = vunpack.c.l.b16 %v1406
  %v1439 = vunpack.c.l.b16 %v1407
  %v1440 = vunpack.c.l.b16 %v1408
  %v1441 = vunpack.c.l.b16 %v1409
  %v1442 = vunpack.c.l.b16 %v1410
  %v1443 = vunpack.c.l.b16 %v1411
  %v1444 = vunpack.c.l.b16 %v1412
  %v1445 = vunpack.c.l.b16 %v1413
  %v1446 = vunpack.c.l.b16 %v1414
  %v1447 = vunpack.c.l.b16 %v1415
  %v1448 = vunpack.c.l.b16 %v1416
  %v1449 = vunpack.c.l.b16 %v1417
  %v1450 = vunpack.c.l.b16 %v1418
  %v1451 = vpack.c.b16 %v1436, %v1435
  %v1452 = vpack.c.b16 %v1438, %v1437
  %v1453 = vpack.c.b16 %v1440, %v1439
  %v1454 = vpack.c.b16 %v1442, %v1441
  %v1455 = vpack.c.b16 %v1444, %v1443
  %v1456 = vpack.c.b16 %v1446, %v1445
  %v1457 = vpack.c.b16 %v1448, %v1447
  %v1458 = vpack.c.b16 %v1450, %v1449
  %1467 = vmatpush.bf16.msra.mxu0 %v1458
  %1468 = vmatpush.bf16.msra.mxu0 %v1457
  %1469 = vmatpush.bf16.msra.mxu0 %v1456
  %1470 = vmatpush.bf16.msra.mxu0 %v1455
  %1471 = vmatpush.bf16.msra.mxu0 %v1454
  %1472 = vmatpush.bf16.msra.mxu0 %v1453
  %1473 = vmatpush.bf16.msra.mxu0 %v1452
  %1474 = vmatpush.bf16.msra.mxu0 %v1451
  %1475 = vmatmul.bf16.gmra.mxu0 %v1389
  %v1476 = vpop.f32.mrf.mxu0
  %v1477 = vadd.f32 0.0, %v1476
  %v1478 = vpop.f32.mrf.mxu0
  %v1479 = vadd.f32 0.0, %v1478
  %1480 = vmatmul.bf16.gmra.mxu0 %v1390
  %v1481 = vpop.f32.mrf.mxu0
  %v1482 = vadd.f32 0.0, %v1481
  %v1483 = vpop.f32.mrf.mxu0
  %v1484 = vadd.f32 0.0, %v1483
  %1485 = vmatmul.bf16.gmra.mxu0 %v1391
  %v1486 = vpop.f32.mrf.mxu0
  %v1487 = vadd.f32 0.0, %v1486
  %v1488 = vpop.f32.mrf.mxu0
  %v1489 = vadd.f32 0.0, %v1488
  %1490 = vmatmul.bf16.gmra.mxu0 %v1392
  %v1491 = vpop.f32.mrf.mxu0
  %v1492 = vadd.f32 0.0, %v1491
  %v1493 = vpop.f32.mrf.mxu0
  %v1494 = vadd.f32 0.0, %v1493
  %1495 = vmatmul.bf16.gmra.mxu0 %v1393
  %v1496 = vpop.f32.mrf.mxu0
  %v1497 = vadd.f32 0.0, %v1496
  %v1498 = vpop.f32.mrf.mxu0
  %v1499 = vadd.f32 0.0, %v1498
  %1500 = vmatmul.bf16.gmra.mxu0 %v1394
  %v1501 = vpop.f32.mrf.mxu0
  %v1502 = vadd.f32 0.0, %v1501
  %v1503 = vpop.f32.mrf.mxu0
  %v1504 = vadd.f32 0.0, %v1503
  %1505 = vmatmul.bf16.gmra.mxu0 %v1395
  %v1506 = vpop.f32.mrf.mxu0
  %v1507 = vadd.f32 0.0, %v1506
  %v1508 = vpop.f32.mrf.mxu0
  %v1509 = vadd.f32 0.0, %v1508
  %1510 = vmatmul.bf16.gmra.mxu0 %v1396
  %v1511 = vpop.f32.mrf.mxu0
  %v1512 = vadd.f32 0.0, %v1511
  %v1513 = vpop.f32.mrf.mxu0
  %v1514 = vadd.f32 0.0, %v1513
  %1515 = vmatmul.bf16.gmra.mxu0 %v1397
  %v1516 = vpop.f32.mrf.mxu0
  %v1517 = vadd.f32 0.0, %v1516
  %v1518 = vpop.f32.mrf.mxu0
  %v1519 = vadd.f32 0.0, %v1518
  %1520 = vmatmul.bf16.gmra.mxu0 %v1398
  %v1521 = vpop.f32.mrf.mxu0
  %v1522 = vadd.f32 0.0, %v1521
  %v1523 = vpop.f32.mrf.mxu0
  %v1524 = vadd.f32 0.0, %v1523
  %1525 = vmatmul.bf16.gmra.mxu0 %v1399
  %v1526 = vpop.f32.mrf.mxu0
  %v1527 = vadd.f32 0.0, %v1526
  %v1528 = vpop.f32.mrf.mxu0
  %v1529 = vadd.f32 0.0, %v1528
  %1530 = vmatmul.bf16.gmra.mxu0 %v1400
  %v1531 = vpop.f32.mrf.mxu0
  %v1532 = vadd.f32 0.0, %v1531
  %v1533 = vpop.f32.mrf.mxu0
  %v1534 = vadd.f32 0.0, %v1533
  %1535 = vmatmul.bf16.gmra.mxu0 %v1401
  %v1536 = vpop.f32.mrf.mxu0
  %v1537 = vadd.f32 0.0, %v1536
  %v1538 = vpop.f32.mrf.mxu0
  %v1539 = vadd.f32 0.0, %v1538
  %1540 = vdwg.mxu0
  %v1541 = vadd.f32 %v1337, %v1477
  %v1542 = vadd.f32 %v1338, %v1479
  %v1543 = vadd.f32 %v1339, %v1482
  %v1544 = vadd.f32 %v1340, %v1484
  %v1545 = vadd.f32 %v1341, %v1487
  %v1546 = vadd.f32 %v1342, %v1489
  %v1547 = vadd.f32 %v1343, %v1492
  %v1548 = vadd.f32 %v1344, %v1494
  %v1549 = vadd.f32 %v1345, %v1497
  %v1550 = vadd.f32 %v1346, %v1499
  %v1551 = vadd.f32 %v1347, %v1502
  %v1552 = vadd.f32 %v1348, %v1504
  %v1553 = vadd.f32 %v1349, %v1507
  %v1554 = vadd.f32 %v1350, %v1509
  %v1555 = vadd.f32 %v1351, %v1512
  %v1556 = vadd.f32 %v1352, %v1514
  %v1557 = vadd.f32 %v1353, %v1517
  %v1558 = vadd.f32 %v1354, %v1519
  %v1559 = vadd.f32 %v1355, %v1522
  %v1560 = vadd.f32 %v1356, %v1524
  %v1561 = vadd.f32 %v1357, %v1527
  %v1562 = vadd.f32 %v1358, %v1529
  %v1563 = vadd.f32 %v1359, %v1532
  %v1564 = vadd.f32 %v1360, %v1534
  %v1565 = vadd.f32 %v1361, %v1537
  %v1566 = vadd.f32 %v1362, %v1539
  %v1567 = vld [vmem:[#allocation2 + $0x69] sm:$0xff]
  %v1568 = vld [vmem:[#allocation2 + $0x71] sm:$0xff]
  %v1569 = vld [vmem:[#allocation2 + $0x79] sm:$0xff]
  %v1570 = vld [vmem:[#allocation2 + $0x81] sm:$0xff]
  %v1571 = vld [vmem:[#allocation2 + $0x89] sm:$0xff]
  %v1572 = vld [vmem:[#allocation2 + $0x91] sm:$0xff]
  %v1573 = vld [vmem:[#allocation2 + $0x99] sm:$0xff]
  %v1574 = vld [vmem:[#allocation2 + $0xa1] sm:$0xff]
  %v1575 = vld [vmem:[#allocation2 + $0xa9] sm:$0xff]
  %v1576 = vld [vmem:[#allocation2 + $0xb1] sm:$0xff]
  %v1577 = vld [vmem:[#allocation2 + $0xb9] sm:$0xff]
  %v1578 = vld [vmem:[#allocation2 + $0xc1] sm:$0xff]
  %v1579 = vld [vmem:[#allocation2 + $0xc9] sm:$0xff]
  %v1580 = vld [vmem:[#allocation2 + $0xd1] sm:$0xff]
  %v1581 = vld [vmem:[#allocation2 + $0xd9] sm:$0xff]
  %v1582 = vld [vmem:[#allocation2 + $0xe1] sm:$0xff]
  %v1583 = vld [vmem:[#allocation2 + $0xe9] sm:$0xff]
  %v1584 = vld [vmem:[#allocation2 + $0xf1] sm:$0xff]
  %v1585 = vld [vmem:[#allocation2 + $0xf9] sm:$0xff]
  %v1586 = vld [vmem:[#allocation2 + $0x101] sm:$0xff]
  %v1587 = vld [vmem:[#allocation2 + $0x109] sm:$0xff]
  %v1588 = vld [vmem:[#allocation2 + $0x111] sm:$0xff]
  %v1589 = vld [vmem:[#allocation2 + $0x119] sm:$0xff]
  %v1590 = vld [vmem:[#allocation2 + $0x121] sm:$0xff]
  %v1591 = vld [vmem:[#allocation2 + $0x129] sm:$0xff]
  %v1592 = vld [vmem:[#allocation2 + $0x131] sm:$0xff]
  %v1593 = vpack.c.bf16 %v1568, %v1567
  %v1594 = vpack.c.bf16 %v1570, %v1569
  %v1595 = vpack.c.bf16 %v1572, %v1571
  %v1596 = vpack.c.bf16 %v1574, %v1573
  %v1597 = vpack.c.bf16 %v1576, %v1575
  %v1598 = vpack.c.bf16 %v1578, %v1577
  %v1599 = vpack.c.bf16 %v1580, %v1579
  %v1600 = vpack.c.bf16 %v1582, %v1581
  %v1601 = vpack.c.bf16 %v1584, %v1583
  %v1602 = vpack.c.bf16 %v1586, %v1585
  %v1603 = vpack.c.bf16 %v1588, %v1587
  %v1604 = vpack.c.bf16 %v1590, %v1589
  %v1605 = vpack.c.bf16 %v1592, %v1591
  %s1606 = scalar_lea.vmem %s1, 320
  %v1607 = vld [vmem:[%s1606] sm:$0xf]
  %v1608 = vld [vmem:[%s1606 + $0x4] sm:$0xf]
  %v1609 = vld [vmem:[%s1606 + $0x8] sm:$0xf]
  %v1610 = vld [vmem:[%s1606 + $0xc] sm:$0xf]
  %v1611 = vld [vmem:[%s1606 + $0x10] sm:$0xf]
  %v1612 = vld [vmem:[%s1606 + $0x14] sm:$0xf]
  %v1613 = vld [vmem:[%s1606 + $0x18] sm:$0xf]
  %v1614 = vld [vmem:[%s1606 + $0x1c] sm:$0xf]
  %v1615 = vld [vmem:[%s1606 + $0x20] sm:$0xf]
  %v1616 = vld [vmem:[%s1606 + $0x24] sm:$0xf]
  %v1617 = vld [vmem:[%s1606 + $0x28] sm:$0xf]
  %v1618 = vld [vmem:[%s1606 + $0x2c] sm:$0xf]
  %v1619 = vld [vmem:[%s1606 + $0x30] sm:$0xf]
  %v1620 = vld [vmem:[%s1606 + $0x34] sm:$0xf]
  %v1621 = vld [vmem:[%s1606 + $0x38] sm:$0xf]
  %v1622 = vld [vmem:[%s1606 + $0x3c] sm:$0xf]
  %v1639 = vunpack.c.l.b16 %v1607
  %v1640 = vunpack.c.l.b16 %v1608
  %v1641 = vunpack.c.l.b16 %v1609
  %v1642 = vunpack.c.l.b16 %v1610
  %v1643 = vunpack.c.l.b16 %v1611
  %v1644 = vunpack.c.l.b16 %v1612
  %v1645 = vunpack.c.l.b16 %v1613
  %v1646 = vunpack.c.l.b16 %v1614
  %v1647 = vunpack.c.l.b16 %v1615
  %v1648 = vunpack.c.l.b16 %v1616
  %v1649 = vunpack.c.l.b16 %v1617
  %v1650 = vunpack.c.l.b16 %v1618
  %v1651 = vunpack.c.l.b16 %v1619
  %v1652 = vunpack.c.l.b16 %v1620
  %v1653 = vunpack.c.l.b16 %v1621
  %v1654 = vunpack.c.l.b16 %v1622
  %v1655 = vpack.c.b16 %v1640, %v1639
  %v1656 = vpack.c.b16 %v1642, %v1641
  %v1657 = vpack.c.b16 %v1644, %v1643
  %v1658 = vpack.c.b16 %v1646, %v1645
  %v1659 = vpack.c.b16 %v1648, %v1647
  %v1660 = vpack.c.b16 %v1650, %v1649
  %v1661 = vpack.c.b16 %v1652, %v1651
  %v1662 = vpack.c.b16 %v1654, %v1653
  %1671 = vmatpush.bf16.msra.mxu0 %v1662
  %1672 = vmatpush.bf16.msra.mxu0 %v1661
  %1673 = vmatpush.bf16.msra.mxu0 %v1660
  %1674 = vmatpush.bf16.msra.mxu0 %v1659
  %1675 = vmatpush.bf16.msra.mxu0 %v1658
  %1676 = vmatpush.bf16.msra.mxu0 %v1657
  %1677 = vmatpush.bf16.msra.mxu0 %v1656
  %1678 = vmatpush.bf16.msra.mxu0 %v1655
  %1679 = vmatmul.bf16.gmra.mxu0 %v1593
  %v1680 = vpop.f32.mrf.mxu0
  %v1681 = vadd.f32 0.0, %v1680
  %v1682 = vpop.f32.mrf.mxu0
  %v1683 = vadd.f32 0.0, %v1682
  %1684 = vmatmul.bf16.gmra.mxu0 %v1594
  %v1685 = vpop.f32.mrf.mxu0
  %v1686 = vadd.f32 0.0, %v1685
  %v1687 = vpop.f32.mrf.mxu0
  %v1688 = vadd.f32 0.0, %v1687
  %1689 = vmatmul.bf16.gmra.mxu0 %v1595
  %v1690 = vpop.f32.mrf.mxu0
  %v1691 = vadd.f32 0.0, %v1690
  %v1692 = vpop.f32.mrf.mxu0
  %v1693 = vadd.f32 0.0, %v1692
  %1694 = vmatmul.bf16.gmra.mxu0 %v1596
  %v1695 = vpop.f32.mrf.mxu0
  %v1696 = vadd.f32 0.0, %v1695
  %v1697 = vpop.f32.mrf.mxu0
  %v1698 = vadd.f32 0.0, %v1697
  %1699 = vmatmul.bf16.gmra.mxu0 %v1597
  %v1700 = vpop.f32.mrf.mxu0
  %v1701 = vadd.f32 0.0, %v1700
  %v1702 = vpop.f32.mrf.mxu0
  %v1703 = vadd.f32 0.0, %v1702
  %1704 = vmatmul.bf16.gmra.mxu0 %v1598
  %v1705 = vpop.f32.mrf.mxu0
  %v1706 = vadd.f32 0.0, %v1705
  %v1707 = vpop.f32.mrf.mxu0
  %v1708 = vadd.f32 0.0, %v1707
  %1709 = vmatmul.bf16.gmra.mxu0 %v1599
  %v1710 = vpop.f32.mrf.mxu0
  %v1711 = vadd.f32 0.0, %v1710
  %v1712 = vpop.f32.mrf.mxu0
  %v1713 = vadd.f32 0.0, %v1712
  %1714 = vmatmul.bf16.gmra.mxu0 %v1600
  %v1715 = vpop.f32.mrf.mxu0
  %v1716 = vadd.f32 0.0, %v1715
  %v1717 = vpop.f32.mrf.mxu0
  %v1718 = vadd.f32 0.0, %v1717
  %1719 = vmatmul.bf16.gmra.mxu0 %v1601
  %v1720 = vpop.f32.mrf.mxu0
  %v1721 = vadd.f32 0.0, %v1720
  %v1722 = vpop.f32.mrf.mxu0
  %v1723 = vadd.f32 0.0, %v1722
  %1724 = vmatmul.bf16.gmra.mxu0 %v1602
  %v1725 = vpop.f32.mrf.mxu0
  %v1726 = vadd.f32 0.0, %v1725
  %v1727 = vpop.f32.mrf.mxu0
  %v1728 = vadd.f32 0.0, %v1727
  %1729 = vmatmul.bf16.gmra.mxu0 %v1603
  %v1730 = vpop.f32.mrf.mxu0
  %v1731 = vadd.f32 0.0, %v1730
  %v1732 = vpop.f32.mrf.mxu0
  %v1733 = vadd.f32 0.0, %v1732
  %1734 = vmatmul.bf16.gmra.mxu0 %v1604
  %v1735 = vpop.f32.mrf.mxu0
  %v1736 = vadd.f32 0.0, %v1735
  %v1737 = vpop.f32.mrf.mxu0
  %v1738 = vadd.f32 0.0, %v1737
  %1739 = vmatmul.bf16.gmra.mxu0 %v1605
  %v1740 = vpop.f32.mrf.mxu0
  %v1741 = vadd.f32 0.0, %v1740
  %v1742 = vpop.f32.mrf.mxu0
  %v1743 = vadd.f32 0.0, %v1742
  %1744 = vdwg.mxu0
  %v1745 = vadd.f32 %v1541, %v1681
  %v1746 = vadd.f32 %v1542, %v1683
  %v1747 = vadd.f32 %v1543, %v1686
  %v1748 = vadd.f32 %v1544, %v1688
  %v1749 = vadd.f32 %v1545, %v1691
  %v1750 = vadd.f32 %v1546, %v1693
  %v1751 = vadd.f32 %v1547, %v1696
  %v1752 = vadd.f32 %v1548, %v1698
  %v1753 = vadd.f32 %v1549, %v1701
  %v1754 = vadd.f32 %v1550, %v1703
  %v1755 = vadd.f32 %v1551, %v1706
  %v1756 = vadd.f32 %v1552, %v1708
  %v1757 = vadd.f32 %v1553, %v1711
  %v1758 = vadd.f32 %v1554, %v1713
  %v1759 = vadd.f32 %v1555, %v1716
  %v1760 = vadd.f32 %v1556, %v1718
  %v1761 = vadd.f32 %v1557, %v1721
  %v1762 = vadd.f32 %v1558, %v1723
  %v1763 = vadd.f32 %v1559, %v1726
  %v1764 = vadd.f32 %v1560, %v1728
  %v1765 = vadd.f32 %v1561, %v1731
  %v1766 = vadd.f32 %v1562, %v1733
  %v1767 = vadd.f32 %v1563, %v1736
  %v1768 = vadd.f32 %v1564, %v1738
  %v1769 = vadd.f32 %v1565, %v1741
  %v1770 = vadd.f32 %v1566, %v1743
  %v1771 = vld [vmem:[#allocation2 + $0x71] sm:$0xff]
  %v1772 = vld [vmem:[#allocation2 + $0x79] sm:$0xff]
  %v1773 = vld [vmem:[#allocation2 + $0x81] sm:$0xff]
  %v1774 = vld [vmem:[#allocation2 + $0x89] sm:$0xff]
  %v1775 = vld [vmem:[#allocation2 + $0x91] sm:$0xff]
  %v1776 = vld [vmem:[#allocation2 + $0x99] sm:$0xff]
  %v1777 = vld [vmem:[#allocation2 + $0xa1] sm:$0xff]
  %v1778 = vld [vmem:[#allocation2 + $0xa9] sm:$0xff]
  %v1779 = vld [vmem:[#allocation2 + $0xb1] sm:$0xff]
  %v1780 = vld [vmem:[#allocation2 + $0xb9] sm:$0xff]
  %v1781 = vld [vmem:[#allocation2 + $0xc1] sm:$0xff]
  %v1782 = vld [vmem:[#allocation2 + $0xc9] sm:$0xff]
  %v1783 = vld [vmem:[#allocation2 + $0xd1] sm:$0xff]
  %v1784 = vld [vmem:[#allocation2 + $0xd9] sm:$0xff]
  %v1785 = vld [vmem:[#allocation2 + $0xe1] sm:$0xff]
  %v1786 = vld [vmem:[#allocation2 + $0xe9] sm:$0xff]
  %v1787 = vld [vmem:[#allocation2 + $0xf1] sm:$0xff]
  %v1788 = vld [vmem:[#allocation2 + $0xf9] sm:$0xff]
  %v1789 = vld [vmem:[#allocation2 + $0x101] sm:$0xff]
  %v1790 = vld [vmem:[#allocation2 + $0x109] sm:$0xff]
  %v1791 = vld [vmem:[#allocation2 + $0x111] sm:$0xff]
  %v1792 = vld [vmem:[#allocation2 + $0x119] sm:$0xff]
  %v1793 = vld [vmem:[#allocation2 + $0x121] sm:$0xff]
  %v1794 = vld [vmem:[#allocation2 + $0x129] sm:$0xff]
  %v1795 = vld [vmem:[#allocation2 + $0x131] sm:$0xff]
  %v1796 = vld [vmem:[#allocation2 + $0x139] sm:$0xff]
  %v1797 = vpack.c.bf16 %v1772, %v1771
  %v1798 = vpack.c.bf16 %v1774, %v1773
  %v1799 = vpack.c.bf16 %v1776, %v1775
  %v1800 = vpack.c.bf16 %v1778, %v1777
  %v1801 = vpack.c.bf16 %v1780, %v1779
  %v1802 = vpack.c.bf16 %v1782, %v1781
  %v1803 = vpack.c.bf16 %v1784, %v1783
  %v1804 = vpack.c.bf16 %v1786, %v1785
  %v1805 = vpack.c.bf16 %v1788, %v1787
  %v1806 = vpack.c.bf16 %v1790, %v1789
  %v1807 = vpack.c.bf16 %v1792, %v1791
  %v1808 = vpack.c.bf16 %v1794, %v1793
  %v1809 = vpack.c.bf16 %v1796, %v1795
  %s1810 = scalar_lea.vmem %s1, 384
  %v1811 = vld [vmem:[%s1810] sm:$0xf]
  %v1812 = vld [vmem:[%s1810 + $0x4] sm:$0xf]
  %v1813 = vld [vmem:[%s1810 + $0x8] sm:$0xf]
  %v1814 = vld [vmem:[%s1810 + $0xc] sm:$0xf]
  %v1815 = vld [vmem:[%s1810 + $0x10] sm:$0xf]
  %v1816 = vld [vmem:[%s1810 + $0x14] sm:$0xf]
  %v1817 = vld [vmem:[%s1810 + $0x18] sm:$0xf]
  %v1818 = vld [vmem:[%s1810 + $0x1c] sm:$0xf]
  %v1819 = vld [vmem:[%s1810 + $0x20] sm:$0xf]
  %v1820 = vld [vmem:[%s1810 + $0x24] sm:$0xf]
  %v1821 = vld [vmem:[%s1810 + $0x28] sm:$0xf]
  %v1822 = vld [vmem:[%s1810 + $0x2c] sm:$0xf]
  %v1823 = vld [vmem:[%s1810 + $0x30] sm:$0xf]
  %v1824 = vld [vmem:[%s1810 + $0x34] sm:$0xf]
  %v1825 = vld [vmem:[%s1810 + $0x38] sm:$0xf]
  %v1826 = vld [vmem:[%s1810 + $0x3c] sm:$0xf]
  %v1843 = vunpack.c.l.b16 %v1811
  %v1844 = vunpack.c.l.b16 %v1812
  %v1845 = vunpack.c.l.b16 %v1813
  %v1846 = vunpack.c.l.b16 %v1814
  %v1847 = vunpack.c.l.b16 %v1815
  %v1848 = vunpack.c.l.b16 %v1816
  %v1849 = vunpack.c.l.b16 %v1817
  %v1850 = vunpack.c.l.b16 %v1818
  %v1851 = vunpack.c.l.b16 %v1819
  %v1852 = vunpack.c.l.b16 %v1820
  %v1853 = vunpack.c.l.b16 %v1821
  %v1854 = vunpack.c.l.b16 %v1822
  %v1855 = vunpack.c.l.b16 %v1823
  %v1856 = vunpack.c.l.b16 %v1824
  %v1857 = vunpack.c.l.b16 %v1825
  %v1858 = vunpack.c.l.b16 %v1826
  %v1859 = vpack.c.b16 %v1844, %v1843
  %v1860 = vpack.c.b16 %v1846, %v1845
  %v1861 = vpack.c.b16 %v1848, %v1847
  %v1862 = vpack.c.b16 %v1850, %v1849
  %v1863 = vpack.c.b16 %v1852, %v1851
  %v1864 = vpack.c.b16 %v1854, %v1853
  %v1865 = vpack.c.b16 %v1856, %v1855
  %v1866 = vpack.c.b16 %v1858, %v1857
  %1875 = vmatpush.bf16.msra.mxu0 %v1866
  %1876 = vmatpush.bf16.msra.mxu0 %v1865
  %1877 = vmatpush.bf16.msra.mxu0 %v1864
  %1878 = vmatpush.bf16.msra.mxu0 %v1863
  %1879 = vmatpush.bf16.msra.mxu0 %v1862
  %1880 = vmatpush.bf16.msra.mxu0 %v1861
  %1881 = vmatpush.bf16.msra.mxu0 %v1860
  %1882 = vmatpush.bf16.msra.mxu0 %v1859
  %1883 = vmatmul.bf16.gmra.mxu0 %v1797
  %v1884 = vpop.f32.mrf.mxu0
  %v1885 = vadd.f32 0.0, %v1884
  %v1886 = vpop.f32.mrf.mxu0
  %v1887 = vadd.f32 0.0, %v1886
  %1888 = vmatmul.bf16.gmra.mxu0 %v1798
  %v1889 = vpop.f32.mrf.mxu0
  %v1890 = vadd.f32 0.0, %v1889
  %v1891 = vpop.f32.mrf.mxu0
  %v1892 = vadd.f32 0.0, %v1891
  %1893 = vmatmul.bf16.gmra.mxu0 %v1799
  %v1894 = vpop.f32.mrf.mxu0
  %v1895 = vadd.f32 0.0, %v1894
  %v1896 = vpop.f32.mrf.mxu0
  %v1897 = vadd.f32 0.0, %v1896
  %1898 = vmatmul.bf16.gmra.mxu0 %v1800
  %v1899 = vpop.f32.mrf.mxu0
  %v1900 = vadd.f32 0.0, %v1899
  %v1901 = vpop.f32.mrf.mxu0
  %v1902 = vadd.f32 0.0, %v1901
  %1903 = vmatmul.bf16.gmra.mxu0 %v1801
  %v1904 = vpop.f32.mrf.mxu0
  %v1905 = vadd.f32 0.0, %v1904
  %v1906 = vpop.f32.mrf.mxu0
  %v1907 = vadd.f32 0.0, %v1906
  %1908 = vmatmul.bf16.gmra.mxu0 %v1802
  %v1909 = vpop.f32.mrf.mxu0
  %v1910 = vadd.f32 0.0, %v1909
  %v1911 = vpop.f32.mrf.mxu0
  %v1912 = vadd.f32 0.0, %v1911
  %1913 = vmatmul.bf16.gmra.mxu0 %v1803
  %v1914 = vpop.f32.mrf.mxu0
  %v1915 = vadd.f32 0.0, %v1914
  %v1916 = vpop.f32.mrf.mxu0
  %v1917 = vadd.f32 0.0, %v1916
  %1918 = vmatmul.bf16.gmra.mxu0 %v1804
  %v1919 = vpop.f32.mrf.mxu0
  %v1920 = vadd.f32 0.0, %v1919
  %v1921 = vpop.f32.mrf.mxu0
  %v1922 = vadd.f32 0.0, %v1921
  %1923 = vmatmul.bf16.gmra.mxu0 %v1805
  %v1924 = vpop.f32.mrf.mxu0
  %v1925 = vadd.f32 0.0, %v1924
  %v1926 = vpop.f32.mrf.mxu0
  %v1927 = vadd.f32 0.0, %v1926
  %1928 = vmatmul.bf16.gmra.mxu0 %v1806
  %v1929 = vpop.f32.mrf.mxu0
  %v1930 = vadd.f32 0.0, %v1929
  %v1931 = vpop.f32.mrf.mxu0
  %v1932 = vadd.f32 0.0, %v1931
  %1933 = vmatmul.bf16.gmra.mxu0 %v1807
  %v1934 = vpop.f32.mrf.mxu0
  %v1935 = vadd.f32 0.0, %v1934
  %v1936 = vpop.f32.mrf.mxu0
  %v1937 = vadd.f32 0.0, %v1936
  %1938 = vmatmul.bf16.gmra.mxu0 %v1808
  %v1939 = vpop.f32.mrf.mxu0
  %v1940 = vadd.f32 0.0, %v1939
  %v1941 = vpop.f32.mrf.mxu0
  %v1942 = vadd.f32 0.0, %v1941
  %1943 = vmatmul.bf16.gmra.mxu0 %v1809
  %v1944 = vpop.f32.mrf.mxu0
  %v1945 = vadd.f32 0.0, %v1944
  %v1946 = vpop.f32.mrf.mxu0
  %v1947 = vadd.f32 0.0, %v1946
  %1948 = vdwg.mxu0
  %v1949 = vadd.f32 %v1745, %v1885
  %v1950 = vadd.f32 %v1746, %v1887
  %v1951 = vadd.f32 %v1747, %v1890
  %v1952 = vadd.f32 %v1748, %v1892
  %v1953 = vadd.f32 %v1749, %v1895
  %v1954 = vadd.f32 %v1750, %v1897
  %v1955 = vadd.f32 %v1751, %v1900
  %v1956 = vadd.f32 %v1752, %v1902
  %v1957 = vadd.f32 %v1753, %v1905
  %v1958 = vadd.f32 %v1754, %v1907
  %v1959 = vadd.f32 %v1755, %v1910
  %v1960 = vadd.f32 %v1756, %v1912
  %v1961 = vadd.f32 %v1757, %v1915
  %v1962 = vadd.f32 %v1758, %v1917
  %v1963 = vadd.f32 %v1759, %v1920
  %v1964 = vadd.f32 %v1760, %v1922
  %v1965 = vadd.f32 %v1761, %v1925
  %v1966 = vadd.f32 %v1762, %v1927
  %v1967 = vadd.f32 %v1763, %v1930
  %v1968 = vadd.f32 %v1764, %v1932
  %v1969 = vadd.f32 %v1765, %v1935
  %v1970 = vadd.f32 %v1766, %v1937
  %v1971 = vadd.f32 %v1767, %v1940
  %v1972 = vadd.f32 %v1768, %v1942
  %v1973 = vadd.f32 %v1769, %v1945
  %v1974 = vadd.f32 %v1770, %v1947
  %v1975 = vld [vmem:[#allocation2 + $0x72] sm:$0xff]
  %v1976 = vld [vmem:[#allocation2 + $0x7a] sm:$0xff]
  %v1977 = vld [vmem:[#allocation2 + $0x82] sm:$0xff]
  %v1978 = vld [vmem:[#allocation2 + $0x8a] sm:$0xff]
  %v1979 = vld [vmem:[#allocation2 + $0x92] sm:$0xff]
  %v1980 = vld [vmem:[#allocation2 + $0x9a] sm:$0xff]
  %v1981 = vld [vmem:[#allocation2 + $0xa2] sm:$0xff]
  %v1982 = vld [vmem:[#allocation2 + $0xaa] sm:$0xff]
  %v1983 = vld [vmem:[#allocation2 + $0xb2] sm:$0xff]
  %v1984 = vld [vmem:[#allocation2 + $0xba] sm:$0xff]
  %v1985 = vld [vmem:[#allocation2 + $0xc2] sm:$0xff]
  %v1986 = vld [vmem:[#allocation2 + $0xca] sm:$0xff]
  %v1987 = vld [vmem:[#allocation2 + $0xd2] sm:$0xff]
  %v1988 = vld [vmem:[#allocation2 + $0xda] sm:$0xff]
  %v1989 = vld [vmem:[#allocation2 + $0xe2] sm:$0xff]
  %v1990 = vld [vmem:[#allocation2 + $0xea] sm:$0xff]
  %v1991 = vld [vmem:[#allocation2 + $0xf2] sm:$0xff]
  %v1992 = vld [vmem:[#allocation2 + $0xfa] sm:$0xff]
  %v1993 = vld [vmem:[#allocation2 + $0x102] sm:$0xff]
  %v1994 = vld [vmem:[#allocation2 + $0x10a] sm:$0xff]
  %v1995 = vld [vmem:[#allocation2 + $0x112] sm:$0xff]
  %v1996 = vld [vmem:[#allocation2 + $0x11a] sm:$0xff]
  %v1997 = vld [vmem:[#allocation2 + $0x122] sm:$0xff]
  %v1998 = vld [vmem:[#allocation2 + $0x12a] sm:$0xff]
  %v1999 = vld [vmem:[#allocation2 + $0x132] sm:$0xff]
  %v2000 = vld [vmem:[#allocation2 + $0x13a] sm:$0xff]
  %v2001 = vpack.c.bf16 %v1976, %v1975
  %v2002 = vpack.c.bf16 %v1978, %v1977
  %v2003 = vpack.c.bf16 %v1980, %v1979
  %v2004 = vpack.c.bf16 %v1982, %v1981
  %v2005 = vpack.c.bf16 %v1984, %v1983
  %v2006 = vpack.c.bf16 %v1986, %v1985
  %v2007 = vpack.c.bf16 %v1988, %v1987
  %v2008 = vpack.c.bf16 %v1990, %v1989
  %v2009 = vpack.c.bf16 %v1992, %v1991
  %v2010 = vpack.c.bf16 %v1994, %v1993
  %v2011 = vpack.c.bf16 %v1996, %v1995
  %v2012 = vpack.c.bf16 %v1998, %v1997
  %v2013 = vpack.c.bf16 %v2000, %v1999
  %s2014 = scalar_lea.vmem %s1, 448
  %v2015 = vld [vmem:[%s2014] sm:$0xf]
  %v2016 = vld [vmem:[%s2014 + $0x4] sm:$0xf]
  %v2017 = vld [vmem:[%s2014 + $0x8] sm:$0xf]
  %v2018 = vld [vmem:[%s2014 + $0xc] sm:$0xf]
  %v2019 = vld [vmem:[%s2014 + $0x10] sm:$0xf]
  %v2020 = vld [vmem:[%s2014 + $0x14] sm:$0xf]
  %v2021 = vld [vmem:[%s2014 + $0x18] sm:$0xf]
  %v2022 = vld [vmem:[%s2014 + $0x1c] sm:$0xf]
  %v2023 = vld [vmem:[%s2014 + $0x20] sm:$0xf]
  %v2024 = vld [vmem:[%s2014 + $0x24] sm:$0xf]
  %v2025 = vld [vmem:[%s2014 + $0x28] sm:$0xf]
  %v2026 = vld [vmem:[%s2014 + $0x2c] sm:$0xf]
  %v2027 = vld [vmem:[%s2014 + $0x30] sm:$0xf]
  %v2028 = vld [vmem:[%s2014 + $0x34] sm:$0xf]
  %v2029 = vld [vmem:[%s2014 + $0x38] sm:$0xf]
  %v2030 = vld [vmem:[%s2014 + $0x3c] sm:$0xf]
  %v2047 = vunpack.c.l.b16 %v2015
  %v2048 = vunpack.c.l.b16 %v2016
  %v2049 = vunpack.c.l.b16 %v2017
  %v2050 = vunpack.c.l.b16 %v2018
  %v2051 = vunpack.c.l.b16 %v2019
  %v2052 = vunpack.c.l.b16 %v2020
  %v2053 = vunpack.c.l.b16 %v2021
  %v2054 = vunpack.c.l.b16 %v2022
  %v2055 = vunpack.c.l.b16 %v2023
  %v2056 = vunpack.c.l.b16 %v2024
  %v2057 = vunpack.c.l.b16 %v2025
  %v2058 = vunpack.c.l.b16 %v2026
  %v2059 = vunpack.c.l.b16 %v2027
  %v2060 = vunpack.c.l.b16 %v2028
  %v2061 = vunpack.c.l.b16 %v2029
  %v2062 = vunpack.c.l.b16 %v2030
  %v2063 = vpack.c.b16 %v2048, %v2047
  %v2064 = vpack.c.b16 %v2050, %v2049
  %v2065 = vpack.c.b16 %v2052, %v2051
  %v2066 = vpack.c.b16 %v2054, %v2053
  %v2067 = vpack.c.b16 %v2056, %v2055
  %v2068 = vpack.c.b16 %v2058, %v2057
  %v2069 = vpack.c.b16 %v2060, %v2059
  %v2070 = vpack.c.b16 %v2062, %v2061
  %2079 = vmatpush.bf16.msra.mxu0 %v2070
  %2080 = vmatpush.bf16.msra.mxu0 %v2069
  %2081 = vmatpush.bf16.msra.mxu0 %v2068
  %2082 = vmatpush.bf16.msra.mxu0 %v2067
  %2083 = vmatpush.bf16.msra.mxu0 %v2066
  %2084 = vmatpush.bf16.msra.mxu0 %v2065
  %2085 = vmatpush.bf16.msra.mxu0 %v2064
  %2086 = vmatpush.bf16.msra.mxu0 %v2063
  %2087 = vmatmul.bf16.gmra.mxu0 %v2001
  %v2088 = vpop.f32.mrf.mxu0
  %v2089 = vadd.f32 0.0, %v2088
  %v2090 = vpop.f32.mrf.mxu0
  %v2091 = vadd.f32 0.0, %v2090
  %2092 = vmatmul.bf16.gmra.mxu0 %v2002
  %v2093 = vpop.f32.mrf.mxu0
  %v2094 = vadd.f32 0.0, %v2093
  %v2095 = vpop.f32.mrf.mxu0
  %v2096 = vadd.f32 0.0, %v2095
  %2097 = vmatmul.bf16.gmra.mxu0 %v2003
  %v2098 = vpop.f32.mrf.mxu0
  %v2099 = vadd.f32 0.0, %v2098
  %v2100 = vpop.f32.mrf.mxu0
  %v2101 = vadd.f32 0.0, %v2100
  %2102 = vmatmul.bf16.gmra.mxu0 %v2004
  %v2103 = vpop.f32.mrf.mxu0
  %v2104 = vadd.f32 0.0, %v2103
  %v2105 = vpop.f32.mrf.mxu0
  %v2106 = vadd.f32 0.0, %v2105
  %2107 = vmatmul.bf16.gmra.mxu0 %v2005
  %v2108 = vpop.f32.mrf.mxu0
  %v2109 = vadd.f32 0.0, %v2108
  %v2110 = vpop.f32.mrf.mxu0
  %v2111 = vadd.f32 0.0, %v2110
  %2112 = vmatmul.bf16.gmra.mxu0 %v2006
  %v2113 = vpop.f32.mrf.mxu0
  %v2114 = vadd.f32 0.0, %v2113
  %v2115 = vpop.f32.mrf.mxu0
  %v2116 = vadd.f32 0.0, %v2115
  %2117 = vmatmul.bf16.gmra.mxu0 %v2007
  %v2118 = vpop.f32.mrf.mxu0
  %v2119 = vadd.f32 0.0, %v2118
  %v2120 = vpop.f32.mrf.mxu0
  %v2121 = vadd.f32 0.0, %v2120
  %2122 = vmatmul.bf16.gmra.mxu0 %v2008
  %v2123 = vpop.f32.mrf.mxu0
  %v2124 = vadd.f32 0.0, %v2123
  %v2125 = vpop.f32.mrf.mxu0
  %v2126 = vadd.f32 0.0, %v2125
  %2127 = vmatmul.bf16.gmra.mxu0 %v2009
  %v2128 = vpop.f32.mrf.mxu0
  %v2129 = vadd.f32 0.0, %v2128
  %v2130 = vpop.f32.mrf.mxu0
  %v2131 = vadd.f32 0.0, %v2130
  %2132 = vmatmul.bf16.gmra.mxu0 %v2010
  %v2133 = vpop.f32.mrf.mxu0
  %v2134 = vadd.f32 0.0, %v2133
  %v2135 = vpop.f32.mrf.mxu0
  %v2136 = vadd.f32 0.0, %v2135
  %2137 = vmatmul.bf16.gmra.mxu0 %v2011
  %v2138 = vpop.f32.mrf.mxu0
  %v2139 = vadd.f32 0.0, %v2138
  %v2140 = vpop.f32.mrf.mxu0
  %v2141 = vadd.f32 0.0, %v2140
  %2142 = vmatmul.bf16.gmra.mxu0 %v2012
  %v2143 = vpop.f32.mrf.mxu0
  %v2144 = vadd.f32 0.0, %v2143
  %v2145 = vpop.f32.mrf.mxu0
  %v2146 = vadd.f32 0.0, %v2145
  %2147 = vmatmul.bf16.gmra.mxu0 %v2013
  %v2148 = vpop.f32.mrf.mxu0
  %v2149 = vadd.f32 0.0, %v2148
  %v2150 = vpop.f32.mrf.mxu0
  %v2151 = vadd.f32 0.0, %v2150
  %2152 = vdwg.mxu0
  %v2153 = vadd.f32 %v1949, %v2089
  %v2154 = vadd.f32 %v1950, %v2091
  %v2155 = vadd.f32 %v1951, %v2094
  %v2156 = vadd.f32 %v1952, %v2096
  %v2157 = vadd.f32 %v1953, %v2099
  %v2158 = vadd.f32 %v1954, %v2101
  %v2159 = vadd.f32 %v1955, %v2104
  %v2160 = vadd.f32 %v1956, %v2106
  %v2161 = vadd.f32 %v1957, %v2109
  %v2162 = vadd.f32 %v1958, %v2111
  %v2163 = vadd.f32 %v1959, %v2114
  %v2164 = vadd.f32 %v1960, %v2116
  %v2165 = vadd.f32 %v1961, %v2119
  %v2166 = vadd.f32 %v1962, %v2121
  %v2167 = vadd.f32 %v1963, %v2124
  %v2168 = vadd.f32 %v1964, %v2126
  %v2169 = vadd.f32 %v1965, %v2129
  %v2170 = vadd.f32 %v1966, %v2131
  %v2171 = vadd.f32 %v1967, %v2134
  %v2172 = vadd.f32 %v1968, %v2136
  %v2173 = vadd.f32 %v1969, %v2139
  %v2174 = vadd.f32 %v1970, %v2141
  %v2175 = vadd.f32 %v1971, %v2144
  %v2176 = vadd.f32 %v1972, %v2146
  %v2177 = vadd.f32 %v1973, %v2149
  %v2178 = vadd.f32 %v1974, %v2151
  %v2179 = vld [vmem:[#allocation2 + $0x73] sm:$0xff]
  %v2180 = vld [vmem:[#allocation2 + $0x7b] sm:$0xff]
  %v2181 = vld [vmem:[#allocation2 + $0x83] sm:$0xff]
  %v2182 = vld [vmem:[#allocation2 + $0x8b] sm:$0xff]
  %v2183 = vld [vmem:[#allocation2 + $0x93] sm:$0xff]
  %v2184 = vld [vmem:[#allocation2 + $0x9b] sm:$0xff]
  %v2185 = vld [vmem:[#allocation2 + $0xa3] sm:$0xff]
  %v2186 = vld [vmem:[#allocation2 + $0xab] sm:$0xff]
  %v2187 = vld [vmem:[#allocation2 + $0xb3] sm:$0xff]
  %v2188 = vld [vmem:[#allocation2 + $0xbb] sm:$0xff]
  %v2189 = vld [vmem:[#allocation2 + $0xc3] sm:$0xff]
  %v2190 = vld [vmem:[#allocation2 + $0xcb] sm:$0xff]
  %v2191 = vld [vmem:[#allocation2 + $0xd3] sm:$0xff]
  %v2192 = vld [vmem:[#allocation2 + $0xdb] sm:$0xff]
  %v2193 = vld [vmem:[#allocation2 + $0xe3] sm:$0xff]
  %v2194 = vld [vmem:[#allocation2 + $0xeb] sm:$0xff]
  %v2195 = vld [vmem:[#allocation2 + $0xf3] sm:$0xff]
  %v2196 = vld [vmem:[#allocation2 + $0xfb] sm:$0xff]
  %v2197 = vld [vmem:[#allocation2 + $0x103] sm:$0xff]
  %v2198 = vld [vmem:[#allocation2 + $0x10b] sm:$0xff]
  %v2199 = vld [vmem:[#allocation2 + $0x113] sm:$0xff]
  %v2200 = vld [vmem:[#allocation2 + $0x11b] sm:$0xff]
  %v2201 = vld [vmem:[#allocation2 + $0x123] sm:$0xff]
  %v2202 = vld [vmem:[#allocation2 + $0x12b] sm:$0xff]
  %v2203 = vld [vmem:[#allocation2 + $0x133] sm:$0xff]
  %v2204 = vld [vmem:[#allocation2 + $0x13b] sm:$0xff]
  %v2205 = vpack.c.bf16 %v2180, %v2179
  %v2206 = vpack.c.bf16 %v2182, %v2181
  %v2207 = vpack.c.bf16 %v2184, %v2183
  %v2208 = vpack.c.bf16 %v2186, %v2185
  %v2209 = vpack.c.bf16 %v2188, %v2187
  %v2210 = vpack.c.bf16 %v2190, %v2189
  %v2211 = vpack.c.bf16 %v2192, %v2191
  %v2212 = vpack.c.bf16 %v2194, %v2193
  %v2213 = vpack.c.bf16 %v2196, %v2195
  %v2214 = vpack.c.bf16 %v2198, %v2197
  %v2215 = vpack.c.bf16 %v2200, %v2199
  %v2216 = vpack.c.bf16 %v2202, %v2201
  %v2217 = vpack.c.bf16 %v2204, %v2203
  %s2218 = scalar_lea.vmem %s1, 512
  %v2219 = vld [vmem:[%s2218] sm:$0xf]
  %v2220 = vld [vmem:[%s2218 + $0x4] sm:$0xf]
  %v2221 = vld [vmem:[%s2218 + $0x8] sm:$0xf]
  %v2222 = vld [vmem:[%s2218 + $0xc] sm:$0xf]
  %v2223 = vld [vmem:[%s2218 + $0x10] sm:$0xf]
  %v2224 = vld [vmem:[%s2218 + $0x14] sm:$0xf]
  %v2225 = vld [vmem:[%s2218 + $0x18] sm:$0xf]
  %v2226 = vld [vmem:[%s2218 + $0x1c] sm:$0xf]
  %v2227 = vld [vmem:[%s2218 + $0x20] sm:$0xf]
  %v2228 = vld [vmem:[%s2218 + $0x24] sm:$0xf]
  %v2229 = vld [vmem:[%s2218 + $0x28] sm:$0xf]
  %v2230 = vld [vmem:[%s2218 + $0x2c] sm:$0xf]
  %v2231 = vld [vmem:[%s2218 + $0x30] sm:$0xf]
  %v2232 = vld [vmem:[%s2218 + $0x34] sm:$0xf]
  %v2233 = vld [vmem:[%s2218 + $0x38] sm:$0xf]
  %v2234 = vld [vmem:[%s2218 + $0x3c] sm:$0xf]
  %v2251 = vunpack.c.l.b16 %v2219
  %v2252 = vunpack.c.l.b16 %v2220
  %v2253 = vunpack.c.l.b16 %v2221
  %v2254 = vunpack.c.l.b16 %v2222
  %v2255 = vunpack.c.l.b16 %v2223
  %v2256 = vunpack.c.l.b16 %v2224
  %v2257 = vunpack.c.l.b16 %v2225
  %v2258 = vunpack.c.l.b16 %v2226
  %v2259 = vunpack.c.l.b16 %v2227
  %v2260 = vunpack.c.l.b16 %v2228
  %v2261 = vunpack.c.l.b16 %v2229
  %v2262 = vunpack.c.l.b16 %v2230
  %v2263 = vunpack.c.l.b16 %v2231
  %v2264 = vunpack.c.l.b16 %v2232
  %v2265 = vunpack.c.l.b16 %v2233
  %v2266 = vunpack.c.l.b16 %v2234
  %v2267 = vpack.c.b16 %v2252, %v2251
  %v2268 = vpack.c.b16 %v2254, %v2253
  %v2269 = vpack.c.b16 %v2256, %v2255
  %v2270 = vpack.c.b16 %v2258, %v2257
  %v2271 = vpack.c.b16 %v2260, %v2259
  %v2272 = vpack.c.b16 %v2262, %v2261
  %v2273 = vpack.c.b16 %v2264, %v2263
  %v2274 = vpack.c.b16 %v2266, %v2265
  %2283 = vmatpush.bf16.msra.mxu0 %v2274
  %2284 = vmatpush.bf16.msra.mxu0 %v2273
  %2285 = vmatpush.bf16.msra.mxu0 %v2272
  %2286 = vmatpush.bf16.msra.mxu0 %v2271
  %2287 = vmatpush.bf16.msra.mxu0 %v2270
  %2288 = vmatpush.bf16.msra.mxu0 %v2269
  %2289 = vmatpush.bf16.msra.mxu0 %v2268
  %2290 = vmatpush.bf16.msra.mxu0 %v2267
  %2291 = vmatmul.bf16.gmra.mxu0 %v2205
  %v2292 = vpop.f32.mrf.mxu0
  %v2293 = vadd.f32 0.0, %v2292
  %v2294 = vpop.f32.mrf.mxu0
  %v2295 = vadd.f32 0.0, %v2294
  %2296 = vmatmul.bf16.gmra.mxu0 %v2206
  %v2297 = vpop.f32.mrf.mxu0
  %v2298 = vadd.f32 0.0, %v2297
  %v2299 = vpop.f32.mrf.mxu0
  %v2300 = vadd.f32 0.0, %v2299
  %2301 = vmatmul.bf16.gmra.mxu0 %v2207
  %v2302 = vpop.f32.mrf.mxu0
  %v2303 = vadd.f32 0.0, %v2302
  %v2304 = vpop.f32.mrf.mxu0
  %v2305 = vadd.f32 0.0, %v2304
  %2306 = vmatmul.bf16.gmra.mxu0 %v2208
  %v2307 = vpop.f32.mrf.mxu0
  %v2308 = vadd.f32 0.0, %v2307
  %v2309 = vpop.f32.mrf.mxu0
  %v2310 = vadd.f32 0.0, %v2309
  %2311 = vmatmul.bf16.gmra.mxu0 %v2209
  %v2312 = vpop.f32.mrf.mxu0
  %v2313 = vadd.f32 0.0, %v2312
  %v2314 = vpop.f32.mrf.mxu0
  %v2315 = vadd.f32 0.0, %v2314
  %2316 = vmatmul.bf16.gmra.mxu0 %v2210
  %v2317 = vpop.f32.mrf.mxu0
  %v2318 = vadd.f32 0.0, %v2317
  %v2319 = vpop.f32.mrf.mxu0
  %v2320 = vadd.f32 0.0, %v2319
  %2321 = vmatmul.bf16.gmra.mxu0 %v2211
  %v2322 = vpop.f32.mrf.mxu0
  %v2323 = vadd.f32 0.0, %v2322
  %v2324 = vpop.f32.mrf.mxu0
  %v2325 = vadd.f32 0.0, %v2324
  %2326 = vmatmul.bf16.gmra.mxu0 %v2212
  %v2327 = vpop.f32.mrf.mxu0
  %v2328 = vadd.f32 0.0, %v2327
  %v2329 = vpop.f32.mrf.mxu0
  %v2330 = vadd.f32 0.0, %v2329
  %2331 = vmatmul.bf16.gmra.mxu0 %v2213
  %v2332 = vpop.f32.mrf.mxu0
  %v2333 = vadd.f32 0.0, %v2332
  %v2334 = vpop.f32.mrf.mxu0
  %v2335 = vadd.f32 0.0, %v2334
  %2336 = vmatmul.bf16.gmra.mxu0 %v2214
  %v2337 = vpop.f32.mrf.mxu0
  %v2338 = vadd.f32 0.0, %v2337
  %v2339 = vpop.f32.mrf.mxu0
  %v2340 = vadd.f32 0.0, %v2339
  %2341 = vmatmul.bf16.gmra.mxu0 %v2215
  %v2342 = vpop.f32.mrf.mxu0
  %v2343 = vadd.f32 0.0, %v2342
  %v2344 = vpop.f32.mrf.mxu0
  %v2345 = vadd.f32 0.0, %v2344
  %2346 = vmatmul.bf16.gmra.mxu0 %v2216
  %v2347 = vpop.f32.mrf.mxu0
  %v2348 = vadd.f32 0.0, %v2347
  %v2349 = vpop.f32.mrf.mxu0
  %v2350 = vadd.f32 0.0, %v2349
  %2351 = vmatmul.bf16.gmra.mxu0 %v2217
  %v2352 = vpop.f32.mrf.mxu0
  %v2353 = vadd.f32 0.0, %v2352
  %v2354 = vpop.f32.mrf.mxu0
  %v2355 = vadd.f32 0.0, %v2354
  %2356 = vdwg.mxu0
  %v2357 = vadd.f32 %v2153, %v2293
  %v2358 = vadd.f32 %v2154, %v2295
  %v2359 = vadd.f32 %v2155, %v2298
  %v2360 = vadd.f32 %v2156, %v2300
  %v2361 = vadd.f32 %v2157, %v2303
  %v2362 = vadd.f32 %v2158, %v2305
  %v2363 = vadd.f32 %v2159, %v2308
  %v2364 = vadd.f32 %v2160, %v2310
  %v2365 = vadd.f32 %v2161, %v2313
  %v2366 = vadd.f32 %v2162, %v2315
  %v2367 = vadd.f32 %v2163, %v2318
  %v2368 = vadd.f32 %v2164, %v2320
  %v2369 = vadd.f32 %v2165, %v2323
  %v2370 = vadd.f32 %v2166, %v2325
  %v2371 = vadd.f32 %v2167, %v2328
  %v2372 = vadd.f32 %v2168, %v2330
  %v2373 = vadd.f32 %v2169, %v2333
  %v2374 = vadd.f32 %v2170, %v2335
  %v2375 = vadd.f32 %v2171, %v2338
  %v2376 = vadd.f32 %v2172, %v2340
  %v2377 = vadd.f32 %v2173, %v2343
  %v2378 = vadd.f32 %v2174, %v2345
  %v2379 = vadd.f32 %v2175, %v2348
  %v2380 = vadd.f32 %v2176, %v2350
  %v2381 = vadd.f32 %v2177, %v2353
  %v2382 = vadd.f32 %v2178, %v2355
  %v2383 = vld [vmem:[%s4 + $0x68] sm:$0xff]
  %v2384 = vld [vmem:[%s4 + $0x70] sm:$0xff]
  %v2385 = vld [vmem:[%s4 + $0x78] sm:$0xff]
  %v2386 = vld [vmem:[%s4 + $0x80] sm:$0xff]
  %v2387 = vld [vmem:[%s4 + $0x88] sm:$0xff]
  %v2388 = vld [vmem:[%s4 + $0x90] sm:$0xff]
  %v2389 = vld [vmem:[%s4 + $0x98] sm:$0xff]
  %v2390 = vld [vmem:[%s4 + $0xa0] sm:$0xff]
  %v2391 = vld [vmem:[%s4 + $0xa8] sm:$0xff]
  %v2392 = vld [vmem:[%s4 + $0xb0] sm:$0xff]
  %v2393 = vld [vmem:[%s4 + $0xb8] sm:$0xff]
  %v2394 = vld [vmem:[%s4 + $0xc0] sm:$0xff]
  %v2395 = vld [vmem:[%s4 + $0xc8] sm:$0xff]
  %v2396 = vld [vmem:[%s4 + $0xd0] sm:$0xff]
  %v2397 = vld [vmem:[%s4 + $0xd8] sm:$0xff]
  %v2398 = vld [vmem:[%s4 + $0xe0] sm:$0xff]
  %v2399 = vld [vmem:[%s4 + $0xe8] sm:$0xff]
  %v2400 = vld [vmem:[%s4 + $0xf0] sm:$0xff]
  %v2401 = vld [vmem:[%s4 + $0xf8] sm:$0xff]
  %v2402 = vld [vmem:[%s4 + $0x100] sm:$0xff]
  %v2403 = vld [vmem:[%s4 + $0x108] sm:$0xff]
  %v2404 = vld [vmem:[%s4 + $0x110] sm:$0xff]
  %v2405 = vld [vmem:[%s4 + $0x118] sm:$0xff]
  %v2406 = vld [vmem:[%s4 + $0x120] sm:$0xff]
  %v2407 = vld [vmem:[%s4 + $0x128] sm:$0xff]
  %v2408 = vld [vmem:[%s4 + $0x130] sm:$0xff]
  %2410 = vset.pattern.permute.xlu0 0
  %2411 = vperm.xlu0 %2410, %v2383
  %v2412 = vpop.permute.xlu0 %2411
  %2415 = vset.pattern.permute.xlu0 0
  %2416 = vperm.xlu0 %2415, %v2384
  %v2417 = vpop.permute.xlu0 %2416
  %2420 = vset.pattern.permute.xlu0 0
  %2421 = vperm.xlu0 %2420, %v2385
  %v2422 = vpop.permute.xlu0 %2421
  %2425 = vset.pattern.permute.xlu0 0
  %2426 = vperm.xlu0 %2425, %v2386
  %v2427 = vpop.permute.xlu0 %2426
  %2430 = vset.pattern.permute.xlu0 0
  %2431 = vperm.xlu0 %2430, %v2387
  %v2432 = vpop.permute.xlu0 %2431
  %2435 = vset.pattern.permute.xlu0 0
  %2436 = vperm.xlu0 %2435, %v2388
  %v2437 = vpop.permute.xlu0 %2436
  %2440 = vset.pattern.permute.xlu0 0
  %2441 = vperm.xlu0 %2440, %v2389
  %v2442 = vpop.permute.xlu0 %2441
  %2445 = vset.pattern.permute.xlu0 0
  %2446 = vperm.xlu0 %2445, %v2390
  %v2447 = vpop.permute.xlu0 %2446
  %2450 = vset.pattern.permute.xlu0 0
  %2451 = vperm.xlu0 %2450, %v2391
  %v2452 = vpop.permute.xlu0 %2451
  %2455 = vset.pattern.permute.xlu0 0
  %2456 = vperm.xlu0 %2455, %v2392
  %v2457 = vpop.permute.xlu0 %2456
  %2460 = vset.pattern.permute.xlu0 0
  %2461 = vperm.xlu0 %2460, %v2393
  %v2462 = vpop.permute.xlu0 %2461
  %2465 = vset.pattern.permute.xlu0 0
  %2466 = vperm.xlu0 %2465, %v2394
  %v2467 = vpop.permute.xlu0 %2466
  %2470 = vset.pattern.permute.xlu0 0
  %2471 = vperm.xlu0 %2470, %v2395
  %v2472 = vpop.permute.xlu0 %2471
  %2475 = vset.pattern.permute.xlu0 0
  %2476 = vperm.xlu0 %2475, %v2396
  %v2477 = vpop.permute.xlu0 %2476
  %2480 = vset.pattern.permute.xlu0 0
  %2481 = vperm.xlu0 %2480, %v2397
  %v2482 = vpop.permute.xlu0 %2481
  %2485 = vset.pattern.permute.xlu0 0
  %2486 = vperm.xlu0 %2485, %v2398
  %v2487 = vpop.permute.xlu0 %2486
  %2490 = vset.pattern.permute.xlu0 0
  %2491 = vperm.xlu0 %2490, %v2399
  %v2492 = vpop.permute.xlu0 %2491
  %2495 = vset.pattern.permute.xlu0 0
  %2496 = vperm.xlu0 %2495, %v2400
  %v2497 = vpop.permute.xlu0 %2496
  %2500 = vset.pattern.permute.xlu0 0
  %2501 = vperm.xlu0 %2500, %v2401
  %v2502 = vpop.permute.xlu0 %2501
  %2505 = vset.pattern.permute.xlu0 0
  %2506 = vperm.xlu0 %2505, %v2402
  %v2507 = vpop.permute.xlu0 %2506
  %2510 = vset.pattern.permute.xlu0 0
  %2511 = vperm.xlu0 %2510, %v2403
  %v2512 = vpop.permute.xlu0 %2511
  %2515 = vset.pattern.permute.xlu0 0
  %2516 = vperm.xlu0 %2515, %v2404
  %v2517 = vpop.permute.xlu0 %2516
  %2520 = vset.pattern.permute.xlu0 0
  %2521 = vperm.xlu0 %2520, %v2405
  %v2522 = vpop.permute.xlu0 %2521
  %2525 = vset.pattern.permute.xlu0 0
  %2526 = vperm.xlu0 %2525, %v2406
  %v2527 = vpop.permute.xlu0 %2526
  %2530 = vset.pattern.permute.xlu0 0
  %2531 = vperm.xlu0 %2530, %v2407
  %v2532 = vpop.permute.xlu0 %2531
  %2535 = vset.pattern.permute.xlu0 0
  %2536 = vperm.xlu0 %2535, %v2408
  %v2537 = vpop.permute.xlu0 %2536
  %v2539 = vmul.f32 %v2357, %v2412
  %v2540 = vmul.f32 %v2358, %v2417
  %v2541 = vmul.f32 %v2359, %v2422
  %v2542 = vmul.f32 %v2360, %v2427
  %v2543 = vmul.f32 %v2361, %v2432
  %v2544 = vmul.f32 %v2362, %v2437
  %v2545 = vmul.f32 %v2363, %v2442
  %v2546 = vmul.f32 %v2364, %v2447
  %v2547 = vmul.f32 %v2365, %v2452
  %v2548 = vmul.f32 %v2366, %v2457
  %v2549 = vmul.f32 %v2367, %v2462
  %v2550 = vmul.f32 %v2368, %v2467
  %v2551 = vmul.f32 %v2369, %v2472
  %v2552 = vmul.f32 %v2370, %v2477
  %v2553 = vmul.f32 %v2371, %v2482
  %v2554 = vmul.f32 %v2372, %v2487
  %v2555 = vmul.f32 %v2373, %v2492
  %v2556 = vmul.f32 %v2374, %v2497
  %v2557 = vmul.f32 %v2375, %v2502
  %v2558 = vmul.f32 %v2376, %v2507
  %v2559 = vmul.f32 %v2377, %v2512
  %v2560 = vmul.f32 %v2378, %v2517
  %v2561 = vmul.f32 %v2379, %v2522
  %v2562 = vmul.f32 %v2380, %v2527
  %v2563 = vmul.f32 %v2381, %v2532
  %v2564 = vmul.f32 %v2382, %v2537
  %2565 = vst [vmem:[%s5] sm:$0xff] 0.0
  %2566 = vst [vmem:[%s5 + $0x8] sm:$0xff] 0.0
  %2567 = vst [vmem:[%s5 + $0x10] sm:$0xff] 0.0
  %2568 = vst [vmem:[%s5 + $0x18] sm:$0xff] 0.0
  %2569 = vst [vmem:[%s5 + $0x20] sm:$0xff] 0.0
  %2570 = vst [vmem:[%s5 + $0x28] sm:$0xff] 0.0
  %2571 = vst [vmem:[%s5 + $0x30] sm:$0xff] 0.0
  %2572 = vst [vmem:[%s5 + $0x38] sm:$0xff] 0.0
  %2573 = vst [vmem:[%s5 + $0x40] sm:$0xff] 0.0
  %2574 = vst [vmem:[%s5 + $0x48] sm:$0xff] 0.0
  %2575 = vst [vmem:[%s5 + $0x50] sm:$0xff] 0.0
  %2576 = vst [vmem:[%s5 + $0x58] sm:$0xff] 0.0
  %2577 = vst [vmem:[%s5 + $0x60] sm:$0xff] 0.0
  %2578 = vst [vmem:[%s5 + $0x68] sm:$0xff] %v2539
  %2579 = vst [vmem:[%s5 + $0x70] sm:$0xff] %v2540
  %2580 = vst [vmem:[%s5 + $0x78] sm:$0xff] %v2541
  %2581 = vst [vmem:[%s5 + $0x80] sm:$0xff] %v2542
  %2582 = vst [vmem:[%s5 + $0x88] sm:$0xff] %v2543
  %2583 = vst [vmem:[%s5 + $0x90] sm:$0xff] %v2544
  %2584 = vst [vmem:[%s5 + $0x98] sm:$0xff] %v2545
  %2585 = vst [vmem:[%s5 + $0xa0] sm:$0xff] %v2546
  %2586 = vst [vmem:[%s5 + $0xa8] sm:$0xff] %v2547
  %2587 = vst [vmem:[%s5 + $0xb0] sm:$0xff] %v2548
  %2588 = vst [vmem:[%s5 + $0xb8] sm:$0xff] %v2549
  %2589 = vst [vmem:[%s5 + $0xc0] sm:$0xff] %v2550
  %2590 = vst [vmem:[%s5 + $0xc8] sm:$0xff] %v2551
  %2591 = vst [vmem:[%s5 + $0xd0] sm:$0xff] %v2552
  %2592 = vst [vmem:[%s5 + $0xd8] sm:$0xff] %v2553
  %2593 = vst [vmem:[%s5 + $0xe0] sm:$0xff] %v2554
  %2594 = vst [vmem:[%s5 + $0xe8] sm:$0xff] %v2555
  %2595 = vst [vmem:[%s5 + $0xf0] sm:$0xff] %v2556
  %2596 = vst [vmem:[%s5 + $0xf8] sm:$0xff] %v2557
  %2597 = vst [vmem:[%s5 + $0x100] sm:$0xff] %v2558
  %2598 = vst [vmem:[%s5 + $0x108] sm:$0xff] %v2559
  %2599 = vst [vmem:[%s5 + $0x110] sm:$0xff] %v2560
  %2600 = vst [vmem:[%s5 + $0x118] sm:$0xff] %v2561
  %2601 = vst [vmem:[%s5 + $0x120] sm:$0xff] %v2562
  %2602 = vst [vmem:[%s5 + $0x128] sm:$0xff] %v2563
  %2603 = vst [vmem:[%s5 + $0x130] sm:$0xff] %v2564
  %2604 = vst [vmem:[%s5 + $0x138] sm:$0xff] 0.0
  %2605 = vst [vmem:[%s5 + $0x140] sm:$0xff] 0.0
  %2606 = vst [vmem:[%s5 + $0x148] sm:$0xff] 0.0
  %2607 = vst [vmem:[%s5 + $0x150] sm:$0xff] 0.0
  %2608 = vst [vmem:[%s5 + $0x158] sm:$0xff] 0.0
  %2609 = vst [vmem:[%s5 + $0x160] sm:$0xff] 0.0
  %2610 = vst [vmem:[%s5 + $0x168] sm:$0xff] 0.0
  %2611 = vst [vmem:[%s5 + $0x170] sm:$0xff] 0.0
  %2612 = vst [vmem:[%s5 + $0x178] sm:$0xff] 0.0
  %2613 = vst [vmem:[%s5 + $0x180] sm:$0xff] 0.0
  %2614 = vst [vmem:[%s5 + $0x188] sm:$0xff] 0.0
  %2615 = vst [vmem:[%s5 + $0x190] sm:$0xff] 0.0
  %2616 = vst [vmem:[%s5 + $0x198] sm:$0xff] 0.0
  // Predicated region
  $region22: #{downsample_forward.5} parent=0 // pred_check
    _
  $region23: #{downsample_forward.5} parent=0 // pred_check_branch
    %2618 = sbr.rel (0) target = $region25
  $region24: #{downsample_forward.5} parent=0 // pred_region
    _
  $region25: #{downsample_forward.5} parent=0 // pred_fallthru
    _
  // Predicated region
  $region26: #{downsample_forward.5} parent=0 // pred_check
    _
  $region27: #{downsample_forward.5} parent=0 // pred_check_branch
    %2620 = sbr.rel (0) target = $region29
  $region28: #{downsample_forward.5} parent=0 // pred_region
    _
  $region29: #{downsample_forward.5} parent=0 // pred_fallthru
    _

// kernel: downsample_forward.6
$region0: #{downsample_forward.6}
  #allocation0 [shape = 'u32[]', space=smem, size = 0x4, offset = 0x4, fixed_abs, tag = 'smem constant byte address 0x4 - core index']
  #allocation1 [shape = 'u32[72,128]{1,0:T(1,128)}', space=vmem, size = 0x9000, scoped, tag = 'internal scratch']
  #allocation2 [shape = 'f32[416,128]{1,0:T(8,128)}', space=vmem, size = 0x34000, scoped, tag = 'scratch operand']
  %s0 = inlined_call_operand.vmem [shape: f32[416,128], index: 0, kind: input, shape index: {}]
  %s1 = inlined_call_operand.vmem [shape: bf16[9,128,128], index: 1, kind: input, shape index: {}]
  %s2 = inlined_call_operand.vmem [shape: f32[1,128], index: 2, kind: input, shape index: {}]
  %s3 = inlined_call_operand.vmem [shape: f32[1,128], index: 3, kind: input, shape index: {}]
  %s4 = inlined_call_operand.vmem [shape: f32[416,1], index: 4, kind: input, shape index: {}]
  %s5 = inlined_call_operand.vmem [shape: f32[416,128], index: 5, kind: output, shape index: {}]
  %s6 = sld [smem:[#allocation0]]
  $region30: #{downsample_forward.6} parent=0
    _
  %s8 = ssub.s32 1, %s6
  %s9 = scalar_select 0, %s8, %s6
  // Predicated region
  $region2: #{downsample_forward.6} parent=0 // pred_check
    _
  $region3: #{downsample_forward.6} parent=0 // pred_check_branch
    %11 = sbr.rel (0) target = $region5
  $region4: #{downsample_forward.6} parent=0 // pred_region
    _
  $region5: #{downsample_forward.6} parent=0 // pred_fallthru
    _
  // Predicated region
  $region6: #{downsample_forward.6} parent=0 // pred_check
    _
  $region7: #{downsample_forward.6} parent=0 // pred_check_branch
    %13 = sbr.rel (0) target = $region9
  $region8: #{downsample_forward.6} parent=0 // pred_region
    _
  $region9: #{downsample_forward.6} parent=0 // pred_fallthru
    _
  // Predicated region
  $region10: #{downsample_forward.6} parent=0 // pred_check
    _
  $region11: #{downsample_forward.6} parent=0 // pred_check_branch
    %15 = sbr.rel (0) target = $region13
  $region12: #{downsample_forward.6} parent=0 // pred_region
    _
  $region13: #{downsample_forward.6} parent=0 // pred_fallthru
    _
  // Predicated region
  $region14: #{downsample_forward.6} parent=0 // pred_check
    _
  $region15: #{downsample_forward.6} parent=0 // pred_check_branch
    %17 = sbr.rel (0) target = $region17
  $region16: #{downsample_forward.6} parent=0 // pred_region
    _
  $region17: #{downsample_forward.6} parent=0 // pred_fallthru
    _
  // Predicated region
  $region18: #{downsample_forward.6} parent=0 // pred_check
    _
  $region19: #{downsample_forward.6} parent=0 // pred_check_branch
    %19 = sbr.rel (0) target = $region21
  $region20: #{downsample_forward.6} parent=0 // pred_region
    _
  $region21: #{downsample_forward.6} parent=0 // pred_fallthru
    _
  %v20 = vld [vmem:[%s4] sm:$0xff]
  %v21 = vld [vmem:[%s4 + $0x8] sm:$0xff]
  %v22 = vld [vmem:[%s4 + $0x10] sm:$0xff]
  %v23 = vld [vmem:[%s4 + $0x18] sm:$0xff]
  %v24 = vld [vmem:[%s4 + $0x20] sm:$0xff]
  %v25 = vld [vmem:[%s4 + $0x28] sm:$0xff]
  %v26 = vld [vmem:[%s4 + $0x30] sm:$0xff]
  %v27 = vld [vmem:[%s4 + $0x38] sm:$0xff]
  %v28 = vld [vmem:[%s4 + $0x40] sm:$0xff]
  %v29 = vld [vmem:[%s4 + $0x48] sm:$0xff]
  %v30 = vld [vmem:[%s4 + $0x50] sm:$0xff]
  %v31 = vld [vmem:[%s4 + $0x58] sm:$0xff]
  %v32 = vld [vmem:[%s4 + $0x60] sm:$0xff]
  %v33 = vld [vmem:[%s4 + $0x68] sm:$0xff]
  %v34 = vld [vmem:[%s4 + $0x70] sm:$0xff]
  %v35 = vld [vmem:[%s4 + $0x78] sm:$0xff]
  %v36 = vld [vmem:[%s4 + $0x80] sm:$0xff]
  %v37 = vld [vmem:[%s4 + $0x88] sm:$0xff]
  %v38 = vld [vmem:[%s4 + $0x90] sm:$0xff]
  %v39 = vld [vmem:[%s4 + $0x98] sm:$0xff]
  %v40 = vld [vmem:[%s4 + $0xa0] sm:$0xff]
  %v41 = vld [vmem:[%s4 + $0xa8] sm:$0xff]
  %v42 = vld [vmem:[%s4 + $0xb0] sm:$0xff]
  %v43 = vld [vmem:[%s4 + $0xb8] sm:$0xff]
  %v44 = vld [vmem:[%s4 + $0xc0] sm:$0xff]
  %v45 = vld [vmem:[%s4 + $0xc8] sm:$0xff]
  %v46 = vld [vmem:[%s4 + $0xd0] sm:$0xff]
  %v47 = vld [vmem:[%s4 + $0xd8] sm:$0xff]
  %v48 = vld [vmem:[%s4 + $0xe0] sm:$0xff]
  %v49 = vld [vmem:[%s4 + $0xe8] sm:$0xff]
  %v50 = vld [vmem:[%s4 + $0xf0] sm:$0xff]
  %v51 = vld [vmem:[%s4 + $0xf8] sm:$0xff]
  %v52 = vld [vmem:[%s4 + $0x100] sm:$0xff]
  %v53 = vld [vmem:[%s4 + $0x108] sm:$0xff]
  %v54 = vld [vmem:[%s4 + $0x110] sm:$0xff]
  %v55 = vld [vmem:[%s4 + $0x118] sm:$0xff]
  %v56 = vld [vmem:[%s4 + $0x120] sm:$0xff]
  %v57 = vld [vmem:[%s4 + $0x128] sm:$0xff]
  %v58 = vld [vmem:[%s4 + $0x130] sm:$0xff]
  %v59 = vld [vmem:[%s4 + $0x138] sm:$0xff]
  %v60 = vld [vmem:[%s4 + $0x140] sm:$0xff]
  %v61 = vld [vmem:[%s4 + $0x148] sm:$0xff]
  %v62 = vld [vmem:[%s4 + $0x150] sm:$0xff]
  %v63 = vld [vmem:[%s4 + $0x158] sm:$0xff]
  %v64 = vld [vmem:[%s4 + $0x160] sm:$0xff]
  %v65 = vld [vmem:[%s4 + $0x168] sm:$0xff]
  %v66 = vld [vmem:[%s4 + $0x170] sm:$0xff]
  %v67 = vld [vmem:[%s4 + $0x178] sm:$0xff]
  %v68 = vld [vmem:[%s4 + $0x180] sm:$0xff]
  %v69 = vld [vmem:[%s4 + $0x188] sm:$0xff]
  %v70 = vld [vmem:[%s4 + $0x190] sm:$0xff]
  %v71 = vld [vmem:[%s4 + $0x198] sm:$0xff]
  %v72 = vld [vmem:[%s0] sm:$0xff]
  %v73 = vld [vmem:[%s0 + $0x8] sm:$0xff]
  %v74 = vld [vmem:[%s0 + $0x10] sm:$0xff]
  %v75 = vld [vmem:[%s0 + $0x18] sm:$0xff]
  %v76 = vld [vmem:[%s0 + $0x20] sm:$0xff]
  %v77 = vld [vmem:[%s0 + $0x28] sm:$0xff]
  %v78 = vld [vmem:[%s0 + $0x30] sm:$0xff]
  %v79 = vld [vmem:[%s0 + $0x38] sm:$0xff]
  %v80 = vld [vmem:[%s0 + $0x40] sm:$0xff]
  %v81 = vld [vmem:[%s0 + $0x48] sm:$0xff]
  %v82 = vld [vmem:[%s0 + $0x50] sm:$0xff]
  %v83 = vld [vmem:[%s0 + $0x58] sm:$0xff]
  %v84 = vld [vmem:[%s0 + $0x60] sm:$0xff]
  %v85 = vld [vmem:[%s0 + $0x68] sm:$0xff]
  %v86 = vld [vmem:[%s0 + $0x70] sm:$0xff]
  %v87 = vld [vmem:[%s0 + $0x78] sm:$0xff]
  %v88 = vld [vmem:[%s0 + $0x80] sm:$0xff]
  %v89 = vld [vmem:[%s0 + $0x88] sm:$0xff]
  %v90 = vld [vmem:[%s0 + $0x90] sm:$0xff]
  %v91 = vld [vmem:[%s0 + $0x98] sm:$0xff]
  %v92 = vld [vmem:[%s0 + $0xa0] sm:$0xff]
  %v93 = vld [vmem:[%s0 + $0xa8] sm:$0xff]
  %v94 = vld [vmem:[%s0 + $0xb0] sm:$0xff]
  %v95 = vld [vmem:[%s0 + $0xb8] sm:$0xff]
  %v96 = vld [vmem:[%s0 + $0xc0] sm:$0xff]
  %v97 = vld [vmem:[%s0 + $0xc8] sm:$0xff]
  %v98 = vld [vmem:[%s0 + $0xd0] sm:$0xff]
  %v99 = vld [vmem:[%s0 + $0xd8] sm:$0xff]
  %v100 = vld [vmem:[%s0 + $0xe0] sm:$0xff]
  %v101 = vld [vmem:[%s0 + $0xe8] sm:$0xff]
  %v102 = vld [vmem:[%s0 + $0xf0] sm:$0xff]
  %v103 = vld [vmem:[%s0 + $0xf8] sm:$0xff]
  %v104 = vld [vmem:[%s0 + $0x100] sm:$0xff]
  %v105 = vld [vmem:[%s0 + $0x108] sm:$0xff]
  %v106 = vld [vmem:[%s0 + $0x110] sm:$0xff]
  %v107 = vld [vmem:[%s0 + $0x118] sm:$0xff]
  %v108 = vld [vmem:[%s0 + $0x120] sm:$0xff]
  %v109 = vld [vmem:[%s0 + $0x128] sm:$0xff]
  %v110 = vld [vmem:[%s0 + $0x130] sm:$0xff]
  %v111 = vld [vmem:[%s0 + $0x138] sm:$0xff]
  %v112 = vld [vmem:[%s0 + $0x140] sm:$0xff]
  %v113 = vld [vmem:[%s0 + $0x148] sm:$0xff]
  %v114 = vld [vmem:[%s0 + $0x150] sm:$0xff]
  %v115 = vld [vmem:[%s0 + $0x158] sm:$0xff]
  %v116 = vld [vmem:[%s0 + $0x160] sm:$0xff]
  %v117 = vld [vmem:[%s0 + $0x168] sm:$0xff]
  %v118 = vld [vmem:[%s0 + $0x170] sm:$0xff]
  %v119 = vld [vmem:[%s0 + $0x178] sm:$0xff]
  %v120 = vld [vmem:[%s0 + $0x180] sm:$0xff]
  %v121 = vld [vmem:[%s0 + $0x188] sm:$0xff]
  %v122 = vld [vmem:[%s0 + $0x190] sm:$0xff]
  %v123 = vld [vmem:[%s0 + $0x198] sm:$0xff]
  %v124 = vld [vmem:[%s2] sm:$0x1]
  %v126 = vperm.slane %v124, 0
  %v128 = vmul.f32 %v72, %v126
  %v129 = vmul.f32 %v73, %v126
  %v130 = vmul.f32 %v74, %v126
  %v131 = vmul.f32 %v75, %v126
  %v132 = vmul.f32 %v76, %v126
  %v133 = vmul.f32 %v77, %v126
  %v134 = vmul.f32 %v78, %v126
  %v135 = vmul.f32 %v79, %v126
  %v136 = vmul.f32 %v80, %v126
  %v137 = vmul.f32 %v81, %v126
  %v138 = vmul.f32 %v82, %v126
  %v139 = vmul.f32 %v83, %v126
  %v140 = vmul.f32 %v84, %v126
  %v141 = vmul.f32 %v85, %v126
  %v142 = vmul.f32 %v86, %v126
  %v143 = vmul.f32 %v87, %v126
  %v144 = vmul.f32 %v88, %v126
  %v145 = vmul.f32 %v89, %v126
  %v146 = vmul.f32 %v90, %v126
  %v147 = vmul.f32 %v91, %v126
  %v148 = vmul.f32 %v92, %v126
  %v149 = vmul.f32 %v93, %v126
  %v150 = vmul.f32 %v94, %v126
  %v151 = vmul.f32 %v95, %v126
  %v152 = vmul.f32 %v96, %v126
  %v153 = vmul.f32 %v97, %v126
  %v154 = vmul.f32 %v98, %v126
  %v155 = vmul.f32 %v99, %v126
  %v156 = vmul.f32 %v100, %v126
  %v157 = vmul.f32 %v101, %v126
  %v158 = vmul.f32 %v102, %v126
  %v159 = vmul.f32 %v103, %v126
  %v160 = vmul.f32 %v104, %v126
  %v161 = vmul.f32 %v105, %v126
  %v162 = vmul.f32 %v106, %v126
  %v163 = vmul.f32 %v107, %v126
  %v164 = vmul.f32 %v108, %v126
  %v165 = vmul.f32 %v109, %v126
  %v166 = vmul.f32 %v110, %v126
  %v167 = vmul.f32 %v111, %v126
  %v168 = vmul.f32 %v112, %v126
  %v169 = vmul.f32 %v113, %v126
  %v170 = vmul.f32 %v114, %v126
  %v171 = vmul.f32 %v115, %v126
  %v172 = vmul.f32 %v116, %v126
  %v173 = vmul.f32 %v117, %v126
  %v174 = vmul.f32 %v118, %v126
  %v175 = vmul.f32 %v119, %v126
  %v176 = vmul.f32 %v120, %v126
  %v177 = vmul.f32 %v121, %v126
  %v178 = vmul.f32 %v122, %v126
  %v179 = vmul.f32 %v123, %v126
  %v180 = vld [vmem:[%s3] sm:$0x1]
  %v182 = vperm.slane %v180, 0
  %v184 = vadd.f32 %v128, %v182
  %v185 = vadd.f32 %v129, %v182
  %v186 = vadd.f32 %v130, %v182
  %v187 = vadd.f32 %v131, %v182
  %v188 = vadd.f32 %v132, %v182
  %v189 = vadd.f32 %v133, %v182
  %v190 = vadd.f32 %v134, %v182
  %v191 = vadd.f32 %v135, %v182
  %v192 = vadd.f32 %v136, %v182
  %v193 = vadd.f32 %v137, %v182
  %v194 = vadd.f32 %v138, %v182
  %v195 = vadd.f32 %v139, %v182
  %v196 = vadd.f32 %v140, %v182
  %v197 = vadd.f32 %v141, %v182
  %v198 = vadd.f32 %v142, %v182
  %v199 = vadd.f32 %v143, %v182
  %v200 = vadd.f32 %v144, %v182
  %v201 = vadd.f32 %v145, %v182
  %v202 = vadd.f32 %v146, %v182
  %v203 = vadd.f32 %v147, %v182
  %v204 = vadd.f32 %v148, %v182
  %v205 = vadd.f32 %v149, %v182
  %v206 = vadd.f32 %v150, %v182
  %v207 = vadd.f32 %v151, %v182
  %v208 = vadd.f32 %v152, %v182
  %v209 = vadd.f32 %v153, %v182
  %v210 = vadd.f32 %v154, %v182
  %v211 = vadd.f32 %v155, %v182
  %v212 = vadd.f32 %v156, %v182
  %v213 = vadd.f32 %v157, %v182
  %v214 = vadd.f32 %v158, %v182
  %v215 = vadd.f32 %v159, %v182
  %v216 = vadd.f32 %v160, %v182
  %v217 = vadd.f32 %v161, %v182
  %v218 = vadd.f32 %v162, %v182
  %v219 = vadd.f32 %v163, %v182
  %v220 = vadd.f32 %v164, %v182
  %v221 = vadd.f32 %v165, %v182
  %v222 = vadd.f32 %v166, %v182
  %v223 = vadd.f32 %v167, %v182
  %v224 = vadd.f32 %v168, %v182
  %v225 = vadd.f32 %v169, %v182
  %v226 = vadd.f32 %v170, %v182
  %v227 = vadd.f32 %v171, %v182
  %v228 = vadd.f32 %v172, %v182
  %v229 = vadd.f32 %v173, %v182
  %v230 = vadd.f32 %v174, %v182
  %v231 = vadd.f32 %v175, %v182
  %v232 = vadd.f32 %v176, %v182
  %v233 = vadd.f32 %v177, %v182
  %v234 = vadd.f32 %v178, %v182
  %v235 = vadd.f32 %v179, %v182
  %v236 = vmax.f32 %v184, 0.0
  %v237 = vmax.f32 %v185, 0.0
  %v238 = vmax.f32 %v186, 0.0
  %v239 = vmax.f32 %v187, 0.0
  %v240 = vmax.f32 %v188, 0.0
  %v241 = vmax.f32 %v189, 0.0
  %v242 = vmax.f32 %v190, 0.0
  %v243 = vmax.f32 %v191, 0.0
  %v244 = vmax.f32 %v192, 0.0
  %v245 = vmax.f32 %v193, 0.0
  %v246 = vmax.f32 %v194, 0.0
  %v247 = vmax.f32 %v195, 0.0
  %v248 = vmax.f32 %v196, 0.0
  %v249 = vmax.f32 %v197, 0.0
  %v250 = vmax.f32 %v198, 0.0
  %v251 = vmax.f32 %v199, 0.0
  %v252 = vmax.f32 %v200, 0.0
  %v253 = vmax.f32 %v201, 0.0
  %v254 = vmax.f32 %v202, 0.0
  %v255 = vmax.f32 %v203, 0.0
  %v256 = vmax.f32 %v204, 0.0
  %v257 = vmax.f32 %v205, 0.0
  %v258 = vmax.f32 %v206, 0.0
  %v259 = vmax.f32 %v207, 0.0
  %v260 = vmax.f32 %v208, 0.0
  %v261 = vmax.f32 %v209, 0.0
  %v262 = vmax.f32 %v210, 0.0
  %v263 = vmax.f32 %v211, 0.0
  %v264 = vmax.f32 %v212, 0.0
  %v265 = vmax.f32 %v213, 0.0
  %v266 = vmax.f32 %v214, 0.0
  %v267 = vmax.f32 %v215, 0.0
  %v268 = vmax.f32 %v216, 0.0
  %v269 = vmax.f32 %v217, 0.0
  %v270 = vmax.f32 %v218, 0.0
  %v271 = vmax.f32 %v219, 0.0
  %v272 = vmax.f32 %v220, 0.0
  %v273 = vmax.f32 %v221, 0.0
  %v274 = vmax.f32 %v222, 0.0
  %v275 = vmax.f32 %v223, 0.0
  %v276 = vmax.f32 %v224, 0.0
  %v277 = vmax.f32 %v225, 0.0
  %v278 = vmax.f32 %v226, 0.0
  %v279 = vmax.f32 %v227, 0.0
  %v280 = vmax.f32 %v228, 0.0
  %v281 = vmax.f32 %v229, 0.0
  %v282 = vmax.f32 %v230, 0.0
  %v283 = vmax.f32 %v231, 0.0
  %v284 = vmax.f32 %v232, 0.0
  %v285 = vmax.f32 %v233, 0.0
  %v286 = vmax.f32 %v234, 0.0
  %v287 = vmax.f32 %v235, 0.0
  %289 = vset.pattern.permute.xlu0 0
  %290 = vperm.xlu0 %289, %v20
  %v291 = vpop.permute.xlu0 %290
  %294 = vset.pattern.permute.xlu0 0
  %295 = vperm.xlu0 %294, %v21
  %v296 = vpop.permute.xlu0 %295
  %299 = vset.pattern.permute.xlu0 0
  %300 = vperm.xlu0 %299, %v22
  %v301 = vpop.permute.xlu0 %300
  %304 = vset.pattern.permute.xlu0 0
  %305 = vperm.xlu0 %304, %v23
  %v306 = vpop.permute.xlu0 %305
  %309 = vset.pattern.permute.xlu0 0
  %310 = vperm.xlu0 %309, %v24
  %v311 = vpop.permute.xlu0 %310
  %314 = vset.pattern.permute.xlu0 0
  %315 = vperm.xlu0 %314, %v25
  %v316 = vpop.permute.xlu0 %315
  %319 = vset.pattern.permute.xlu0 0
  %320 = vperm.xlu0 %319, %v26
  %v321 = vpop.permute.xlu0 %320
  %324 = vset.pattern.permute.xlu0 0
  %325 = vperm.xlu0 %324, %v27
  %v326 = vpop.permute.xlu0 %325
  %329 = vset.pattern.permute.xlu0 0
  %330 = vperm.xlu0 %329, %v28
  %v331 = vpop.permute.xlu0 %330
  %334 = vset.pattern.permute.xlu0 0
  %335 = vperm.xlu0 %334, %v29
  %v336 = vpop.permute.xlu0 %335
  %339 = vset.pattern.permute.xlu0 0
  %340 = vperm.xlu0 %339, %v30
  %v341 = vpop.permute.xlu0 %340
  %344 = vset.pattern.permute.xlu0 0
  %345 = vperm.xlu0 %344, %v31
  %v346 = vpop.permute.xlu0 %345
  %349 = vset.pattern.permute.xlu0 0
  %350 = vperm.xlu0 %349, %v32
  %v351 = vpop.permute.xlu0 %350
  %354 = vset.pattern.permute.xlu0 0
  %355 = vperm.xlu0 %354, %v33
  %v356 = vpop.permute.xlu0 %355
  %359 = vset.pattern.permute.xlu0 0
  %360 = vperm.xlu0 %359, %v34
  %v361 = vpop.permute.xlu0 %360
  %364 = vset.pattern.permute.xlu0 0
  %365 = vperm.xlu0 %364, %v35
  %v366 = vpop.permute.xlu0 %365
  %369 = vset.pattern.permute.xlu0 0
  %370 = vperm.xlu0 %369, %v36
  %v371 = vpop.permute.xlu0 %370
  %374 = vset.pattern.permute.xlu0 0
  %375 = vperm.xlu0 %374, %v37
  %v376 = vpop.permute.xlu0 %375
  %379 = vset.pattern.permute.xlu0 0
  %380 = vperm.xlu0 %379, %v38
  %v381 = vpop.permute.xlu0 %380
  %384 = vset.pattern.permute.xlu0 0
  %385 = vperm.xlu0 %384, %v39
  %v386 = vpop.permute.xlu0 %385
  %389 = vset.pattern.permute.xlu0 0
  %390 = vperm.xlu0 %389, %v40
  %v391 = vpop.permute.xlu0 %390
  %394 = vset.pattern.permute.xlu0 0
  %395 = vperm.xlu0 %394, %v41
  %v396 = vpop.permute.xlu0 %395
  %399 = vset.pattern.permute.xlu0 0
  %400 = vperm.xlu0 %399, %v42
  %v401 = vpop.permute.xlu0 %400
  %404 = vset.pattern.permute.xlu0 0
  %405 = vperm.xlu0 %404, %v43
  %v406 = vpop.permute.xlu0 %405
  %409 = vset.pattern.permute.xlu0 0
  %410 = vperm.xlu0 %409, %v44
  %v411 = vpop.permute.xlu0 %410
  %414 = vset.pattern.permute.xlu0 0
  %415 = vperm.xlu0 %414, %v45
  %v416 = vpop.permute.xlu0 %415
  %419 = vset.pattern.permute.xlu0 0
  %420 = vperm.xlu0 %419, %v46
  %v421 = vpop.permute.xlu0 %420
  %424 = vset.pattern.permute.xlu0 0
  %425 = vperm.xlu0 %424, %v47
  %v426 = vpop.permute.xlu0 %425
  %429 = vset.pattern.permute.xlu0 0
  %430 = vperm.xlu0 %429, %v48
  %v431 = vpop.permute.xlu0 %430
  %434 = vset.pattern.permute.xlu0 0
  %435 = vperm.xlu0 %434, %v49
  %v436 = vpop.permute.xlu0 %435
  %439 = vset.pattern.permute.xlu0 0
  %440 = vperm.xlu0 %439, %v50
  %v441 = vpop.permute.xlu0 %440
  %444 = vset.pattern.permute.xlu0 0
  %445 = vperm.xlu0 %444, %v51
  %v446 = vpop.permute.xlu0 %445
  %449 = vset.pattern.permute.xlu0 0
  %450 = vperm.xlu0 %449, %v52
  %v451 = vpop.permute.xlu0 %450
  %454 = vset.pattern.permute.xlu0 0
  %455 = vperm.xlu0 %454, %v53
  %v456 = vpop.permute.xlu0 %455
  %459 = vset.pattern.permute.xlu0 0
  %460 = vperm.xlu0 %459, %v54
  %v461 = vpop.permute.xlu0 %460
  %464 = vset.pattern.permute.xlu0 0
  %465 = vperm.xlu0 %464, %v55
  %v466 = vpop.permute.xlu0 %465
  %469 = vset.pattern.permute.xlu0 0
  %470 = vperm.xlu0 %469, %v56
  %v471 = vpop.permute.xlu0 %470
  %474 = vset.pattern.permute.xlu0 0
  %475 = vperm.xlu0 %474, %v57
  %v476 = vpop.permute.xlu0 %475
  %479 = vset.pattern.permute.xlu0 0
  %480 = vperm.xlu0 %479, %v58
  %v481 = vpop.permute.xlu0 %480
  %484 = vset.pattern.permute.xlu0 0
  %485 = vperm.xlu0 %484, %v59
  %v486 = vpop.permute.xlu0 %485
  %489 = vset.pattern.permute.xlu0 0
  %490 = vperm.xlu0 %489, %v60
  %v491 = vpop.permute.xlu0 %490
  %494 = vset.pattern.permute.xlu0 0
  %495 = vperm.xlu0 %494, %v61
  %v496 = vpop.permute.xlu0 %495
  %499 = vset.pattern.permute.xlu0 0
  %500 = vperm.xlu0 %499, %v62
  %v501 = vpop.permute.xlu0 %500
  %504 = vset.pattern.permute.xlu0 0
  %505 = vperm.xlu0 %504, %v63
  %v506 = vpop.permute.xlu0 %505
  %509 = vset.pattern.permute.xlu0 0
  %510 = vperm.xlu0 %509, %v64
  %v511 = vpop.permute.xlu0 %510
  %514 = vset.pattern.permute.xlu0 0
  %515 = vperm.xlu0 %514, %v65
  %v516 = vpop.permute.xlu0 %515
  %519 = vset.pattern.permute.xlu0 0
  %520 = vperm.xlu0 %519, %v66
  %v521 = vpop.permute.xlu0 %520
  %524 = vset.pattern.permute.xlu0 0
  %525 = vperm.xlu0 %524, %v67
  %v526 = vpop.permute.xlu0 %525
  %529 = vset.pattern.permute.xlu0 0
  %530 = vperm.xlu0 %529, %v68
  %v531 = vpop.permute.xlu0 %530
  %534 = vset.pattern.permute.xlu0 0
  %535 = vperm.xlu0 %534, %v69
  %v536 = vpop.permute.xlu0 %535
  %539 = vset.pattern.permute.xlu0 0
  %540 = vperm.xlu0 %539, %v70
  %v541 = vpop.permute.xlu0 %540
  %544 = vset.pattern.permute.xlu0 0
  %545 = vperm.xlu0 %544, %v71
  %v546 = vpop.permute.xlu0 %545
  %v548 = vmul.f32 %v236, %v291
  %v549 = vmul.f32 %v237, %v296
  %v550 = vmul.f32 %v238, %v301
  %v551 = vmul.f32 %v239, %v306
  %v552 = vmul.f32 %v240, %v311
  %v553 = vmul.f32 %v241, %v316
  %v554 = vmul.f32 %v242, %v321
  %v555 = vmul.f32 %v243, %v326
  %v556 = vmul.f32 %v244, %v331
  %v557 = vmul.f32 %v245, %v336
  %v558 = vmul.f32 %v246, %v341
  %v559 = vmul.f32 %v247, %v346
  %v560 = vmul.f32 %v248, %v351
  %v561 = vmul.f32 %v249, %v356
  %v562 = vmul.f32 %v250, %v361
  %v563 = vmul.f32 %v251, %v366
  %v564 = vmul.f32 %v252, %v371
  %v565 = vmul.f32 %v253, %v376
  %v566 = vmul.f32 %v254, %v381
  %v567 = vmul.f32 %v255, %v386
  %v568 = vmul.f32 %v256, %v391
  %v569 = vmul.f32 %v257, %v396
  %v570 = vmul.f32 %v258, %v401
  %v571 = vmul.f32 %v259, %v406
  %v572 = vmul.f32 %v260, %v411
  %v573 = vmul.f32 %v261, %v416
  %v574 = vmul.f32 %v262, %v421
  %v575 = vmul.f32 %v263, %v426
  %v576 = vmul.f32 %v264, %v431
  %v577 = vmul.f32 %v265, %v436
  %v578 = vmul.f32 %v266, %v441
  %v579 = vmul.f32 %v267, %v446
  %v580 = vmul.f32 %v268, %v451
  %v581 = vmul.f32 %v269, %v456
  %v582 = vmul.f32 %v270, %v461
  %v583 = vmul.f32 %v271, %v466
  %v584 = vmul.f32 %v272, %v471
  %v585 = vmul.f32 %v273, %v476
  %v586 = vmul.f32 %v274, %v481
  %v587 = vmul.f32 %v275, %v486
  %v588 = vmul.f32 %v276, %v491
  %v589 = vmul.f32 %v277, %v496
  %v590 = vmul.f32 %v278, %v501
  %v591 = vmul.f32 %v279, %v506
  %v592 = vmul.f32 %v280, %v511
  %v593 = vmul.f32 %v281, %v516
  %v594 = vmul.f32 %v282, %v521
  %v595 = vmul.f32 %v283, %v526
  %v596 = vmul.f32 %v284, %v531
  %v597 = vmul.f32 %v285, %v536
  %v598 = vmul.f32 %v286, %v541
  %v599 = vmul.f32 %v287, %v546
  %600 = vst [vmem:[#allocation2] sm:$0xff] %v548
  %601 = vst [vmem:[#allocation2 + $0x8] sm:$0xff] %v549
  %602 = vst [vmem:[#allocation2 + $0x10] sm:$0xff] %v550
  %603 = vst [vmem:[#allocation2 + $0x18] sm:$0xff] %v551
  %604 = vst [vmem:[#allocation2 + $0x20] sm:$0xff] %v552
  %605 = vst [vmem:[#allocation2 + $0x28] sm:$0xff] %v553
  %606 = vst [vmem:[#allocation2 + $0x30] sm:$0xff] %v554
  %607 = vst [vmem:[#allocation2 + $0x38] sm:$0xff] %v555
  %608 = vst [vmem:[#allocation2 + $0x40] sm:$0xff] %v556
  %609 = vst [vmem:[#allocation2 + $0x48] sm:$0xff] %v557
  %610 = vst [vmem:[#allocation2 + $0x50] sm:$0xff] %v558
  %611 = vst [vmem:[#allocation2 + $0x58] sm:$0xff] %v559
  %612 = vst [vmem:[#allocation2 + $0x60] sm:$0xff] %v560
  %613 = vst [vmem:[#allocation2 + $0x68] sm:$0xff] %v561
  %614 = vst [vmem:[#allocation2 + $0x70] sm:$0xff] %v562
  %615 = vst [vmem:[#allocation2 + $0x78] sm:$0xff] %v563
  %616 = vst [vmem:[#allocation2 + $0x80] sm:$0xff] %v564
  %617 = vst [vmem:[#allocation2 + $0x88] sm:$0xff] %v565
  %618 = vst [vmem:[#allocation2 + $0x90] sm:$0xff] %v566
  %619 = vst [vmem:[#allocation2 + $0x98] sm:$0xff] %v567
  %620 = vst [vmem:[#allocation2 + $0xa0] sm:$0xff] %v568
  %621 = vst [vmem:[#allocation2 + $0xa8] sm:$0xff] %v569
  %622 = vst [vmem:[#allocation2 + $0xb0] sm:$0xff] %v570
  %623 = vst [vmem:[#allocation2 + $0xb8] sm:$0xff] %v571
  %624 = vst [vmem:[#allocation2 + $0xc0] sm:$0xff] %v572
  %625 = vst [vmem:[#allocation2 + $0xc8] sm:$0xff] %v573
  %626 = vst [vmem:[#allocation2 + $0xd0] sm:$0xff] %v574
  %627 = vst [vmem:[#allocation2 + $0xd8] sm:$0xff] %v575
  %628 = vst [vmem:[#allocation2 + $0xe0] sm:$0xff] %v576
  %629 = vst [vmem:[#allocation2 + $0xe8] sm:$0xff] %v577
  %630 = vst [vmem:[#allocation2 + $0xf0] sm:$0xff] %v578
  %631 = vst [vmem:[#allocation2 + $0xf8] sm:$0xff] %v579
  %632 = vst [vmem:[#allocation2 + $0x100] sm:$0xff] %v580
  %633 = vst [vmem:[#allocation2 + $0x108] sm:$0xff] %v581
  %634 = vst [vmem:[#allocation2 + $0x110] sm:$0xff] %v582
  %635 = vst [vmem:[#allocation2 + $0x118] sm:$0xff] %v583
  %636 = vst [vmem:[#allocation2 + $0x120] sm:$0xff] %v584
  %637 = vst [vmem:[#allocation2 + $0x128] sm:$0xff] %v585
  %638 = vst [vmem:[#allocation2 + $0x130] sm:$0xff] %v586
  %639 = vst [vmem:[#allocation2 + $0x138] sm:$0xff] %v587
  %640 = vst [vmem:[#allocation2 + $0x140] sm:$0xff] %v588
  %641 = vst [vmem:[#allocation2 + $0x148] sm:$0xff] %v589
  %642 = vst [vmem:[#allocation2 + $0x150] sm:$0xff] %v590
  %643 = vst [vmem:[#allocation2 + $0x158] sm:$0xff] %v591
  %644 = vst [vmem:[#allocation2 + $0x160] sm:$0xff] %v592
  %645 = vst [vmem:[#allocation2 + $0x168] sm:$0xff] %v593
  %646 = vst [vmem:[#allocation2 + $0x170] sm:$0xff] %v594
  %647 = vst [vmem:[#allocation2 + $0x178] sm:$0xff] %v595
  %648 = vst [vmem:[#allocation2 + $0x180] sm:$0xff] %v596
  %649 = vst [vmem:[#allocation2 + $0x188] sm:$0xff] %v597
  %650 = vst [vmem:[#allocation2 + $0x190] sm:$0xff] %v598
  %651 = vst [vmem:[#allocation2 + $0x198] sm:$0xff] %v599
  %v652 = vld [vmem:[#allocation2 + $0x5d] sm:$0xff]
  %v653 = vld [vmem:[#allocation2 + $0x65] sm:$0xff]
  %v654 = vld [vmem:[#allocation2 + $0x6d] sm:$0xff]
  %v655 = vld [vmem:[#allocation2 + $0x75] sm:$0xff]
  %v656 = vld [vmem:[#allocation2 + $0x7d] sm:$0xff]
  %v657 = vld [vmem:[#allocation2 + $0x85] sm:$0xff]
  %v658 = vld [vmem:[#allocation2 + $0x8d] sm:$0xff]
  %v659 = vld [vmem:[#allocation2 + $0x95] sm:$0xff]
  %v660 = vld [vmem:[#allocation2 + $0x9d] sm:$0xff]
  %v661 = vld [vmem:[#allocation2 + $0xa5] sm:$0xff]
  %v662 = vld [vmem:[#allocation2 + $0xad] sm:$0xff]
  %v663 = vld [vmem:[#allocation2 + $0xb5] sm:$0xff]
  %v664 = vld [vmem:[#allocation2 + $0xbd] sm:$0xff]
  %v665 = vld [vmem:[#allocation2 + $0xc5] sm:$0xff]
  %v666 = vld [vmem:[#allocation2 + $0xcd] sm:$0xff]
  %v667 = vld [vmem:[#allocation2 + $0xd5] sm:$0xff]
  %v668 = vld [vmem:[#allocation2 + $0xdd] sm:$0xff]
  %v669 = vld [vmem:[#allocation2 + $0xe5] sm:$0xff]
  %v670 = vld [vmem:[#allocation2 + $0xed] sm:$0xff]
  %v671 = vld [vmem:[#allocation2 + $0xf5] sm:$0xff]
  %v672 = vld [vmem:[#allocation2 + $0xfd] sm:$0xff]
  %v673 = vld [vmem:[#allocation2 + $0x105] sm:$0xff]
  %v674 = vld [vmem:[#allocation2 + $0x10d] sm:$0xff]
  %v675 = vld [vmem:[#allocation2 + $0x115] sm:$0xff]
  %v676 = vld [vmem:[#allocation2 + $0x11d] sm:$0xff]
  %v677 = vld [vmem:[#allocation2 + $0x125] sm:$0xff]
  %v678 = vpack.c.bf16 %v653, %v652
  %v679 = vpack.c.bf16 %v655, %v654
  %v680 = vpack.c.bf16 %v657, %v656
  %v681 = vpack.c.bf16 %v659, %v658
  %v682 = vpack.c.bf16 %v661, %v660
  %v683 = vpack.c.bf16 %v663, %v662
  %v684 = vpack.c.bf16 %v665, %v664
  %v685 = vpack.c.bf16 %v667, %v666
  %v686 = vpack.c.bf16 %v669, %v668
  %v687 = vpack.c.bf16 %v671, %v670
  %v688 = vpack.c.bf16 %v673, %v672
  %v689 = vpack.c.bf16 %v675, %v674
  %v690 = vpack.c.bf16 %v677, %v676
  %v691 = vld [vmem:[%s1] sm:$0xf]
  %v692 = vld [vmem:[%s1 + $0x4] sm:$0xf]
  %v693 = vld [vmem:[%s1 + $0x8] sm:$0xf]
  %v694 = vld [vmem:[%s1 + $0xc] sm:$0xf]
  %v695 = vld [vmem:[%s1 + $0x10] sm:$0xf]
  %v696 = vld [vmem:[%s1 + $0x14] sm:$0xf]
  %v697 = vld [vmem:[%s1 + $0x18] sm:$0xf]
  %v698 = vld [vmem:[%s1 + $0x1c] sm:$0xf]
  %v699 = vld [vmem:[%s1 + $0x20] sm:$0xf]
  %v700 = vld [vmem:[%s1 + $0x24] sm:$0xf]
  %v701 = vld [vmem:[%s1 + $0x28] sm:$0xf]
  %v702 = vld [vmem:[%s1 + $0x2c] sm:$0xf]
  %v703 = vld [vmem:[%s1 + $0x30] sm:$0xf]
  %v704 = vld [vmem:[%s1 + $0x34] sm:$0xf]
  %v705 = vld [vmem:[%s1 + $0x38] sm:$0xf]
  %v706 = vld [vmem:[%s1 + $0x3c] sm:$0xf]
  %v707 = vld [vmem:[#allocation2 + $0x5e] sm:$0xff]
  %v708 = vld [vmem:[#allocation2 + $0x66] sm:$0xff]
  %v709 = vld [vmem:[#allocation2 + $0x6e] sm:$0xff]
  %v710 = vld [vmem:[#allocation2 + $0x76] sm:$0xff]
  %v711 = vld [vmem:[#allocation2 + $0x7e] sm:$0xff]
  %v712 = vld [vmem:[#allocation2 + $0x86] sm:$0xff]
  %v713 = vld [vmem:[#allocation2 + $0x8e] sm:$0xff]
  %v714 = vld [vmem:[#allocation2 + $0x96] sm:$0xff]
  %v715 = vld [vmem:[#allocation2 + $0x9e] sm:$0xff]
  %v716 = vld [vmem:[#allocation2 + $0xa6] sm:$0xff]
  %v717 = vld [vmem:[#allocation2 + $0xae] sm:$0xff]
  %v718 = vld [vmem:[#allocation2 + $0xb6] sm:$0xff]
  %v719 = vld [vmem:[#allocation2 + $0xbe] sm:$0xff]
  %v720 = vld [vmem:[#allocation2 + $0xc6] sm:$0xff]
  %v721 = vld [vmem:[#allocation2 + $0xce] sm:$0xff]
  %v722 = vld [vmem:[#allocation2 + $0xd6] sm:$0xff]
  %v723 = vld [vmem:[#allocation2 + $0xde] sm:$0xff]
  %v724 = vld [vmem:[#allocation2 + $0xe6] sm:$0xff]
  %v725 = vld [vmem:[#allocation2 + $0xee] sm:$0xff]
  %v726 = vld [vmem:[#allocation2 + $0xf6] sm:$0xff]
  %v727 = vld [vmem:[#allocation2 + $0xfe] sm:$0xff]
  %v728 = vld [vmem:[#allocation2 + $0x106] sm:$0xff]
  %v729 = vld [vmem:[#allocation2 + $0x10e] sm:$0xff]
  %v730 = vld [vmem:[#allocation2 + $0x116] sm:$0xff]
  %v731 = vld [vmem:[#allocation2 + $0x11e] sm:$0xff]
  %v732 = vld [vmem:[#allocation2 + $0x126] sm:$0xff]
  %v733 = vpack.c.bf16 %v708, %v707
  %v734 = vpack.c.bf16 %v710, %v709
  %v735 = vpack.c.bf16 %v712, %v711
  %v736 = vpack.c.bf16 %v714, %v713
  %v737 = vpack.c.bf16 %v716, %v715
  %v738 = vpack.c.bf16 %v718, %v717
  %v739 = vpack.c.bf16 %v720, %v719
  %v740 = vpack.c.bf16 %v722, %v721
  %v741 = vpack.c.bf16 %v724, %v723
  %v742 = vpack.c.bf16 %v726, %v725
  %v743 = vpack.c.bf16 %v728, %v727
  %v744 = vpack.c.bf16 %v730, %v729
  %v745 = vpack.c.bf16 %v732, %v731
  %s746 = scalar_lea.vmem %s1, 64
  %v747 = vld [vmem:[%s746] sm:$0xf]
  %v748 = vld [vmem:[%s746 + $0x4] sm:$0xf]
  %v749 = vld [vmem:[%s746 + $0x8] sm:$0xf]
  %v750 = vld [vmem:[%s746 + $0xc] sm:$0xf]
  %v751 = vld [vmem:[%s746 + $0x10] sm:$0xf]
  %v752 = vld [vmem:[%s746 + $0x14] sm:$0xf]
  %v753 = vld [vmem:[%s746 + $0x18] sm:$0xf]
  %v754 = vld [vmem:[%s746 + $0x1c] sm:$0xf]
  %v755 = vld [vmem:[%s746 + $0x20] sm:$0xf]
  %v756 = vld [vmem:[%s746 + $0x24] sm:$0xf]
  %v757 = vld [vmem:[%s746 + $0x28] sm:$0xf]
  %v758 = vld [vmem:[%s746 + $0x2c] sm:$0xf]
  %v759 = vld [vmem:[%s746 + $0x30] sm:$0xf]
  %v760 = vld [vmem:[%s746 + $0x34] sm:$0xf]
  %v761 = vld [vmem:[%s746 + $0x38] sm:$0xf]
  %v762 = vld [vmem:[%s746 + $0x3c] sm:$0xf]
  %v779 = vunpack.c.l.b16 %v747
  %v780 = vunpack.c.l.b16 %v748
  %v781 = vunpack.c.l.b16 %v749
  %v782 = vunpack.c.l.b16 %v750
  %v783 = vunpack.c.l.b16 %v751
  %v784 = vunpack.c.l.b16 %v752
  %v785 = vunpack.c.l.b16 %v753
  %v786 = vunpack.c.l.b16 %v754
  %v787 = vunpack.c.l.b16 %v755
  %v788 = vunpack.c.l.b16 %v756
  %v789 = vunpack.c.l.b16 %v757
  %v790 = vunpack.c.l.b16 %v758
  %v791 = vunpack.c.l.b16 %v759
  %v792 = vunpack.c.l.b16 %v760
  %v793 = vunpack.c.l.b16 %v761
  %v794 = vunpack.c.l.b16 %v762
  %v795 = vpack.c.b16 %v780, %v779
  %v796 = vpack.c.b16 %v782, %v781
  %v797 = vpack.c.b16 %v784, %v783
  %v798 = vpack.c.b16 %v786, %v785
  %v799 = vpack.c.b16 %v788, %v787
  %v800 = vpack.c.b16 %v790, %v789
  %v801 = vpack.c.b16 %v792, %v791
  %v802 = vpack.c.b16 %v794, %v793
  %811 = vmatpush.bf16.msra.mxu0 %v802
  %812 = vmatpush.bf16.msra.mxu0 %v801
  %813 = vmatpush.bf16.msra.mxu0 %v800
  %814 = vmatpush.bf16.msra.mxu0 %v799
  %815 = vmatpush.bf16.msra.mxu0 %v798
  %816 = vmatpush.bf16.msra.mxu0 %v797
  %817 = vmatpush.bf16.msra.mxu0 %v796
  %818 = vmatpush.bf16.msra.mxu0 %v795
  %819 = vmatmul.bf16.gmra.mxu0 %v733
  %v820 = vpop.f32.mrf.mxu0
  %v821 = vadd.f32 0.0, %v820
  %v822 = vpop.f32.mrf.mxu0
  %v823 = vadd.f32 0.0, %v822
  %824 = vmatmul.bf16.gmra.mxu0 %v734
  %v825 = vpop.f32.mrf.mxu0
  %v826 = vadd.f32 0.0, %v825
  %v827 = vpop.f32.mrf.mxu0
  %v828 = vadd.f32 0.0, %v827
  %829 = vmatmul.bf16.gmra.mxu0 %v735
  %v830 = vpop.f32.mrf.mxu0
  %v831 = vadd.f32 0.0, %v830
  %v832 = vpop.f32.mrf.mxu0
  %v833 = vadd.f32 0.0, %v832
  %834 = vmatmul.bf16.gmra.mxu0 %v736
  %v835 = vpop.f32.mrf.mxu0
  %v836 = vadd.f32 0.0, %v835
  %v837 = vpop.f32.mrf.mxu0
  %v838 = vadd.f32 0.0, %v837
  %839 = vmatmul.bf16.gmra.mxu0 %v737
  %v840 = vpop.f32.mrf.mxu0
  %v841 = vadd.f32 0.0, %v840
  %v842 = vpop.f32.mrf.mxu0
  %v843 = vadd.f32 0.0, %v842
  %844 = vmatmul.bf16.gmra.mxu0 %v738
  %v845 = vpop.f32.mrf.mxu0
  %v846 = vadd.f32 0.0, %v845
  %v847 = vpop.f32.mrf.mxu0
  %v848 = vadd.f32 0.0, %v847
  %849 = vmatmul.bf16.gmra.mxu0 %v739
  %v850 = vpop.f32.mrf.mxu0
  %v851 = vadd.f32 0.0, %v850
  %v852 = vpop.f32.mrf.mxu0
  %v853 = vadd.f32 0.0, %v852
  %854 = vmatmul.bf16.gmra.mxu0 %v740
  %v855 = vpop.f32.mrf.mxu0
  %v856 = vadd.f32 0.0, %v855
  %v857 = vpop.f32.mrf.mxu0
  %v858 = vadd.f32 0.0, %v857
  %859 = vmatmul.bf16.gmra.mxu0 %v741
  %v860 = vpop.f32.mrf.mxu0
  %v861 = vadd.f32 0.0, %v860
  %v862 = vpop.f32.mrf.mxu0
  %v863 = vadd.f32 0.0, %v862
  %864 = vmatmul.bf16.gmra.mxu0 %v742
  %v865 = vpop.f32.mrf.mxu0
  %v866 = vadd.f32 0.0, %v865
  %v867 = vpop.f32.mrf.mxu0
  %v868 = vadd.f32 0.0, %v867
  %869 = vmatmul.bf16.gmra.mxu0 %v743
  %v870 = vpop.f32.mrf.mxu0
  %v871 = vadd.f32 0.0, %v870
  %v872 = vpop.f32.mrf.mxu0
  %v873 = vadd.f32 0.0, %v872
  %874 = vmatmul.bf16.gmra.mxu0 %v744
  %v875 = vpop.f32.mrf.mxu0
  %v876 = vadd.f32 0.0, %v875
  %v877 = vpop.f32.mrf.mxu0
  %v878 = vadd.f32 0.0, %v877
  %879 = vmatmul.bf16.gmra.mxu0 %v745
  %v880 = vpop.f32.mrf.mxu0
  %v881 = vadd.f32 0.0, %v880
  %v882 = vpop.f32.mrf.mxu0
  %v883 = vadd.f32 0.0, %v882
  %884 = vdwg.mxu0
  %v901 = vunpack.c.l.b16 %v691
  %v902 = vunpack.c.l.b16 %v692
  %v903 = vunpack.c.l.b16 %v693
  %v904 = vunpack.c.l.b16 %v694
  %v905 = vunpack.c.l.b16 %v695
  %v906 = vunpack.c.l.b16 %v696
  %v907 = vunpack.c.l.b16 %v697
  %v908 = vunpack.c.l.b16 %v698
  %v909 = vunpack.c.l.b16 %v699
  %v910 = vunpack.c.l.b16 %v700
  %v911 = vunpack.c.l.b16 %v701
  %v912 = vunpack.c.l.b16 %v702
  %v913 = vunpack.c.l.b16 %v703
  %v914 = vunpack.c.l.b16 %v704
  %v915 = vunpack.c.l.b16 %v705
  %v916 = vunpack.c.l.b16 %v706
  %v917 = vpack.c.b16 %v902, %v901
  %v918 = vpack.c.b16 %v904, %v903
  %v919 = vpack.c.b16 %v906, %v905
  %v920 = vpack.c.b16 %v908, %v907
  %v921 = vpack.c.b16 %v910, %v909
  %v922 = vpack.c.b16 %v912, %v911
  %v923 = vpack.c.b16 %v914, %v913
  %v924 = vpack.c.b16 %v916, %v915
  %933 = vmatpush.bf16.msra.mxu0 %v924
  %934 = vmatpush.bf16.msra.mxu0 %v923
  %935 = vmatpush.bf16.msra.mxu0 %v922
  %936 = vmatpush.bf16.msra.mxu0 %v921
  %937 = vmatpush.bf16.msra.mxu0 %v920
  %938 = vmatpush.bf16.msra.mxu0 %v919
  %939 = vmatpush.bf16.msra.mxu0 %v918
  %940 = vmatpush.bf16.msra.mxu0 %v917
  %941 = vmatmul.bf16.gmra.mxu0 %v678
  %v942 = vpop.f32.mrf.mxu0
  %v943 = vadd.f32 %v821, %v942
  %v944 = vpop.f32.mrf.mxu0
  %v945 = vadd.f32 %v823, %v944
  %946 = vmatmul.bf16.gmra.mxu0 %v679
  %v947 = vpop.f32.mrf.mxu0
  %v948 = vadd.f32 %v826, %v947
  %v949 = vpop.f32.mrf.mxu0
  %v950 = vadd.f32 %v828, %v949
  %951 = vmatmul.bf16.gmra.mxu0 %v680
  %v952 = vpop.f32.mrf.mxu0
  %v953 = vadd.f32 %v831, %v952
  %v954 = vpop.f32.mrf.mxu0
  %v955 = vadd.f32 %v833, %v954
  %956 = vmatmul.bf16.gmra.mxu0 %v681
  %v957 = vpop.f32.mrf.mxu0
  %v958 = vadd.f32 %v836, %v957
  %v959 = vpop.f32.mrf.mxu0
  %v960 = vadd.f32 %v838, %v959
  %961 = vmatmul.bf16.gmra.mxu0 %v682
  %v962 = vpop.f32.mrf.mxu0
  %v963 = vadd.f32 %v841, %v962
  %v964 = vpop.f32.mrf.mxu0
  %v965 = vadd.f32 %v843, %v964
  %966 = vmatmul.bf16.gmra.mxu0 %v683
  %v967 = vpop.f32.mrf.mxu0
  %v968 = vadd.f32 %v846, %v967
  %v969 = vpop.f32.mrf.mxu0
  %v970 = vadd.f32 %v848, %v969
  %971 = vmatmul.bf16.gmra.mxu0 %v684
  %v972 = vpop.f32.mrf.mxu0
  %v973 = vadd.f32 %v851, %v972
  %v974 = vpop.f32.mrf.mxu0
  %v975 = vadd.f32 %v853, %v974
  %976 = vmatmul.bf16.gmra.mxu0 %v685
  %v977 = vpop.f32.mrf.mxu0
  %v978 = vadd.f32 %v856, %v977
  %v979 = vpop.f32.mrf.mxu0
  %v980 = vadd.f32 %v858, %v979
  %981 = vmatmul.bf16.gmra.mxu0 %v686
  %v982 = vpop.f32.mrf.mxu0
  %v983 = vadd.f32 %v861, %v982
  %v984 = vpop.f32.mrf.mxu0
  %v985 = vadd.f32 %v863, %v984
  %986 = vmatmul.bf16.gmra.mxu0 %v687
  %v987 = vpop.f32.mrf.mxu0
  %v988 = vadd.f32 %v866, %v987
  %v989 = vpop.f32.mrf.mxu0
  %v990 = vadd.f32 %v868, %v989
  %991 = vmatmul.bf16.gmra.mxu0 %v688
  %v992 = vpop.f32.mrf.mxu0
  %v993 = vadd.f32 %v871, %v992
  %v994 = vpop.f32.mrf.mxu0
  %v995 = vadd.f32 %v873, %v994
  %996 = vmatmul.bf16.gmra.mxu0 %v689
  %v997 = vpop.f32.mrf.mxu0
  %v998 = vadd.f32 %v876, %v997
  %v999 = vpop.f32.mrf.mxu0
  %v1000 = vadd.f32 %v878, %v999
  %1001 = vmatmul.bf16.gmra.mxu0 %v690
  %v1002 = vpop.f32.mrf.mxu0
  %v1003 = vadd.f32 %v881, %v1002
  %v1004 = vpop.f32.mrf.mxu0
  %v1005 = vadd.f32 %v883, %v1004
  %1006 = vdwg.mxu0
  %v1007 = vld [vmem:[#allocation2 + $0x5f] sm:$0xff]
  %v1008 = vld [vmem:[#allocation2 + $0x67] sm:$0xff]
  %v1009 = vld [vmem:[#allocation2 + $0x6f] sm:$0xff]
  %v1010 = vld [vmem:[#allocation2 + $0x77] sm:$0xff]
  %v1011 = vld [vmem:[#allocation2 + $0x7f] sm:$0xff]
  %v1012 = vld [vmem:[#allocation2 + $0x87] sm:$0xff]
  %v1013 = vld [vmem:[#allocation2 + $0x8f] sm:$0xff]
  %v1014 = vld [vmem:[#allocation2 + $0x97] sm:$0xff]
  %v1015 = vld [vmem:[#allocation2 + $0x9f] sm:$0xff]
  %v1016 = vld [vmem:[#allocation2 + $0xa7] sm:$0xff]
  %v1017 = vld [vmem:[#allocation2 + $0xaf] sm:$0xff]
  %v1018 = vld [vmem:[#allocation2 + $0xb7] sm:$0xff]
  %v1019 = vld [vmem:[#allocation2 + $0xbf] sm:$0xff]
  %v1020 = vld [vmem:[#allocation2 + $0xc7] sm:$0xff]
  %v1021 = vld [vmem:[#allocation2 + $0xcf] sm:$0xff]
  %v1022 = vld [vmem:[#allocation2 + $0xd7] sm:$0xff]
  %v1023 = vld [vmem:[#allocation2 + $0xdf] sm:$0xff]
  %v1024 = vld [vmem:[#allocation2 + $0xe7] sm:$0xff]
  %v1025 = vld [vmem:[#allocation2 + $0xef] sm:$0xff]
  %v1026 = vld [vmem:[#allocation2 + $0xf7] sm:$0xff]
  %v1027 = vld [vmem:[#allocation2 + $0xff] sm:$0xff]
  %v1028 = vld [vmem:[#allocation2 + $0x107] sm:$0xff]
  %v1029 = vld [vmem:[#allocation2 + $0x10f] sm:$0xff]
  %v1030 = vld [vmem:[#allocation2 + $0x117] sm:$0xff]
  %v1031 = vld [vmem:[#allocation2 + $0x11f] sm:$0xff]
  %v1032 = vld [vmem:[#allocation2 + $0x127] sm:$0xff]
  %v1033 = vpack.c.bf16 %v1008, %v1007
  %v1034 = vpack.c.bf16 %v1010, %v1009
  %v1035 = vpack.c.bf16 %v1012, %v1011
  %v1036 = vpack.c.bf16 %v1014, %v1013
  %v1037 = vpack.c.bf16 %v1016, %v1015
  %v1038 = vpack.c.bf16 %v1018, %v1017
  %v1039 = vpack.c.bf16 %v1020, %v1019
  %v1040 = vpack.c.bf16 %v1022, %v1021
  %v1041 = vpack.c.bf16 %v1024, %v1023
  %v1042 = vpack.c.bf16 %v1026, %v1025
  %v1043 = vpack.c.bf16 %v1028, %v1027
  %v1044 = vpack.c.bf16 %v1030, %v1029
  %v1045 = vpack.c.bf16 %v1032, %v1031
  %s1046 = scalar_lea.vmem %s1, 128
  %v1047 = vld [vmem:[%s1046] sm:$0xf]
  %v1048 = vld [vmem:[%s1046 + $0x4] sm:$0xf]
  %v1049 = vld [vmem:[%s1046 + $0x8] sm:$0xf]
  %v1050 = vld [vmem:[%s1046 + $0xc] sm:$0xf]
  %v1051 = vld [vmem:[%s1046 + $0x10] sm:$0xf]
  %v1052 = vld [vmem:[%s1046 + $0x14] sm:$0xf]
  %v1053 = vld [vmem:[%s1046 + $0x18] sm:$0xf]
  %v1054 = vld [vmem:[%s1046 + $0x1c] sm:$0xf]
  %v1055 = vld [vmem:[%s1046 + $0x20] sm:$0xf]
  %v1056 = vld [vmem:[%s1046 + $0x24] sm:$0xf]
  %v1057 = vld [vmem:[%s1046 + $0x28] sm:$0xf]
  %v1058 = vld [vmem:[%s1046 + $0x2c] sm:$0xf]
  %v1059 = vld [vmem:[%s1046 + $0x30] sm:$0xf]
  %v1060 = vld [vmem:[%s1046 + $0x34] sm:$0xf]
  %v1061 = vld [vmem:[%s1046 + $0x38] sm:$0xf]
  %v1062 = vld [vmem:[%s1046 + $0x3c] sm:$0xf]
  %v1079 = vunpack.c.l.b16 %v1047
  %v1080 = vunpack.c.l.b16 %v1048
  %v1081 = vunpack.c.l.b16 %v1049
  %v1082 = vunpack.c.l.b16 %v1050
  %v1083 = vunpack.c.l.b16 %v1051
  %v1084 = vunpack.c.l.b16 %v1052
  %v1085 = vunpack.c.l.b16 %v1053
  %v1086 = vunpack.c.l.b16 %v1054
  %v1087 = vunpack.c.l.b16 %v1055
  %v1088 = vunpack.c.l.b16 %v1056
  %v1089 = vunpack.c.l.b16 %v1057
  %v1090 = vunpack.c.l.b16 %v1058
  %v1091 = vunpack.c.l.b16 %v1059
  %v1092 = vunpack.c.l.b16 %v1060
  %v1093 = vunpack.c.l.b16 %v1061
  %v1094 = vunpack.c.l.b16 %v1062
  %v1095 = vpack.c.b16 %v1080, %v1079
  %v1096 = vpack.c.b16 %v1082, %v1081
  %v1097 = vpack.c.b16 %v1084, %v1083
  %v1098 = vpack.c.b16 %v1086, %v1085
  %v1099 = vpack.c.b16 %v1088, %v1087
  %v1100 = vpack.c.b16 %v1090, %v1089
  %v1101 = vpack.c.b16 %v1092, %v1091
  %v1102 = vpack.c.b16 %v1094, %v1093
  %1111 = vmatpush.bf16.msra.mxu0 %v1102
  %1112 = vmatpush.bf16.msra.mxu0 %v1101
  %1113 = vmatpush.bf16.msra.mxu0 %v1100
  %1114 = vmatpush.bf16.msra.mxu0 %v1099
  %1115 = vmatpush.bf16.msra.mxu0 %v1098
  %1116 = vmatpush.bf16.msra.mxu0 %v1097
  %1117 = vmatpush.bf16.msra.mxu0 %v1096
  %1118 = vmatpush.bf16.msra.mxu0 %v1095
  %1119 = vmatmul.bf16.gmra.mxu0 %v1033
  %v1120 = vpop.f32.mrf.mxu0
  %v1121 = vadd.f32 0.0, %v1120
  %v1122 = vpop.f32.mrf.mxu0
  %v1123 = vadd.f32 0.0, %v1122
  %1124 = vmatmul.bf16.gmra.mxu0 %v1034
  %v1125 = vpop.f32.mrf.mxu0
  %v1126 = vadd.f32 0.0, %v1125
  %v1127 = vpop.f32.mrf.mxu0
  %v1128 = vadd.f32 0.0, %v1127
  %1129 = vmatmul.bf16.gmra.mxu0 %v1035
  %v1130 = vpop.f32.mrf.mxu0
  %v1131 = vadd.f32 0.0, %v1130
  %v1132 = vpop.f32.mrf.mxu0
  %v1133 = vadd.f32 0.0, %v1132
  %1134 = vmatmul.bf16.gmra.mxu0 %v1036
  %v1135 = vpop.f32.mrf.mxu0
  %v1136 = vadd.f32 0.0, %v1135
  %v1137 = vpop.f32.mrf.mxu0
  %v1138 = vadd.f32 0.0, %v1137
  %1139 = vmatmul.bf16.gmra.mxu0 %v1037
  %v1140 = vpop.f32.mrf.mxu0
  %v1141 = vadd.f32 0.0, %v1140
  %v1142 = vpop.f32.mrf.mxu0
  %v1143 = vadd.f32 0.0, %v1142
  %1144 = vmatmul.bf16.gmra.mxu0 %v1038
  %v1145 = vpop.f32.mrf.mxu0
  %v1146 = vadd.f32 0.0, %v1145
  %v1147 = vpop.f32.mrf.mxu0
  %v1148 = vadd.f32 0.0, %v1147
  %1149 = vmatmul.bf16.gmra.mxu0 %v1039
  %v1150 = vpop.f32.mrf.mxu0
  %v1151 = vadd.f32 0.0, %v1150
  %v1152 = vpop.f32.mrf.mxu0
  %v1153 = vadd.f32 0.0, %v1152
  %1154 = vmatmul.bf16.gmra.mxu0 %v1040
  %v1155 = vpop.f32.mrf.mxu0
  %v1156 = vadd.f32 0.0, %v1155
  %v1157 = vpop.f32.mrf.mxu0
  %v1158 = vadd.f32 0.0, %v1157
  %1159 = vmatmul.bf16.gmra.mxu0 %v1041
  %v1160 = vpop.f32.mrf.mxu0
  %v1161 = vadd.f32 0.0, %v1160
  %v1162 = vpop.f32.mrf.mxu0
  %v1163 = vadd.f32 0.0, %v1162
  %1164 = vmatmul.bf16.gmra.mxu0 %v1042
  %v1165 = vpop.f32.mrf.mxu0
  %v1166 = vadd.f32 0.0, %v1165
  %v1167 = vpop.f32.mrf.mxu0
  %v1168 = vadd.f32 0.0, %v1167
  %1169 = vmatmul.bf16.gmra.mxu0 %v1043
  %v1170 = vpop.f32.mrf.mxu0
  %v1171 = vadd.f32 0.0, %v1170
  %v1172 = vpop.f32.mrf.mxu0
  %v1173 = vadd.f32 0.0, %v1172
  %1174 = vmatmul.bf16.gmra.mxu0 %v1044
  %v1175 = vpop.f32.mrf.mxu0
  %v1176 = vadd.f32 0.0, %v1175
  %v1177 = vpop.f32.mrf.mxu0
  %v1178 = vadd.f32 0.0, %v1177
  %1179 = vmatmul.bf16.gmra.mxu0 %v1045
  %v1180 = vpop.f32.mrf.mxu0
  %v1181 = vadd.f32 0.0, %v1180
  %v1182 = vpop.f32.mrf.mxu0
  %v1183 = vadd.f32 0.0, %v1182
  %1184 = vdwg.mxu0
  %v1185 = vadd.f32 %v943, %v1121
  %v1186 = vadd.f32 %v945, %v1123
  %v1187 = vadd.f32 %v948, %v1126
  %v1188 = vadd.f32 %v950, %v1128
  %v1189 = vadd.f32 %v953, %v1131
  %v1190 = vadd.f32 %v955, %v1133
  %v1191 = vadd.f32 %v958, %v1136
  %v1192 = vadd.f32 %v960, %v1138
  %v1193 = vadd.f32 %v963, %v1141
  %v1194 = vadd.f32 %v965, %v1143
  %v1195 = vadd.f32 %v968, %v1146
  %v1196 = vadd.f32 %v970, %v1148
  %v1197 = vadd.f32 %v973, %v1151
  %v1198 = vadd.f32 %v975, %v1153
  %v1199 = vadd.f32 %v978, %v1156
  %v1200 = vadd.f32 %v980, %v1158
  %v1201 = vadd.f32 %v983, %v1161
  %v1202 = vadd.f32 %v985, %v1163
  %v1203 = vadd.f32 %v988, %v1166
  %v1204 = vadd.f32 %v990, %v1168
  %v1205 = vadd.f32 %v993, %v1171
  %v1206 = vadd.f32 %v995, %v1173
  %v1207 = vadd.f32 %v998, %v1176
  %v1208 = vadd.f32 %v1000, %v1178
  %v1209 = vadd.f32 %v1003, %v1181
  %v1210 = vadd.f32 %v1005, %v1183
  %v1211 = vld [vmem:[#allocation2 + $0x67] sm:$0xff]
  %v1212 = vld [vmem:[#allocation2 + $0x6f] sm:$0xff]
  %v1213 = vld [vmem:[#allocation2 + $0x77] sm:$0xff]
  %v1214 = vld [vmem:[#allocation2 + $0x7f] sm:$0xff]
  %v1215 = vld [vmem:[#allocation2 + $0x87] sm:$0xff]
  %v1216 = vld [vmem:[#allocation2 + $0x8f] sm:$0xff]
  %v1217 = vld [vmem:[#allocation2 + $0x97] sm:$0xff]
  %v1218 = vld [vmem:[#allocation2 + $0x9f] sm:$0xff]
  %v1219 = vld [vmem:[#allocation2 + $0xa7] sm:$0xff]
  %v1220 = vld [vmem:[#allocation2 + $0xaf] sm:$0xff]
  %v1221 = vld [vmem:[#allocation2 + $0xb7] sm:$0xff]
  %v1222 = vld [vmem:[#allocation2 + $0xbf] sm:$0xff]
  %v1223 = vld [vmem:[#allocation2 + $0xc7] sm:$0xff]
  %v1224 = vld [vmem:[#allocation2 + $0xcf] sm:$0xff]
  %v1225 = vld [vmem:[#allocation2 + $0xd7] sm:$0xff]
  %v1226 = vld [vmem:[#allocation2 + $0xdf] sm:$0xff]
  %v1227 = vld [vmem:[#allocation2 + $0xe7] sm:$0xff]
  %v1228 = vld [vmem:[#allocation2 + $0xef] sm:$0xff]
  %v1229 = vld [vmem:[#allocation2 + $0xf7] sm:$0xff]
  %v1230 = vld [vmem:[#allocation2 + $0xff] sm:$0xff]
  %v1231 = vld [vmem:[#allocation2 + $0x107] sm:$0xff]
  %v1232 = vld [vmem:[#allocation2 + $0x10f] sm:$0xff]
  %v1233 = vld [vmem:[#allocation2 + $0x117] sm:$0xff]
  %v1234 = vld [vmem:[#allocation2 + $0x11f] sm:$0xff]
  %v1235 = vld [vmem:[#allocation2 + $0x127] sm:$0xff]
  %v1236 = vld [vmem:[#allocation2 + $0x12f] sm:$0xff]
  %v1237 = vpack.c.bf16 %v1212, %v1211
  %v1238 = vpack.c.bf16 %v1214, %v1213
  %v1239 = vpack.c.bf16 %v1216, %v1215
  %v1240 = vpack.c.bf16 %v1218, %v1217
  %v1241 = vpack.c.bf16 %v1220, %v1219
  %v1242 = vpack.c.bf16 %v1222, %v1221
  %v1243 = vpack.c.bf16 %v1224, %v1223
  %v1244 = vpack.c.bf16 %v1226, %v1225
  %v1245 = vpack.c.bf16 %v1228, %v1227
  %v1246 = vpack.c.bf16 %v1230, %v1229
  %v1247 = vpack.c.bf16 %v1232, %v1231
  %v1248 = vpack.c.bf16 %v1234, %v1233
  %v1249 = vpack.c.bf16 %v1236, %v1235
  %s1250 = scalar_lea.vmem %s1, 192
  %v1251 = vld [vmem:[%s1250] sm:$0xf]
  %v1252 = vld [vmem:[%s1250 + $0x4] sm:$0xf]
  %v1253 = vld [vmem:[%s1250 + $0x8] sm:$0xf]
  %v1254 = vld [vmem:[%s1250 + $0xc] sm:$0xf]
  %v1255 = vld [vmem:[%s1250 + $0x10] sm:$0xf]
  %v1256 = vld [vmem:[%s1250 + $0x14] sm:$0xf]
  %v1257 = vld [vmem:[%s1250 + $0x18] sm:$0xf]
  %v1258 = vld [vmem:[%s1250 + $0x1c] sm:$0xf]
  %v1259 = vld [vmem:[%s1250 + $0x20] sm:$0xf]
  %v1260 = vld [vmem:[%s1250 + $0x24] sm:$0xf]
  %v1261 = vld [vmem:[%s1250 + $0x28] sm:$0xf]
  %v1262 = vld [vmem:[%s1250 + $0x2c] sm:$0xf]
  %v1263 = vld [vmem:[%s1250 + $0x30] sm:$0xf]
  %v1264 = vld [vmem:[%s1250 + $0x34] sm:$0xf]
  %v1265 = vld [vmem:[%s1250 + $0x38] sm:$0xf]
  %v1266 = vld [vmem:[%s1250 + $0x3c] sm:$0xf]
  %v1283 = vunpack.c.l.b16 %v1251
  %v1284 = vunpack.c.l.b16 %v1252
  %v1285 = vunpack.c.l.b16 %v1253
  %v1286 = vunpack.c.l.b16 %v1254
  %v1287 = vunpack.c.l.b16 %v1255
  %v1288 = vunpack.c.l.b16 %v1256
  %v1289 = vunpack.c.l.b16 %v1257
  %v1290 = vunpack.c.l.b16 %v1258
  %v1291 = vunpack.c.l.b16 %v1259
  %v1292 = vunpack.c.l.b16 %v1260
  %v1293 = vunpack.c.l.b16 %v1261
  %v1294 = vunpack.c.l.b16 %v1262
  %v1295 = vunpack.c.l.b16 %v1263
  %v1296 = vunpack.c.l.b16 %v1264
  %v1297 = vunpack.c.l.b16 %v1265
  %v1298 = vunpack.c.l.b16 %v1266
  %v1299 = vpack.c.b16 %v1284, %v1283
  %v1300 = vpack.c.b16 %v1286, %v1285
  %v1301 = vpack.c.b16 %v1288, %v1287
  %v1302 = vpack.c.b16 %v1290, %v1289
  %v1303 = vpack.c.b16 %v1292, %v1291
  %v1304 = vpack.c.b16 %v1294, %v1293
  %v1305 = vpack.c.b16 %v1296, %v1295
  %v1306 = vpack.c.b16 %v1298, %v1297
  %1315 = vmatpush.bf16.msra.mxu0 %v1306
  %1316 = vmatpush.bf16.msra.mxu0 %v1305
  %1317 = vmatpush.bf16.msra.mxu0 %v1304
  %1318 = vmatpush.bf16.msra.mxu0 %v1303
  %1319 = vmatpush.bf16.msra.mxu0 %v1302
  %1320 = vmatpush.bf16.msra.mxu0 %v1301
  %1321 = vmatpush.bf16.msra.mxu0 %v1300
  %1322 = vmatpush.bf16.msra.mxu0 %v1299
  %1323 = vmatmul.bf16.gmra.mxu0 %v1237
  %v1324 = vpop.f32.mrf.mxu0
  %v1325 = vadd.f32 0.0, %v1324
  %v1326 = vpop.f32.mrf.mxu0
  %v1327 = vadd.f32 0.0, %v1326
  %1328 = vmatmul.bf16.gmra.mxu0 %v1238
  %v1329 = vpop.f32.mrf.mxu0
  %v1330 = vadd.f32 0.0, %v1329
  %v1331 = vpop.f32.mrf.mxu0
  %v1332 = vadd.f32 0.0, %v1331
  %1333 = vmatmul.bf16.gmra.mxu0 %v1239
  %v1334 = vpop.f32.mrf.mxu0
  %v1335 = vadd.f32 0.0, %v1334
  %v1336 = vpop.f32.mrf.mxu0
  %v1337 = vadd.f32 0.0, %v1336
  %1338 = vmatmul.bf16.gmra.mxu0 %v1240
  %v1339 = vpop.f32.mrf.mxu0
  %v1340 = vadd.f32 0.0, %v1339
  %v1341 = vpop.f32.mrf.mxu0
  %v1342 = vadd.f32 0.0, %v1341
  %1343 = vmatmul.bf16.gmra.mxu0 %v1241
  %v1344 = vpop.f32.mrf.mxu0
  %v1345 = vadd.f32 0.0, %v1344
  %v1346 = vpop.f32.mrf.mxu0
  %v1347 = vadd.f32 0.0, %v1346
  %1348 = vmatmul.bf16.gmra.mxu0 %v1242
  %v1349 = vpop.f32.mrf.mxu0
  %v1350 = vadd.f32 0.0, %v1349
  %v1351 = vpop.f32.mrf.mxu0
  %v1352 = vadd.f32 0.0, %v1351
  %1353 = vmatmul.bf16.gmra.mxu0 %v1243
  %v1354 = vpop.f32.mrf.mxu0
  %v1355 = vadd.f32 0.0, %v1354
  %v1356 = vpop.f32.mrf.mxu0
  %v1357 = vadd.f32 0.0, %v1356
  %1358 = vmatmul.bf16.gmra.mxu0 %v1244
  %v1359 = vpop.f32.mrf.mxu0
  %v1360 = vadd.f32 0.0, %v1359
  %v1361 = vpop.f32.mrf.mxu0
  %v1362 = vadd.f32 0.0, %v1361
  %1363 = vmatmul.bf16.gmra.mxu0 %v1245
  %v1364 = vpop.f32.mrf.mxu0
  %v1365 = vadd.f32 0.0, %v1364
  %v1366 = vpop.f32.mrf.mxu0
  %v1367 = vadd.f32 0.0, %v1366
  %1368 = vmatmul.bf16.gmra.mxu0 %v1246
  %v1369 = vpop.f32.mrf.mxu0
  %v1370 = vadd.f32 0.0, %v1369
  %v1371 = vpop.f32.mrf.mxu0
  %v1372 = vadd.f32 0.0, %v1371
  %1373 = vmatmul.bf16.gmra.mxu0 %v1247
  %v1374 = vpop.f32.mrf.mxu0
  %v1375 = vadd.f32 0.0, %v1374
  %v1376 = vpop.f32.mrf.mxu0
  %v1377 = vadd.f32 0.0, %v1376
  %1378 = vmatmul.bf16.gmra.mxu0 %v1248
  %v1379 = vpop.f32.mrf.mxu0
  %v1380 = vadd.f32 0.0, %v1379
  %v1381 = vpop.f32.mrf.mxu0
  %v1382 = vadd.f32 0.0, %v1381
  %1383 = vmatmul.bf16.gmra.mxu0 %v1249
  %v1384 = vpop.f32.mrf.mxu0
  %v1385 = vadd.f32 0.0, %v1384
  %v1386 = vpop.f32.mrf.mxu0
  %v1387 = vadd.f32 0.0, %v1386
  %1388 = vdwg.mxu0
  %v1389 = vadd.f32 %v1185, %v1325
  %v1390 = vadd.f32 %v1186, %v1327
  %v1391 = vadd.f32 %v1187, %v1330
  %v1392 = vadd.f32 %v1188, %v1332
  %v1393 = vadd.f32 %v1189, %v1335
  %v1394 = vadd.f32 %v1190, %v1337
  %v1395 = vadd.f32 %v1191, %v1340
  %v1396 = vadd.f32 %v1192, %v1342
  %v1397 = vadd.f32 %v1193, %v1345
  %v1398 = vadd.f32 %v1194, %v1347
  %v1399 = vadd.f32 %v1195, %v1350
  %v1400 = vadd.f32 %v1196, %v1352
  %v1401 = vadd.f32 %v1197, %v1355
  %v1402 = vadd.f32 %v1198, %v1357
  %v1403 = vadd.f32 %v1199, %v1360
  %v1404 = vadd.f32 %v1200, %v1362
  %v1405 = vadd.f32 %v1201, %v1365
  %v1406 = vadd.f32 %v1202, %v1367
  %v1407 = vadd.f32 %v1203, %v1370
  %v1408 = vadd.f32 %v1204, %v1372
  %v1409 = vadd.f32 %v1205, %v1375
  %v1410 = vadd.f32 %v1206, %v1377
  %v1411 = vadd.f32 %v1207, %v1380
  %v1412 = vadd.f32 %v1208, %v1382
  %v1413 = vadd.f32 %v1209, %v1385
  %v1414 = vadd.f32 %v1210, %v1387
  %v1415 = vld [vmem:[#allocation2 + $0x68] sm:$0xff]
  %v1416 = vld [vmem:[#allocation2 + $0x70] sm:$0xff]
  %v1417 = vld [vmem:[#allocation2 + $0x78] sm:$0xff]
  %v1418 = vld [vmem:[#allocation2 + $0x80] sm:$0xff]
  %v1419 = vld [vmem:[#allocation2 + $0x88] sm:$0xff]
  %v1420 = vld [vmem:[#allocation2 + $0x90] sm:$0xff]
  %v1421 = vld [vmem:[#allocation2 + $0x98] sm:$0xff]
  %v1422 = vld [vmem:[#allocation2 + $0xa0] sm:$0xff]
  %v1423 = vld [vmem:[#allocation2 + $0xa8] sm:$0xff]
  %v1424 = vld [vmem:[#allocation2 + $0xb0] sm:$0xff]
  %v1425 = vld [vmem:[#allocation2 + $0xb8] sm:$0xff]
  %v1426 = vld [vmem:[#allocation2 + $0xc0] sm:$0xff]
  %v1427 = vld [vmem:[#allocation2 + $0xc8] sm:$0xff]
  %v1428 = vld [vmem:[#allocation2 + $0xd0] sm:$0xff]
  %v1429 = vld [vmem:[#allocation2 + $0xd8] sm:$0xff]
  %v1430 = vld [vmem:[#allocation2 + $0xe0] sm:$0xff]
  %v1431 = vld [vmem:[#allocation2 + $0xe8] sm:$0xff]
  %v1432 = vld [vmem:[#allocation2 + $0xf0] sm:$0xff]
  %v1433 = vld [vmem:[#allocation2 + $0xf8] sm:$0xff]
  %v1434 = vld [vmem:[#allocation2 + $0x100] sm:$0xff]
  %v1435 = vld [vmem:[#allocation2 + $0x108] sm:$0xff]
  %v1436 = vld [vmem:[#allocation2 + $0x110] sm:$0xff]
  %v1437 = vld [vmem:[#allocation2 + $0x118] sm:$0xff]
  %v1438 = vld [vmem:[#allocation2 + $0x120] sm:$0xff]
  %v1439 = vld [vmem:[#allocation2 + $0x128] sm:$0xff]
  %v1440 = vld [vmem:[#allocation2 + $0x130] sm:$0xff]
  %v1441 = vpack.c.bf16 %v1416, %v1415
  %v1442 = vpack.c.bf16 %v1418, %v1417
  %v1443 = vpack.c.bf16 %v1420, %v1419
  %v1444 = vpack.c.bf16 %v1422, %v1421
  %v1445 = vpack.c.bf16 %v1424, %v1423
  %v1446 = vpack.c.bf16 %v1426, %v1425
  %v1447 = vpack.c.bf16 %v1428, %v1427
  %v1448 = vpack.c.bf16 %v1430, %v1429
  %v1449 = vpack.c.bf16 %v1432, %v1431
  %v1450 = vpack.c.bf16 %v1434, %v1433
  %v1451 = vpack.c.bf16 %v1436, %v1435
  %v1452 = vpack.c.bf16 %v1438, %v1437
  %v1453 = vpack.c.bf16 %v1440, %v1439
  %s1454 = scalar_lea.vmem %s1, 256
  %v1455 = vld [vmem:[%s1454] sm:$0xf]
  %v1456 = vld [vmem:[%s1454 + $0x4] sm:$0xf]
  %v1457 = vld [vmem:[%s1454 + $0x8] sm:$0xf]
  %v1458 = vld [vmem:[%s1454 + $0xc] sm:$0xf]
  %v1459 = vld [vmem:[%s1454 + $0x10] sm:$0xf]
  %v1460 = vld [vmem:[%s1454 + $0x14] sm:$0xf]
  %v1461 = vld [vmem:[%s1454 + $0x18] sm:$0xf]
  %v1462 = vld [vmem:[%s1454 + $0x1c] sm:$0xf]
  %v1463 = vld [vmem:[%s1454 + $0x20] sm:$0xf]
  %v1464 = vld [vmem:[%s1454 + $0x24] sm:$0xf]
  %v1465 = vld [vmem:[%s1454 + $0x28] sm:$0xf]
  %v1466 = vld [vmem:[%s1454 + $0x2c] sm:$0xf]
  %v1467 = vld [vmem:[%s1454 + $0x30] sm:$0xf]
  %v1468 = vld [vmem:[%s1454 + $0x34] sm:$0xf]
  %v1469 = vld [vmem:[%s1454 + $0x38] sm:$0xf]
  %v1470 = vld [vmem:[%s1454 + $0x3c] sm:$0xf]
  %v1487 = vunpack.c.l.b16 %v1455
  %v1488 = vunpack.c.l.b16 %v1456
  %v1489 = vunpack.c.l.b16 %v1457
  %v1490 = vunpack.c.l.b16 %v1458
  %v1491 = vunpack.c.l.b16 %v1459
  %v1492 = vunpack.c.l.b16 %v1460
  %v1493 = vunpack.c.l.b16 %v1461
  %v1494 = vunpack.c.l.b16 %v1462
  %v1495 = vunpack.c.l.b16 %v1463
  %v1496 = vunpack.c.l.b16 %v1464
  %v1497 = vunpack.c.l.b16 %v1465
  %v1498 = vunpack.c.l.b16 %v1466
  %v1499 = vunpack.c.l.b16 %v1467
  %v1500 = vunpack.c.l.b16 %v1468
  %v1501 = vunpack.c.l.b16 %v1469
  %v1502 = vunpack.c.l.b16 %v1470
  %v1503 = vpack.c.b16 %v1488, %v1487
  %v1504 = vpack.c.b16 %v1490, %v1489
  %v1505 = vpack.c.b16 %v1492, %v1491
  %v1506 = vpack.c.b16 %v1494, %v1493
  %v1507 = vpack.c.b16 %v1496, %v1495
  %v1508 = vpack.c.b16 %v1498, %v1497
  %v1509 = vpack.c.b16 %v1500, %v1499
  %v1510 = vpack.c.b16 %v1502, %v1501
  %1519 = vmatpush.bf16.msra.mxu0 %v1510
  %1520 = vmatpush.bf16.msra.mxu0 %v1509
  %1521 = vmatpush.bf16.msra.mxu0 %v1508
  %1522 = vmatpush.bf16.msra.mxu0 %v1507
  %1523 = vmatpush.bf16.msra.mxu0 %v1506
  %1524 = vmatpush.bf16.msra.mxu0 %v1505
  %1525 = vmatpush.bf16.msra.mxu0 %v1504
  %1526 = vmatpush.bf16.msra.mxu0 %v1503
  %1527 = vmatmul.bf16.gmra.mxu0 %v1441
  %v1528 = vpop.f32.mrf.mxu0
  %v1529 = vadd.f32 0.0, %v1528
  %v1530 = vpop.f32.mrf.mxu0
  %v1531 = vadd.f32 0.0, %v1530
  %1532 = vmatmul.bf16.gmra.mxu0 %v1442
  %v1533 = vpop.f32.mrf.mxu0
  %v1534 = vadd.f32 0.0, %v1533
  %v1535 = vpop.f32.mrf.mxu0
  %v1536 = vadd.f32 0.0, %v1535
  %1537 = vmatmul.bf16.gmra.mxu0 %v1443
  %v1538 = vpop.f32.mrf.mxu0
  %v1539 = vadd.f32 0.0, %v1538
  %v1540 = vpop.f32.mrf.mxu0
  %v1541 = vadd.f32 0.0, %v1540
  %1542 = vmatmul.bf16.gmra.mxu0 %v1444
  %v1543 = vpop.f32.mrf.mxu0
  %v1544 = vadd.f32 0.0, %v1543
  %v1545 = vpop.f32.mrf.mxu0
  %v1546 = vadd.f32 0.0, %v1545
  %1547 = vmatmul.bf16.gmra.mxu0 %v1445
  %v1548 = vpop.f32.mrf.mxu0
  %v1549 = vadd.f32 0.0, %v1548
  %v1550 = vpop.f32.mrf.mxu0
  %v1551 = vadd.f32 0.0, %v1550
  %1552 = vmatmul.bf16.gmra.mxu0 %v1446
  %v1553 = vpop.f32.mrf.mxu0
  %v1554 = vadd.f32 0.0, %v1553
  %v1555 = vpop.f32.mrf.mxu0
  %v1556 = vadd.f32 0.0, %v1555
  %1557 = vmatmul.bf16.gmra.mxu0 %v1447
  %v1558 = vpop.f32.mrf.mxu0
  %v1559 = vadd.f32 0.0, %v1558
  %v1560 = vpop.f32.mrf.mxu0
  %v1561 = vadd.f32 0.0, %v1560
  %1562 = vmatmul.bf16.gmra.mxu0 %v1448
  %v1563 = vpop.f32.mrf.mxu0
  %v1564 = vadd.f32 0.0, %v1563
  %v1565 = vpop.f32.mrf.mxu0
  %v1566 = vadd.f32 0.0, %v1565
  %1567 = vmatmul.bf16.gmra.mxu0 %v1449
  %v1568 = vpop.f32.mrf.mxu0
  %v1569 = vadd.f32 0.0, %v1568
  %v1570 = vpop.f32.mrf.mxu0
  %v1571 = vadd.f32 0.0, %v1570
  %1572 = vmatmul.bf16.gmra.mxu0 %v1450
  %v1573 = vpop.f32.mrf.mxu0
  %v1574 = vadd.f32 0.0, %v1573
  %v1575 = vpop.f32.mrf.mxu0
  %v1576 = vadd.f32 0.0, %v1575
  %1577 = vmatmul.bf16.gmra.mxu0 %v1451
  %v1578 = vpop.f32.mrf.mxu0
  %v1579 = vadd.f32 0.0, %v1578
  %v1580 = vpop.f32.mrf.mxu0
  %v1581 = vadd.f32 0.0, %v1580
  %1582 = vmatmul.bf16.gmra.mxu0 %v1452
  %v1583 = vpop.f32.mrf.mxu0
  %v1584 = vadd.f32 0.0, %v1583
  %v1585 = vpop.f32.mrf.mxu0
  %v1586 = vadd.f32 0.0, %v1585
  %1587 = vmatmul.bf16.gmra.mxu0 %v1453
  %v1588 = vpop.f32.mrf.mxu0
  %v1589 = vadd.f32 0.0, %v1588
  %v1590 = vpop.f32.mrf.mxu0
  %v1591 = vadd.f32 0.0, %v1590
  %1592 = vdwg.mxu0
  %v1593 = vadd.f32 %v1389, %v1529
  %v1594 = vadd.f32 %v1390, %v1531
  %v1595 = vadd.f32 %v1391, %v1534
  %v1596 = vadd.f32 %v1392, %v1536
  %v1597 = vadd.f32 %v1393, %v1539
  %v1598 = vadd.f32 %v1394, %v1541
  %v1599 = vadd.f32 %v1395, %v1544
  %v1600 = vadd.f32 %v1396, %v1546
  %v1601 = vadd.f32 %v1397, %v1549
  %v1602 = vadd.f32 %v1398, %v1551
  %v1603 = vadd.f32 %v1399, %v1554
  %v1604 = vadd.f32 %v1400, %v1556
  %v1605 = vadd.f32 %v1401, %v1559
  %v1606 = vadd.f32 %v1402, %v1561
  %v1607 = vadd.f32 %v1403, %v1564
  %v1608 = vadd.f32 %v1404, %v1566
  %v1609 = vadd.f32 %v1405, %v1569
  %v1610 = vadd.f32 %v1406, %v1571
  %v1611 = vadd.f32 %v1407, %v1574
  %v1612 = vadd.f32 %v1408, %v1576
  %v1613 = vadd.f32 %v1409, %v1579
  %v1614 = vadd.f32 %v1410, %v1581
  %v1615 = vadd.f32 %v1411, %v1584
  %v1616 = vadd.f32 %v1412, %v1586
  %v1617 = vadd.f32 %v1413, %v1589
  %v1618 = vadd.f32 %v1414, %v1591
  %v1619 = vld [vmem:[#allocation2 + $0x69] sm:$0xff]
  %v1620 = vld [vmem:[#allocation2 + $0x71] sm:$0xff]
  %v1621 = vld [vmem:[#allocation2 + $0x79] sm:$0xff]
  %v1622 = vld [vmem:[#allocation2 + $0x81] sm:$0xff]
  %v1623 = vld [vmem:[#allocation2 + $0x89] sm:$0xff]
  %v1624 = vld [vmem:[#allocation2 + $0x91] sm:$0xff]
  %v1625 = vld [vmem:[#allocation2 + $0x99] sm:$0xff]
  %v1626 = vld [vmem:[#allocation2 + $0xa1] sm:$0xff]
  %v1627 = vld [vmem:[#allocation2 + $0xa9] sm:$0xff]
  %v1628 = vld [vmem:[#allocation2 + $0xb1] sm:$0xff]
  %v1629 = vld [vmem:[#allocation2 + $0xb9] sm:$0xff]
  %v1630 = vld [vmem:[#allocation2 + $0xc1] sm:$0xff]
  %v1631 = vld [vmem:[#allocation2 + $0xc9] sm:$0xff]
  %v1632 = vld [vmem:[#allocation2 + $0xd1] sm:$0xff]
  %v1633 = vld [vmem:[#allocation2 + $0xd9] sm:$0xff]
  %v1634 = vld [vmem:[#allocation2 + $0xe1] sm:$0xff]
  %v1635 = vld [vmem:[#allocation2 + $0xe9] sm:$0xff]
  %v1636 = vld [vmem:[#allocation2 + $0xf1] sm:$0xff]
  %v1637 = vld [vmem:[#allocation2 + $0xf9] sm:$0xff]
  %v1638 = vld [vmem:[#allocation2 + $0x101] sm:$0xff]
  %v1639 = vld [vmem:[#allocation2 + $0x109] sm:$0xff]
  %v1640 = vld [vmem:[#allocation2 + $0x111] sm:$0xff]
  %v1641 = vld [vmem:[#allocation2 + $0x119] sm:$0xff]
  %v1642 = vld [vmem:[#allocation2 + $0x121] sm:$0xff]
  %v1643 = vld [vmem:[#allocation2 + $0x129] sm:$0xff]
  %v1644 = vld [vmem:[#allocation2 + $0x131] sm:$0xff]
  %v1645 = vpack.c.bf16 %v1620, %v1619
  %v1646 = vpack.c.bf16 %v1622, %v1621
  %v1647 = vpack.c.bf16 %v1624, %v1623
  %v1648 = vpack.c.bf16 %v1626, %v1625
  %v1649 = vpack.c.bf16 %v1628, %v1627
  %v1650 = vpack.c.bf16 %v1630, %v1629
  %v1651 = vpack.c.bf16 %v1632, %v1631
  %v1652 = vpack.c.bf16 %v1634, %v1633
  %v1653 = vpack.c.bf16 %v1636, %v1635
  %v1654 = vpack.c.bf16 %v1638, %v1637
  %v1655 = vpack.c.bf16 %v1640, %v1639
  %v1656 = vpack.c.bf16 %v1642, %v1641
  %v1657 = vpack.c.bf16 %v1644, %v1643
  %s1658 = scalar_lea.vmem %s1, 320
  %v1659 = vld [vmem:[%s1658] sm:$0xf]
  %v1660 = vld [vmem:[%s1658 + $0x4] sm:$0xf]
  %v1661 = vld [vmem:[%s1658 + $0x8] sm:$0xf]
  %v1662 = vld [vmem:[%s1658 + $0xc] sm:$0xf]
  %v1663 = vld [vmem:[%s1658 + $0x10] sm:$0xf]
  %v1664 = vld [vmem:[%s1658 + $0x14] sm:$0xf]
  %v1665 = vld [vmem:[%s1658 + $0x18] sm:$0xf]
  %v1666 = vld [vmem:[%s1658 + $0x1c] sm:$0xf]
  %v1667 = vld [vmem:[%s1658 + $0x20] sm:$0xf]
  %v1668 = vld [vmem:[%s1658 + $0x24] sm:$0xf]
  %v1669 = vld [vmem:[%s1658 + $0x28] sm:$0xf]
  %v1670 = vld [vmem:[%s1658 + $0x2c] sm:$0xf]
  %v1671 = vld [vmem:[%s1658 + $0x30] sm:$0xf]
  %v1672 = vld [vmem:[%s1658 + $0x34] sm:$0xf]
  %v1673 = vld [vmem:[%s1658 + $0x38] sm:$0xf]
  %v1674 = vld [vmem:[%s1658 + $0x3c] sm:$0xf]
  %v1691 = vunpack.c.l.b16 %v1659
  %v1692 = vunpack.c.l.b16 %v1660
  %v1693 = vunpack.c.l.b16 %v1661
  %v1694 = vunpack.c.l.b16 %v1662
  %v1695 = vunpack.c.l.b16 %v1663
  %v1696 = vunpack.c.l.b16 %v1664
  %v1697 = vunpack.c.l.b16 %v1665
  %v1698 = vunpack.c.l.b16 %v1666
  %v1699 = vunpack.c.l.b16 %v1667
  %v1700 = vunpack.c.l.b16 %v1668
  %v1701 = vunpack.c.l.b16 %v1669
  %v1702 = vunpack.c.l.b16 %v1670
  %v1703 = vunpack.c.l.b16 %v1671
  %v1704 = vunpack.c.l.b16 %v1672
  %v1705 = vunpack.c.l.b16 %v1673
  %v1706 = vunpack.c.l.b16 %v1674
  %v1707 = vpack.c.b16 %v1692, %v1691
  %v1708 = vpack.c.b16 %v1694, %v1693
  %v1709 = vpack.c.b16 %v1696, %v1695
  %v1710 = vpack.c.b16 %v1698, %v1697
  %v1711 = vpack.c.b16 %v1700, %v1699
  %v1712 = vpack.c.b16 %v1702, %v1701
  %v1713 = vpack.c.b16 %v1704, %v1703
  %v1714 = vpack.c.b16 %v1706, %v1705
  %1723 = vmatpush.bf16.msra.mxu0 %v1714
  %1724 = vmatpush.bf16.msra.mxu0 %v1713
  %1725 = vmatpush.bf16.msra.mxu0 %v1712
  %1726 = vmatpush.bf16.msra.mxu0 %v1711
  %1727 = vmatpush.bf16.msra.mxu0 %v1710
  %1728 = vmatpush.bf16.msra.mxu0 %v1709
  %1729 = vmatpush.bf16.msra.mxu0 %v1708
  %1730 = vmatpush.bf16.msra.mxu0 %v1707
  %1731 = vmatmul.bf16.gmra.mxu0 %v1645
  %v1732 = vpop.f32.mrf.mxu0
  %v1733 = vadd.f32 0.0, %v1732
  %v1734 = vpop.f32.mrf.mxu0
  %v1735 = vadd.f32 0.0, %v1734
  %1736 = vmatmul.bf16.gmra.mxu0 %v1646
  %v1737 = vpop.f32.mrf.mxu0
  %v1738 = vadd.f32 0.0, %v1737
  %v1739 = vpop.f32.mrf.mxu0
  %v1740 = vadd.f32 0.0, %v1739
  %1741 = vmatmul.bf16.gmra.mxu0 %v1647
  %v1742 = vpop.f32.mrf.mxu0
  %v1743 = vadd.f32 0.0, %v1742
  %v1744 = vpop.f32.mrf.mxu0
  %v1745 = vadd.f32 0.0, %v1744
  %1746 = vmatmul.bf16.gmra.mxu0 %v1648
  %v1747 = vpop.f32.mrf.mxu0
  %v1748 = vadd.f32 0.0, %v1747
  %v1749 = vpop.f32.mrf.mxu0
  %v1750 = vadd.f32 0.0, %v1749
  %1751 = vmatmul.bf16.gmra.mxu0 %v1649
  %v1752 = vpop.f32.mrf.mxu0
  %v1753 = vadd.f32 0.0, %v1752
  %v1754 = vpop.f32.mrf.mxu0
  %v1755 = vadd.f32 0.0, %v1754
  %1756 = vmatmul.bf16.gmra.mxu0 %v1650
  %v1757 = vpop.f32.mrf.mxu0
  %v1758 = vadd.f32 0.0, %v1757
  %v1759 = vpop.f32.mrf.mxu0
  %v1760 = vadd.f32 0.0, %v1759
  %1761 = vmatmul.bf16.gmra.mxu0 %v1651
  %v1762 = vpop.f32.mrf.mxu0
  %v1763 = vadd.f32 0.0, %v1762
  %v1764 = vpop.f32.mrf.mxu0
  %v1765 = vadd.f32 0.0, %v1764
  %1766 = vmatmul.bf16.gmra.mxu0 %v1652
  %v1767 = vpop.f32.mrf.mxu0
  %v1768 = vadd.f32 0.0, %v1767
  %v1769 = vpop.f32.mrf.mxu0
  %v1770 = vadd.f32 0.0, %v1769
  %1771 = vmatmul.bf16.gmra.mxu0 %v1653
  %v1772 = vpop.f32.mrf.mxu0
  %v1773 = vadd.f32 0.0, %v1772
  %v1774 = vpop.f32.mrf.mxu0
  %v1775 = vadd.f32 0.0, %v1774
  %1776 = vmatmul.bf16.gmra.mxu0 %v1654
  %v1777 = vpop.f32.mrf.mxu0
  %v1778 = vadd.f32 0.0, %v1777
  %v1779 = vpop.f32.mrf.mxu0
  %v1780 = vadd.f32 0.0, %v1779
  %1781 = vmatmul.bf16.gmra.mxu0 %v1655
  %v1782 = vpop.f32.mrf.mxu0
  %v1783 = vadd.f32 0.0, %v1782
  %v1784 = vpop.f32.mrf.mxu0
  %v1785 = vadd.f32 0.0, %v1784
  %1786 = vmatmul.bf16.gmra.mxu0 %v1656
  %v1787 = vpop.f32.mrf.mxu0
  %v1788 = vadd.f32 0.0, %v1787
  %v1789 = vpop.f32.mrf.mxu0
  %v1790 = vadd.f32 0.0, %v1789
  %1791 = vmatmul.bf16.gmra.mxu0 %v1657
  %v1792 = vpop.f32.mrf.mxu0
  %v1793 = vadd.f32 0.0, %v1792
  %v1794 = vpop.f32.mrf.mxu0
  %v1795 = vadd.f32 0.0, %v1794
  %1796 = vdwg.mxu0
  %v1797 = vadd.f32 %v1593, %v1733
  %v1798 = vadd.f32 %v1594, %v1735
  %v1799 = vadd.f32 %v1595, %v1738
  %v1800 = vadd.f32 %v1596, %v1740
  %v1801 = vadd.f32 %v1597, %v1743
  %v1802 = vadd.f32 %v1598, %v1745
  %v1803 = vadd.f32 %v1599, %v1748
  %v1804 = vadd.f32 %v1600, %v1750
  %v1805 = vadd.f32 %v1601, %v1753
  %v1806 = vadd.f32 %v1602, %v1755
  %v1807 = vadd.f32 %v1603, %v1758
  %v1808 = vadd.f32 %v1604, %v1760
  %v1809 = vadd.f32 %v1605, %v1763
  %v1810 = vadd.f32 %v1606, %v1765
  %v1811 = vadd.f32 %v1607, %v1768
  %v1812 = vadd.f32 %v1608, %v1770
  %v1813 = vadd.f32 %v1609, %v1773
  %v1814 = vadd.f32 %v1610, %v1775
  %v1815 = vadd.f32 %v1611, %v1778
  %v1816 = vadd.f32 %v1612, %v1780
  %v1817 = vadd.f32 %v1613, %v1783
  %v1818 = vadd.f32 %v1614, %v1785
  %v1819 = vadd.f32 %v1615, %v1788
  %v1820 = vadd.f32 %v1616, %v1790
  %v1821 = vadd.f32 %v1617, %v1793
  %v1822 = vadd.f32 %v1618, %v1795
  %v1823 = vld [vmem:[#allocation2 + $0x71] sm:$0xff]
  %v1824 = vld [vmem:[#allocation2 + $0x79] sm:$0xff]
  %v1825 = vld [vmem:[#allocation2 + $0x81] sm:$0xff]
  %v1826 = vld [vmem:[#allocation2 + $0x89] sm:$0xff]
  %v1827 = vld [vmem:[#allocation2 + $0x91] sm:$0xff]
  %v1828 = vld [vmem:[#allocation2 + $0x99] sm:$0xff]
  %v1829 = vld [vmem:[#allocation2 + $0xa1] sm:$0xff]
  %v1830 = vld [vmem:[#allocation2 + $0xa9] sm:$0xff]
  %v1831 = vld [vmem:[#allocation2 + $0xb1] sm:$0xff]
  %v1832 = vld [vmem:[#allocation2 + $0xb9] sm:$0xff]
  %v1833 = vld [vmem:[#allocation2 + $0xc1] sm:$0xff]
  %v1834 = vld [vmem:[#allocation2 + $0xc9] sm:$0xff]
  %v1835 = vld [vmem:[#allocation2 + $0xd1] sm:$0xff]
  %v1836 = vld [vmem:[#allocation2 + $0xd9] sm:$0xff]
  %v1837 = vld [vmem:[#allocation2 + $0xe1] sm:$0xff]
  %v1838 = vld [vmem:[#allocation2 + $0xe9] sm:$0xff]
  %v1839 = vld [vmem:[#allocation2 + $0xf1] sm:$0xff]
  %v1840 = vld [vmem:[#allocation2 + $0xf9] sm:$0xff]
  %v1841 = vld [vmem:[#allocation2 + $0x101] sm:$0xff]
  %v1842 = vld [vmem:[#allocation2 + $0x109] sm:$0xff]
  %v1843 = vld [vmem:[#allocation2 + $0x111] sm:$0xff]
  %v1844 = vld [vmem:[#allocation2 + $0x119] sm:$0xff]
  %v1845 = vld [vmem:[#allocation2 + $0x121] sm:$0xff]
  %v1846 = vld [vmem:[#allocation2 + $0x129] sm:$0xff]
  %v1847 = vld [vmem:[#allocation2 + $0x131] sm:$0xff]
  %v1848 = vld [vmem:[#allocation2 + $0x139] sm:$0xff]
  %v1849 = vpack.c.bf16 %v1824, %v1823
  %v1850 = vpack.c.bf16 %v1826, %v1825
  %v1851 = vpack.c.bf16 %v1828, %v1827
  %v1852 = vpack.c.bf16 %v1830, %v1829
  %v1853 = vpack.c.bf16 %v1832, %v1831
  %v1854 = vpack.c.bf16 %v1834, %v1833
  %v1855 = vpack.c.bf16 %v1836, %v1835
  %v1856 = vpack.c.bf16 %v1838, %v1837
  %v1857 = vpack.c.bf16 %v1840, %v1839
  %v1858 = vpack.c.bf16 %v1842, %v1841
  %v1859 = vpack.c.bf16 %v1844, %v1843
  %v1860 = vpack.c.bf16 %v1846, %v1845
  %v1861 = vpack.c.bf16 %v1848, %v1847
  %s1862 = scalar_lea.vmem %s1, 384
  %v1863 = vld [vmem:[%s1862] sm:$0xf]
  %v1864 = vld [vmem:[%s1862 + $0x4] sm:$0xf]
  %v1865 = vld [vmem:[%s1862 + $0x8] sm:$0xf]
  %v1866 = vld [vmem:[%s1862 + $0xc] sm:$0xf]
  %v1867 = vld [vmem:[%s1862 + $0x10] sm:$0xf]
  %v1868 = vld [vmem:[%s1862 + $0x14] sm:$0xf]
  %v1869 = vld [vmem:[%s1862 + $0x18] sm:$0xf]
  %v1870 = vld [vmem:[%s1862 + $0x1c] sm:$0xf]
  %v1871 = vld [vmem:[%s1862 + $0x20] sm:$0xf]
  %v1872 = vld [vmem:[%s1862 + $0x24] sm:$0xf]
  %v1873 = vld [vmem:[%s1862 + $0x28] sm:$0xf]
  %v1874 = vld [vmem:[%s1862 + $0x2c] sm:$0xf]
  %v1875 = vld [vmem:[%s1862 + $0x30] sm:$0xf]
  %v1876 = vld [vmem:[%s1862 + $0x34] sm:$0xf]
  %v1877 = vld [vmem:[%s1862 + $0x38] sm:$0xf]
  %v1878 = vld [vmem:[%s1862 + $0x3c] sm:$0xf]
  %v1895 = vunpack.c.l.b16 %v1863
  %v1896 = vunpack.c.l.b16 %v1864
  %v1897 = vunpack.c.l.b16 %v1865
  %v1898 = vunpack.c.l.b16 %v1866
  %v1899 = vunpack.c.l.b16 %v1867
  %v1900 = vunpack.c.l.b16 %v1868
  %v1901 = vunpack.c.l.b16 %v1869
  %v1902 = vunpack.c.l.b16 %v1870
  %v1903 = vunpack.c.l.b16 %v1871
  %v1904 = vunpack.c.l.b16 %v1872
  %v1905 = vunpack.c.l.b16 %v1873
  %v1906 = vunpack.c.l.b16 %v1874
  %v1907 = vunpack.c.l.b16 %v1875
  %v1908 = vunpack.c.l.b16 %v1876
  %v1909 = vunpack.c.l.b16 %v1877
  %v1910 = vunpack.c.l.b16 %v1878
  %v1911 = vpack.c.b16 %v1896, %v1895
  %v1912 = vpack.c.b16 %v1898, %v1897
  %v1913 = vpack.c.b16 %v1900, %v1899
  %v1914 = vpack.c.b16 %v1902, %v1901
  %v1915 = vpack.c.b16 %v1904, %v1903
  %v1916 = vpack.c.b16 %v1906, %v1905
  %v1917 = vpack.c.b16 %v1908, %v1907
  %v1918 = vpack.c.b16 %v1910, %v1909
  %1927 = vmatpush.bf16.msra.mxu0 %v1918
  %1928 = vmatpush.bf16.msra.mxu0 %v1917
  %1929 = vmatpush.bf16.msra.mxu0 %v1916
  %1930 = vmatpush.bf16.msra.mxu0 %v1915
  %1931 = vmatpush.bf16.msra.mxu0 %v1914
  %1932 = vmatpush.bf16.msra.mxu0 %v1913
  %1933 = vmatpush.bf16.msra.mxu0 %v1912
  %1934 = vmatpush.bf16.msra.mxu0 %v1911
  %1935 = vmatmul.bf16.gmra.mxu0 %v1849
  %v1936 = vpop.f32.mrf.mxu0
  %v1937 = vadd.f32 0.0, %v1936
  %v1938 = vpop.f32.mrf.mxu0
  %v1939 = vadd.f32 0.0, %v1938
  %1940 = vmatmul.bf16.gmra.mxu0 %v1850
  %v1941 = vpop.f32.mrf.mxu0
  %v1942 = vadd.f32 0.0, %v1941
  %v1943 = vpop.f32.mrf.mxu0
  %v1944 = vadd.f32 0.0, %v1943
  %1945 = vmatmul.bf16.gmra.mxu0 %v1851
  %v1946 = vpop.f32.mrf.mxu0
  %v1947 = vadd.f32 0.0, %v1946
  %v1948 = vpop.f32.mrf.mxu0
  %v1949 = vadd.f32 0.0, %v1948
  %1950 = vmatmul.bf16.gmra.mxu0 %v1852
  %v1951 = vpop.f32.mrf.mxu0
  %v1952 = vadd.f32 0.0, %v1951
  %v1953 = vpop.f32.mrf.mxu0
  %v1954 = vadd.f32 0.0, %v1953
  %1955 = vmatmul.bf16.gmra.mxu0 %v1853
  %v1956 = vpop.f32.mrf.mxu0
  %v1957 = vadd.f32 0.0, %v1956
  %v1958 = vpop.f32.mrf.mxu0
  %v1959 = vadd.f32 0.0, %v1958
  %1960 = vmatmul.bf16.gmra.mxu0 %v1854
  %v1961 = vpop.f32.mrf.mxu0
  %v1962 = vadd.f32 0.0, %v1961
  %v1963 = vpop.f32.mrf.mxu0
  %v1964 = vadd.f32 0.0, %v1963
  %1965 = vmatmul.bf16.gmra.mxu0 %v1855
  %v1966 = vpop.f32.mrf.mxu0
  %v1967 = vadd.f32 0.0, %v1966
  %v1968 = vpop.f32.mrf.mxu0
  %v1969 = vadd.f32 0.0, %v1968
  %1970 = vmatmul.bf16.gmra.mxu0 %v1856
  %v1971 = vpop.f32.mrf.mxu0
  %v1972 = vadd.f32 0.0, %v1971
  %v1973 = vpop.f32.mrf.mxu0
  %v1974 = vadd.f32 0.0, %v1973
  %1975 = vmatmul.bf16.gmra.mxu0 %v1857
  %v1976 = vpop.f32.mrf.mxu0
  %v1977 = vadd.f32 0.0, %v1976
  %v1978 = vpop.f32.mrf.mxu0
  %v1979 = vadd.f32 0.0, %v1978
  %1980 = vmatmul.bf16.gmra.mxu0 %v1858
  %v1981 = vpop.f32.mrf.mxu0
  %v1982 = vadd.f32 0.0, %v1981
  %v1983 = vpop.f32.mrf.mxu0
  %v1984 = vadd.f32 0.0, %v1983
  %1985 = vmatmul.bf16.gmra.mxu0 %v1859
  %v1986 = vpop.f32.mrf.mxu0
  %v1987 = vadd.f32 0.0, %v1986
  %v1988 = vpop.f32.mrf.mxu0
  %v1989 = vadd.f32 0.0, %v1988
  %1990 = vmatmul.bf16.gmra.mxu0 %v1860
  %v1991 = vpop.f32.mrf.mxu0
  %v1992 = vadd.f32 0.0, %v1991
  %v1993 = vpop.f32.mrf.mxu0
  %v1994 = vadd.f32 0.0, %v1993
  %1995 = vmatmul.bf16.gmra.mxu0 %v1861
  %v1996 = vpop.f32.mrf.mxu0
  %v1997 = vadd.f32 0.0, %v1996
  %v1998 = vpop.f32.mrf.mxu0
  %v1999 = vadd.f32 0.0, %v1998
  %2000 = vdwg.mxu0
  %v2001 = vadd.f32 %v1797, %v1937
  %v2002 = vadd.f32 %v1798, %v1939
  %v2003 = vadd.f32 %v1799, %v1942
  %v2004 = vadd.f32 %v1800, %v1944
  %v2005 = vadd.f32 %v1801, %v1947
  %v2006 = vadd.f32 %v1802, %v1949
  %v2007 = vadd.f32 %v1803, %v1952
  %v2008 = vadd.f32 %v1804, %v1954
  %v2009 = vadd.f32 %v1805, %v1957
  %v2010 = vadd.f32 %v1806, %v1959
  %v2011 = vadd.f32 %v1807, %v1962
  %v2012 = vadd.f32 %v1808, %v1964
  %v2013 = vadd.f32 %v1809, %v1967
  %v2014 = vadd.f32 %v1810, %v1969
  %v2015 = vadd.f32 %v1811, %v1972
  %v2016 = vadd.f32 %v1812, %v1974
  %v2017 = vadd.f32 %v1813, %v1977
  %v2018 = vadd.f32 %v1814, %v1979
  %v2019 = vadd.f32 %v1815, %v1982
  %v2020 = vadd.f32 %v1816, %v1984
  %v2021 = vadd.f32 %v1817, %v1987
  %v2022 = vadd.f32 %v1818, %v1989
  %v2023 = vadd.f32 %v1819, %v1992
  %v2024 = vadd.f32 %v1820, %v1994
  %v2025 = vadd.f32 %v1821, %v1997
  %v2026 = vadd.f32 %v1822, %v1999
  %v2027 = vld [vmem:[#allocation2 + $0x72] sm:$0xff]
  %v2028 = vld [vmem:[#allocation2 + $0x7a] sm:$0xff]
  %v2029 = vld [vmem:[#allocation2 + $0x82] sm:$0xff]
  %v2030 = vld [vmem:[#allocation2 + $0x8a] sm:$0xff]
  %v2031 = vld [vmem:[#allocation2 + $0x92] sm:$0xff]
  %v2032 = vld [vmem:[#allocation2 + $0x9a] sm:$0xff]
  %v2033 = vld [vmem:[#allocation2 + $0xa2] sm:$0xff]
  %v2034 = vld [vmem:[#allocation2 + $0xaa] sm:$0xff]
  %v2035 = vld [vmem:[#allocation2 + $0xb2] sm:$0xff]
  %v2036 = vld [vmem:[#allocation2 + $0xba] sm:$0xff]
  %v2037 = vld [vmem:[#allocation2 + $0xc2] sm:$0xff]
  %v2038 = vld [vmem:[#allocation2 + $0xca] sm:$0xff]
  %v2039 = vld [vmem:[#allocation2 + $0xd2] sm:$0xff]
  %v2040 = vld [vmem:[#allocation2 + $0xda] sm:$0xff]
  %v2041 = vld [vmem:[#allocation2 + $0xe2] sm:$0xff]
  %v2042 = vld [vmem:[#allocation2 + $0xea] sm:$0xff]
  %v2043 = vld [vmem:[#allocation2 + $0xf2] sm:$0xff]
  %v2044 = vld [vmem:[#allocation2 + $0xfa] sm:$0xff]
  %v2045 = vld [vmem:[#allocation2 + $0x102] sm:$0xff]
  %v2046 = vld [vmem:[#allocation2 + $0x10a] sm:$0xff]
  %v2047 = vld [vmem:[#allocation2 + $0x112] sm:$0xff]
  %v2048 = vld [vmem:[#allocation2 + $0x11a] sm:$0xff]
  %v2049 = vld [vmem:[#allocation2 + $0x122] sm:$0xff]
  %v2050 = vld [vmem:[#allocation2 + $0x12a] sm:$0xff]
  %v2051 = vld [vmem:[#allocation2 + $0x132] sm:$0xff]
  %v2052 = vld [vmem:[#allocation2 + $0x13a] sm:$0xff]
  %v2053 = vpack.c.bf16 %v2028, %v2027
  %v2054 = vpack.c.bf16 %v2030, %v2029
  %v2055 = vpack.c.bf16 %v2032, %v2031
  %v2056 = vpack.c.bf16 %v2034, %v2033
  %v2057 = vpack.c.bf16 %v2036, %v2035
  %v2058 = vpack.c.bf16 %v2038, %v2037
  %v2059 = vpack.c.bf16 %v2040, %v2039
  %v2060 = vpack.c.bf16 %v2042, %v2041
  %v2061 = vpack.c.bf16 %v2044, %v2043
  %v2062 = vpack.c.bf16 %v2046, %v2045
  %v2063 = vpack.c.bf16 %v2048, %v2047
  %v2064 = vpack.c.bf16 %v2050, %v2049
  %v2065 = vpack.c.bf16 %v2052, %v2051
  %s2066 = scalar_lea.vmem %s1, 448
  %v2067 = vld [vmem:[%s2066] sm:$0xf]
  %v2068 = vld [vmem:[%s2066 + $0x4] sm:$0xf]
  %v2069 = vld [vmem:[%s2066 + $0x8] sm:$0xf]
  %v2070 = vld [vmem:[%s2066 + $0xc] sm:$0xf]
  %v2071 = vld [vmem:[%s2066 + $0x10] sm:$0xf]
  %v2072 = vld [vmem:[%s2066 + $0x14] sm:$0xf]
  %v2073 = vld [vmem:[%s2066 + $0x18] sm:$0xf]
  %v2074 = vld [vmem:[%s2066 + $0x1c] sm:$0xf]
  %v2075 = vld [vmem:[%s2066 + $0x20] sm:$0xf]
  %v2076 = vld [vmem:[%s2066 + $0x24] sm:$0xf]
  %v2077 = vld [vmem:[%s2066 + $0x28] sm:$0xf]
  %v2078 = vld [vmem:[%s2066 + $0x2c] sm:$0xf]
  %v2079 = vld [vmem:[%s2066 + $0x30] sm:$0xf]
  %v2080 = vld [vmem:[%s2066 + $0x34] sm:$0xf]
  %v2081 = vld [vmem:[%s2066 + $0x38] sm:$0xf]
  %v2082 = vld [vmem:[%s2066 + $0x3c] sm:$0xf]
  %v2099 = vunpack.c.l.b16 %v2067
  %v2100 = vunpack.c.l.b16 %v2068
  %v2101 = vunpack.c.l.b16 %v2069
  %v2102 = vunpack.c.l.b16 %v2070
  %v2103 = vunpack.c.l.b16 %v2071
  %v2104 = vunpack.c.l.b16 %v2072
  %v2105 = vunpack.c.l.b16 %v2073
  %v2106 = vunpack.c.l.b16 %v2074
  %v2107 = vunpack.c.l.b16 %v2075
  %v2108 = vunpack.c.l.b16 %v2076
  %v2109 = vunpack.c.l.b16 %v2077
  %v2110 = vunpack.c.l.b16 %v2078
  %v2111 = vunpack.c.l.b16 %v2079
  %v2112 = vunpack.c.l.b16 %v2080
  %v2113 = vunpack.c.l.b16 %v2081
  %v2114 = vunpack.c.l.b16 %v2082
  %v2115 = vpack.c.b16 %v2100, %v2099
  %v2116 = vpack.c.b16 %v2102, %v2101
  %v2117 = vpack.c.b16 %v2104, %v2103
  %v2118 = vpack.c.b16 %v2106, %v2105
  %v2119 = vpack.c.b16 %v2108, %v2107
  %v2120 = vpack.c.b16 %v2110, %v2109
  %v2121 = vpack.c.b16 %v2112, %v2111
  %v2122 = vpack.c.b16 %v2114, %v2113
  %2131 = vmatpush.bf16.msra.mxu0 %v2122
  %2132 = vmatpush.bf16.msra.mxu0 %v2121
  %2133 = vmatpush.bf16.msra.mxu0 %v2120
  %2134 = vmatpush.bf16.msra.mxu0 %v2119
  %2135 = vmatpush.bf16.msra.mxu0 %v2118
  %2136 = vmatpush.bf16.msra.mxu0 %v2117
  %2137 = vmatpush.bf16.msra.mxu0 %v2116
  %2138 = vmatpush.bf16.msra.mxu0 %v2115
  %2139 = vmatmul.bf16.gmra.mxu0 %v2053
  %v2140 = vpop.f32.mrf.mxu0
  %v2141 = vadd.f32 0.0, %v2140
  %v2142 = vpop.f32.mrf.mxu0
  %v2143 = vadd.f32 0.0, %v2142
  %2144 = vmatmul.bf16.gmra.mxu0 %v2054
  %v2145 = vpop.f32.mrf.mxu0
  %v2146 = vadd.f32 0.0, %v2145
  %v2147 = vpop.f32.mrf.mxu0
  %v2148 = vadd.f32 0.0, %v2147
  %2149 = vmatmul.bf16.gmra.mxu0 %v2055
  %v2150 = vpop.f32.mrf.mxu0
  %v2151 = vadd.f32 0.0, %v2150
  %v2152 = vpop.f32.mrf.mxu0
  %v2153 = vadd.f32 0.0, %v2152
  %2154 = vmatmul.bf16.gmra.mxu0 %v2056
  %v2155 = vpop.f32.mrf.mxu0
  %v2156 = vadd.f32 0.0, %v2155
  %v2157 = vpop.f32.mrf.mxu0
  %v2158 = vadd.f32 0.0, %v2157
  %2159 = vmatmul.bf16.gmra.mxu0 %v2057
  %v2160 = vpop.f32.mrf.mxu0
  %v2161 = vadd.f32 0.0, %v2160
  %v2162 = vpop.f32.mrf.mxu0
  %v2163 = vadd.f32 0.0, %v2162
  %2164 = vmatmul.bf16.gmra.mxu0 %v2058
  %v2165 = vpop.f32.mrf.mxu0
  %v2166 = vadd.f32 0.0, %v2165
  %v2167 = vpop.f32.mrf.mxu0
  %v2168 = vadd.f32 0.0, %v2167
  %2169 = vmatmul.bf16.gmra.mxu0 %v2059
  %v2170 = vpop.f32.mrf.mxu0
  %v2171 = vadd.f32 0.0, %v2170
  %v2172 = vpop.f32.mrf.mxu0
  %v2173 = vadd.f32 0.0, %v2172
  %2174 = vmatmul.bf16.gmra.mxu0 %v2060
  %v2175 = vpop.f32.mrf.mxu0
  %v2176 = vadd.f32 0.0, %v2175
  %v2177 = vpop.f32.mrf.mxu0
  %v2178 = vadd.f32 0.0, %v2177
  %2179 = vmatmul.bf16.gmra.mxu0 %v2061
  %v2180 = vpop.f32.mrf.mxu0
  %v2181 = vadd.f32 0.0, %v2180
  %v2182 = vpop.f32.mrf.mxu0
  %v2183 = vadd.f32 0.0, %v2182
  %2184 = vmatmul.bf16.gmra.mxu0 %v2062
  %v2185 = vpop.f32.mrf.mxu0
  %v2186 = vadd.f32 0.0, %v2185
  %v2187 = vpop.f32.mrf.mxu0
  %v2188 = vadd.f32 0.0, %v2187
  %2189 = vmatmul.bf16.gmra.mxu0 %v2063
  %v2190 = vpop.f32.mrf.mxu0
  %v2191 = vadd.f32 0.0, %v2190
  %v2192 = vpop.f32.mrf.mxu0
  %v2193 = vadd.f32 0.0, %v2192
  %2194 = vmatmul.bf16.gmra.mxu0 %v2064
  %v2195 = vpop.f32.mrf.mxu0
  %v2196 = vadd.f32 0.0, %v2195
  %v2197 = vpop.f32.mrf.mxu0
  %v2198 = vadd.f32 0.0, %v2197
  %2199 = vmatmul.bf16.gmra.mxu0 %v2065
  %v2200 = vpop.f32.mrf.mxu0
  %v2201 = vadd.f32 0.0, %v2200
  %v2202 = vpop.f32.mrf.mxu0
  %v2203 = vadd.f32 0.0, %v2202
  %2204 = vdwg.mxu0
  %v2205 = vadd.f32 %v2001, %v2141
  %v2206 = vadd.f32 %v2002, %v2143
  %v2207 = vadd.f32 %v2003, %v2146
  %v2208 = vadd.f32 %v2004, %v2148
  %v2209 = vadd.f32 %v2005, %v2151
  %v2210 = vadd.f32 %v2006, %v2153
  %v2211 = vadd.f32 %v2007, %v2156
  %v2212 = vadd.f32 %v2008, %v2158
  %v2213 = vadd.f32 %v2009, %v2161
  %v2214 = vadd.f32 %v2010, %v2163
  %v2215 = vadd.f32 %v2011, %v2166
  %v2216 = vadd.f32 %v2012, %v2168
  %v2217 = vadd.f32 %v2013, %v2171
  %v2218 = vadd.f32 %v2014, %v2173
  %v2219 = vadd.f32 %v2015, %v2176
  %v2220 = vadd.f32 %v2016, %v2178
  %v2221 = vadd.f32 %v2017, %v2181
  %v2222 = vadd.f32 %v2018, %v2183
  %v2223 = vadd.f32 %v2019, %v2186
  %v2224 = vadd.f32 %v2020, %v2188
  %v2225 = vadd.f32 %v2021, %v2191
  %v2226 = vadd.f32 %v2022, %v2193
  %v2227 = vadd.f32 %v2023, %v2196
  %v2228 = vadd.f32 %v2024, %v2198
  %v2229 = vadd.f32 %v2025, %v2201
  %v2230 = vadd.f32 %v2026, %v2203
  %v2231 = vld [vmem:[#allocation2 + $0x73] sm:$0xff]
  %v2232 = vld [vmem:[#allocation2 + $0x7b] sm:$0xff]
  %v2233 = vld [vmem:[#allocation2 + $0x83] sm:$0xff]
  %v2234 = vld [vmem:[#allocation2 + $0x8b] sm:$0xff]
  %v2235 = vld [vmem:[#allocation2 + $0x93] sm:$0xff]
  %v2236 = vld [vmem:[#allocation2 + $0x9b] sm:$0xff]
  %v2237 = vld [vmem:[#allocation2 + $0xa3] sm:$0xff]
  %v2238 = vld [vmem:[#allocation2 + $0xab] sm:$0xff]
  %v2239 = vld [vmem:[#allocation2 + $0xb3] sm:$0xff]
  %v2240 = vld [vmem:[#allocation2 + $0xbb] sm:$0xff]
  %v2241 = vld [vmem:[#allocation2 + $0xc3] sm:$0xff]
  %v2242 = vld [vmem:[#allocation2 + $0xcb] sm:$0xff]
  %v2243 = vld [vmem:[#allocation2 + $0xd3] sm:$0xff]
  %v2244 = vld [vmem:[#allocation2 + $0xdb] sm:$0xff]
  %v2245 = vld [vmem:[#allocation2 + $0xe3] sm:$0xff]
  %v2246 = vld [vmem:[#allocation2 + $0xeb] sm:$0xff]
  %v2247 = vld [vmem:[#allocation2 + $0xf3] sm:$0xff]
  %v2248 = vld [vmem:[#allocation2 + $0xfb] sm:$0xff]
  %v2249 = vld [vmem:[#allocation2 + $0x103] sm:$0xff]
  %v2250 = vld [vmem:[#allocation2 + $0x10b] sm:$0xff]
  %v2251 = vld [vmem:[#allocation2 + $0x113] sm:$0xff]
  %v2252 = vld [vmem:[#allocation2 + $0x11b] sm:$0xff]
  %v2253 = vld [vmem:[#allocation2 + $0x123] sm:$0xff]
  %v2254 = vld [vmem:[#allocation2 + $0x12b] sm:$0xff]
  %v2255 = vld [vmem:[#allocation2 + $0x133] sm:$0xff]
  %v2256 = vld [vmem:[#allocation2 + $0x13b] sm:$0xff]
  %v2257 = vpack.c.bf16 %v2232, %v2231
  %v2258 = vpack.c.bf16 %v2234, %v2233
  %v2259 = vpack.c.bf16 %v2236, %v2235
  %v2260 = vpack.c.bf16 %v2238, %v2237
  %v2261 = vpack.c.bf16 %v2240, %v2239
  %v2262 = vpack.c.bf16 %v2242, %v2241
  %v2263 = vpack.c.bf16 %v2244, %v2243
  %v2264 = vpack.c.bf16 %v2246, %v2245
  %v2265 = vpack.c.bf16 %v2248, %v2247
  %v2266 = vpack.c.bf16 %v2250, %v2249
  %v2267 = vpack.c.bf16 %v2252, %v2251
  %v2268 = vpack.c.bf16 %v2254, %v2253
  %v2269 = vpack.c.bf16 %v2256, %v2255
  %s2270 = scalar_lea.vmem %s1, 512
  %v2271 = vld [vmem:[%s2270] sm:$0xf]
  %v2272 = vld [vmem:[%s2270 + $0x4] sm:$0xf]
  %v2273 = vld [vmem:[%s2270 + $0x8] sm:$0xf]
  %v2274 = vld [vmem:[%s2270 + $0xc] sm:$0xf]
  %v2275 = vld [vmem:[%s2270 + $0x10] sm:$0xf]
  %v2276 = vld [vmem:[%s2270 + $0x14] sm:$0xf]
  %v2277 = vld [vmem:[%s2270 + $0x18] sm:$0xf]
  %v2278 = vld [vmem:[%s2270 + $0x1c] sm:$0xf]
  %v2279 = vld [vmem:[%s2270 + $0x20] sm:$0xf]
  %v2280 = vld [vmem:[%s2270 + $0x24] sm:$0xf]
  %v2281 = vld [vmem:[%s2270 + $0x28] sm:$0xf]
  %v2282 = vld [vmem:[%s2270 + $0x2c] sm:$0xf]
  %v2283 = vld [vmem:[%s2270 + $0x30] sm:$0xf]
  %v2284 = vld [vmem:[%s2270 + $0x34] sm:$0xf]
  %v2285 = vld [vmem:[%s2270 + $0x38] sm:$0xf]
  %v2286 = vld [vmem:[%s2270 + $0x3c] sm:$0xf]
  %v2303 = vunpack.c.l.b16 %v2271
  %v2304 = vunpack.c.l.b16 %v2272
  %v2305 = vunpack.c.l.b16 %v2273
  %v2306 = vunpack.c.l.b16 %v2274
  %v2307 = vunpack.c.l.b16 %v2275
  %v2308 = vunpack.c.l.b16 %v2276
  %v2309 = vunpack.c.l.b16 %v2277
  %v2310 = vunpack.c.l.b16 %v2278
  %v2311 = vunpack.c.l.b16 %v2279
  %v2312 = vunpack.c.l.b16 %v2280
  %v2313 = vunpack.c.l.b16 %v2281
  %v2314 = vunpack.c.l.b16 %v2282
  %v2315 = vunpack.c.l.b16 %v2283
  %v2316 = vunpack.c.l.b16 %v2284
  %v2317 = vunpack.c.l.b16 %v2285
  %v2318 = vunpack.c.l.b16 %v2286
  %v2319 = vpack.c.b16 %v2304, %v2303
  %v2320 = vpack.c.b16 %v2306, %v2305
  %v2321 = vpack.c.b16 %v2308, %v2307
  %v2322 = vpack.c.b16 %v2310, %v2309
  %v2323 = vpack.c.b16 %v2312, %v2311
  %v2324 = vpack.c.b16 %v2314, %v2313
  %v2325 = vpack.c.b16 %v2316, %v2315
  %v2326 = vpack.c.b16 %v2318, %v2317
  %2335 = vmatpush.bf16.msra.mxu0 %v2326
  %2336 = vmatpush.bf16.msra.mxu0 %v2325
  %2337 = vmatpush.bf16.msra.mxu0 %v2324
  %2338 = vmatpush.bf16.msra.mxu0 %v2323
  %2339 = vmatpush.bf16.msra.mxu0 %v2322
  %2340 = vmatpush.bf16.msra.mxu0 %v2321
  %2341 = vmatpush.bf16.msra.mxu0 %v2320
  %2342 = vmatpush.bf16.msra.mxu0 %v2319
  %2343 = vmatmul.bf16.gmra.mxu0 %v2257
  %v2344 = vpop.f32.mrf.mxu0
  %v2345 = vadd.f32 0.0, %v2344
  %v2346 = vpop.f32.mrf.mxu0
  %v2347 = vadd.f32 0.0, %v2346
  %2348 = vmatmul.bf16.gmra.mxu0 %v2258
  %v2349 = vpop.f32.mrf.mxu0
  %v2350 = vadd.f32 0.0, %v2349
  %v2351 = vpop.f32.mrf.mxu0
  %v2352 = vadd.f32 0.0, %v2351
  %2353 = vmatmul.bf16.gmra.mxu0 %v2259
  %v2354 = vpop.f32.mrf.mxu0
  %v2355 = vadd.f32 0.0, %v2354
  %v2356 = vpop.f32.mrf.mxu0
  %v2357 = vadd.f32 0.0, %v2356
  %2358 = vmatmul.bf16.gmra.mxu0 %v2260
  %v2359 = vpop.f32.mrf.mxu0
  %v2360 = vadd.f32 0.0, %v2359
  %v2361 = vpop.f32.mrf.mxu0
  %v2362 = vadd.f32 0.0, %v2361
  %2363 = vmatmul.bf16.gmra.mxu0 %v2261
  %v2364 = vpop.f32.mrf.mxu0
  %v2365 = vadd.f32 0.0, %v2364
  %v2366 = vpop.f32.mrf.mxu0
  %v2367 = vadd.f32 0.0, %v2366
  %2368 = vmatmul.bf16.gmra.mxu0 %v2262
  %v2369 = vpop.f32.mrf.mxu0
  %v2370 = vadd.f32 0.0, %v2369
  %v2371 = vpop.f32.mrf.mxu0
  %v2372 = vadd.f32 0.0, %v2371
  %2373 = vmatmul.bf16.gmra.mxu0 %v2263
  %v2374 = vpop.f32.mrf.mxu0
  %v2375 = vadd.f32 0.0, %v2374
  %v2376 = vpop.f32.mrf.mxu0
  %v2377 = vadd.f32 0.0, %v2376
  %2378 = vmatmul.bf16.gmra.mxu0 %v2264
  %v2379 = vpop.f32.mrf.mxu0
  %v2380 = vadd.f32 0.0, %v2379
  %v2381 = vpop.f32.mrf.mxu0
  %v2382 = vadd.f32 0.0, %v2381
  %2383 = vmatmul.bf16.gmra.mxu0 %v2265
  %v2384 = vpop.f32.mrf.mxu0
  %v2385 = vadd.f32 0.0, %v2384
  %v2386 = vpop.f32.mrf.mxu0
  %v2387 = vadd.f32 0.0, %v2386
  %2388 = vmatmul.bf16.gmra.mxu0 %v2266
  %v2389 = vpop.f32.mrf.mxu0
  %v2390 = vadd.f32 0.0, %v2389
  %v2391 = vpop.f32.mrf.mxu0
  %v2392 = vadd.f32 0.0, %v2391
  %2393 = vmatmul.bf16.gmra.mxu0 %v2267
  %v2394 = vpop.f32.mrf.mxu0
  %v2395 = vadd.f32 0.0, %v2394
  %v2396 = vpop.f32.mrf.mxu0
  %v2397 = vadd.f32 0.0, %v2396
  %2398 = vmatmul.bf16.gmra.mxu0 %v2268
  %v2399 = vpop.f32.mrf.mxu0
  %v2400 = vadd.f32 0.0, %v2399
  %v2401 = vpop.f32.mrf.mxu0
  %v2402 = vadd.f32 0.0, %v2401
  %2403 = vmatmul.bf16.gmra.mxu0 %v2269
  %v2404 = vpop.f32.mrf.mxu0
  %v2405 = vadd.f32 0.0, %v2404
  %v2406 = vpop.f32.mrf.mxu0
  %v2407 = vadd.f32 0.0, %v2406
  %2408 = vdwg.mxu0
  %v2409 = vadd.f32 %v2205, %v2345
  %v2410 = vadd.f32 %v2206, %v2347
  %v2411 = vadd.f32 %v2207, %v2350
  %v2412 = vadd.f32 %v2208, %v2352
  %v2413 = vadd.f32 %v2209, %v2355
  %v2414 = vadd.f32 %v2210, %v2357
  %v2415 = vadd.f32 %v2211, %v2360
  %v2416 = vadd.f32 %v2212, %v2362
  %v2417 = vadd.f32 %v2213, %v2365
  %v2418 = vadd.f32 %v2214, %v2367
  %v2419 = vadd.f32 %v2215, %v2370
  %v2420 = vadd.f32 %v2216, %v2372
  %v2421 = vadd.f32 %v2217, %v2375
  %v2422 = vadd.f32 %v2218, %v2377
  %v2423 = vadd.f32 %v2219, %v2380
  %v2424 = vadd.f32 %v2220, %v2382
  %v2425 = vadd.f32 %v2221, %v2385
  %v2426 = vadd.f32 %v2222, %v2387
  %v2427 = vadd.f32 %v2223, %v2390
  %v2428 = vadd.f32 %v2224, %v2392
  %v2429 = vadd.f32 %v2225, %v2395
  %v2430 = vadd.f32 %v2226, %v2397
  %v2431 = vadd.f32 %v2227, %v2400
  %v2432 = vadd.f32 %v2228, %v2402
  %v2433 = vadd.f32 %v2229, %v2405
  %v2434 = vadd.f32 %v2230, %v2407
  %v2435 = vld [vmem:[%s4 + $0x68] sm:$0xff]
  %v2436 = vld [vmem:[%s4 + $0x70] sm:$0xff]
  %v2437 = vld [vmem:[%s4 + $0x78] sm:$0xff]
  %v2438 = vld [vmem:[%s4 + $0x80] sm:$0xff]
  %v2439 = vld [vmem:[%s4 + $0x88] sm:$0xff]
  %v2440 = vld [vmem:[%s4 + $0x90] sm:$0xff]
  %v2441 = vld [vmem:[%s4 + $0x98] sm:$0xff]
  %v2442 = vld [vmem:[%s4 + $0xa0] sm:$0xff]
  %v2443 = vld [vmem:[%s4 + $0xa8] sm:$0xff]
  %v2444 = vld [vmem:[%s4 + $0xb0] sm:$0xff]
  %v2445 = vld [vmem:[%s4 + $0xb8] sm:$0xff]
  %v2446 = vld [vmem:[%s4 + $0xc0] sm:$0xff]
  %v2447 = vld [vmem:[%s4 + $0xc8] sm:$0xff]
  %v2448 = vld [vmem:[%s4 + $0xd0] sm:$0xff]
  %v2449 = vld [vmem:[%s4 + $0xd8] sm:$0xff]
  %v2450 = vld [vmem:[%s4 + $0xe0] sm:$0xff]
  %v2451 = vld [vmem:[%s4 + $0xe8] sm:$0xff]
  %v2452 = vld [vmem:[%s4 + $0xf0] sm:$0xff]
  %v2453 = vld [vmem:[%s4 + $0xf8] sm:$0xff]
  %v2454 = vld [vmem:[%s4 + $0x100] sm:$0xff]
  %v2455 = vld [vmem:[%s4 + $0x108] sm:$0xff]
  %v2456 = vld [vmem:[%s4 + $0x110] sm:$0xff]
  %v2457 = vld [vmem:[%s4 + $0x118] sm:$0xff]
  %v2458 = vld [vmem:[%s4 + $0x120] sm:$0xff]
  %v2459 = vld [vmem:[%s4 + $0x128] sm:$0xff]
  %v2460 = vld [vmem:[%s4 + $0x130] sm:$0xff]
  %2462 = vset.pattern.permute.xlu0 0
  %2463 = vperm.xlu0 %2462, %v2435
  %v2464 = vpop.permute.xlu0 %2463
  %2467 = vset.pattern.permute.xlu0 0
  %2468 = vperm.xlu0 %2467, %v2436
  %v2469 = vpop.permute.xlu0 %2468
  %2472 = vset.pattern.permute.xlu0 0
  %2473 = vperm.xlu0 %2472, %v2437
  %v2474 = vpop.permute.xlu0 %2473
  %2477 = vset.pattern.permute.xlu0 0
  %2478 = vperm.xlu0 %2477, %v2438
  %v2479 = vpop.permute.xlu0 %2478
  %2482 = vset.pattern.permute.xlu0 0
  %2483 = vperm.xlu0 %2482, %v2439
  %v2484 = vpop.permute.xlu0 %2483
  %2487 = vset.pattern.permute.xlu0 0
  %2488 = vperm.xlu0 %2487, %v2440
  %v2489 = vpop.permute.xlu0 %2488
  %2492 = vset.pattern.permute.xlu0 0
  %2493 = vperm.xlu0 %2492, %v2441
  %v2494 = vpop.permute.xlu0 %2493
  %2497 = vset.pattern.permute.xlu0 0
  %2498 = vperm.xlu0 %2497, %v2442
  %v2499 = vpop.permute.xlu0 %2498
  %2502 = vset.pattern.permute.xlu0 0
  %2503 = vperm.xlu0 %2502, %v2443
  %v2504 = vpop.permute.xlu0 %2503
  %2507 = vset.pattern.permute.xlu0 0
  %2508 = vperm.xlu0 %2507, %v2444
  %v2509 = vpop.permute.xlu0 %2508
  %2512 = vset.pattern.permute.xlu0 0
  %2513 = vperm.xlu0 %2512, %v2445
  %v2514 = vpop.permute.xlu0 %2513
  %2517 = vset.pattern.permute.xlu0 0
  %2518 = vperm.xlu0 %2517, %v2446
  %v2519 = vpop.permute.xlu0 %2518
  %2522 = vset.pattern.permute.xlu0 0
  %2523 = vperm.xlu0 %2522, %v2447
  %v2524 = vpop.permute.xlu0 %2523
  %2527 = vset.pattern.permute.xlu0 0
  %2528 = vperm.xlu0 %2527, %v2448
  %v2529 = vpop.permute.xlu0 %2528
  %2532 = vset.pattern.permute.xlu0 0
  %2533 = vperm.xlu0 %2532, %v2449
  %v2534 = vpop.permute.xlu0 %2533
  %2537 = vset.pattern.permute.xlu0 0
  %2538 = vperm.xlu0 %2537, %v2450
  %v2539 = vpop.permute.xlu0 %2538
  %2542 = vset.pattern.permute.xlu0 0
  %2543 = vperm.xlu0 %2542, %v2451
  %v2544 = vpop.permute.xlu0 %2543
  %2547 = vset.pattern.permute.xlu0 0
  %2548 = vperm.xlu0 %2547, %v2452
  %v2549 = vpop.permute.xlu0 %2548
  %2552 = vset.pattern.permute.xlu0 0
  %2553 = vperm.xlu0 %2552, %v2453
  %v2554 = vpop.permute.xlu0 %2553
  %2557 = vset.pattern.permute.xlu0 0
  %2558 = vperm.xlu0 %2557, %v2454
  %v2559 = vpop.permute.xlu0 %2558
  %2562 = vset.pattern.permute.xlu0 0
  %2563 = vperm.xlu0 %2562, %v2455
  %v2564 = vpop.permute.xlu0 %2563
  %2567 = vset.pattern.permute.xlu0 0
  %2568 = vperm.xlu0 %2567, %v2456
  %v2569 = vpop.permute.xlu0 %2568
  %2572 = vset.pattern.permute.xlu0 0
  %2573 = vperm.xlu0 %2572, %v2457
  %v2574 = vpop.permute.xlu0 %2573
  %2577 = vset.pattern.permute.xlu0 0
  %2578 = vperm.xlu0 %2577, %v2458
  %v2579 = vpop.permute.xlu0 %2578
  %2582 = vset.pattern.permute.xlu0 0
  %2583 = vperm.xlu0 %2582, %v2459
  %v2584 = vpop.permute.xlu0 %2583
  %2587 = vset.pattern.permute.xlu0 0
  %2588 = vperm.xlu0 %2587, %v2460
  %v2589 = vpop.permute.xlu0 %2588
  %v2591 = vmul.f32 %v2409, %v2464
  %v2592 = vmul.f32 %v2410, %v2469
  %v2593 = vmul.f32 %v2411, %v2474
  %v2594 = vmul.f32 %v2412, %v2479
  %v2595 = vmul.f32 %v2413, %v2484
  %v2596 = vmul.f32 %v2414, %v2489
  %v2597 = vmul.f32 %v2415, %v2494
  %v2598 = vmul.f32 %v2416, %v2499
  %v2599 = vmul.f32 %v2417, %v2504
  %v2600 = vmul.f32 %v2418, %v2509
  %v2601 = vmul.f32 %v2419, %v2514
  %v2602 = vmul.f32 %v2420, %v2519
  %v2603 = vmul.f32 %v2421, %v2524
  %v2604 = vmul.f32 %v2422, %v2529
  %v2605 = vmul.f32 %v2423, %v2534
  %v2606 = vmul.f32 %v2424, %v2539
  %v2607 = vmul.f32 %v2425, %v2544
  %v2608 = vmul.f32 %v2426, %v2549
  %v2609 = vmul.f32 %v2427, %v2554
  %v2610 = vmul.f32 %v2428, %v2559
  %v2611 = vmul.f32 %v2429, %v2564
  %v2612 = vmul.f32 %v2430, %v2569
  %v2613 = vmul.f32 %v2431, %v2574
  %v2614 = vmul.f32 %v2432, %v2579
  %v2615 = vmul.f32 %v2433, %v2584
  %v2616 = vmul.f32 %v2434, %v2589
  %2617 = vst [vmem:[%s5] sm:$0xff] 0.0
  %2618 = vst [vmem:[%s5 + $0x8] sm:$0xff] 0.0
  %2619 = vst [vmem:[%s5 + $0x10] sm:$0xff] 0.0
  %2620 = vst [vmem:[%s5 + $0x18] sm:$0xff] 0.0
  %2621 = vst [vmem:[%s5 + $0x20] sm:$0xff] 0.0
  %2622 = vst [vmem:[%s5 + $0x28] sm:$0xff] 0.0
  %2623 = vst [vmem:[%s5 + $0x30] sm:$0xff] 0.0
  %2624 = vst [vmem:[%s5 + $0x38] sm:$0xff] 0.0
  %2625 = vst [vmem:[%s5 + $0x40] sm:$0xff] 0.0
  %2626 = vst [vmem:[%s5 + $0x48] sm:$0xff] 0.0
  %2627 = vst [vmem:[%s5 + $0x50] sm:$0xff] 0.0
  %2628 = vst [vmem:[%s5 + $0x58] sm:$0xff] 0.0
  %2629 = vst [vmem:[%s5 + $0x60] sm:$0xff] 0.0
  %2630 = vst [vmem:[%s5 + $0x68] sm:$0xff] %v2591
  %2631 = vst [vmem:[%s5 + $0x70] sm:$0xff] %v2592
  %2632 = vst [vmem:[%s5 + $0x78] sm:$0xff] %v2593
  %2633 = vst [vmem:[%s5 + $0x80] sm:$0xff] %v2594
  %2634 = vst [vmem:[%s5 + $0x88] sm:$0xff] %v2595
  %2635 = vst [vmem:[%s5 + $0x90] sm:$0xff] %v2596
  %2636 = vst [vmem:[%s5 + $0x98] sm:$0xff] %v2597
  %2637 = vst [vmem:[%s5 + $0xa0] sm:$0xff] %v2598
  %2638 = vst [vmem:[%s5 + $0xa8] sm:$0xff] %v2599
  %2639 = vst [vmem:[%s5 + $0xb0] sm:$0xff] %v2600
  %2640 = vst [vmem:[%s5 + $0xb8] sm:$0xff] %v2601
  %2641 = vst [vmem:[%s5 + $0xc0] sm:$0xff] %v2602
  %2642 = vst [vmem:[%s5 + $0xc8] sm:$0xff] %v2603
  %2643 = vst [vmem:[%s5 + $0xd0] sm:$0xff] %v2604
  %2644 = vst [vmem:[%s5 + $0xd8] sm:$0xff] %v2605
  %2645 = vst [vmem:[%s5 + $0xe0] sm:$0xff] %v2606
  %2646 = vst [vmem:[%s5 + $0xe8] sm:$0xff] %v2607
  %2647 = vst [vmem:[%s5 + $0xf0] sm:$0xff] %v2608
  %2648 = vst [vmem:[%s5 + $0xf8] sm:$0xff] %v2609
  %2649 = vst [vmem:[%s5 + $0x100] sm:$0xff] %v2610
  %2650 = vst [vmem:[%s5 + $0x108] sm:$0xff] %v2611
  %2651 = vst [vmem:[%s5 + $0x110] sm:$0xff] %v2612
  %2652 = vst [vmem:[%s5 + $0x118] sm:$0xff] %v2613
  %2653 = vst [vmem:[%s5 + $0x120] sm:$0xff] %v2614
  %2654 = vst [vmem:[%s5 + $0x128] sm:$0xff] %v2615
  %2655 = vst [vmem:[%s5 + $0x130] sm:$0xff] %v2616
  %2656 = vst [vmem:[%s5 + $0x138] sm:$0xff] 0.0
  %2657 = vst [vmem:[%s5 + $0x140] sm:$0xff] 0.0
  %2658 = vst [vmem:[%s5 + $0x148] sm:$0xff] 0.0
  %2659 = vst [vmem:[%s5 + $0x150] sm:$0xff] 0.0
  %2660 = vst [vmem:[%s5 + $0x158] sm:$0xff] 0.0
  %2661 = vst [vmem:[%s5 + $0x160] sm:$0xff] 0.0
  %2662 = vst [vmem:[%s5 + $0x168] sm:$0xff] 0.0
  %2663 = vst [vmem:[%s5 + $0x170] sm:$0xff] 0.0
  %2664 = vst [vmem:[%s5 + $0x178] sm:$0xff] 0.0
  %2665 = vst [vmem:[%s5 + $0x180] sm:$0xff] 0.0
  %2666 = vst [vmem:[%s5 + $0x188] sm:$0xff] 0.0
  %2667 = vst [vmem:[%s5 + $0x190] sm:$0xff] 0.0
  %2668 = vst [vmem:[%s5 + $0x198] sm:$0xff] 0.0
  // Predicated region
  $region22: #{downsample_forward.6} parent=0 // pred_check
    _
  $region23: #{downsample_forward.6} parent=0 // pred_check_branch
    %2670 = sbr.rel (0) target = $region25
  $region24: #{downsample_forward.6} parent=0 // pred_region
    _
  $region25: #{downsample_forward.6} parent=0 // pred_fallthru
    _
  // Predicated region
  $region26: #{downsample_forward.6} parent=0 // pred_check
    _
  $region27: #{downsample_forward.6} parent=0 // pred_check_branch
    %2672 = sbr.rel (0) target = $region29
  $region28: #{downsample_forward.6} parent=0 // pred_region
    _
  $region29: #{downsample_forward.6} parent=0 // pred_fallthru
    _

// kernel: downsample_forward.7
$region0: #{downsample_forward.7}
  #allocation0 [shape = 'u32[]', space=smem, size = 0x4, offset = 0x4, fixed_abs, tag = 'smem constant byte address 0x4 - core index']
  #allocation1 [shape = 'u32[72,128]{1,0:T(1,128)}', space=vmem, size = 0x9000, scoped, tag = 'internal scratch']
  #allocation2 [shape = 'f32[416,128]{1,0:T(8,128)}', space=vmem, size = 0x34000, scoped, tag = 'scratch operand']
  %s0 = inlined_call_operand.vmem [shape: f32[416,128], index: 0, kind: input, shape index: {}]
  %s1 = inlined_call_operand.vmem [shape: f32[416,128], index: 1, kind: input, shape index: {}]
  %s2 = inlined_call_operand.vmem [shape: bf16[9,128,128], index: 2, kind: input, shape index: {}]
  %s3 = inlined_call_operand.vmem [shape: f32[1,128], index: 3, kind: input, shape index: {}]
  %s4 = inlined_call_operand.vmem [shape: f32[1,128], index: 4, kind: input, shape index: {}]
  %s5 = inlined_call_operand.vmem [shape: f32[416,1], index: 5, kind: input, shape index: {}]
  %s6 = inlined_call_operand.vmem [shape: f32[416,128], index: 6, kind: output, shape index: {}]
  %s7 = sld [smem:[#allocation0]]
  $region34: #{downsample_forward.7} parent=0
    _
  %s9 = ssub.s32 1, %s7
  %s10 = scalar_select 0, %s9, %s7
  // Predicated region
  $region2: #{downsample_forward.7} parent=0 // pred_check
    _
  $region3: #{downsample_forward.7} parent=0 // pred_check_branch
    %12 = sbr.rel (0) target = $region5
  $region4: #{downsample_forward.7} parent=0 // pred_region
    _
  $region5: #{downsample_forward.7} parent=0 // pred_fallthru
    _
  // Predicated region
  $region6: #{downsample_forward.7} parent=0 // pred_check
    _
  $region7: #{downsample_forward.7} parent=0 // pred_check_branch
    %14 = sbr.rel (0) target = $region9
  $region8: #{downsample_forward.7} parent=0 // pred_region
    _
  $region9: #{downsample_forward.7} parent=0 // pred_fallthru
    _
  // Predicated region
  $region10: #{downsample_forward.7} parent=0 // pred_check
    _
  $region11: #{downsample_forward.7} parent=0 // pred_check_branch
    %16 = sbr.rel (0) target = $region13
  $region12: #{downsample_forward.7} parent=0 // pred_region
    _
  $region13: #{downsample_forward.7} parent=0 // pred_fallthru
    _
  // Predicated region
  $region14: #{downsample_forward.7} parent=0 // pred_check
    _
  $region15: #{downsample_forward.7} parent=0 // pred_check_branch
    %18 = sbr.rel (0) target = $region17
  $region16: #{downsample_forward.7} parent=0 // pred_region
    _
  $region17: #{downsample_forward.7} parent=0 // pred_fallthru
    _
  // Predicated region
  $region18: #{downsample_forward.7} parent=0 // pred_check
    _
  $region19: #{downsample_forward.7} parent=0 // pred_check_branch
    %20 = sbr.rel (0) target = $region21
  $region20: #{downsample_forward.7} parent=0 // pred_region
    _
  $region21: #{downsample_forward.7} parent=0 // pred_fallthru
    _
  // Predicated region
  $region22: #{downsample_forward.7} parent=0 // pred_check
    _
  $region23: #{downsample_forward.7} parent=0 // pred_check_branch
    %22 = sbr.rel (0) target = $region25
  $region24: #{downsample_forward.7} parent=0 // pred_region
    _
  $region25: #{downsample_forward.7} parent=0 // pred_fallthru
    _
  %v23 = vld [vmem:[%s5] sm:$0xff]
  %v24 = vld [vmem:[%s5 + $0x8] sm:$0xff]
  %v25 = vld [vmem:[%s5 + $0x10] sm:$0xff]
  %v26 = vld [vmem:[%s5 + $0x18] sm:$0xff]
  %v27 = vld [vmem:[%s5 + $0x20] sm:$0xff]
  %v28 = vld [vmem:[%s5 + $0x28] sm:$0xff]
  %v29 = vld [vmem:[%s5 + $0x30] sm:$0xff]
  %v30 = vld [vmem:[%s5 + $0x38] sm:$0xff]
  %v31 = vld [vmem:[%s5 + $0x40] sm:$0xff]
  %v32 = vld [vmem:[%s5 + $0x48] sm:$0xff]
  %v33 = vld [vmem:[%s5 + $0x50] sm:$0xff]
  %v34 = vld [vmem:[%s5 + $0x58] sm:$0xff]
  %v35 = vld [vmem:[%s5 + $0x60] sm:$0xff]
  %v36 = vld [vmem:[%s5 + $0x68] sm:$0xff]
  %v37 = vld [vmem:[%s5 + $0x70] sm:$0xff]
  %v38 = vld [vmem:[%s5 + $0x78] sm:$0xff]
  %v39 = vld [vmem:[%s5 + $0x80] sm:$0xff]
  %v40 = vld [vmem:[%s5 + $0x88] sm:$0xff]
  %v41 = vld [vmem:[%s5 + $0x90] sm:$0xff]
  %v42 = vld [vmem:[%s5 + $0x98] sm:$0xff]
  %v43 = vld [vmem:[%s5 + $0xa0] sm:$0xff]
  %v44 = vld [vmem:[%s5 + $0xa8] sm:$0xff]
  %v45 = vld [vmem:[%s5 + $0xb0] sm:$0xff]
  %v46 = vld [vmem:[%s5 + $0xb8] sm:$0xff]
  %v47 = vld [vmem:[%s5 + $0xc0] sm:$0xff]
  %v48 = vld [vmem:[%s5 + $0xc8] sm:$0xff]
  %v49 = vld [vmem:[%s5 + $0xd0] sm:$0xff]
  %v50 = vld [vmem:[%s5 + $0xd8] sm:$0xff]
  %v51 = vld [vmem:[%s5 + $0xe0] sm:$0xff]
  %v52 = vld [vmem:[%s5 + $0xe8] sm:$0xff]
  %v53 = vld [vmem:[%s5 + $0xf0] sm:$0xff]
  %v54 = vld [vmem:[%s5 + $0xf8] sm:$0xff]
  %v55 = vld [vmem:[%s5 + $0x100] sm:$0xff]
  %v56 = vld [vmem:[%s5 + $0x108] sm:$0xff]
  %v57 = vld [vmem:[%s5 + $0x110] sm:$0xff]
  %v58 = vld [vmem:[%s5 + $0x118] sm:$0xff]
  %v59 = vld [vmem:[%s5 + $0x120] sm:$0xff]
  %v60 = vld [vmem:[%s5 + $0x128] sm:$0xff]
  %v61 = vld [vmem:[%s5 + $0x130] sm:$0xff]
  %v62 = vld [vmem:[%s5 + $0x138] sm:$0xff]
  %v63 = vld [vmem:[%s5 + $0x140] sm:$0xff]
  %v64 = vld [vmem:[%s5 + $0x148] sm:$0xff]
  %v65 = vld [vmem:[%s5 + $0x150] sm:$0xff]
  %v66 = vld [vmem:[%s5 + $0x158] sm:$0xff]
  %v67 = vld [vmem:[%s5 + $0x160] sm:$0xff]
  %v68 = vld [vmem:[%s5 + $0x168] sm:$0xff]
  %v69 = vld [vmem:[%s5 + $0x170] sm:$0xff]
  %v70 = vld [vmem:[%s5 + $0x178] sm:$0xff]
  %v71 = vld [vmem:[%s5 + $0x180] sm:$0xff]
  %v72 = vld [vmem:[%s5 + $0x188] sm:$0xff]
  %v73 = vld [vmem:[%s5 + $0x190] sm:$0xff]
  %v74 = vld [vmem:[%s5 + $0x198] sm:$0xff]
  %v75 = vld [vmem:[%s0] sm:$0xff]
  %v76 = vld [vmem:[%s0 + $0x8] sm:$0xff]
  %v77 = vld [vmem:[%s0 + $0x10] sm:$0xff]
  %v78 = vld [vmem:[%s0 + $0x18] sm:$0xff]
  %v79 = vld [vmem:[%s0 + $0x20] sm:$0xff]
  %v80 = vld [vmem:[%s0 + $0x28] sm:$0xff]
  %v81 = vld [vmem:[%s0 + $0x30] sm:$0xff]
  %v82 = vld [vmem:[%s0 + $0x38] sm:$0xff]
  %v83 = vld [vmem:[%s0 + $0x40] sm:$0xff]
  %v84 = vld [vmem:[%s0 + $0x48] sm:$0xff]
  %v85 = vld [vmem:[%s0 + $0x50] sm:$0xff]
  %v86 = vld [vmem:[%s0 + $0x58] sm:$0xff]
  %v87 = vld [vmem:[%s0 + $0x60] sm:$0xff]
  %v88 = vld [vmem:[%s0 + $0x68] sm:$0xff]
  %v89 = vld [vmem:[%s0 + $0x70] sm:$0xff]
  %v90 = vld [vmem:[%s0 + $0x78] sm:$0xff]
  %v91 = vld [vmem:[%s0 + $0x80] sm:$0xff]
  %v92 = vld [vmem:[%s0 + $0x88] sm:$0xff]
  %v93 = vld [vmem:[%s0 + $0x90] sm:$0xff]
  %v94 = vld [vmem:[%s0 + $0x98] sm:$0xff]
  %v95 = vld [vmem:[%s0 + $0xa0] sm:$0xff]
  %v96 = vld [vmem:[%s0 + $0xa8] sm:$0xff]
  %v97 = vld [vmem:[%s0 + $0xb0] sm:$0xff]
  %v98 = vld [vmem:[%s0 + $0xb8] sm:$0xff]
  %v99 = vld [vmem:[%s0 + $0xc0] sm:$0xff]
  %v100 = vld [vmem:[%s0 + $0xc8] sm:$0xff]
  %v101 = vld [vmem:[%s0 + $0xd0] sm:$0xff]
  %v102 = vld [vmem:[%s0 + $0xd8] sm:$0xff]
  %v103 = vld [vmem:[%s0 + $0xe0] sm:$0xff]
  %v104 = vld [vmem:[%s0 + $0xe8] sm:$0xff]
  %v105 = vld [vmem:[%s0 + $0xf0] sm:$0xff]
  %v106 = vld [vmem:[%s0 + $0xf8] sm:$0xff]
  %v107 = vld [vmem:[%s0 + $0x100] sm:$0xff]
  %v108 = vld [vmem:[%s0 + $0x108] sm:$0xff]
  %v109 = vld [vmem:[%s0 + $0x110] sm:$0xff]
  %v110 = vld [vmem:[%s0 + $0x118] sm:$0xff]
  %v111 = vld [vmem:[%s0 + $0x120] sm:$0xff]
  %v112 = vld [vmem:[%s0 + $0x128] sm:$0xff]
  %v113 = vld [vmem:[%s0 + $0x130] sm:$0xff]
  %v114 = vld [vmem:[%s0 + $0x138] sm:$0xff]
  %v115 = vld [vmem:[%s0 + $0x140] sm:$0xff]
  %v116 = vld [vmem:[%s0 + $0x148] sm:$0xff]
  %v117 = vld [vmem:[%s0 + $0x150] sm:$0xff]
  %v118 = vld [vmem:[%s0 + $0x158] sm:$0xff]
  %v119 = vld [vmem:[%s0 + $0x160] sm:$0xff]
  %v120 = vld [vmem:[%s0 + $0x168] sm:$0xff]
  %v121 = vld [vmem:[%s0 + $0x170] sm:$0xff]
  %v122 = vld [vmem:[%s0 + $0x178] sm:$0xff]
  %v123 = vld [vmem:[%s0 + $0x180] sm:$0xff]
  %v124 = vld [vmem:[%s0 + $0x188] sm:$0xff]
  %v125 = vld [vmem:[%s0 + $0x190] sm:$0xff]
  %v126 = vld [vmem:[%s0 + $0x198] sm:$0xff]
  %v127 = vld [vmem:[%s3] sm:$0x1]
  %v129 = vperm.slane %v127, 0
  %v131 = vmul.f32 %v75, %v129
  %v132 = vmul.f32 %v76, %v129
  %v133 = vmul.f32 %v77, %v129
  %v134 = vmul.f32 %v78, %v129
  %v135 = vmul.f32 %v79, %v129
  %v136 = vmul.f32 %v80, %v129
  %v137 = vmul.f32 %v81, %v129
  %v138 = vmul.f32 %v82, %v129
  %v139 = vmul.f32 %v83, %v129
  %v140 = vmul.f32 %v84, %v129
  %v141 = vmul.f32 %v85, %v129
  %v142 = vmul.f32 %v86, %v129
  %v143 = vmul.f32 %v87, %v129
  %v144 = vmul.f32 %v88, %v129
  %v145 = vmul.f32 %v89, %v129
  %v146 = vmul.f32 %v90, %v129
  %v147 = vmul.f32 %v91, %v129
  %v148 = vmul.f32 %v92, %v129
  %v149 = vmul.f32 %v93, %v129
  %v150 = vmul.f32 %v94, %v129
  %v151 = vmul.f32 %v95, %v129
  %v152 = vmul.f32 %v96, %v129
  %v153 = vmul.f32 %v97, %v129
  %v154 = vmul.f32 %v98, %v129
  %v155 = vmul.f32 %v99, %v129
  %v156 = vmul.f32 %v100, %v129
  %v157 = vmul.f32 %v101, %v129
  %v158 = vmul.f32 %v102, %v129
  %v159 = vmul.f32 %v103, %v129
  %v160 = vmul.f32 %v104, %v129
  %v161 = vmul.f32 %v105, %v129
  %v162 = vmul.f32 %v106, %v129
  %v163 = vmul.f32 %v107, %v129
  %v164 = vmul.f32 %v108, %v129
  %v165 = vmul.f32 %v109, %v129
  %v166 = vmul.f32 %v110, %v129
  %v167 = vmul.f32 %v111, %v129
  %v168 = vmul.f32 %v112, %v129
  %v169 = vmul.f32 %v113, %v129
  %v170 = vmul.f32 %v114, %v129
  %v171 = vmul.f32 %v115, %v129
  %v172 = vmul.f32 %v116, %v129
  %v173 = vmul.f32 %v117, %v129
  %v174 = vmul.f32 %v118, %v129
  %v175 = vmul.f32 %v119, %v129
  %v176 = vmul.f32 %v120, %v129
  %v177 = vmul.f32 %v121, %v129
  %v178 = vmul.f32 %v122, %v129
  %v179 = vmul.f32 %v123, %v129
  %v180 = vmul.f32 %v124, %v129
  %v181 = vmul.f32 %v125, %v129
  %v182 = vmul.f32 %v126, %v129
  %v183 = vld [vmem:[%s4] sm:$0x1]
  %v185 = vperm.slane %v183, 0
  %v187 = vadd.f32 %v131, %v185
  %v188 = vadd.f32 %v132, %v185
  %v189 = vadd.f32 %v133, %v185
  %v190 = vadd.f32 %v134, %v185
  %v191 = vadd.f32 %v135, %v185
  %v192 = vadd.f32 %v136, %v185
  %v193 = vadd.f32 %v137, %v185
  %v194 = vadd.f32 %v138, %v185
  %v195 = vadd.f32 %v139, %v185
  %v196 = vadd.f32 %v140, %v185
  %v197 = vadd.f32 %v141, %v185
  %v198 = vadd.f32 %v142, %v185
  %v199 = vadd.f32 %v143, %v185
  %v200 = vadd.f32 %v144, %v185
  %v201 = vadd.f32 %v145, %v185
  %v202 = vadd.f32 %v146, %v185
  %v203 = vadd.f32 %v147, %v185
  %v204 = vadd.f32 %v148, %v185
  %v205 = vadd.f32 %v149, %v185
  %v206 = vadd.f32 %v150, %v185
  %v207 = vadd.f32 %v151, %v185
  %v208 = vadd.f32 %v152, %v185
  %v209 = vadd.f32 %v153, %v185
  %v210 = vadd.f32 %v154, %v185
  %v211 = vadd.f32 %v155, %v185
  %v212 = vadd.f32 %v156, %v185
  %v213 = vadd.f32 %v157, %v185
  %v214 = vadd.f32 %v158, %v185
  %v215 = vadd.f32 %v159, %v185
  %v216 = vadd.f32 %v160, %v185
  %v217 = vadd.f32 %v161, %v185
  %v218 = vadd.f32 %v162, %v185
  %v219 = vadd.f32 %v163, %v185
  %v220 = vadd.f32 %v164, %v185
  %v221 = vadd.f32 %v165, %v185
  %v222 = vadd.f32 %v166, %v185
  %v223 = vadd.f32 %v167, %v185
  %v224 = vadd.f32 %v168, %v185
  %v225 = vadd.f32 %v169, %v185
  %v226 = vadd.f32 %v170, %v185
  %v227 = vadd.f32 %v171, %v185
  %v228 = vadd.f32 %v172, %v185
  %v229 = vadd.f32 %v173, %v185
  %v230 = vadd.f32 %v174, %v185
  %v231 = vadd.f32 %v175, %v185
  %v232 = vadd.f32 %v176, %v185
  %v233 = vadd.f32 %v177, %v185
  %v234 = vadd.f32 %v178, %v185
  %v235 = vadd.f32 %v179, %v185
  %v236 = vadd.f32 %v180, %v185
  %v237 = vadd.f32 %v181, %v185
  %v238 = vadd.f32 %v182, %v185
  %v239 = vld [vmem:[%s1] sm:$0xff]
  %v240 = vld [vmem:[%s1 + $0x8] sm:$0xff]
  %v241 = vld [vmem:[%s1 + $0x10] sm:$0xff]
  %v242 = vld [vmem:[%s1 + $0x18] sm:$0xff]
  %v243 = vld [vmem:[%s1 + $0x20] sm:$0xff]
  %v244 = vld [vmem:[%s1 + $0x28] sm:$0xff]
  %v245 = vld [vmem:[%s1 + $0x30] sm:$0xff]
  %v246 = vld [vmem:[%s1 + $0x38] sm:$0xff]
  %v247 = vld [vmem:[%s1 + $0x40] sm:$0xff]
  %v248 = vld [vmem:[%s1 + $0x48] sm:$0xff]
  %v249 = vld [vmem:[%s1 + $0x50] sm:$0xff]
  %v250 = vld [vmem:[%s1 + $0x58] sm:$0xff]
  %v251 = vld [vmem:[%s1 + $0x60] sm:$0xff]
  %v252 = vld [vmem:[%s1 + $0x68] sm:$0xff]
  %v253 = vld [vmem:[%s1 + $0x70] sm:$0xff]
  %v254 = vld [vmem:[%s1 + $0x78] sm:$0xff]
  %v255 = vld [vmem:[%s1 + $0x80] sm:$0xff]
  %v256 = vld [vmem:[%s1 + $0x88] sm:$0xff]
  %v257 = vld [vmem:[%s1 + $0x90] sm:$0xff]
  %v258 = vld [vmem:[%s1 + $0x98] sm:$0xff]
  %v259 = vld [vmem:[%s1 + $0xa0] sm:$0xff]
  %v260 = vld [vmem:[%s1 + $0xa8] sm:$0xff]
  %v261 = vld [vmem:[%s1 + $0xb0] sm:$0xff]
  %v262 = vld [vmem:[%s1 + $0xb8] sm:$0xff]
  %v263 = vld [vmem:[%s1 + $0xc0] sm:$0xff]
  %v264 = vld [vmem:[%s1 + $0xc8] sm:$0xff]
  %v265 = vld [vmem:[%s1 + $0xd0] sm:$0xff]
  %v266 = vld [vmem:[%s1 + $0xd8] sm:$0xff]
  %v267 = vld [vmem:[%s1 + $0xe0] sm:$0xff]
  %v268 = vld [vmem:[%s1 + $0xe8] sm:$0xff]
  %v269 = vld [vmem:[%s1 + $0xf0] sm:$0xff]
  %v270 = vld [vmem:[%s1 + $0xf8] sm:$0xff]
  %v271 = vld [vmem:[%s1 + $0x100] sm:$0xff]
  %v272 = vld [vmem:[%s1 + $0x108] sm:$0xff]
  %v273 = vld [vmem:[%s1 + $0x110] sm:$0xff]
  %v274 = vld [vmem:[%s1 + $0x118] sm:$0xff]
  %v275 = vld [vmem:[%s1 + $0x120] sm:$0xff]
  %v276 = vld [vmem:[%s1 + $0x128] sm:$0xff]
  %v277 = vld [vmem:[%s1 + $0x130] sm:$0xff]
  %v278 = vld [vmem:[%s1 + $0x138] sm:$0xff]
  %v279 = vld [vmem:[%s1 + $0x140] sm:$0xff]
  %v280 = vld [vmem:[%s1 + $0x148] sm:$0xff]
  %v281 = vld [vmem:[%s1 + $0x150] sm:$0xff]
  %v282 = vld [vmem:[%s1 + $0x158] sm:$0xff]
  %v283 = vld [vmem:[%s1 + $0x160] sm:$0xff]
  %v284 = vld [vmem:[%s1 + $0x168] sm:$0xff]
  %v285 = vld [vmem:[%s1 + $0x170] sm:$0xff]
  %v286 = vld [vmem:[%s1 + $0x178] sm:$0xff]
  %v287 = vld [vmem:[%s1 + $0x180] sm:$0xff]
  %v288 = vld [vmem:[%s1 + $0x188] sm:$0xff]
  %v289 = vld [vmem:[%s1 + $0x190] sm:$0xff]
  %v290 = vld [vmem:[%s1 + $0x198] sm:$0xff]
  %v291 = vadd.f32 %v187, %v239
  %v292 = vadd.f32 %v188, %v240
  %v293 = vadd.f32 %v189, %v241
  %v294 = vadd.f32 %v190, %v242
  %v295 = vadd.f32 %v191, %v243
  %v296 = vadd.f32 %v192, %v244
  %v297 = vadd.f32 %v193, %v245
  %v298 = vadd.f32 %v194, %v246
  %v299 = vadd.f32 %v195, %v247
  %v300 = vadd.f32 %v196, %v248
  %v301 = vadd.f32 %v197, %v249
  %v302 = vadd.f32 %v198, %v250
  %v303 = vadd.f32 %v199, %v251
  %v304 = vadd.f32 %v200, %v252
  %v305 = vadd.f32 %v201, %v253
  %v306 = vadd.f32 %v202, %v254
  %v307 = vadd.f32 %v203, %v255
  %v308 = vadd.f32 %v204, %v256
  %v309 = vadd.f32 %v205, %v257
  %v310 = vadd.f32 %v206, %v258
  %v311 = vadd.f32 %v207, %v259
  %v312 = vadd.f32 %v208, %v260
  %v313 = vadd.f32 %v209, %v261
  %v314 = vadd.f32 %v210, %v262
  %v315 = vadd.f32 %v211, %v263
  %v316 = vadd.f32 %v212, %v264
  %v317 = vadd.f32 %v213, %v265
  %v318 = vadd.f32 %v214, %v266
  %v319 = vadd.f32 %v215, %v267
  %v320 = vadd.f32 %v216, %v268
  %v321 = vadd.f32 %v217, %v269
  %v322 = vadd.f32 %v218, %v270
  %v323 = vadd.f32 %v219, %v271
  %v324 = vadd.f32 %v220, %v272
  %v325 = vadd.f32 %v221, %v273
  %v326 = vadd.f32 %v222, %v274
  %v327 = vadd.f32 %v223, %v275
  %v328 = vadd.f32 %v224, %v276
  %v329 = vadd.f32 %v225, %v277
  %v330 = vadd.f32 %v226, %v278
  %v331 = vadd.f32 %v227, %v279
  %v332 = vadd.f32 %v228, %v280
  %v333 = vadd.f32 %v229, %v281
  %v334 = vadd.f32 %v230, %v282
  %v335 = vadd.f32 %v231, %v283
  %v336 = vadd.f32 %v232, %v284
  %v337 = vadd.f32 %v233, %v285
  %v338 = vadd.f32 %v234, %v286
  %v339 = vadd.f32 %v235, %v287
  %v340 = vadd.f32 %v236, %v288
  %v341 = vadd.f32 %v237, %v289
  %v342 = vadd.f32 %v238, %v290
  %v343 = vmax.f32 %v291, 0.0
  %v344 = vmax.f32 %v292, 0.0
  %v345 = vmax.f32 %v293, 0.0
  %v346 = vmax.f32 %v294, 0.0
  %v347 = vmax.f32 %v295, 0.0
  %v348 = vmax.f32 %v296, 0.0
  %v349 = vmax.f32 %v297, 0.0
  %v350 = vmax.f32 %v298, 0.0
  %v351 = vmax.f32 %v299, 0.0
  %v352 = vmax.f32 %v300, 0.0
  %v353 = vmax.f32 %v301, 0.0
  %v354 = vmax.f32 %v302, 0.0
  %v355 = vmax.f32 %v303, 0.0
  %v356 = vmax.f32 %v304, 0.0
  %v357 = vmax.f32 %v305, 0.0
  %v358 = vmax.f32 %v306, 0.0
  %v359 = vmax.f32 %v307, 0.0
  %v360 = vmax.f32 %v308, 0.0
  %v361 = vmax.f32 %v309, 0.0
  %v362 = vmax.f32 %v310, 0.0
  %v363 = vmax.f32 %v311, 0.0
  %v364 = vmax.f32 %v312, 0.0
  %v365 = vmax.f32 %v313, 0.0
  %v366 = vmax.f32 %v314, 0.0
  %v367 = vmax.f32 %v315, 0.0
  %v368 = vmax.f32 %v316, 0.0
  %v369 = vmax.f32 %v317, 0.0
  %v370 = vmax.f32 %v318, 0.0
  %v371 = vmax.f32 %v319, 0.0
  %v372 = vmax.f32 %v320, 0.0
  %v373 = vmax.f32 %v321, 0.0
  %v374 = vmax.f32 %v322, 0.0
  %v375 = vmax.f32 %v323, 0.0
  %v376 = vmax.f32 %v324, 0.0
  %v377 = vmax.f32 %v325, 0.0
  %v378 = vmax.f32 %v326, 0.0
  %v379 = vmax.f32 %v327, 0.0
  %v380 = vmax.f32 %v328, 0.0
  %v381 = vmax.f32 %v329, 0.0
  %v382 = vmax.f32 %v330, 0.0
  %v383 = vmax.f32 %v331, 0.0
  %v384 = vmax.f32 %v332, 0.0
  %v385 = vmax.f32 %v333, 0.0
  %v386 = vmax.f32 %v334, 0.0
  %v387 = vmax.f32 %v335, 0.0
  %v388 = vmax.f32 %v336, 0.0
  %v389 = vmax.f32 %v337, 0.0
  %v390 = vmax.f32 %v338, 0.0
  %v391 = vmax.f32 %v339, 0.0
  %v392 = vmax.f32 %v340, 0.0
  %v393 = vmax.f32 %v341, 0.0
  %v394 = vmax.f32 %v342, 0.0
  %396 = vset.pattern.permute.xlu0 0
  %397 = vperm.xlu0 %396, %v23
  %v398 = vpop.permute.xlu0 %397
  %401 = vset.pattern.permute.xlu0 0
  %402 = vperm.xlu0 %401, %v24
  %v403 = vpop.permute.xlu0 %402
  %406 = vset.pattern.permute.xlu0 0
  %407 = vperm.xlu0 %406, %v25
  %v408 = vpop.permute.xlu0 %407
  %411 = vset.pattern.permute.xlu0 0
  %412 = vperm.xlu0 %411, %v26
  %v413 = vpop.permute.xlu0 %412
  %416 = vset.pattern.permute.xlu0 0
  %417 = vperm.xlu0 %416, %v27
  %v418 = vpop.permute.xlu0 %417
  %421 = vset.pattern.permute.xlu0 0
  %422 = vperm.xlu0 %421, %v28
  %v423 = vpop.permute.xlu0 %422
  %426 = vset.pattern.permute.xlu0 0
  %427 = vperm.xlu0 %426, %v29
  %v428 = vpop.permute.xlu0 %427
  %431 = vset.pattern.permute.xlu0 0
  %432 = vperm.xlu0 %431, %v30
  %v433 = vpop.permute.xlu0 %432
  %436 = vset.pattern.permute.xlu0 0
  %437 = vperm.xlu0 %436, %v31
  %v438 = vpop.permute.xlu0 %437
  %441 = vset.pattern.permute.xlu0 0
  %442 = vperm.xlu0 %441, %v32
  %v443 = vpop.permute.xlu0 %442
  %446 = vset.pattern.permute.xlu0 0
  %447 = vperm.xlu0 %446, %v33
  %v448 = vpop.permute.xlu0 %447
  %451 = vset.pattern.permute.xlu0 0
  %452 = vperm.xlu0 %451, %v34
  %v453 = vpop.permute.xlu0 %452
  %456 = vset.pattern.permute.xlu0 0
  %457 = vperm.xlu0 %456, %v35
  %v458 = vpop.permute.xlu0 %457
  %461 = vset.pattern.permute.xlu0 0
  %462 = vperm.xlu0 %461, %v36
  %v463 = vpop.permute.xlu0 %462
  %466 = vset.pattern.permute.xlu0 0
  %467 = vperm.xlu0 %466, %v37
  %v468 = vpop.permute.xlu0 %467
  %471 = vset.pattern.permute.xlu0 0
  %472 = vperm.xlu0 %471, %v38
  %v473 = vpop.permute.xlu0 %472
  %476 = vset.pattern.permute.xlu0 0
  %477 = vperm.xlu0 %476, %v39
  %v478 = vpop.permute.xlu0 %477
  %481 = vset.pattern.permute.xlu0 0
  %482 = vperm.xlu0 %481, %v40
  %v483 = vpop.permute.xlu0 %482
  %486 = vset.pattern.permute.xlu0 0
  %487 = vperm.xlu0 %486, %v41
  %v488 = vpop.permute.xlu0 %487
  %491 = vset.pattern.permute.xlu0 0
  %492 = vperm.xlu0 %491, %v42
  %v493 = vpop.permute.xlu0 %492
  %496 = vset.pattern.permute.xlu0 0
  %497 = vperm.xlu0 %496, %v43
  %v498 = vpop.permute.xlu0 %497
  %501 = vset.pattern.permute.xlu0 0
  %502 = vperm.xlu0 %501, %v44
  %v503 = vpop.permute.xlu0 %502
  %506 = vset.pattern.permute.xlu0 0
  %507 = vperm.xlu0 %506, %v45
  %v508 = vpop.permute.xlu0 %507
  %511 = vset.pattern.permute.xlu0 0
  %512 = vperm.xlu0 %511, %v46
  %v513 = vpop.permute.xlu0 %512
  %516 = vset.pattern.permute.xlu0 0
  %517 = vperm.xlu0 %516, %v47
  %v518 = vpop.permute.xlu0 %517
  %521 = vset.pattern.permute.xlu0 0
  %522 = vperm.xlu0 %521, %v48
  %v523 = vpop.permute.xlu0 %522
  %526 = vset.pattern.permute.xlu0 0
  %527 = vperm.xlu0 %526, %v49
  %v528 = vpop.permute.xlu0 %527
  %531 = vset.pattern.permute.xlu0 0
  %532 = vperm.xlu0 %531, %v50
  %v533 = vpop.permute.xlu0 %532
  %536 = vset.pattern.permute.xlu0 0
  %537 = vperm.xlu0 %536, %v51
  %v538 = vpop.permute.xlu0 %537
  %541 = vset.pattern.permute.xlu0 0
  %542 = vperm.xlu0 %541, %v52
  %v543 = vpop.permute.xlu0 %542
  %546 = vset.pattern.permute.xlu0 0
  %547 = vperm.xlu0 %546, %v53
  %v548 = vpop.permute.xlu0 %547
  %551 = vset.pattern.permute.xlu0 0
  %552 = vperm.xlu0 %551, %v54
  %v553 = vpop.permute.xlu0 %552
  %556 = vset.pattern.permute.xlu0 0
  %557 = vperm.xlu0 %556, %v55
  %v558 = vpop.permute.xlu0 %557
  %561 = vset.pattern.permute.xlu0 0
  %562 = vperm.xlu0 %561, %v56
  %v563 = vpop.permute.xlu0 %562
  %566 = vset.pattern.permute.xlu0 0
  %567 = vperm.xlu0 %566, %v57
  %v568 = vpop.permute.xlu0 %567
  %571 = vset.pattern.permute.xlu0 0
  %572 = vperm.xlu0 %571, %v58
  %v573 = vpop.permute.xlu0 %572
  %576 = vset.pattern.permute.xlu0 0
  %577 = vperm.xlu0 %576, %v59
  %v578 = vpop.permute.xlu0 %577
  %581 = vset.pattern.permute.xlu0 0
  %582 = vperm.xlu0 %581, %v60
  %v583 = vpop.permute.xlu0 %582
  %586 = vset.pattern.permute.xlu0 0
  %587 = vperm.xlu0 %586, %v61
  %v588 = vpop.permute.xlu0 %587
  %591 = vset.pattern.permute.xlu0 0
  %592 = vperm.xlu0 %591, %v62
  %v593 = vpop.permute.xlu0 %592
  %596 = vset.pattern.permute.xlu0 0
  %597 = vperm.xlu0 %596, %v63
  %v598 = vpop.permute.xlu0 %597
  %601 = vset.pattern.permute.xlu0 0
  %602 = vperm.xlu0 %601, %v64
  %v603 = vpop.permute.xlu0 %602
  %606 = vset.pattern.permute.xlu0 0
  %607 = vperm.xlu0 %606, %v65
  %v608 = vpop.permute.xlu0 %607
  %611 = vset.pattern.permute.xlu0 0
  %612 = vperm.xlu0 %611, %v66
  %v613 = vpop.permute.xlu0 %612
  %616 = vset.pattern.permute.xlu0 0
  %617 = vperm.xlu0 %616, %v67
  %v618 = vpop.permute.xlu0 %617
  %621 = vset.pattern.permute.xlu0 0
  %622 = vperm.xlu0 %621, %v68
  %v623 = vpop.permute.xlu0 %622
  %626 = vset.pattern.permute.xlu0 0
  %627 = vperm.xlu0 %626, %v69
  %v628 = vpop.permute.xlu0 %627
  %631 = vset.pattern.permute.xlu0 0
  %632 = vperm.xlu0 %631, %v70
  %v633 = vpop.permute.xlu0 %632
  %636 = vset.pattern.permute.xlu0 0
  %637 = vperm.xlu0 %636, %v71
  %v638 = vpop.permute.xlu0 %637
  %641 = vset.pattern.permute.xlu0 0
  %642 = vperm.xlu0 %641, %v72
  %v643 = vpop.permute.xlu0 %642
  %646 = vset.pattern.permute.xlu0 0
  %647 = vperm.xlu0 %646, %v73
  %v648 = vpop.permute.xlu0 %647
  %651 = vset.pattern.permute.xlu0 0
  %652 = vperm.xlu0 %651, %v74
  %v653 = vpop.permute.xlu0 %652
  %v655 = vmul.f32 %v343, %v398
  %v656 = vmul.f32 %v344, %v403
  %v657 = vmul.f32 %v345, %v408
  %v658 = vmul.f32 %v346, %v413
  %v659 = vmul.f32 %v347, %v418
  %v660 = vmul.f32 %v348, %v423
  %v661 = vmul.f32 %v349, %v428
  %v662 = vmul.f32 %v350, %v433
  %v663 = vmul.f32 %v351, %v438
  %v664 = vmul.f32 %v352, %v443
  %v665 = vmul.f32 %v353, %v448
  %v666 = vmul.f32 %v354, %v453
  %v667 = vmul.f32 %v355, %v458
  %v668 = vmul.f32 %v356, %v463
  %v669 = vmul.f32 %v357, %v468
  %v670 = vmul.f32 %v358, %v473
  %v671 = vmul.f32 %v359, %v478
  %v672 = vmul.f32 %v360, %v483
  %v673 = vmul.f32 %v361, %v488
  %v674 = vmul.f32 %v362, %v493
  %v675 = vmul.f32 %v363, %v498
  %v676 = vmul.f32 %v364, %v503
  %v677 = vmul.f32 %v365, %v508
  %v678 = vmul.f32 %v366, %v513
  %v679 = vmul.f32 %v367, %v518
  %v680 = vmul.f32 %v368, %v523
  %v681 = vmul.f32 %v369, %v528
  %v682 = vmul.f32 %v370, %v533
  %v683 = vmul.f32 %v371, %v538
  %v684 = vmul.f32 %v372, %v543
  %v685 = vmul.f32 %v373, %v548
  %v686 = vmul.f32 %v374, %v553
  %v687 = vmul.f32 %v375, %v558
  %v688 = vmul.f32 %v376, %v563
  %v689 = vmul.f32 %v377, %v568
  %v690 = vmul.f32 %v378, %v573
  %v691 = vmul.f32 %v379, %v578
  %v692 = vmul.f32 %v380, %v583
  %v693 = vmul.f32 %v381, %v588
  %v694 = vmul.f32 %v382, %v593
  %v695 = vmul.f32 %v383, %v598
  %v696 = vmul.f32 %v384, %v603
  %v697 = vmul.f32 %v385, %v608
  %v698 = vmul.f32 %v386, %v613
  %v699 = vmul.f32 %v387, %v618
  %v700 = vmul.f32 %v388, %v623
  %v701 = vmul.f32 %v389, %v628
  %v702 = vmul.f32 %v390, %v633
  %v703 = vmul.f32 %v391, %v638
  %v704 = vmul.f32 %v392, %v643
  %v705 = vmul.f32 %v393, %v648
  %v706 = vmul.f32 %v394, %v653
  %707 = vst [vmem:[#allocation2] sm:$0xff] %v655
  %708 = vst [vmem:[#allocation2 + $0x8] sm:$0xff] %v656
  %709 = vst [vmem:[#allocation2 + $0x10] sm:$0xff] %v657
  %710 = vst [vmem:[#allocation2 + $0x18] sm:$0xff] %v658
  %711 = vst [vmem:[#allocation2 + $0x20] sm:$0xff] %v659
  %712 = vst [vmem:[#allocation2 + $0x28] sm:$0xff] %v660
  %713 = vst [vmem:[#allocation2 + $0x30] sm:$0xff] %v661
  %714 = vst [vmem:[#allocation2 + $0x38] sm:$0xff] %v662
  %715 = vst [vmem:[#allocation2 + $0x40] sm:$0xff] %v663
  %716 = vst [vmem:[#allocation2 + $0x48] sm:$0xff] %v664
  %717 = vst [vmem:[#allocation2 + $0x50] sm:$0xff] %v665
  %718 = vst [vmem:[#allocation2 + $0x58] sm:$0xff] %v666
  %719 = vst [vmem:[#allocation2 + $0x60] sm:$0xff] %v667
  %720 = vst [vmem:[#allocation2 + $0x68] sm:$0xff] %v668
  %721 = vst [vmem:[#allocation2 + $0x70] sm:$0xff] %v669
  %722 = vst [vmem:[#allocation2 + $0x78] sm:$0xff] %v670
  %723 = vst [vmem:[#allocation2 + $0x80] sm:$0xff] %v671
  %724 = vst [vmem:[#allocation2 + $0x88] sm:$0xff] %v672
  %725 = vst [vmem:[#allocation2 + $0x90] sm:$0xff] %v673
  %726 = vst [vmem:[#allocation2 + $0x98] sm:$0xff] %v674
  %727 = vst [vmem:[#allocation2 + $0xa0] sm:$0xff] %v675
  %728 = vst [vmem:[#allocation2 + $0xa8] sm:$0xff] %v676
  %729 = vst [vmem:[#allocation2 + $0xb0] sm:$0xff] %v677
  %730 = vst [vmem:[#allocation2 + $0xb8] sm:$0xff] %v678
  %731 = vst [vmem:[#allocation2 + $0xc0] sm:$0xff] %v679
  %732 = vst [vmem:[#allocation2 + $0xc8] sm:$0xff] %v680
  %733 = vst [vmem:[#allocation2 + $0xd0] sm:$0xff] %v681
  %734 = vst [vmem:[#allocation2 + $0xd8] sm:$0xff] %v682
  %735 = vst [vmem:[#allocation2 + $0xe0] sm:$0xff] %v683
  %736 = vst [vmem:[#allocation2 + $0xe8] sm:$0xff] %v684
  %737 = vst [vmem:[#allocation2 + $0xf0] sm:$0xff] %v685
  %738 = vst [vmem:[#allocation2 + $0xf8] sm:$0xff] %v686
  %739 = vst [vmem:[#allocation2 + $0x100] sm:$0xff] %v687
  %740 = vst [vmem:[#allocation2 + $0x108] sm:$0xff] %v688
  %741 = vst [vmem:[#allocation2 + $0x110] sm:$0xff] %v689
  %742 = vst [vmem:[#allocation2 + $0x118] sm:$0xff] %v690
  %743 = vst [vmem:[#allocation2 + $0x120] sm:$0xff] %v691
  %744 = vst [vmem:[#allocation2 + $0x128] sm:$0xff] %v692
  %745 = vst [vmem:[#allocation2 + $0x130] sm:$0xff] %v693
  %746 = vst [vmem:[#allocation2 + $0x138] sm:$0xff] %v694
  %747 = vst [vmem:[#allocation2 + $0x140] sm:$0xff] %v695
  %748 = vst [vmem:[#allocation2 + $0x148] sm:$0xff] %v696
  %749 = vst [vmem:[#allocation2 + $0x150] sm:$0xff] %v697
  %750 = vst [vmem:[#allocation2 + $0x158] sm:$0xff] %v698
  %751 = vst [vmem:[#allocation2 + $0x160] sm:$0xff] %v699
  %752 = vst [vmem:[#allocation2 + $0x168] sm:$0xff] %v700
  %753 = vst [vmem:[#allocation2 + $0x170] sm:$0xff] %v701
  %754 = vst [vmem:[#allocation2 + $0x178] sm:$0xff] %v702
  %755 = vst [vmem:[#allocation2 + $0x180] sm:$0xff] %v703
  %756 = vst [vmem:[#allocation2 + $0x188] sm:$0xff] %v704
  %757 = vst [vmem:[#allocation2 + $0x190] sm:$0xff] %v705
  %758 = vst [vmem:[#allocation2 + $0x198] sm:$0xff] %v706
  %v759 = vld [vmem:[#allocation2 + $0x5d] sm:$0xff]
  %v760 = vld [vmem:[#allocation2 + $0x65] sm:$0xff]
  %v761 = vld [vmem:[#allocation2 + $0x6d] sm:$0xff]
  %v762 = vld [vmem:[#allocation2 + $0x75] sm:$0xff]
  %v763 = vld [vmem:[#allocation2 + $0x7d] sm:$0xff]
  %v764 = vld [vmem:[#allocation2 + $0x85] sm:$0xff]
  %v765 = vld [vmem:[#allocation2 + $0x8d] sm:$0xff]
  %v766 = vld [vmem:[#allocation2 + $0x95] sm:$0xff]
  %v767 = vld [vmem:[#allocation2 + $0x9d] sm:$0xff]
  %v768 = vld [vmem:[#allocation2 + $0xa5] sm:$0xff]
  %v769 = vld [vmem:[#allocation2 + $0xad] sm:$0xff]
  %v770 = vld [vmem:[#allocation2 + $0xb5] sm:$0xff]
  %v771 = vld [vmem:[#allocation2 + $0xbd] sm:$0xff]
  %v772 = vld [vmem:[#allocation2 + $0xc5] sm:$0xff]
  %v773 = vld [vmem:[#allocation2 + $0xcd] sm:$0xff]
  %v774 = vld [vmem:[#allocation2 + $0xd5] sm:$0xff]
  %v775 = vld [vmem:[#allocation2 + $0xdd] sm:$0xff]
  %v776 = vld [vmem:[#allocation2 + $0xe5] sm:$0xff]
  %v777 = vld [vmem:[#allocation2 + $0xed] sm:$0xff]
  %v778 = vld [vmem:[#allocation2 + $0xf5] sm:$0xff]
  %v779 = vld [vmem:[#allocation2 + $0xfd] sm:$0xff]
  %v780 = vld [vmem:[#allocation2 + $0x105] sm:$0xff]
  %v781 = vld [vmem:[#allocation2 + $0x10d] sm:$0xff]
  %v782 = vld [vmem:[#allocation2 + $0x115] sm:$0xff]
  %v783 = vld [vmem:[#allocation2 + $0x11d] sm:$0xff]
  %v784 = vld [vmem:[#allocation2 + $0x125] sm:$0xff]
  %v785 = vpack.c.bf16 %v760, %v759
  %v786 = vpack.c.bf16 %v762, %v761
  %v787 = vpack.c.bf16 %v764, %v763
  %v788 = vpack.c.bf16 %v766, %v765
  %v789 = vpack.c.bf16 %v768, %v767
  %v790 = vpack.c.bf16 %v770, %v769
  %v791 = vpack.c.bf16 %v772, %v771
  %v792 = vpack.c.bf16 %v774, %v773
  %v793 = vpack.c.bf16 %v776, %v775
  %v794 = vpack.c.bf16 %v778, %v777
  %v795 = vpack.c.bf16 %v780, %v779
  %v796 = vpack.c.bf16 %v782, %v781
  %v797 = vpack.c.bf16 %v784, %v783
  %v798 = vld [vmem:[%s2] sm:$0xf]
  %v799 = vld [vmem:[%s2 + $0x4] sm:$0xf]
  %v800 = vld [vmem:[%s2 + $0x8] sm:$0xf]
  %v801 = vld [vmem:[%s2 + $0xc] sm:$0xf]
  %v802 = vld [vmem:[%s2 + $0x10] sm:$0xf]
  %v803 = vld [vmem:[%s2 + $0x14] sm:$0xf]
  %v804 = vld [vmem:[%s2 + $0x18] sm:$0xf]
  %v805 = vld [vmem:[%s2 + $0x1c] sm:$0xf]
  %v806 = vld [vmem:[%s2 + $0x20] sm:$0xf]
  %v807 = vld [vmem:[%s2 + $0x24] sm:$0xf]
  %v808 = vld [vmem:[%s2 + $0x28] sm:$0xf]
  %v809 = vld [vmem:[%s2 + $0x2c] sm:$0xf]
  %v810 = vld [vmem:[%s2 + $0x30] sm:$0xf]
  %v811 = vld [vmem:[%s2 + $0x34] sm:$0xf]
  %v812 = vld [vmem:[%s2 + $0x38] sm:$0xf]
  %v813 = vld [vmem:[%s2 + $0x3c] sm:$0xf]
  %v814 = vld [vmem:[#allocation2 + $0x5e] sm:$0xff]
  %v815 = vld [vmem:[#allocation2 + $0x66] sm:$0xff]
  %v816 = vld [vmem:[#allocation2 + $0x6e] sm:$0xff]
  %v817 = vld [vmem:[#allocation2 + $0x76] sm:$0xff]
  %v818 = vld [vmem:[#allocation2 + $0x7e] sm:$0xff]
  %v819 = vld [vmem:[#allocation2 + $0x86] sm:$0xff]
  %v820 = vld [vmem:[#allocation2 + $0x8e] sm:$0xff]
  %v821 = vld [vmem:[#allocation2 + $0x96] sm:$0xff]
  %v822 = vld [vmem:[#allocation2 + $0x9e] sm:$0xff]
  %v823 = vld [vmem:[#allocation2 + $0xa6] sm:$0xff]
  %v824 = vld [vmem:[#allocation2 + $0xae] sm:$0xff]
  %v825 = vld [vmem:[#allocation2 + $0xb6] sm:$0xff]
  %v826 = vld [vmem:[#allocation2 + $0xbe] sm:$0xff]
  %v827 = vld [vmem:[#allocation2 + $0xc6] sm:$0xff]
  %v828 = vld [vmem:[#allocation2 + $0xce] sm:$0xff]
  %v829 = vld [vmem:[#allocation2 + $0xd6] sm:$0xff]
  %v830 = vld [vmem:[#allocation2 + $0xde] sm:$0xff]
  %v831 = vld [vmem:[#allocation2 + $0xe6] sm:$0xff]
  %v832 = vld [vmem:[#allocation2 + $0xee] sm:$0xff]
  %v833 = vld [vmem:[#allocation2 + $0xf6] sm:$0xff]
  %v834 = vld [vmem:[#allocation2 + $0xfe] sm:$0xff]
  %v835 = vld [vmem:[#allocation2 + $0x106] sm:$0xff]
  %v836 = vld [vmem:[#allocation2 + $0x10e] sm:$0xff]
  %v837 = vld [vmem:[#allocation2 + $0x116] sm:$0xff]
  %v838 = vld [vmem:[#allocation2 + $0x11e] sm:$0xff]
  %v839 = vld [vmem:[#allocation2 + $0x126] sm:$0xff]
  %v840 = vpack.c.bf16 %v815, %v814
  %v841 = vpack.c.bf16 %v817, %v816
  %v842 = vpack.c.bf16 %v819, %v818
  %v843 = vpack.c.bf16 %v821, %v820
  %v844 = vpack.c.bf16 %v823, %v822
  %v845 = vpack.c.bf16 %v825, %v824
  %v846 = vpack.c.bf16 %v827, %v826
  %v847 = vpack.c.bf16 %v829, %v828
  %v848 = vpack.c.bf16 %v831, %v830
  %v849 = vpack.c.bf16 %v833, %v832
  %v850 = vpack.c.bf16 %v835, %v834
  %v851 = vpack.c.bf16 %v837, %v836
  %v852 = vpack.c.bf16 %v839, %v838
  %s853 = scalar_lea.vmem %s2, 64
  %v854 = vld [vmem:[%s853] sm:$0xf]
  %v855 = vld [vmem:[%s853 + $0x4] sm:$0xf]
  %v856 = vld [vmem:[%s853 + $0x8] sm:$0xf]
  %v857 = vld [vmem:[%s853 + $0xc] sm:$0xf]
  %v858 = vld [vmem:[%s853 + $0x10] sm:$0xf]
  %v859 = vld [vmem:[%s853 + $0x14] sm:$0xf]
  %v860 = vld [vmem:[%s853 + $0x18] sm:$0xf]
  %v861 = vld [vmem:[%s853 + $0x1c] sm:$0xf]
  %v862 = vld [vmem:[%s853 + $0x20] sm:$0xf]
  %v863 = vld [vmem:[%s853 + $0x24] sm:$0xf]
  %v864 = vld [vmem:[%s853 + $0x28] sm:$0xf]
  %v865 = vld [vmem:[%s853 + $0x2c] sm:$0xf]
  %v866 = vld [vmem:[%s853 + $0x30] sm:$0xf]
  %v867 = vld [vmem:[%s853 + $0x34] sm:$0xf]
  %v868 = vld [vmem:[%s853 + $0x38] sm:$0xf]
  %v869 = vld [vmem:[%s853 + $0x3c] sm:$0xf]
  %v886 = vunpack.c.l.b16 %v854
  %v887 = vunpack.c.l.b16 %v855
  %v888 = vunpack.c.l.b16 %v856
  %v889 = vunpack.c.l.b16 %v857
  %v890 = vunpack.c.l.b16 %v858
  %v891 = vunpack.c.l.b16 %v859
  %v892 = vunpack.c.l.b16 %v860
  %v893 = vunpack.c.l.b16 %v861
  %v894 = vunpack.c.l.b16 %v862
  %v895 = vunpack.c.l.b16 %v863
  %v896 = vunpack.c.l.b16 %v864
  %v897 = vunpack.c.l.b16 %v865
  %v898 = vunpack.c.l.b16 %v866
  %v899 = vunpack.c.l.b16 %v867
  %v900 = vunpack.c.l.b16 %v868
  %v901 = vunpack.c.l.b16 %v869
  %v902 = vpack.c.b16 %v887, %v886
  %v903 = vpack.c.b16 %v889, %v888
  %v904 = vpack.c.b16 %v891, %v890
  %v905 = vpack.c.b16 %v893, %v892
  %v906 = vpack.c.b16 %v895, %v894
  %v907 = vpack.c.b16 %v897, %v896
  %v908 = vpack.c.b16 %v899, %v898
  %v909 = vpack.c.b16 %v901, %v900
  %918 = vmatpush.bf16.msra.mxu0 %v909
  %919 = vmatpush.bf16.msra.mxu0 %v908
  %920 = vmatpush.bf16.msra.mxu0 %v907
  %921 = vmatpush.bf16.msra.mxu0 %v906
  %922 = vmatpush.bf16.msra.mxu0 %v905
  %923 = vmatpush.bf16.msra.mxu0 %v904
  %924 = vmatpush.bf16.msra.mxu0 %v903
  %925 = vmatpush.bf16.msra.mxu0 %v902
  %926 = vmatmul.bf16.gmra.mxu0 %v840
  %v927 = vpop.f32.mrf.mxu0
  %v928 = vadd.f32 0.0, %v927
  %v929 = vpop.f32.mrf.mxu0
  %v930 = vadd.f32 0.0, %v929
  %931 = vmatmul.bf16.gmra.mxu0 %v841
  %v932 = vpop.f32.mrf.mxu0
  %v933 = vadd.f32 0.0, %v932
  %v934 = vpop.f32.mrf.mxu0
  %v935 = vadd.f32 0.0, %v934
  %936 = vmatmul.bf16.gmra.mxu0 %v842
  %v937 = vpop.f32.mrf.mxu0
  %v938 = vadd.f32 0.0, %v937
  %v939 = vpop.f32.mrf.mxu0
  %v940 = vadd.f32 0.0, %v939
  %941 = vmatmul.bf16.gmra.mxu0 %v843
  %v942 = vpop.f32.mrf.mxu0
  %v943 = vadd.f32 0.0, %v942
  %v944 = vpop.f32.mrf.mxu0
  %v945 = vadd.f32 0.0, %v944
  %946 = vmatmul.bf16.gmra.mxu0 %v844
  %v947 = vpop.f32.mrf.mxu0
  %v948 = vadd.f32 0.0, %v947
  %v949 = vpop.f32.mrf.mxu0
  %v950 = vadd.f32 0.0, %v949
  %951 = vmatmul.bf16.gmra.mxu0 %v845
  %v952 = vpop.f32.mrf.mxu0
  %v953 = vadd.f32 0.0, %v952
  %v954 = vpop.f32.mrf.mxu0
  %v955 = vadd.f32 0.0, %v954
  %956 = vmatmul.bf16.gmra.mxu0 %v846
  %v957 = vpop.f32.mrf.mxu0
  %v958 = vadd.f32 0.0, %v957
  %v959 = vpop.f32.mrf.mxu0
  %v960 = vadd.f32 0.0, %v959
  %961 = vmatmul.bf16.gmra.mxu0 %v847
  %v962 = vpop.f32.mrf.mxu0
  %v963 = vadd.f32 0.0, %v962
  %v964 = vpop.f32.mrf.mxu0
  %v965 = vadd.f32 0.0, %v964
  %966 = vmatmul.bf16.gmra.mxu0 %v848
  %v967 = vpop.f32.mrf.mxu0
  %v968 = vadd.f32 0.0, %v967
  %v969 = vpop.f32.mrf.mxu0
  %v970 = vadd.f32 0.0, %v969
  %971 = vmatmul.bf16.gmra.mxu0 %v849
  %v972 = vpop.f32.mrf.mxu0
  %v973 = vadd.f32 0.0, %v972
  %v974 = vpop.f32.mrf.mxu0
  %v975 = vadd.f32 0.0, %v974
  %976 = vmatmul.bf16.gmra.mxu0 %v850
  %v977 = vpop.f32.mrf.mxu0
  %v978 = vadd.f32 0.0, %v977
  %v979 = vpop.f32.mrf.mxu0
  %v980 = vadd.f32 0.0, %v979
  %981 = vmatmul.bf16.gmra.mxu0 %v851
  %v982 = vpop.f32.mrf.mxu0
  %v983 = vadd.f32 0.0, %v982
  %v984 = vpop.f32.mrf.mxu0
  %v985 = vadd.f32 0.0, %v984
  %986 = vmatmul.bf16.gmra.mxu0 %v852
  %v987 = vpop.f32.mrf.mxu0
  %v988 = vadd.f32 0.0, %v987
  %v989 = vpop.f32.mrf.mxu0
  %v990 = vadd.f32 0.0, %v989
  %991 = vdwg.mxu0
  %v1008 = vunpack.c.l.b16 %v798
  %v1009 = vunpack.c.l.b16 %v799
  %v1010 = vunpack.c.l.b16 %v800
  %v1011 = vunpack.c.l.b16 %v801
  %v1012 = vunpack.c.l.b16 %v802
  %v1013 = vunpack.c.l.b16 %v803
  %v1014 = vunpack.c.l.b16 %v804
  %v1015 = vunpack.c.l.b16 %v805
  %v1016 = vunpack.c.l.b16 %v806
  %v1017 = vunpack.c.l.b16 %v807
  %v1018 = vunpack.c.l.b16 %v808
  %v1019 = vunpack.c.l.b16 %v809
  %v1020 = vunpack.c.l.b16 %v810
  %v1021 = vunpack.c.l.b16 %v811
  %v1022 = vunpack.c.l.b16 %v812
  %v1023 = vunpack.c.l.b16 %v813
  %v1024 = vpack.c.b16 %v1009, %v1008
  %v1025 = vpack.c.b16 %v1011, %v1010
  %v1026 = vpack.c.b16 %v1013, %v1012
  %v1027 = vpack.c.b16 %v1015, %v1014
  %v1028 = vpack.c.b16 %v1017, %v1016
  %v1029 = vpack.c.b16 %v1019, %v1018
  %v1030 = vpack.c.b16 %v1021, %v1020
  %v1031 = vpack.c.b16 %v1023, %v1022
  %1040 = vmatpush.bf16.msra.mxu0 %v1031
  %1041 = vmatpush.bf16.msra.mxu0 %v1030
  %1042 = vmatpush.bf16.msra.mxu0 %v1029
  %1043 = vmatpush.bf16.msra.mxu0 %v1028
  %1044 = vmatpush.bf16.msra.mxu0 %v1027
  %1045 = vmatpush.bf16.msra.mxu0 %v1026
  %1046 = vmatpush.bf16.msra.mxu0 %v1025
  %1047 = vmatpush.bf16.msra.mxu0 %v1024
  %1048 = vmatmul.bf16.gmra.mxu0 %v785
  %v1049 = vpop.f32.mrf.mxu0
  %v1050 = vadd.f32 %v928, %v1049
  %v1051 = vpop.f32.mrf.mxu0
  %v1052 = vadd.f32 %v930, %v1051
  %1053 = vmatmul.bf16.gmra.mxu0 %v786
  %v1054 = vpop.f32.mrf.mxu0
  %v1055 = vadd.f32 %v933, %v1054
  %v1056 = vpop.f32.mrf.mxu0
  %v1057 = vadd.f32 %v935, %v1056
  %1058 = vmatmul.bf16.gmra.mxu0 %v787
  %v1059 = vpop.f32.mrf.mxu0
  %v1060 = vadd.f32 %v938, %v1059
  %v1061 = vpop.f32.mrf.mxu0
  %v1062 = vadd.f32 %v940, %v1061
  %1063 = vmatmul.bf16.gmra.mxu0 %v788
  %v1064 = vpop.f32.mrf.mxu0
  %v1065 = vadd.f32 %v943, %v1064
  %v1066 = vpop.f32.mrf.mxu0
  %v1067 = vadd.f32 %v945, %v1066
  %1068 = vmatmul.bf16.gmra.mxu0 %v789
  %v1069 = vpop.f32.mrf.mxu0
  %v1070 = vadd.f32 %v948, %v1069
  %v1071 = vpop.f32.mrf.mxu0
  %v1072 = vadd.f32 %v950, %v1071
  %1073 = vmatmul.bf16.gmra.mxu0 %v790
  %v1074 = vpop.f32.mrf.mxu0
  %v1075 = vadd.f32 %v953, %v1074
  %v1076 = vpop.f32.mrf.mxu0
  %v1077 = vadd.f32 %v955, %v1076
  %1078 = vmatmul.bf16.gmra.mxu0 %v791
  %v1079 = vpop.f32.mrf.mxu0
  %v1080 = vadd.f32 %v958, %v1079
  %v1081 = vpop.f32.mrf.mxu0
  %v1082 = vadd.f32 %v960, %v1081
  %1083 = vmatmul.bf16.gmra.mxu0 %v792
  %v1084 = vpop.f32.mrf.mxu0
  %v1085 = vadd.f32 %v963, %v1084
  %v1086 = vpop.f32.mrf.mxu0
  %v1087 = vadd.f32 %v965, %v1086
  %1088 = vmatmul.bf16.gmra.mxu0 %v793
  %v1089 = vpop.f32.mrf.mxu0
  %v1090 = vadd.f32 %v968, %v1089
  %v1091 = vpop.f32.mrf.mxu0
  %v1092 = vadd.f32 %v970, %v1091
  %1093 = vmatmul.bf16.gmra.mxu0 %v794
  %v1094 = vpop.f32.mrf.mxu0
  %v1095 = vadd.f32 %v973, %v1094
  %v1096 = vpop.f32.mrf.mxu0
  %v1097 = vadd.f32 %v975, %v1096
  %1098 = vmatmul.bf16.gmra.mxu0 %v795
  %v1099 = vpop.f32.mrf.mxu0
  %v1100 = vadd.f32 %v978, %v1099
  %v1101 = vpop.f32.mrf.mxu0
  %v1102 = vadd.f32 %v980, %v1101
  %1103 = vmatmul.bf16.gmra.mxu0 %v796
  %v1104 = vpop.f32.mrf.mxu0
  %v1105 = vadd.f32 %v983, %v1104
  %v1106 = vpop.f32.mrf.mxu0
  %v1107 = vadd.f32 %v985, %v1106
  %1108 = vmatmul.bf16.gmra.mxu0 %v797
  %v1109 = vpop.f32.mrf.mxu0
  %v1110 = vadd.f32 %v988, %v1109
  %v1111 = vpop.f32.mrf.mxu0
  %v1112 = vadd.f32 %v990, %v1111
  %1113 = vdwg.mxu0
  %v1114 = vld [vmem:[#allocation2 + $0x5f] sm:$0xff]
  %v1115 = vld [vmem:[#allocation2 + $0x67] sm:$0xff]
  %v1116 = vld [vmem:[#allocation2 + $0x6f] sm:$0xff]
  %v1117 = vld [vmem:[#allocation2 + $0x77] sm:$0xff]
  %v1118 = vld [vmem:[#allocation2 + $0x7f] sm:$0xff]
  %v1119 = vld [vmem:[#allocation2 + $0x87] sm:$0xff]
  %v1120 = vld [vmem:[#allocation2 + $0x8f] sm:$0xff]
  %v1121 = vld [vmem:[#allocation2 + $0x97] sm:$0xff]
  %v1122 = vld [vmem:[#allocation2 + $0x9f] sm:$0xff]
  %v1123 = vld [vmem:[#allocation2 + $0xa7] sm:$0xff]
  %v1124 = vld [vmem:[#allocation2 + $0xaf] sm:$0xff]
  %v1125 = vld [vmem:[#allocation2 + $0xb7] sm:$0xff]
  %v1126 = vld [vmem:[#allocation2 + $0xbf] sm:$0xff]
  %v1127 = vld [vmem:[#allocation2 + $0xc7] sm:$0xff]
  %v1128 = vld [vmem:[#allocation2 + $0xcf] sm:$0xff]
  %v1129 = vld [vmem:[#allocation2 + $0xd7] sm:$0xff]
  %v1130 = vld [vmem:[#allocation2 + $0xdf] sm:$0xff]
  %v1131 = vld [vmem:[#allocation2 + $0xe7] sm:$0xff]
  %v1132 = vld [vmem:[#allocation2 + $0xef] sm:$0xff]
  %v1133 = vld [vmem:[#allocation2 + $0xf7] sm:$0xff]
  %v1134 = vld [vmem:[#allocation2 + $0xff] sm:$0xff]
  %v1135 = vld [vmem:[#allocation2 + $0x107] sm:$0xff]
  %v1136 = vld [vmem:[#allocation2 + $0x10f] sm:$0xff]
  %v1137 = vld [vmem:[#allocation2 + $0x117] sm:$0xff]
  %v1138 = vld [vmem:[#allocation2 + $0x11f] sm:$0xff]
  %v1139 = vld [vmem:[#allocation2 + $0x127] sm:$0xff]
  %v1140 = vpack.c.bf16 %v1115, %v1114
  %v1141 = vpack.c.bf16 %v1117, %v1116
  %v1142 = vpack.c.bf16 %v1119, %v1118
  %v1143 = vpack.c.bf16 %v1121, %v1120
  %v1144 = vpack.c.bf16 %v1123, %v1122
  %v1145 = vpack.c.bf16 %v1125, %v1124
  %v1146 = vpack.c.bf16 %v1127, %v1126
  %v1147 = vpack.c.bf16 %v1129, %v1128
  %v1148 = vpack.c.bf16 %v1131, %v1130
  %v1149 = vpack.c.bf16 %v1133, %v1132
  %v1150 = vpack.c.bf16 %v1135, %v1134
  %v1151 = vpack.c.bf16 %v1137, %v1136
  %v1152 = vpack.c.bf16 %v1139, %v1138
  %s1153 = scalar_lea.vmem %s2, 128
  %v1154 = vld [vmem:[%s1153] sm:$0xf]
  %v1155 = vld [vmem:[%s1153 + $0x4] sm:$0xf]
  %v1156 = vld [vmem:[%s1153 + $0x8] sm:$0xf]
  %v1157 = vld [vmem:[%s1153 + $0xc] sm:$0xf]
  %v1158 = vld [vmem:[%s1153 + $0x10] sm:$0xf]
  %v1159 = vld [vmem:[%s1153 + $0x14] sm:$0xf]
  %v1160 = vld [vmem:[%s1153 + $0x18] sm:$0xf]
  %v1161 = vld [vmem:[%s1153 + $0x1c] sm:$0xf]
  %v1162 = vld [vmem:[%s1153 + $0x20] sm:$0xf]
  %v1163 = vld [vmem:[%s1153 + $0x24] sm:$0xf]
  %v1164 = vld [vmem:[%s1153 + $0x28] sm:$0xf]
  %v1165 = vld [vmem:[%s1153 + $0x2c] sm:$0xf]
  %v1166 = vld [vmem:[%s1153 + $0x30] sm:$0xf]
  %v1167 = vld [vmem:[%s1153 + $0x34] sm:$0xf]
  %v1168 = vld [vmem:[%s1153 + $0x38] sm:$0xf]
  %v1169 = vld [vmem:[%s1153 + $0x3c] sm:$0xf]
  %v1186 = vunpack.c.l.b16 %v1154
  %v1187 = vunpack.c.l.b16 %v1155
  %v1188 = vunpack.c.l.b16 %v1156
  %v1189 = vunpack.c.l.b16 %v1157
  %v1190 = vunpack.c.l.b16 %v1158
  %v1191 = vunpack.c.l.b16 %v1159
  %v1192 = vunpack.c.l.b16 %v1160
  %v1193 = vunpack.c.l.b16 %v1161
  %v1194 = vunpack.c.l.b16 %v1162
  %v1195 = vunpack.c.l.b16 %v1163
  %v1196 = vunpack.c.l.b16 %v1164
  %v1197 = vunpack.c.l.b16 %v1165
  %v1198 = vunpack.c.l.b16 %v1166
  %v1199 = vunpack.c.l.b16 %v1167
  %v1200 = vunpack.c.l.b16 %v1168
  %v1201 = vunpack.c.l.b16 %v1169
  %v1202 = vpack.c.b16 %v1187, %v1186
  %v1203 = vpack.c.b16 %v1189, %v1188
  %v1204 = vpack.c.b16 %v1191, %v1190
  %v1205 = vpack.c.b16 %v1193, %v1192
  %v1206 = vpack.c.b16 %v1195, %v1194
  %v1207 = vpack.c.b16 %v1197, %v1196
  %v1208 = vpack.c.b16 %v1199, %v1198
  %v1209 = vpack.c.b16 %v1201, %v1200
  %1218 = vmatpush.bf16.msra.mxu0 %v1209
  %1219 = vmatpush.bf16.msra.mxu0 %v1208
  %1220 = vmatpush.bf16.msra.mxu0 %v1207
  %1221 = vmatpush.bf16.msra.mxu0 %v1206
  %1222 = vmatpush.bf16.msra.mxu0 %v1205
  %1223 = vmatpush.bf16.msra.mxu0 %v1204
  %1224 = vmatpush.bf16.msra.mxu0 %v1203
  %1225 = vmatpush.bf16.msra.mxu0 %v1202
  %1226 = vmatmul.bf16.gmra.mxu0 %v1140
  %v1227 = vpop.f32.mrf.mxu0
  %v1228 = vadd.f32 0.0, %v1227
  %v1229 = vpop.f32.mrf.mxu0
  %v1230 = vadd.f32 0.0, %v1229
  %1231 = vmatmul.bf16.gmra.mxu0 %v1141
  %v1232 = vpop.f32.mrf.mxu0
  %v1233 = vadd.f32 0.0, %v1232
  %v1234 = vpop.f32.mrf.mxu0
  %v1235 = vadd.f32 0.0, %v1234
  %1236 = vmatmul.bf16.gmra.mxu0 %v1142
  %v1237 = vpop.f32.mrf.mxu0
  %v1238 = vadd.f32 0.0, %v1237
  %v1239 = vpop.f32.mrf.mxu0
  %v1240 = vadd.f32 0.0, %v1239
  %1241 = vmatmul.bf16.gmra.mxu0 %v1143
  %v1242 = vpop.f32.mrf.mxu0
  %v1243 = vadd.f32 0.0, %v1242
  %v1244 = vpop.f32.mrf.mxu0
  %v1245 = vadd.f32 0.0, %v1244
  %1246 = vmatmul.bf16.gmra.mxu0 %v1144
  %v1247 = vpop.f32.mrf.mxu0
  %v1248 = vadd.f32 0.0, %v1247
  %v1249 = vpop.f32.mrf.mxu0
  %v1250 = vadd.f32 0.0, %v1249
  %1251 = vmatmul.bf16.gmra.mxu0 %v1145
  %v1252 = vpop.f32.mrf.mxu0
  %v1253 = vadd.f32 0.0, %v1252
  %v1254 = vpop.f32.mrf.mxu0
  %v1255 = vadd.f32 0.0, %v1254
  %1256 = vmatmul.bf16.gmra.mxu0 %v1146
  %v1257 = vpop.f32.mrf.mxu0
  %v1258 = vadd.f32 0.0, %v1257
  %v1259 = vpop.f32.mrf.mxu0
  %v1260 = vadd.f32 0.0, %v1259
  %1261 = vmatmul.bf16.gmra.mxu0 %v1147
  %v1262 = vpop.f32.mrf.mxu0
  %v1263 = vadd.f32 0.0, %v1262
  %v1264 = vpop.f32.mrf.mxu0
  %v1265 = vadd.f32 0.0, %v1264
  %1266 = vmatmul.bf16.gmra.mxu0 %v1148
  %v1267 = vpop.f32.mrf.mxu0
  %v1268 = vadd.f32 0.0, %v1267
  %v1269 = vpop.f32.mrf.mxu0
  %v1270 = vadd.f32 0.0, %v1269
  %1271 = vmatmul.bf16.gmra.mxu0 %v1149
  %v1272 = vpop.f32.mrf.mxu0
  %v1273 = vadd.f32 0.0, %v1272
  %v1274 = vpop.f32.mrf.mxu0
  %v1275 = vadd.f32 0.0, %v1274
  %1276 = vmatmul.bf16.gmra.mxu0 %v1150
  %v1277 = vpop.f32.mrf.mxu0
  %v1278 = vadd.f32 0.0, %v1277
  %v1279 = vpop.f32.mrf.mxu0
  %v1280 = vadd.f32 0.0, %v1279
  %1281 = vmatmul.bf16.gmra.mxu0 %v1151
  %v1282 = vpop.f32.mrf.mxu0
  %v1283 = vadd.f32 0.0, %v1282
  %v1284 = vpop.f32.mrf.mxu0
  %v1285 = vadd.f32 0.0, %v1284
  %1286 = vmatmul.bf16.gmra.mxu0 %v1152
  %v1287 = vpop.f32.mrf.mxu0
  %v1288 = vadd.f32 0.0, %v1287
  %v1289 = vpop.f32.mrf.mxu0
  %v1290 = vadd.f32 0.0, %v1289
  %1291 = vdwg.mxu0
  %v1292 = vadd.f32 %v1050, %v1228
  %v1293 = vadd.f32 %v1052, %v1230
  %v1294 = vadd.f32 %v1055, %v1233
  %v1295 = vadd.f32 %v1057, %v1235
  %v1296 = vadd.f32 %v1060, %v1238
  %v1297 = vadd.f32 %v1062, %v1240
  %v1298 = vadd.f32 %v1065, %v1243
  %v1299 = vadd.f32 %v1067, %v1245
  %v1300 = vadd.f32 %v1070, %v1248
  %v1301 = vadd.f32 %v1072, %v1250
  %v1302 = vadd.f32 %v1075, %v1253
  %v1303 = vadd.f32 %v1077, %v1255
  %v1304 = vadd.f32 %v1080, %v1258
  %v1305 = vadd.f32 %v1082, %v1260
  %v1306 = vadd.f32 %v1085, %v1263
  %v1307 = vadd.f32 %v1087, %v1265
  %v1308 = vadd.f32 %v1090, %v1268
  %v1309 = vadd.f32 %v1092, %v1270
  %v1310 = vadd.f32 %v1095, %v1273
  %v1311 = vadd.f32 %v1097, %v1275
  %v1312 = vadd.f32 %v1100, %v1278
  %v1313 = vadd.f32 %v1102, %v1280
  %v1314 = vadd.f32 %v1105, %v1283
  %v1315 = vadd.f32 %v1107, %v1285
  %v1316 = vadd.f32 %v1110, %v1288
  %v1317 = vadd.f32 %v1112, %v1290
  %v1318 = vld [vmem:[#allocation2 + $0x67] sm:$0xff]
  %v1319 = vld [vmem:[#allocation2 + $0x6f] sm:$0xff]
  %v1320 = vld [vmem:[#allocation2 + $0x77] sm:$0xff]
  %v1321 = vld [vmem:[#allocation2 + $0x7f] sm:$0xff]
  %v1322 = vld [vmem:[#allocation2 + $0x87] sm:$0xff]
  %v1323 = vld [vmem:[#allocation2 + $0x8f] sm:$0xff]
  %v1324 = vld [vmem:[#allocation2 + $0x97] sm:$0xff]
  %v1325 = vld [vmem:[#allocation2 + $0x9f] sm:$0xff]
  %v1326 = vld [vmem:[#allocation2 + $0xa7] sm:$0xff]
  %v1327 = vld [vmem:[#allocation2 + $0xaf] sm:$0xff]
  %v1328 = vld [vmem:[#allocation2 + $0xb7] sm:$0xff]
  %v1329 = vld [vmem:[#allocation2 + $0xbf] sm:$0xff]
  %v1330 = vld [vmem:[#allocation2 + $0xc7] sm:$0xff]
  %v1331 = vld [vmem:[#allocation2 + $0xcf] sm:$0xff]
  %v1332 = vld [vmem:[#allocation2 + $0xd7] sm:$0xff]
  %v1333 = vld [vmem:[#allocation2 + $0xdf] sm:$0xff]
  %v1334 = vld [vmem:[#allocation2 + $0xe7] sm:$0xff]
  %v1335 = vld [vmem:[#allocation2 + $0xef] sm:$0xff]
  %v1336 = vld [vmem:[#allocation2 + $0xf7] sm:$0xff]
  %v1337 = vld [vmem:[#allocation2 + $0xff] sm:$0xff]
  %v1338 = vld [vmem:[#allocation2 + $0x107] sm:$0xff]
  %v1339 = vld [vmem:[#allocation2 + $0x10f] sm:$0xff]
  %v1340 = vld [vmem:[#allocation2 + $0x117] sm:$0xff]
  %v1341 = vld [vmem:[#allocation2 + $0x11f] sm:$0xff]
  %v1342 = vld [vmem:[#allocation2 + $0x127] sm:$0xff]
  %v1343 = vld [vmem:[#allocation2 + $0x12f] sm:$0xff]
  %v1344 = vpack.c.bf16 %v1319, %v1318
  %v1345 = vpack.c.bf16 %v1321, %v1320
  %v1346 = vpack.c.bf16 %v1323, %v1322
  %v1347 = vpack.c.bf16 %v1325, %v1324
  %v1348 = vpack.c.bf16 %v1327, %v1326
  %v1349 = vpack.c.bf16 %v1329, %v1328
  %v1350 = vpack.c.bf16 %v1331, %v1330
  %v1351 = vpack.c.bf16 %v1333, %v1332
  %v1352 = vpack.c.bf16 %v1335, %v1334
  %v1353 = vpack.c.bf16 %v1337, %v1336
  %v1354 = vpack.c.bf16 %v1339, %v1338
  %v1355 = vpack.c.bf16 %v1341, %v1340
  %v1356 = vpack.c.bf16 %v1343, %v1342
  %s1357 = scalar_lea.vmem %s2, 192
  %v1358 = vld [vmem:[%s1357] sm:$0xf]
  %v1359 = vld [vmem:[%s1357 + $0x4] sm:$0xf]
  %v1360 = vld [vmem:[%s1357 + $0x8] sm:$0xf]
  %v1361 = vld [vmem:[%s1357 + $0xc] sm:$0xf]
  %v1362 = vld [vmem:[%s1357 + $0x10] sm:$0xf]
  %v1363 = vld [vmem:[%s1357 + $0x14] sm:$0xf]
  %v1364 = vld [vmem:[%s1357 + $0x18] sm:$0xf]
  %v1365 = vld [vmem:[%s1357 + $0x1c] sm:$0xf]
  %v1366 = vld [vmem:[%s1357 + $0x20] sm:$0xf]
  %v1367 = vld [vmem:[%s1357 + $0x24] sm:$0xf]
  %v1368 = vld [vmem:[%s1357 + $0x28] sm:$0xf]
  %v1369 = vld [vmem:[%s1357 + $0x2c] sm:$0xf]
  %v1370 = vld [vmem:[%s1357 + $0x30] sm:$0xf]
  %v1371 = vld [vmem:[%s1357 + $0x34] sm:$0xf]
  %v1372 = vld [vmem:[%s1357 + $0x38] sm:$0xf]
  %v1373 = vld [vmem:[%s1357 + $0x3c] sm:$0xf]
  %v1390 = vunpack.c.l.b16 %v1358
  %v1391 = vunpack.c.l.b16 %v1359
  %v1392 = vunpack.c.l.b16 %v1360
  %v1393 = vunpack.c.l.b16 %v1361
  %v1394 = vunpack.c.l.b16 %v1362
  %v1395 = vunpack.c.l.b16 %v1363
  %v1396 = vunpack.c.l.b16 %v1364
  %v1397 = vunpack.c.l.b16 %v1365
  %v1398 = vunpack.c.l.b16 %v1366
  %v1399 = vunpack.c.l.b16 %v1367
  %v1400 = vunpack.c.l.b16 %v1368
  %v1401 = vunpack.c.l.b16 %v1369
  %v1402 = vunpack.c.l.b16 %v1370
  %v1403 = vunpack.c.l.b16 %v1371
  %v1404 = vunpack.c.l.b16 %v1372
  %v1405 = vunpack.c.l.b16 %v1373
  %v1406 = vpack.c.b16 %v1391, %v1390
  %v1407 = vpack.c.b16 %v1393, %v1392
  %v1408 = vpack.c.b16 %v1395, %v1394
  %v1409 = vpack.c.b16 %v1397, %v1396
  %v1410 = vpack.c.b16 %v1399, %v1398
  %v1411 = vpack.c.b16 %v1401, %v1400
  %v1412 = vpack.c.b16 %v1403, %v1402
  %v1413 = vpack.c.b16 %v1405, %v1404
  %1422 = vmatpush.bf16.msra.mxu0 %v1413
  %1423 = vmatpush.bf16.msra.mxu0 %v1412
  %1424 = vmatpush.bf16.msra.mxu0 %v1411
  %1425 = vmatpush.bf16.msra.mxu0 %v1410
  %1426 = vmatpush.bf16.msra.mxu0 %v1409
  %1427 = vmatpush.bf16.msra.mxu0 %v1408
  %1428 = vmatpush.bf16.msra.mxu0 %v1407
  %1429 = vmatpush.bf16.msra.mxu0 %v1406
  %1430 = vmatmul.bf16.gmra.mxu0 %v1344
  %v1431 = vpop.f32.mrf.mxu0
  %v1432 = vadd.f32 0.0, %v1431
  %v1433 = vpop.f32.mrf.mxu0
  %v1434 = vadd.f32 0.0, %v1433
  %1435 = vmatmul.bf16.gmra.mxu0 %v1345
  %v1436 = vpop.f32.mrf.mxu0
  %v1437 = vadd.f32 0.0, %v1436
  %v1438 = vpop.f32.mrf.mxu0
  %v1439 = vadd.f32 0.0, %v1438
  %1440 = vmatmul.bf16.gmra.mxu0 %v1346
  %v1441 = vpop.f32.mrf.mxu0
  %v1442 = vadd.f32 0.0, %v1441
  %v1443 = vpop.f32.mrf.mxu0
  %v1444 = vadd.f32 0.0, %v1443
  %1445 = vmatmul.bf16.gmra.mxu0 %v1347
  %v1446 = vpop.f32.mrf.mxu0
  %v1447 = vadd.f32 0.0, %v1446
  %v1448 = vpop.f32.mrf.mxu0
  %v1449 = vadd.f32 0.0, %v1448
  %1450 = vmatmul.bf16.gmra.mxu0 %v1348
  %v1451 = vpop.f32.mrf.mxu0
  %v1452 = vadd.f32 0.0, %v1451
  %v1453 = vpop.f32.mrf.mxu0
  %v1454 = vadd.f32 0.0, %v1453
  %1455 = vmatmul.bf16.gmra.mxu0 %v1349
  %v1456 = vpop.f32.mrf.mxu0
  %v1457 = vadd.f32 0.0, %v1456
  %v1458 = vpop.f32.mrf.mxu0
  %v1459 = vadd.f32 0.0, %v1458
  %1460 = vmatmul.bf16.gmra.mxu0 %v1350
  %v1461 = vpop.f32.mrf.mxu0
  %v1462 = vadd.f32 0.0, %v1461
  %v1463 = vpop.f32.mrf.mxu0
  %v1464 = vadd.f32 0.0, %v1463
  %1465 = vmatmul.bf16.gmra.mxu0 %v1351
  %v1466 = vpop.f32.mrf.mxu0
  %v1467 = vadd.f32 0.0, %v1466
  %v1468 = vpop.f32.mrf.mxu0
  %v1469 = vadd.f32 0.0, %v1468
  %1470 = vmatmul.bf16.gmra.mxu0 %v1352
  %v1471 = vpop.f32.mrf.mxu0
  %v1472 = vadd.f32 0.0, %v1471
  %v1473 = vpop.f32.mrf.mxu0
  %v1474 = vadd.f32 0.0, %v1473
  %1475 = vmatmul.bf16.gmra.mxu0 %v1353
  %v1476 = vpop.f32.mrf.mxu0
  %v1477 = vadd.f32 0.0, %v1476
  %v1478 = vpop.f32.mrf.mxu0
  %v1479 = vadd.f32 0.0, %v1478
  %1480 = vmatmul.bf16.gmra.mxu0 %v1354
  %v1481 = vpop.f32.mrf.mxu0
  %v1482 = vadd.f32 0.0, %v1481
  %v1483 = vpop.f32.mrf.mxu0
  %v1484 = vadd.f32 0.0, %v1483
  %1485 = vmatmul.bf16.gmra.mxu0 %v1355
  %v1486 = vpop.f32.mrf.mxu0
  %v1487 = vadd.f32 0.0, %v1486
  %v1488 = vpop.f32.mrf.mxu0
  %v1489 = vadd.f32 0.0, %v1488
  %1490 = vmatmul.bf16.gmra.mxu0 %v1356
  %v1491 = vpop.f32.mrf.mxu0
  %v1492 = vadd.f32 0.0, %v1491
  %v1493 = vpop.f32.mrf.mxu0
  %v1494 = vadd.f32 0.0, %v1493
  %1495 = vdwg.mxu0
  %v1496 = vadd.f32 %v1292, %v1432
  %v1497 = vadd.f32 %v1293, %v1434
  %v1498 = vadd.f32 %v1294, %v1437
  %v1499 = vadd.f32 %v1295, %v1439
  %v1500 = vadd.f32 %v1296, %v1442
  %v1501 = vadd.f32 %v1297, %v1444
  %v1502 = vadd.f32 %v1298, %v1447
  %v1503 = vadd.f32 %v1299, %v1449
  %v1504 = vadd.f32 %v1300, %v1452
  %v1505 = vadd.f32 %v1301, %v1454
  %v1506 = vadd.f32 %v1302, %v1457
  %v1507 = vadd.f32 %v1303, %v1459
  %v1508 = vadd.f32 %v1304, %v1462
  %v1509 = vadd.f32 %v1305, %v1464
  %v1510 = vadd.f32 %v1306, %v1467
  %v1511 = vadd.f32 %v1307, %v1469
  %v1512 = vadd.f32 %v1308, %v1472
  %v1513 = vadd.f32 %v1309, %v1474
  %v1514 = vadd.f32 %v1310, %v1477
  %v1515 = vadd.f32 %v1311, %v1479
  %v1516 = vadd.f32 %v1312, %v1482
  %v1517 = vadd.f32 %v1313, %v1484
  %v1518 = vadd.f32 %v1314, %v1487
  %v1519 = vadd.f32 %v1315, %v1489
  %v1520 = vadd.f32 %v1316, %v1492
  %v1521 = vadd.f32 %v1317, %v1494
  %v1522 = vld [vmem:[#allocation2 + $0x68] sm:$0xff]
  %v1523 = vld [vmem:[#allocation2 + $0x70] sm:$0xff]
  %v1524 = vld [vmem:[#allocation2 + $0x78] sm:$0xff]
  %v1525 = vld [vmem:[#allocation2 + $0x80] sm:$0xff]
  %v1526 = vld [vmem:[#allocation2 + $0x88] sm:$0xff]
  %v1527 = vld [vmem:[#allocation2 + $0x90] sm:$0xff]
  %v1528 = vld [vmem:[#allocation2 + $0x98] sm:$0xff]
  %v1529 = vld [vmem:[#allocation2 + $0xa0] sm:$0xff]
  %v1530 = vld [vmem:[#allocation2 + $0xa8] sm:$0xff]
  %v1531 = vld [vmem:[#allocation2 + $0xb0] sm:$0xff]
  %v1532 = vld [vmem:[#allocation2 + $0xb8] sm:$0xff]
  %v1533 = vld [vmem:[#allocation2 + $0xc0] sm:$0xff]
  %v1534 = vld [vmem:[#allocation2 + $0xc8] sm:$0xff]
  %v1535 = vld [vmem:[#allocation2 + $0xd0] sm:$0xff]
  %v1536 = vld [vmem:[#allocation2 + $0xd8] sm:$0xff]
  %v1537 = vld [vmem:[#allocation2 + $0xe0] sm:$0xff]
  %v1538 = vld [vmem:[#allocation2 + $0xe8] sm:$0xff]
  %v1539 = vld [vmem:[#allocation2 + $0xf0] sm:$0xff]
  %v1540 = vld [vmem:[#allocation2 + $0xf8] sm:$0xff]
  %v1541 = vld [vmem:[#allocation2 + $0x100] sm:$0xff]
  %v1542 = vld [vmem:[#allocation2 + $0x108] sm:$0xff]
  %v1543 = vld [vmem:[#allocation2 + $0x110] sm:$0xff]
  %v1544 = vld [vmem:[#allocation2 + $0x118] sm:$0xff]
  %v1545 = vld [vmem:[#allocation2 + $0x120] sm:$0xff]
  %v1546 = vld [vmem:[#allocation2 + $0x128] sm:$0xff]
  %v1547 = vld [vmem:[#allocation2 + $0x130] sm:$0xff]
  %v1548 = vpack.c.bf16 %v1523, %v1522
  %v1549 = vpack.c.bf16 %v1525, %v1524
  %v1550 = vpack.c.bf16 %v1527, %v1526
  %v1551 = vpack.c.bf16 %v1529, %v1528
  %v1552 = vpack.c.bf16 %v1531, %v1530
  %v1553 = vpack.c.bf16 %v1533, %v1532
  %v1554 = vpack.c.bf16 %v1535, %v1534
  %v1555 = vpack.c.bf16 %v1537, %v1536
  %v1556 = vpack.c.bf16 %v1539, %v1538
  %v1557 = vpack.c.bf16 %v1541, %v1540
  %v1558 = vpack.c.bf16 %v1543, %v1542
  %v1559 = vpack.c.bf16 %v1545, %v1544
  %v1560 = vpack.c.bf16 %v1547, %v1546
  %s1561 = scalar_lea.vmem %s2, 256
  %v1562 = vld [vmem:[%s1561] sm:$0xf]
  %v1563 = vld [vmem:[%s1561 + $0x4] sm:$0xf]
  %v1564 = vld [vmem:[%s1561 + $0x8] sm:$0xf]
  %v1565 = vld [vmem:[%s1561 + $0xc] sm:$0xf]
  %v1566 = vld [vmem:[%s1561 + $0x10] sm:$0xf]
  %v1567 = vld [vmem:[%s1561 + $0x14] sm:$0xf]
  %v1568 = vld [vmem:[%s1561 + $0x18] sm:$0xf]
  %v1569 = vld [vmem:[%s1561 + $0x1c] sm:$0xf]
  %v1570 = vld [vmem:[%s1561 + $0x20] sm:$0xf]
  %v1571 = vld [vmem:[%s1561 + $0x24] sm:$0xf]
  %v1572 = vld [vmem:[%s1561 + $0x28] sm:$0xf]
  %v1573 = vld [vmem:[%s1561 + $0x2c] sm:$0xf]
  %v1574 = vld [vmem:[%s1561 + $0x30] sm:$0xf]
  %v1575 = vld [vmem:[%s1561 + $0x34] sm:$0xf]
  %v1576 = vld [vmem:[%s1561 + $0x38] sm:$0xf]
  %v1577 = vld [vmem:[%s1561 + $0x3c] sm:$0xf]
  %v1594 = vunpack.c.l.b16 %v1562
  %v1595 = vunpack.c.l.b16 %v1563
  %v1596 = vunpack.c.l.b16 %v1564
  %v1597 = vunpack.c.l.b16 %v1565
  %v1598 = vunpack.c.l.b16 %v1566
  %v1599 = vunpack.c.l.b16 %v1567
  %v1600 = vunpack.c.l.b16 %v1568
  %v1601 = vunpack.c.l.b16 %v1569
  %v1602 = vunpack.c.l.b16 %v1570
  %v1603 = vunpack.c.l.b16 %v1571
  %v1604 = vunpack.c.l.b16 %v1572
  %v1605 = vunpack.c.l.b16 %v1573
  %v1606 = vunpack.c.l.b16 %v1574
  %v1607 = vunpack.c.l.b16 %v1575
  %v1608 = vunpack.c.l.b16 %v1576
  %v1609 = vunpack.c.l.b16 %v1577
  %v1610 = vpack.c.b16 %v1595, %v1594
  %v1611 = vpack.c.b16 %v1597, %v1596
  %v1612 = vpack.c.b16 %v1599, %v1598
  %v1613 = vpack.c.b16 %v1601, %v1600
  %v1614 = vpack.c.b16 %v1603, %v1602
  %v1615 = vpack.c.b16 %v1605, %v1604
  %v1616 = vpack.c.b16 %v1607, %v1606
  %v1617 = vpack.c.b16 %v1609, %v1608
  %1626 = vmatpush.bf16.msra.mxu0 %v1617
  %1627 = vmatpush.bf16.msra.mxu0 %v1616
  %1628 = vmatpush.bf16.msra.mxu0 %v1615
  %1629 = vmatpush.bf16.msra.mxu0 %v1614
  %1630 = vmatpush.bf16.msra.mxu0 %v1613
  %1631 = vmatpush.bf16.msra.mxu0 %v1612
  %1632 = vmatpush.bf16.msra.mxu0 %v1611
  %1633 = vmatpush.bf16.msra.mxu0 %v1610
  %1634 = vmatmul.bf16.gmra.mxu0 %v1548
  %v1635 = vpop.f32.mrf.mxu0
  %v1636 = vadd.f32 0.0, %v1635
  %v1637 = vpop.f32.mrf.mxu0
  %v1638 = vadd.f32 0.0, %v1637
  %1639 = vmatmul.bf16.gmra.mxu0 %v1549
  %v1640 = vpop.f32.mrf.mxu0
  %v1641 = vadd.f32 0.0, %v1640
  %v1642 = vpop.f32.mrf.mxu0
  %v1643 = vadd.f32 0.0, %v1642
  %1644 = vmatmul.bf16.gmra.mxu0 %v1550
  %v1645 = vpop.f32.mrf.mxu0
  %v1646 = vadd.f32 0.0, %v1645
  %v1647 = vpop.f32.mrf.mxu0
  %v1648 = vadd.f32 0.0, %v1647
  %1649 = vmatmul.bf16.gmra.mxu0 %v1551
  %v1650 = vpop.f32.mrf.mxu0
  %v1651 = vadd.f32 0.0, %v1650
  %v1652 = vpop.f32.mrf.mxu0
  %v1653 = vadd.f32 0.0, %v1652
  %1654 = vmatmul.bf16.gmra.mxu0 %v1552
  %v1655 = vpop.f32.mrf.mxu0
  %v1656 = vadd.f32 0.0, %v1655
  %v1657 = vpop.f32.mrf.mxu0
  %v1658 = vadd.f32 0.0, %v1657
  %1659 = vmatmul.bf16.gmra.mxu0 %v1553
  %v1660 = vpop.f32.mrf.mxu0
  %v1661 = vadd.f32 0.0, %v1660
  %v1662 = vpop.f32.mrf.mxu0
  %v1663 = vadd.f32 0.0, %v1662
  %1664 = vmatmul.bf16.gmra.mxu0 %v1554
  %v1665 = vpop.f32.mrf.mxu0
  %v1666 = vadd.f32 0.0, %v1665
  %v1667 = vpop.f32.mrf.mxu0
  %v1668 = vadd.f32 0.0, %v1667
  %1669 = vmatmul.bf16.gmra.mxu0 %v1555
  %v1670 = vpop.f32.mrf.mxu0
  %v1671 = vadd.f32 0.0, %v1670
  %v1672 = vpop.f32.mrf.mxu0
  %v1673 = vadd.f32 0.0, %v1672
  %1674 = vmatmul.bf16.gmra.mxu0 %v1556
  %v1675 = vpop.f32.mrf.mxu0
  %v1676 = vadd.f32 0.0, %v1675
  %v1677 = vpop.f32.mrf.mxu0
  %v1678 = vadd.f32 0.0, %v1677
  %1679 = vmatmul.bf16.gmra.mxu0 %v1557
  %v1680 = vpop.f32.mrf.mxu0
  %v1681 = vadd.f32 0.0, %v1680
  %v1682 = vpop.f32.mrf.mxu0
  %v1683 = vadd.f32 0.0, %v1682
  %1684 = vmatmul.bf16.gmra.mxu0 %v1558
  %v1685 = vpop.f32.mrf.mxu0
  %v1686 = vadd.f32 0.0, %v1685
  %v1687 = vpop.f32.mrf.mxu0
  %v1688 = vadd.f32 0.0, %v1687
  %1689 = vmatmul.bf16.gmra.mxu0 %v1559
  %v1690 = vpop.f32.mrf.mxu0
  %v1691 = vadd.f32 0.0, %v1690
  %v1692 = vpop.f32.mrf.mxu0
  %v1693 = vadd.f32 0.0, %v1692
  %1694 = vmatmul.bf16.gmra.mxu0 %v1560
  %v1695 = vpop.f32.mrf.mxu0
  %v1696 = vadd.f32 0.0, %v1695
  %v1697 = vpop.f32.mrf.mxu0
  %v1698 = vadd.f32 0.0, %v1697
  %1699 = vdwg.mxu0
  %v1700 = vadd.f32 %v1496, %v1636
  %v1701 = vadd.f32 %v1497, %v1638
  %v1702 = vadd.f32 %v1498, %v1641
  %v1703 = vadd.f32 %v1499, %v1643
  %v1704 = vadd.f32 %v1500, %v1646
  %v1705 = vadd.f32 %v1501, %v1648
  %v1706 = vadd.f32 %v1502, %v1651
  %v1707 = vadd.f32 %v1503, %v1653
  %v1708 = vadd.f32 %v1504, %v1656
  %v1709 = vadd.f32 %v1505, %v1658
  %v1710 = vadd.f32 %v1506, %v1661
  %v1711 = vadd.f32 %v1507, %v1663
  %v1712 = vadd.f32 %v1508, %v1666
  %v1713 = vadd.f32 %v1509, %v1668
  %v1714 = vadd.f32 %v1510, %v1671
  %v1715 = vadd.f32 %v1511, %v1673
  %v1716 = vadd.f32 %v1512, %v1676
  %v1717 = vadd.f32 %v1513, %v1678
  %v1718 = vadd.f32 %v1514, %v1681
  %v1719 = vadd.f32 %v1515, %v1683
  %v1720 = vadd.f32 %v1516, %v1686
  %v1721 = vadd.f32 %v1517, %v1688
  %v1722 = vadd.f32 %v1518, %v1691
  %v1723 = vadd.f32 %v1519, %v1693
  %v1724 = vadd.f32 %v1520, %v1696
  %v1725 = vadd.f32 %v1521, %v1698
  %v1726 = vld [vmem:[#allocation2 + $0x69] sm:$0xff]
  %v1727 = vld [vmem:[#allocation2 + $0x71] sm:$0xff]
  %v1728 = vld [vmem:[#allocation2 + $0x79] sm:$0xff]
  %v1729 = vld [vmem:[#allocation2 + $0x81] sm:$0xff]
  %v1730 = vld [vmem:[#allocation2 + $0x89] sm:$0xff]
  %v1731 = vld [vmem:[#allocation2 + $0x91] sm:$0xff]
  %v1732 = vld [vmem:[#allocation2 + $0x99] sm:$0xff]
  %v1733 = vld [vmem:[#allocation2 + $0xa1] sm:$0xff]
  %v1734 = vld [vmem:[#allocation2 + $0xa9] sm:$0xff]
  %v1735 = vld [vmem:[#allocation2 + $0xb1] sm:$0xff]
  %v1736 = vld [vmem:[#allocation2 + $0xb9] sm:$0xff]
  %v1737 = vld [vmem:[#allocation2 + $0xc1] sm:$0xff]
  %v1738 = vld [vmem:[#allocation2 + $0xc9] sm:$0xff]
  %v1739 = vld [vmem:[#allocation2 + $0xd1] sm:$0xff]
  %v1740 = vld [vmem:[#allocation2 + $0xd9] sm:$0xff]
  %v1741 = vld [vmem:[#allocation2 + $0xe1] sm:$0xff]
  %v1742 = vld [vmem:[#allocation2 + $0xe9] sm:$0xff]
  %v1743 = vld [vmem:[#allocation2 + $0xf1] sm:$0xff]
  %v1744 = vld [vmem:[#allocation2 + $0xf9] sm:$0xff]
  %v1745 = vld [vmem:[#allocation2 + $0x101] sm:$0xff]
  %v1746 = vld [vmem:[#allocation2 + $0x109] sm:$0xff]
  %v1747 = vld [vmem:[#allocation2 + $0x111] sm:$0xff]
  %v1748 = vld [vmem:[#allocation2 + $0x119] sm:$0xff]
  %v1749 = vld [vmem:[#allocation2 + $0x121] sm:$0xff]
  %v1750 = vld [vmem:[#allocation2 + $0x129] sm:$0xff]
  %v1751 = vld [vmem:[#allocation2 + $0x131] sm:$0xff]
  %v1752 = vpack.c.bf16 %v1727, %v1726
  %v1753 = vpack.c.bf16 %v1729, %v1728
  %v1754 = vpack.c.bf16 %v1731, %v1730
  %v1755 = vpack.c.bf16 %v1733, %v1732
  %v1756 = vpack.c.bf16 %v1735, %v1734
  %v1757 = vpack.c.bf16 %v1737, %v1736
  %v1758 = vpack.c.bf16 %v1739, %v1738
  %v1759 = vpack.c.bf16 %v1741, %v1740
  %v1760 = vpack.c.bf16 %v1743, %v1742
  %v1761 = vpack.c.bf16 %v1745, %v1744
  %v1762 = vpack.c.bf16 %v1747, %v1746
  %v1763 = vpack.c.bf16 %v1749, %v1748
  %v1764 = vpack.c.bf16 %v1751, %v1750
  %s1765 = scalar_lea.vmem %s2, 320
  %v1766 = vld [vmem:[%s1765] sm:$0xf]
  %v1767 = vld [vmem:[%s1765 + $0x4] sm:$0xf]
  %v1768 = vld [vmem:[%s1765 + $0x8] sm:$0xf]
  %v1769 = vld [vmem:[%s1765 + $0xc] sm:$0xf]
  %v1770 = vld [vmem:[%s1765 + $0x10] sm:$0xf]
  %v1771 = vld [vmem:[%s1765 + $0x14] sm:$0xf]
  %v1772 = vld [vmem:[%s1765 + $0x18] sm:$0xf]
  %v1773 = vld [vmem:[%s1765 + $0x1c] sm:$0xf]
  %v1774 = vld [vmem:[%s1765 + $0x20] sm:$0xf]
  %v1775 = vld [vmem:[%s1765 + $0x24] sm:$0xf]
  %v1776 = vld [vmem:[%s1765 + $0x28] sm:$0xf]
  %v1777 = vld [vmem:[%s1765 + $0x2c] sm:$0xf]
  %v1778 = vld [vmem:[%s1765 + $0x30] sm:$0xf]
  %v1779 = vld [vmem:[%s1765 + $0x34] sm:$0xf]
  %v1780 = vld [vmem:[%s1765 + $0x38] sm:$0xf]
  %v1781 = vld [vmem:[%s1765 + $0x3c] sm:$0xf]
  %v1798 = vunpack.c.l.b16 %v1766
  %v1799 = vunpack.c.l.b16 %v1767
  %v1800 = vunpack.c.l.b16 %v1768
  %v1801 = vunpack.c.l.b16 %v1769
  %v1802 = vunpack.c.l.b16 %v1770
  %v1803 = vunpack.c.l.b16 %v1771
  %v1804 = vunpack.c.l.b16 %v1772
  %v1805 = vunpack.c.l.b16 %v1773
  %v1806 = vunpack.c.l.b16 %v1774
  %v1807 = vunpack.c.l.b16 %v1775
  %v1808 = vunpack.c.l.b16 %v1776
  %v1809 = vunpack.c.l.b16 %v1777
  %v1810 = vunpack.c.l.b16 %v1778
  %v1811 = vunpack.c.l.b16 %v1779
  %v1812 = vunpack.c.l.b16 %v1780
  %v1813 = vunpack.c.l.b16 %v1781
  %v1814 = vpack.c.b16 %v1799, %v1798
  %v1815 = vpack.c.b16 %v1801, %v1800
  %v1816 = vpack.c.b16 %v1803, %v1802
  %v1817 = vpack.c.b16 %v1805, %v1804
  %v1818 = vpack.c.b16 %v1807, %v1806
  %v1819 = vpack.c.b16 %v1809, %v1808
  %v1820 = vpack.c.b16 %v1811, %v1810
  %v1821 = vpack.c.b16 %v1813, %v1812
  %1830 = vmatpush.bf16.msra.mxu0 %v1821
  %1831 = vmatpush.bf16.msra.mxu0 %v1820
  %1832 = vmatpush.bf16.msra.mxu0 %v1819
  %1833 = vmatpush.bf16.msra.mxu0 %v1818
  %1834 = vmatpush.bf16.msra.mxu0 %v1817
  %1835 = vmatpush.bf16.msra.mxu0 %v1816
  %1836 = vmatpush.bf16.msra.mxu0 %v1815
  %1837 = vmatpush.bf16.msra.mxu0 %v1814
  %1838 = vmatmul.bf16.gmra.mxu0 %v1752
  %v1839 = vpop.f32.mrf.mxu0
  %v1840 = vadd.f32 0.0, %v1839
  %v1841 = vpop.f32.mrf.mxu0
  %v1842 = vadd.f32 0.0, %v1841
  %1843 = vmatmul.bf16.gmra.mxu0 %v1753
  %v1844 = vpop.f32.mrf.mxu0
  %v1845 = vadd.f32 0.0, %v1844
  %v1846 = vpop.f32.mrf.mxu0
  %v1847 = vadd.f32 0.0, %v1846
  %1848 = vmatmul.bf16.gmra.mxu0 %v1754
  %v1849 = vpop.f32.mrf.mxu0
  %v1850 = vadd.f32 0.0, %v1849
  %v1851 = vpop.f32.mrf.mxu0
  %v1852 = vadd.f32 0.0, %v1851
  %1853 = vmatmul.bf16.gmra.mxu0 %v1755
  %v1854 = vpop.f32.mrf.mxu0
  %v1855 = vadd.f32 0.0, %v1854
  %v1856 = vpop.f32.mrf.mxu0
  %v1857 = vadd.f32 0.0, %v1856
  %1858 = vmatmul.bf16.gmra.mxu0 %v1756
  %v1859 = vpop.f32.mrf.mxu0
  %v1860 = vadd.f32 0.0, %v1859
  %v1861 = vpop.f32.mrf.mxu0
  %v1862 = vadd.f32 0.0, %v1861
  %1863 = vmatmul.bf16.gmra.mxu0 %v1757
  %v1864 = vpop.f32.mrf.mxu0
  %v1865 = vadd.f32 0.0, %v1864
  %v1866 = vpop.f32.mrf.mxu0
  %v1867 = vadd.f32 0.0, %v1866
  %1868 = vmatmul.bf16.gmra.mxu0 %v1758
  %v1869 = vpop.f32.mrf.mxu0
  %v1870 = vadd.f32 0.0, %v1869
  %v1871 = vpop.f32.mrf.mxu0
  %v1872 = vadd.f32 0.0, %v1871
  %1873 = vmatmul.bf16.gmra.mxu0 %v1759
  %v1874 = vpop.f32.mrf.mxu0
  %v1875 = vadd.f32 0.0, %v1874
  %v1876 = vpop.f32.mrf.mxu0
  %v1877 = vadd.f32 0.0, %v1876
  %1878 = vmatmul.bf16.gmra.mxu0 %v1760
  %v1879 = vpop.f32.mrf.mxu0
  %v1880 = vadd.f32 0.0, %v1879
  %v1881 = vpop.f32.mrf.mxu0
  %v1882 = vadd.f32 0.0, %v1881
  %1883 = vmatmul.bf16.gmra.mxu0 %v1761
  %v1884 = vpop.f32.mrf.mxu0
  %v1885 = vadd.f32 0.0, %v1884
  %v1886 = vpop.f32.mrf.mxu0
  %v1887 = vadd.f32 0.0, %v1886
  %1888 = vmatmul.bf16.gmra.mxu0 %v1762
  %v1889 = vpop.f32.mrf.mxu0
  %v1890 = vadd.f32 0.0, %v1889
  %v1891 = vpop.f32.mrf.mxu0
  %v1892 = vadd.f32 0.0, %v1891
  %1893 = vmatmul.bf16.gmra.mxu0 %v1763
  %v1894 = vpop.f32.mrf.mxu0
  %v1895 = vadd.f32 0.0, %v1894
  %v1896 = vpop.f32.mrf.mxu0
  %v1897 = vadd.f32 0.0, %v1896
  %1898 = vmatmul.bf16.gmra.mxu0 %v1764
  %v1899 = vpop.f32.mrf.mxu0
  %v1900 = vadd.f32 0.0, %v1899
  %v1901 = vpop.f32.mrf.mxu0
  %v1902 = vadd.f32 0.0, %v1901
  %1903 = vdwg.mxu0
  %v1904 = vadd.f32 %v1700, %v1840
  %v1905 = vadd.f32 %v1701, %v1842
  %v1906 = vadd.f32 %v1702, %v1845
  %v1907 = vadd.f32 %v1703, %v1847
  %v1908 = vadd.f32 %v1704, %v1850
  %v1909 = vadd.f32 %v1705, %v1852
  %v1910 = vadd.f32 %v1706, %v1855
  %v1911 = vadd.f32 %v1707, %v1857
  %v1912 = vadd.f32 %v1708, %v1860
  %v1913 = vadd.f32 %v1709, %v1862
  %v1914 = vadd.f32 %v1710, %v1865
  %v1915 = vadd.f32 %v1711, %v1867
  %v1916 = vadd.f32 %v1712, %v1870
  %v1917 = vadd.f32 %v1713, %v1872
  %v1918 = vadd.f32 %v1714, %v1875
  %v1919 = vadd.f32 %v1715, %v1877
  %v1920 = vadd.f32 %v1716, %v1880
  %v1921 = vadd.f32 %v1717, %v1882
  %v1922 = vadd.f32 %v1718, %v1885
  %v1923 = vadd.f32 %v1719, %v1887
  %v1924 = vadd.f32 %v1720, %v1890
  %v1925 = vadd.f32 %v1721, %v1892
  %v1926 = vadd.f32 %v1722, %v1895
  %v1927 = vadd.f32 %v1723, %v1897
  %v1928 = vadd.f32 %v1724, %v1900
  %v1929 = vadd.f32 %v1725, %v1902
  %v1930 = vld [vmem:[#allocation2 + $0x71] sm:$0xff]
  %v1931 = vld [vmem:[#allocation2 + $0x79] sm:$0xff]
  %v1932 = vld [vmem:[#allocation2 + $0x81] sm:$0xff]
  %v1933 = vld [vmem:[#allocation2 + $0x89] sm:$0xff]
  %v1934 = vld [vmem:[#allocation2 + $0x91] sm:$0xff]
  %v1935 = vld [vmem:[#allocation2 + $0x99] sm:$0xff]
  %v1936 = vld [vmem:[#allocation2 + $0xa1] sm:$0xff]
  %v1937 = vld [vmem:[#allocation2 + $0xa9] sm:$0xff]
  %v1938 = vld [vmem:[#allocation2 + $0xb1] sm:$0xff]
  %v1939 = vld [vmem:[#allocation2 + $0xb9] sm:$0xff]
  %v1940 = vld [vmem:[#allocation2 + $0xc1] sm:$0xff]
  %v1941 = vld [vmem:[#allocation2 + $0xc9] sm:$0xff]
  %v1942 = vld [vmem:[#allocation2 + $0xd1] sm:$0xff]
  %v1943 = vld [vmem:[#allocation2 + $0xd9] sm:$0xff]
  %v1944 = vld [vmem:[#allocation2 + $0xe1] sm:$0xff]
  %v1945 = vld [vmem:[#allocation2 + $0xe9] sm:$0xff]
  %v1946 = vld [vmem:[#allocation2 + $0xf1] sm:$0xff]
  %v1947 = vld [vmem:[#allocation2 + $0xf9] sm:$0xff]
  %v1948 = vld [vmem:[#allocation2 + $0x101] sm:$0xff]
  %v1949 = vld [vmem:[#allocation2 + $0x109] sm:$0xff]
  %v1950 = vld [vmem:[#allocation2 + $0x111] sm:$0xff]
  %v1951 = vld [vmem:[#allocation2 + $0x119] sm:$0xff]
  %v1952 = vld [vmem:[#allocation2 + $0x121] sm:$0xff]
  %v1953 = vld [vmem:[#allocation2 + $0x129] sm:$0xff]
  %v1954 = vld [vmem:[#allocation2 + $0x131] sm:$0xff]
  %v1955 = vld [vmem:[#allocation2 + $0x139] sm:$0xff]
  %v1956 = vpack.c.bf16 %v1931, %v1930
  %v1957 = vpack.c.bf16 %v1933, %v1932
  %v1958 = vpack.c.bf16 %v1935, %v1934
  %v1959 = vpack.c.bf16 %v1937, %v1936
  %v1960 = vpack.c.bf16 %v1939, %v1938
  %v1961 = vpack.c.bf16 %v1941, %v1940
  %v1962 = vpack.c.bf16 %v1943, %v1942
  %v1963 = vpack.c.bf16 %v1945, %v1944
  %v1964 = vpack.c.bf16 %v1947, %v1946
  %v1965 = vpack.c.bf16 %v1949, %v1948
  %v1966 = vpack.c.bf16 %v1951, %v1950
  %v1967 = vpack.c.bf16 %v1953, %v1952
  %v1968 = vpack.c.bf16 %v1955, %v1954
  %s1969 = scalar_lea.vmem %s2, 384
  %v1970 = vld [vmem:[%s1969] sm:$0xf]
  %v1971 = vld [vmem:[%s1969 + $0x4] sm:$0xf]
  %v1972 = vld [vmem:[%s1969 + $0x8] sm:$0xf]
  %v1973 = vld [vmem:[%s1969 + $0xc] sm:$0xf]
  %v1974 = vld [vmem:[%s1969 + $0x10] sm:$0xf]
  %v1975 = vld [vmem:[%s1969 + $0x14] sm:$0xf]
  %v1976 = vld [vmem:[%s1969 + $0x18] sm:$0xf]
  %v1977 = vld [vmem:[%s1969 + $0x1c] sm:$0xf]
  %v1978 = vld [vmem:[%s1969 + $0x20] sm:$0xf]
  %v1979 = vld [vmem:[%s1969 + $0x24] sm:$0xf]
  %v1980 = vld [vmem:[%s1969 + $0x28] sm:$0xf]
  %v1981 = vld [vmem:[%s1969 + $0x2c] sm:$0xf]
  %v1982 = vld [vmem:[%s1969 + $0x30] sm:$0xf]
  %v1983 = vld [vmem:[%s1969 + $0x34] sm:$0xf]
  %v1984 = vld [vmem:[%s1969 + $0x38] sm:$0xf]
  %v1985 = vld [vmem:[%s1969 + $0x3c] sm:$0xf]
  %v2002 = vunpack.c.l.b16 %v1970
  %v2003 = vunpack.c.l.b16 %v1971
  %v2004 = vunpack.c.l.b16 %v1972
  %v2005 = vunpack.c.l.b16 %v1973
  %v2006 = vunpack.c.l.b16 %v1974
  %v2007 = vunpack.c.l.b16 %v1975
  %v2008 = vunpack.c.l.b16 %v1976
  %v2009 = vunpack.c.l.b16 %v1977
  %v2010 = vunpack.c.l.b16 %v1978
  %v2011 = vunpack.c.l.b16 %v1979
  %v2012 = vunpack.c.l.b16 %v1980
  %v2013 = vunpack.c.l.b16 %v1981
  %v2014 = vunpack.c.l.b16 %v1982
  %v2015 = vunpack.c.l.b16 %v1983
  %v2016 = vunpack.c.l.b16 %v1984
  %v2017 = vunpack.c.l.b16 %v1985
  %v2018 = vpack.c.b16 %v2003, %v2002
  %v2019 = vpack.c.b16 %v2005, %v2004
  %v2020 = vpack.c.b16 %v2007, %v2006
  %v2021 = vpack.c.b16 %v2009, %v2008
  %v2022 = vpack.c.b16 %v2011, %v2010
  %v2023 = vpack.c.b16 %v2013, %v2012
  %v2024 = vpack.c.b16 %v2015, %v2014
  %v2025 = vpack.c.b16 %v2017, %v2016
  %2034 = vmatpush.bf16.msra.mxu0 %v2025
  %2035 = vmatpush.bf16.msra.mxu0 %v2024
  %2036 = vmatpush.bf16.msra.mxu0 %v2023
  %2037 = vmatpush.bf16.msra.mxu0 %v2022
  %2038 = vmatpush.bf16.msra.mxu0 %v2021
  %2039 = vmatpush.bf16.msra.mxu0 %v2020
  %2040 = vmatpush.bf16.msra.mxu0 %v2019
  %2041 = vmatpush.bf16.msra.mxu0 %v2018
  %2042 = vmatmul.bf16.gmra.mxu0 %v1956
  %v2043 = vpop.f32.mrf.mxu0
  %v2044 = vadd.f32 0.0, %v2043
  %v2045 = vpop.f32.mrf.mxu0
  %v2046 = vadd.f32 0.0, %v2045
  %2047 = vmatmul.bf16.gmra.mxu0 %v1957
  %v2048 = vpop.f32.mrf.mxu0
  %v2049 = vadd.f32 0.0, %v2048
  %v2050 = vpop.f32.mrf.mxu0
  %v2051 = vadd.f32 0.0, %v2050
  %2052 = vmatmul.bf16.gmra.mxu0 %v1958
  %v2053 = vpop.f32.mrf.mxu0
  %v2054 = vadd.f32 0.0, %v2053
  %v2055 = vpop.f32.mrf.mxu0
  %v2056 = vadd.f32 0.0, %v2055
  %2057 = vmatmul.bf16.gmra.mxu0 %v1959
  %v2058 = vpop.f32.mrf.mxu0
  %v2059 = vadd.f32 0.0, %v2058
  %v2060 = vpop.f32.mrf.mxu0
  %v2061 = vadd.f32 0.0, %v2060
  %2062 = vmatmul.bf16.gmra.mxu0 %v1960
  %v2063 = vpop.f32.mrf.mxu0
  %v2064 = vadd.f32 0.0, %v2063
  %v2065 = vpop.f32.mrf.mxu0
  %v2066 = vadd.f32 0.0, %v2065
  %2067 = vmatmul.bf16.gmra.mxu0 %v1961
  %v2068 = vpop.f32.mrf.mxu0
  %v2069 = vadd.f32 0.0, %v2068
  %v2070 = vpop.f32.mrf.mxu0
  %v2071 = vadd.f32 0.0, %v2070
  %2072 = vmatmul.bf16.gmra.mxu0 %v1962
  %v2073 = vpop.f32.mrf.mxu0
  %v2074 = vadd.f32 0.0, %v2073
  %v2075 = vpop.f32.mrf.mxu0
  %v2076 = vadd.f32 0.0, %v2075
  %2077 = vmatmul.bf16.gmra.mxu0 %v1963
  %v2078 = vpop.f32.mrf.mxu0
  %v2079 = vadd.f32 0.0, %v2078
  %v2080 = vpop.f32.mrf.mxu0
  %v2081 = vadd.f32 0.0, %v2080
  %2082 = vmatmul.bf16.gmra.mxu0 %v1964
  %v2083 = vpop.f32.mrf.mxu0
  %v2084 = vadd.f32 0.0, %v2083
  %v2085 = vpop.f32.mrf.mxu0
  %v2086 = vadd.f32 0.0, %v2085
  %2087 = vmatmul.bf16.gmra.mxu0 %v1965
  %v2088 = vpop.f32.mrf.mxu0
  %v2089 = vadd.f32 0.0, %v2088
  %v2090 = vpop.f32.mrf.mxu0
  %v2091 = vadd.f32 0.0, %v2090
  %2092 = vmatmul.bf16.gmra.mxu0 %v1966
  %v2093 = vpop.f32.mrf.mxu0
  %v2094 = vadd.f32 0.0, %v2093
  %v2095 = vpop.f32.mrf.mxu0
  %v2096 = vadd.f32 0.0, %v2095
  %2097 = vmatmul.bf16.gmra.mxu0 %v1967
  %v2098 = vpop.f32.mrf.mxu0
  %v2099 = vadd.f32 0.0, %v2098
  %v2100 = vpop.f32.mrf.mxu0
  %v2101 = vadd.f32 0.0, %v2100
  %2102 = vmatmul.bf16.gmra.mxu0 %v1968
  %v2103 = vpop.f32.mrf.mxu0
  %v2104 = vadd.f32 0.0, %v2103
  %v2105 = vpop.f32.mrf.mxu0
  %v2106 = vadd.f32 0.0, %v2105
  %2107 = vdwg.mxu0
  %v2108 = vadd.f32 %v1904, %v2044
  %v2109 = vadd.f32 %v1905, %v2046
  %v2110 = vadd.f32 %v1906, %v2049
  %v2111 = vadd.f32 %v1907, %v2051
  %v2112 = vadd.f32 %v1908, %v2054
  %v2113 = vadd.f32 %v1909, %v2056
  %v2114 = vadd.f32 %v1910, %v2059
  %v2115 = vadd.f32 %v1911, %v2061
  %v2116 = vadd.f32 %v1912, %v2064
  %v2117 = vadd.f32 %v1913, %v2066
  %v2118 = vadd.f32 %v1914, %v2069
  %v2119 = vadd.f32 %v1915, %v2071
  %v2120 = vadd.f32 %v1916, %v2074
  %v2121 = vadd.f32 %v1917, %v2076
  %v2122 = vadd.f32 %v1918, %v2079
  %v2123 = vadd.f32 %v1919, %v2081
  %v2124 = vadd.f32 %v1920, %v2084
  %v2125 = vadd.f32 %v1921, %v2086
  %v2126 = vadd.f32 %v1922, %v2089
  %v2127 = vadd.f32 %v1923, %v2091
  %v2128 = vadd.f32 %v1924, %v2094
  %v2129 = vadd.f32 %v1925, %v2096
  %v2130 = vadd.f32 %v1926, %v2099
  %v2131 = vadd.f32 %v1927, %v2101
  %v2132 = vadd.f32 %v1928, %v2104
  %v2133 = vadd.f32 %v1929, %v2106
  %v2134 = vld [vmem:[#allocation2 + $0x72] sm:$0xff]
  %v2135 = vld [vmem:[#allocation2 + $0x7a] sm:$0xff]
  %v2136 = vld [vmem:[#allocation2 + $0x82] sm:$0xff]
  %v2137 = vld [vmem:[#allocation2 + $0x8a] sm:$0xff]
  %v2138 = vld [vmem:[#allocation2 + $0x92] sm:$0xff]
  %v2139 = vld [vmem:[#allocation2 + $0x9a] sm:$0xff]
  %v2140 = vld [vmem:[#allocation2 + $0xa2] sm:$0xff]
  %v2141 = vld [vmem:[#allocation2 + $0xaa] sm:$0xff]
  %v2142 = vld [vmem:[#allocation2 + $0xb2] sm:$0xff]
  %v2143 = vld [vmem:[#allocation2 + $0xba] sm:$0xff]
  %v2144 = vld [vmem:[#allocation2 + $0xc2] sm:$0xff]
  %v2145 = vld [vmem:[#allocation2 + $0xca] sm:$0xff]
  %v2146 = vld [vmem:[#allocation2 + $0xd2] sm:$0xff]
  %v2147 = vld [vmem:[#allocation2 + $0xda] sm:$0xff]
  %v2148 = vld [vmem:[#allocation2 + $0xe2] sm:$0xff]
  %v2149 = vld [vmem:[#allocation2 + $0xea] sm:$0xff]
  %v2150 = vld [vmem:[#allocation2 + $0xf2] sm:$0xff]
  %v2151 = vld [vmem:[#allocation2 + $0xfa] sm:$0xff]
  %v2152 = vld [vmem:[#allocation2 + $0x102] sm:$0xff]
  %v2153 = vld [vmem:[#allocation2 + $0x10a] sm:$0xff]
  %v2154 = vld [vmem:[#allocation2 + $0x112] sm:$0xff]
  %v2155 = vld [vmem:[#allocation2 + $0x11a] sm:$0xff]
  %v2156 = vld [vmem:[#allocation2 + $0x122] sm:$0xff]
  %v2157 = vld [vmem:[#allocation2 + $0x12a] sm:$0xff]
  %v2158 = vld [vmem:[#allocation2 + $0x132] sm:$0xff]
  %v2159 = vld [vmem:[#allocation2 + $0x13a] sm:$0xff]
  %v2160 = vpack.c.bf16 %v2135, %v2134
  %v2161 = vpack.c.bf16 %v2137, %v2136
  %v2162 = vpack.c.bf16 %v2139, %v2138
  %v2163 = vpack.c.bf16 %v2141, %v2140
  %v2164 = vpack.c.bf16 %v2143, %v2142
  %v2165 = vpack.c.bf16 %v2145, %v2144
  %v2166 = vpack.c.bf16 %v2147, %v2146
  %v2167 = vpack.c.bf16 %v2149, %v2148
  %v2168 = vpack.c.bf16 %v2151, %v2150
  %v2169 = vpack.c.bf16 %v2153, %v2152
  %v2170 = vpack.c.bf16 %v2155, %v2154
  %v2171 = vpack.c.bf16 %v2157, %v2156
  %v2172 = vpack.c.bf16 %v2159, %v2158
  %s2173 = scalar_lea.vmem %s2, 448
  %v2174 = vld [vmem:[%s2173] sm:$0xf]
  %v2175 = vld [vmem:[%s2173 + $0x4] sm:$0xf]
  %v2176 = vld [vmem:[%s2173 + $0x8] sm:$0xf]
  %v2177 = vld [vmem:[%s2173 + $0xc] sm:$0xf]
  %v2178 = vld [vmem:[%s2173 + $0x10] sm:$0xf]
  %v2179 = vld [vmem:[%s2173 + $0x14] sm:$0xf]
  %v2180 = vld [vmem:[%s2173 + $0x18] sm:$0xf]
  %v2181 = vld [vmem:[%s2173 + $0x1c] sm:$0xf]
  %v2182 = vld [vmem:[%s2173 + $0x20] sm:$0xf]
  %v2183 = vld [vmem:[%s2173 + $0x24] sm:$0xf]
  %v2184 = vld [vmem:[%s2173 + $0x28] sm:$0xf]
  %v2185 = vld [vmem:[%s2173 + $0x2c] sm:$0xf]
  %v2186 = vld [vmem:[%s2173 + $0x30] sm:$0xf]
  %v2187 = vld [vmem:[%s2173 + $0x34] sm:$0xf]
  %v2188 = vld [vmem:[%s2173 + $0x38] sm:$0xf]
  %v2189 = vld [vmem:[%s2173 + $0x3c] sm:$0xf]
  %v2206 = vunpack.c.l.b16 %v2174
  %v2207 = vunpack.c.l.b16 %v2175
  %v2208 = vunpack.c.l.b16 %v2176
  %v2209 = vunpack.c.l.b16 %v2177
  %v2210 = vunpack.c.l.b16 %v2178
  %v2211 = vunpack.c.l.b16 %v2179
  %v2212 = vunpack.c.l.b16 %v2180
  %v2213 = vunpack.c.l.b16 %v2181
  %v2214 = vunpack.c.l.b16 %v2182
  %v2215 = vunpack.c.l.b16 %v2183
  %v2216 = vunpack.c.l.b16 %v2184
  %v2217 = vunpack.c.l.b16 %v2185
  %v2218 = vunpack.c.l.b16 %v2186
  %v2219 = vunpack.c.l.b16 %v2187
  %v2220 = vunpack.c.l.b16 %v2188
  %v2221 = vunpack.c.l.b16 %v2189
  %v2222 = vpack.c.b16 %v2207, %v2206
  %v2223 = vpack.c.b16 %v2209, %v2208
  %v2224 = vpack.c.b16 %v2211, %v2210
  %v2225 = vpack.c.b16 %v2213, %v2212
  %v2226 = vpack.c.b16 %v2215, %v2214
  %v2227 = vpack.c.b16 %v2217, %v2216
  %v2228 = vpack.c.b16 %v2219, %v2218
  %v2229 = vpack.c.b16 %v2221, %v2220
  %2238 = vmatpush.bf16.msra.mxu0 %v2229
  %2239 = vmatpush.bf16.msra.mxu0 %v2228
  %2240 = vmatpush.bf16.msra.mxu0 %v2227
  %2241 = vmatpush.bf16.msra.mxu0 %v2226
  %2242 = vmatpush.bf16.msra.mxu0 %v2225
  %2243 = vmatpush.bf16.msra.mxu0 %v2224
  %2244 = vmatpush.bf16.msra.mxu0 %v2223
  %2245 = vmatpush.bf16.msra.mxu0 %v2222
  %2246 = vmatmul.bf16.gmra.mxu0 %v2160
  %v2247 = vpop.f32.mrf.mxu0
  %v2248 = vadd.f32 0.0, %v2247
  %v2249 = vpop.f32.mrf.mxu0
  %v2250 = vadd.f32 0.0, %v2249
  %2251 = vmatmul.bf16.gmra.mxu0 %v2161
  %v2252 = vpop.f32.mrf.mxu0
  %v2253 = vadd.f32 0.0, %v2252
  %v2254 = vpop.f32.mrf.mxu0
  %v2255 = vadd.f32 0.0, %v2254
  %2256 = vmatmul.bf16.gmra.mxu0 %v2162
  %v2257 = vpop.f32.mrf.mxu0
  %v2258 = vadd.f32 0.0, %v2257
  %v2259 = vpop.f32.mrf.mxu0
  %v2260 = vadd.f32 0.0, %v2259
  %2261 = vmatmul.bf16.gmra.mxu0 %v2163
  %v2262 = vpop.f32.mrf.mxu0
  %v2263 = vadd.f32 0.0, %v2262
  %v2264 = vpop.f32.mrf.mxu0
  %v2265 = vadd.f32 0.0, %v2264
  %2266 = vmatmul.bf16.gmra.mxu0 %v2164
  %v2267 = vpop.f32.mrf.mxu0
  %v2268 = vadd.f32 0.0, %v2267
  %v2269 = vpop.f32.mrf.mxu0
  %v2270 = vadd.f32 0.0, %v2269
  %2271 = vmatmul.bf16.gmra.mxu0 %v2165
  %v2272 = vpop.f32.mrf.mxu0
  %v2273 = vadd.f32 0.0, %v2272
  %v2274 = vpop.f32.mrf.mxu0
  %v2275 = vadd.f32 0.0, %v2274
  %2276 = vmatmul.bf16.gmra.mxu0 %v2166
  %v2277 = vpop.f32.mrf.mxu0
  %v2278 = vadd.f32 0.0, %v2277
  %v2279 = vpop.f32.mrf.mxu0
  %v2280 = vadd.f32 0.0, %v2279
  %2281 = vmatmul.bf16.gmra.mxu0 %v2167
  %v2282 = vpop.f32.mrf.mxu0
  %v2283 = vadd.f32 0.0, %v2282
  %v2284 = vpop.f32.mrf.mxu0
  %v2285 = vadd.f32 0.0, %v2284
  %2286 = vmatmul.bf16.gmra.mxu0 %v2168
  %v2287 = vpop.f32.mrf.mxu0
  %v2288 = vadd.f32 0.0, %v2287
  %v2289 = vpop.f32.mrf.mxu0
  %v2290 = vadd.f32 0.0, %v2289
  %2291 = vmatmul.bf16.gmra.mxu0 %v2169
  %v2292 = vpop.f32.mrf.mxu0
  %v2293 = vadd.f32 0.0, %v2292
  %v2294 = vpop.f32.mrf.mxu0
  %v2295 = vadd.f32 0.0, %v2294
  %2296 = vmatmul.bf16.gmra.mxu0 %v2170
  %v2297 = vpop.f32.mrf.mxu0
  %v2298 = vadd.f32 0.0, %v2297
  %v2299 = vpop.f32.mrf.mxu0
  %v2300 = vadd.f32 0.0, %v2299
  %2301 = vmatmul.bf16.gmra.mxu0 %v2171
  %v2302 = vpop.f32.mrf.mxu0
  %v2303 = vadd.f32 0.0, %v2302
  %v2304 = vpop.f32.mrf.mxu0
  %v2305 = vadd.f32 0.0, %v2304
  %2306 = vmatmul.bf16.gmra.mxu0 %v2172
  %v2307 = vpop.f32.mrf.mxu0
  %v2308 = vadd.f32 0.0, %v2307
  %v2309 = vpop.f32.mrf.mxu0
  %v2310 = vadd.f32 0.0, %v2309
  %2311 = vdwg.mxu0
  %v2312 = vadd.f32 %v2108, %v2248
  %v2313 = vadd.f32 %v2109, %v2250
  %v2314 = vadd.f32 %v2110, %v2253
  %v2315 = vadd.f32 %v2111, %v2255
  %v2316 = vadd.f32 %v2112, %v2258
  %v2317 = vadd.f32 %v2113, %v2260
  %v2318 = vadd.f32 %v2114, %v2263
  %v2319 = vadd.f32 %v2115, %v2265
  %v2320 = vadd.f32 %v2116, %v2268
  %v2321 = vadd.f32 %v2117, %v2270
  %v2322 = vadd.f32 %v2118, %v2273
  %v2323 = vadd.f32 %v2119, %v2275
  %v2324 = vadd.f32 %v2120, %v2278
  %v2325 = vadd.f32 %v2121, %v2280
  %v2326 = vadd.f32 %v2122, %v2283
  %v2327 = vadd.f32 %v2123, %v2285
  %v2328 = vadd.f32 %v2124, %v2288
  %v2329 = vadd.f32 %v2125, %v2290
  %v2330 = vadd.f32 %v2126, %v2293
  %v2331 = vadd.f32 %v2127, %v2295
  %v2332 = vadd.f32 %v2128, %v2298
  %v2333 = vadd.f32 %v2129, %v2300
  %v2334 = vadd.f32 %v2130, %v2303
  %v2335 = vadd.f32 %v2131, %v2305
  %v2336 = vadd.f32 %v2132, %v2308
  %v2337 = vadd.f32 %v2133, %v2310
  %v2338 = vld [vmem:[#allocation2 + $0x73] sm:$0xff]
  %v2339 = vld [vmem:[#allocation2 + $0x7b] sm:$0xff]
  %v2340 = vld [vmem:[#allocation2 + $0x83] sm:$0xff]
  %v2341 = vld [vmem:[#allocation2 + $0x8b] sm:$0xff]
  %v2342 = vld [vmem:[#allocation2 + $0x93] sm:$0xff]
  %v2343 = vld [vmem:[#allocation2 + $0x9b] sm:$0xff]
  %v2344 = vld [vmem:[#allocation2 + $0xa3] sm:$0xff]
  %v2345 = vld [vmem:[#allocation2 + $0xab] sm:$0xff]
  %v2346 = vld [vmem:[#allocation2 + $0xb3] sm:$0xff]
  %v2347 = vld [vmem:[#allocation2 + $0xbb] sm:$0xff]
  %v2348 = vld [vmem:[#allocation2 + $0xc3] sm:$0xff]
  %v2349 = vld [vmem:[#allocation2 + $0xcb] sm:$0xff]
  %v2350 = vld [vmem:[#allocation2 + $0xd3] sm:$0xff]
  %v2351 = vld [vmem:[#allocation2 + $0xdb] sm:$0xff]
  %v2352 = vld [vmem:[#allocation2 + $0xe3] sm:$0xff]
  %v2353 = vld [vmem:[#allocation2 + $0xeb] sm:$0xff]
  %v2354 = vld [vmem:[#allocation2 + $0xf3] sm:$0xff]
  %v2355 = vld [vmem:[#allocation2 + $0xfb] sm:$0xff]
  %v2356 = vld [vmem:[#allocation2 + $0x103] sm:$0xff]
  %v2357 = vld [vmem:[#allocation2 + $0x10b] sm:$0xff]
  %v2358 = vld [vmem:[#allocation2 + $0x113] sm:$0xff]
  %v2359 = vld [vmem:[#allocation2 + $0x11b] sm:$0xff]
  %v2360 = vld [vmem:[#allocation2 + $0x123] sm:$0xff]
  %v2361 = vld [vmem:[#allocation2 + $0x12b] sm:$0xff]
  %v2362 = vld [vmem:[#allocation2 + $0x133] sm:$0xff]
  %v2363 = vld [vmem:[#allocation2 + $0x13b] sm:$0xff]
  %v2364 = vpack.c.bf16 %v2339, %v2338
  %v2365 = vpack.c.bf16 %v2341, %v2340
  %v2366 = vpack.c.bf16 %v2343, %v2342
  %v2367 = vpack.c.bf16 %v2345, %v2344
  %v2368 = vpack.c.bf16 %v2347, %v2346
  %v2369 = vpack.c.bf16 %v2349, %v2348
  %v2370 = vpack.c.bf16 %v2351, %v2350
  %v2371 = vpack.c.bf16 %v2353, %v2352
  %v2372 = vpack.c.bf16 %v2355, %v2354
  %v2373 = vpack.c.bf16 %v2357, %v2356
  %v2374 = vpack.c.bf16 %v2359, %v2358
  %v2375 = vpack.c.bf16 %v2361, %v2360
  %v2376 = vpack.c.bf16 %v2363, %v2362
  %s2377 = scalar_lea.vmem %s2, 512
  %v2378 = vld [vmem:[%s2377] sm:$0xf]
  %v2379 = vld [vmem:[%s2377 + $0x4] sm:$0xf]
  %v2380 = vld [vmem:[%s2377 + $0x8] sm:$0xf]
  %v2381 = vld [vmem:[%s2377 + $0xc] sm:$0xf]
  %v2382 = vld [vmem:[%s2377 + $0x10] sm:$0xf]
  %v2383 = vld [vmem:[%s2377 + $0x14] sm:$0xf]
  %v2384 = vld [vmem:[%s2377 + $0x18] sm:$0xf]
  %v2385 = vld [vmem:[%s2377 + $0x1c] sm:$0xf]
  %v2386 = vld [vmem:[%s2377 + $0x20] sm:$0xf]
  %v2387 = vld [vmem:[%s2377 + $0x24] sm:$0xf]
  %v2388 = vld [vmem:[%s2377 + $0x28] sm:$0xf]
  %v2389 = vld [vmem:[%s2377 + $0x2c] sm:$0xf]
  %v2390 = vld [vmem:[%s2377 + $0x30] sm:$0xf]
  %v2391 = vld [vmem:[%s2377 + $0x34] sm:$0xf]
  %v2392 = vld [vmem:[%s2377 + $0x38] sm:$0xf]
  %v2393 = vld [vmem:[%s2377 + $0x3c] sm:$0xf]
  %v2410 = vunpack.c.l.b16 %v2378
  %v2411 = vunpack.c.l.b16 %v2379
  %v2412 = vunpack.c.l.b16 %v2380
  %v2413 = vunpack.c.l.b16 %v2381
  %v2414 = vunpack.c.l.b16 %v2382
  %v2415 = vunpack.c.l.b16 %v2383
  %v2416 = vunpack.c.l.b16 %v2384
  %v2417 = vunpack.c.l.b16 %v2385
  %v2418 = vunpack.c.l.b16 %v2386
  %v2419 = vunpack.c.l.b16 %v2387
  %v2420 = vunpack.c.l.b16 %v2388
  %v2421 = vunpack.c.l.b16 %v2389
  %v2422 = vunpack.c.l.b16 %v2390
  %v2423 = vunpack.c.l.b16 %v2391
  %v2424 = vunpack.c.l.b16 %v2392
  %v2425 = vunpack.c.l.b16 %v2393
  %v2426 = vpack.c.b16 %v2411, %v2410
  %v2427 = vpack.c.b16 %v2413, %v2412
  %v2428 = vpack.c.b16 %v2415, %v2414
  %v2429 = vpack.c.b16 %v2417, %v2416
  %v2430 = vpack.c.b16 %v2419, %v2418
  %v2431 = vpack.c.b16 %v2421, %v2420
  %v2432 = vpack.c.b16 %v2423, %v2422
  %v2433 = vpack.c.b16 %v2425, %v2424
  %2442 = vmatpush.bf16.msra.mxu0 %v2433
  %2443 = vmatpush.bf16.msra.mxu0 %v2432
  %2444 = vmatpush.bf16.msra.mxu0 %v2431
  %2445 = vmatpush.bf16.msra.mxu0 %v2430
  %2446 = vmatpush.bf16.msra.mxu0 %v2429
  %2447 = vmatpush.bf16.msra.mxu0 %v2428
  %2448 = vmatpush.bf16.msra.mxu0 %v2427
  %2449 = vmatpush.bf16.msra.mxu0 %v2426
  %2450 = vmatmul.bf16.gmra.mxu0 %v2364
  %v2451 = vpop.f32.mrf.mxu0
  %v2452 = vadd.f32 0.0, %v2451
  %v2453 = vpop.f32.mrf.mxu0
  %v2454 = vadd.f32 0.0, %v2453
  %2455 = vmatmul.bf16.gmra.mxu0 %v2365
  %v2456 = vpop.f32.mrf.mxu0
  %v2457 = vadd.f32 0.0, %v2456
  %v2458 = vpop.f32.mrf.mxu0
  %v2459 = vadd.f32 0.0, %v2458
  %2460 = vmatmul.bf16.gmra.mxu0 %v2366
  %v2461 = vpop.f32.mrf.mxu0
  %v2462 = vadd.f32 0.0, %v2461
  %v2463 = vpop.f32.mrf.mxu0
  %v2464 = vadd.f32 0.0, %v2463
  %2465 = vmatmul.bf16.gmra.mxu0 %v2367
  %v2466 = vpop.f32.mrf.mxu0
  %v2467 = vadd.f32 0.0, %v2466
  %v2468 = vpop.f32.mrf.mxu0
  %v2469 = vadd.f32 0.0, %v2468
  %2470 = vmatmul.bf16.gmra.mxu0 %v2368
  %v2471 = vpop.f32.mrf.mxu0
  %v2472 = vadd.f32 0.0, %v2471
  %v2473 = vpop.f32.mrf.mxu0
  %v2474 = vadd.f32 0.0, %v2473
  %2475 = vmatmul.bf16.gmra.mxu0 %v2369
  %v2476 = vpop.f32.mrf.mxu0
  %v2477 = vadd.f32 0.0, %v2476
  %v2478 = vpop.f32.mrf.mxu0
  %v2479 = vadd.f32 0.0, %v2478
  %2480 = vmatmul.bf16.gmra.mxu0 %v2370
  %v2481 = vpop.f32.mrf.mxu0
  %v2482 = vadd.f32 0.0, %v2481
  %v2483 = vpop.f32.mrf.mxu0
  %v2484 = vadd.f32 0.0, %v2483
  %2485 = vmatmul.bf16.gmra.mxu0 %v2371
  %v2486 = vpop.f32.mrf.mxu0
  %v2487 = vadd.f32 0.0, %v2486
  %v2488 = vpop.f32.mrf.mxu0
  %v2489 = vadd.f32 0.0, %v2488
  %2490 = vmatmul.bf16.gmra.mxu0 %v2372
  %v2491 = vpop.f32.mrf.mxu0
  %v2492 = vadd.f32 0.0, %v2491
  %v2493 = vpop.f32.mrf.mxu0
  %v2494 = vadd.f32 0.0, %v2493
  %2495 = vmatmul.bf16.gmra.mxu0 %v2373
  %v2496 = vpop.f32.mrf.mxu0
  %v2497 = vadd.f32 0.0, %v2496
  %v2498 = vpop.f32.mrf.mxu0
  %v2499 = vadd.f32 0.0, %v2498
  %2500 = vmatmul.bf16.gmra.mxu0 %v2374
  %v2501 = vpop.f32.mrf.mxu0
  %v2502 = vadd.f32 0.0, %v2501
  %v2503 = vpop.f32.mrf.mxu0
  %v2504 = vadd.f32 0.0, %v2503
  %2505 = vmatmul.bf16.gmra.mxu0 %v2375
  %v2506 = vpop.f32.mrf.mxu0
  %v2507 = vadd.f32 0.0, %v2506
  %v2508 = vpop.f32.mrf.mxu0
  %v2509 = vadd.f32 0.0, %v2508
  %2510 = vmatmul.bf16.gmra.mxu0 %v2376
  %v2511 = vpop.f32.mrf.mxu0
  %v2512 = vadd.f32 0.0, %v2511
  %v2513 = vpop.f32.mrf.mxu0
  %v2514 = vadd.f32 0.0, %v2513
  %2515 = vdwg.mxu0
  %v2516 = vadd.f32 %v2312, %v2452
  %v2517 = vadd.f32 %v2313, %v2454
  %v2518 = vadd.f32 %v2314, %v2457
  %v2519 = vadd.f32 %v2315, %v2459
  %v2520 = vadd.f32 %v2316, %v2462
  %v2521 = vadd.f32 %v2317, %v2464
  %v2522 = vadd.f32 %v2318, %v2467
  %v2523 = vadd.f32 %v2319, %v2469
  %v2524 = vadd.f32 %v2320, %v2472
  %v2525 = vadd.f32 %v2321, %v2474
  %v2526 = vadd.f32 %v2322, %v2477
  %v2527 = vadd.f32 %v2323, %v2479
  %v2528 = vadd.f32 %v2324, %v2482
  %v2529 = vadd.f32 %v2325, %v2484
  %v2530 = vadd.f32 %v2326, %v2487
  %v2531 = vadd.f32 %v2327, %v2489
  %v2532 = vadd.f32 %v2328, %v2492
  %v2533 = vadd.f32 %v2329, %v2494
  %v2534 = vadd.f32 %v2330, %v2497
  %v2535 = vadd.f32 %v2331, %v2499
  %v2536 = vadd.f32 %v2332, %v2502
  %v2537 = vadd.f32 %v2333, %v2504
  %v2538 = vadd.f32 %v2334, %v2507
  %v2539 = vadd.f32 %v2335, %v2509
  %v2540 = vadd.f32 %v2336, %v2512
  %v2541 = vadd.f32 %v2337, %v2514
  %v2542 = vld [vmem:[%s5 + $0x68] sm:$0xff]
  %v2543 = vld [vmem:[%s5 + $0x70] sm:$0xff]
  %v2544 = vld [vmem:[%s5 + $0x78] sm:$0xff]
  %v2545 = vld [vmem:[%s5 + $0x80] sm:$0xff]
  %v2546 = vld [vmem:[%s5 + $0x88] sm:$0xff]
  %v2547 = vld [vmem:[%s5 + $0x90] sm:$0xff]
  %v2548 = vld [vmem:[%s5 + $0x98] sm:$0xff]
  %v2549 = vld [vmem:[%s5 + $0xa0] sm:$0xff]
  %v2550 = vld [vmem:[%s5 + $0xa8] sm:$0xff]
  %v2551 = vld [vmem:[%s5 + $0xb0] sm:$0xff]
  %v2552 = vld [vmem:[%s5 + $0xb8] sm:$0xff]
  %v2553 = vld [vmem:[%s5 + $0xc0] sm:$0xff]
  %v2554 = vld [vmem:[%s5 + $0xc8] sm:$0xff]
  %v2555 = vld [vmem:[%s5 + $0xd0] sm:$0xff]
  %v2556 = vld [vmem:[%s5 + $0xd8] sm:$0xff]
  %v2557 = vld [vmem:[%s5 + $0xe0] sm:$0xff]
  %v2558 = vld [vmem:[%s5 + $0xe8] sm:$0xff]
  %v2559 = vld [vmem:[%s5 + $0xf0] sm:$0xff]
  %v2560 = vld [vmem:[%s5 + $0xf8] sm:$0xff]
  %v2561 = vld [vmem:[%s5 + $0x100] sm:$0xff]
  %v2562 = vld [vmem:[%s5 + $0x108] sm:$0xff]
  %v2563 = vld [vmem:[%s5 + $0x110] sm:$0xff]
  %v2564 = vld [vmem:[%s5 + $0x118] sm:$0xff]
  %v2565 = vld [vmem:[%s5 + $0x120] sm:$0xff]
  %v2566 = vld [vmem:[%s5 + $0x128] sm:$0xff]
  %v2567 = vld [vmem:[%s5 + $0x130] sm:$0xff]
  %2569 = vset.pattern.permute.xlu0 0
  %2570 = vperm.xlu0 %2569, %v2542
  %v2571 = vpop.permute.xlu0 %2570
  %2574 = vset.pattern.permute.xlu0 0
  %2575 = vperm.xlu0 %2574, %v2543
  %v2576 = vpop.permute.xlu0 %2575
  %2579 = vset.pattern.permute.xlu0 0
  %2580 = vperm.xlu0 %2579, %v2544
  %v2581 = vpop.permute.xlu0 %2580
  %2584 = vset.pattern.permute.xlu0 0
  %2585 = vperm.xlu0 %2584, %v2545
  %v2586 = vpop.permute.xlu0 %2585
  %2589 = vset.pattern.permute.xlu0 0
  %2590 = vperm.xlu0 %2589, %v2546
  %v2591 = vpop.permute.xlu0 %2590
  %2594 = vset.pattern.permute.xlu0 0
  %2595 = vperm.xlu0 %2594, %v2547
  %v2596 = vpop.permute.xlu0 %2595
  %2599 = vset.pattern.permute.xlu0 0
  %2600 = vperm.xlu0 %2599, %v2548
  %v2601 = vpop.permute.xlu0 %2600
  %2604 = vset.pattern.permute.xlu0 0
  %2605 = vperm.xlu0 %2604, %v2549
  %v2606 = vpop.permute.xlu0 %2605
  %2609 = vset.pattern.permute.xlu0 0
  %2610 = vperm.xlu0 %2609, %v2550
  %v2611 = vpop.permute.xlu0 %2610
  %2614 = vset.pattern.permute.xlu0 0
  %2615 = vperm.xlu0 %2614, %v2551
  %v2616 = vpop.permute.xlu0 %2615
  %2619 = vset.pattern.permute.xlu0 0
  %2620 = vperm.xlu0 %2619, %v2552
  %v2621 = vpop.permute.xlu0 %2620
  %2624 = vset.pattern.permute.xlu0 0
  %2625 = vperm.xlu0 %2624, %v2553
  %v2626 = vpop.permute.xlu0 %2625
  %2629 = vset.pattern.permute.xlu0 0
  %2630 = vperm.xlu0 %2629, %v2554
  %v2631 = vpop.permute.xlu0 %2630
  %2634 = vset.pattern.permute.xlu0 0
  %2635 = vperm.xlu0 %2634, %v2555
  %v2636 = vpop.permute.xlu0 %2635
  %2639 = vset.pattern.permute.xlu0 0
  %2640 = vperm.xlu0 %2639, %v2556
  %v2641 = vpop.permute.xlu0 %2640
  %2644 = vset.pattern.permute.xlu0 0
  %2645 = vperm.xlu0 %2644, %v2557
  %v2646 = vpop.permute.xlu0 %2645
  %2649 = vset.pattern.permute.xlu0 0
  %2650 = vperm.xlu0 %2649, %v2558
  %v2651 = vpop.permute.xlu0 %2650
  %2654 = vset.pattern.permute.xlu0 0
  %2655 = vperm.xlu0 %2654, %v2559
  %v2656 = vpop.permute.xlu0 %2655
  %2659 = vset.pattern.permute.xlu0 0
  %2660 = vperm.xlu0 %2659, %v2560
  %v2661 = vpop.permute.xlu0 %2660
  %2664 = vset.pattern.permute.xlu0 0
  %2665 = vperm.xlu0 %2664, %v2561
  %v2666 = vpop.permute.xlu0 %2665
  %2669 = vset.pattern.permute.xlu0 0
  %2670 = vperm.xlu0 %2669, %v2562
  %v2671 = vpop.permute.xlu0 %2670
  %2674 = vset.pattern.permute.xlu0 0
  %2675 = vperm.xlu0 %2674, %v2563
  %v2676 = vpop.permute.xlu0 %2675
  %2679 = vset.pattern.permute.xlu0 0
  %2680 = vperm.xlu0 %2679, %v2564
  %v2681 = vpop.permute.xlu0 %2680
  %2684 = vset.pattern.permute.xlu0 0
  %2685 = vperm.xlu0 %2684, %v2565
  %v2686 = vpop.permute.xlu0 %2685
  %2689 = vset.pattern.permute.xlu0 0
  %2690 = vperm.xlu0 %2689, %v2566
  %v2691 = vpop.permute.xlu0 %2690
  %2694 = vset.pattern.permute.xlu0 0
  %2695 = vperm.xlu0 %2694, %v2567
  %v2696 = vpop.permute.xlu0 %2695
  %v2698 = vmul.f32 %v2516, %v2571
  %v2699 = vmul.f32 %v2517, %v2576
  %v2700 = vmul.f32 %v2518, %v2581
  %v2701 = vmul.f32 %v2519, %v2586
  %v2702 = vmul.f32 %v2520, %v2591
  %v2703 = vmul.f32 %v2521, %v2596
  %v2704 = vmul.f32 %v2522, %v2601
  %v2705 = vmul.f32 %v2523, %v2606
  %v2706 = vmul.f32 %v2524, %v2611
  %v2707 = vmul.f32 %v2525, %v2616
  %v2708 = vmul.f32 %v2526, %v2621
  %v2709 = vmul.f32 %v2527, %v2626
  %v2710 = vmul.f32 %v2528, %v2631
  %v2711 = vmul.f32 %v2529, %v2636
  %v2712 = vmul.f32 %v2530, %v2641
  %v2713 = vmul.f32 %v2531, %v2646
  %v2714 = vmul.f32 %v2532, %v2651
  %v2715 = vmul.f32 %v2533, %v2656
  %v2716 = vmul.f32 %v2534, %v2661
  %v2717 = vmul.f32 %v2535, %v2666
  %v2718 = vmul.f32 %v2536, %v2671
  %v2719 = vmul.f32 %v2537, %v2676
  %v2720 = vmul.f32 %v2538, %v2681
  %v2721 = vmul.f32 %v2539, %v2686
  %v2722 = vmul.f32 %v2540, %v2691
  %v2723 = vmul.f32 %v2541, %v2696
  %2724 = vst [vmem:[%s6] sm:$0xff] 0.0
  %2725 = vst [vmem:[%s6 + $0x8] sm:$0xff] 0.0
  %2726 = vst [vmem:[%s6 + $0x10] sm:$0xff] 0.0
  %2727 = vst [vmem:[%s6 + $0x18] sm:$0xff] 0.0
  %2728 = vst [vmem:[%s6 + $0x20] sm:$0xff] 0.0
  %2729 = vst [vmem:[%s6 + $0x28] sm:$0xff] 0.0
  %2730 = vst [vmem:[%s6 + $0x30] sm:$0xff] 0.0
  %2731 = vst [vmem:[%s6 + $0x38] sm:$0xff] 0.0
  %2732 = vst [vmem:[%s6 + $0x40] sm:$0xff] 0.0
  %2733 = vst [vmem:[%s6 + $0x48] sm:$0xff] 0.0
  %2734 = vst [vmem:[%s6 + $0x50] sm:$0xff] 0.0
  %2735 = vst [vmem:[%s6 + $0x58] sm:$0xff] 0.0
  %2736 = vst [vmem:[%s6 + $0x60] sm:$0xff] 0.0
  %2737 = vst [vmem:[%s6 + $0x68] sm:$0xff] %v2698
  %2738 = vst [vmem:[%s6 + $0x70] sm:$0xff] %v2699
  %2739 = vst [vmem:[%s6 + $0x78] sm:$0xff] %v2700
  %2740 = vst [vmem:[%s6 + $0x80] sm:$0xff] %v2701
  %2741 = vst [vmem:[%s6 + $0x88] sm:$0xff] %v2702
  %2742 = vst [vmem:[%s6 + $0x90] sm:$0xff] %v2703
  %2743 = vst [vmem:[%s6 + $0x98] sm:$0xff] %v2704
  %2744 = vst [vmem:[%s6 + $0xa0] sm:$0xff] %v2705
  %2745 = vst [vmem:[%s6 + $0xa8] sm:$0xff] %v2706
  %2746 = vst [vmem:[%s6 + $0xb0] sm:$0xff] %v2707
  %2747 = vst [vmem:[%s6 + $0xb8] sm:$0xff] %v2708
  %2748 = vst [vmem:[%s6 + $0xc0] sm:$0xff] %v2709
  %2749 = vst [vmem:[%s6 + $0xc8] sm:$0xff] %v2710
  %2750 = vst [vmem:[%s6 + $0xd0] sm:$0xff] %v2711
  %2751 = vst [vmem:[%s6 + $0xd8] sm:$0xff] %v2712
  %2752 = vst [vmem:[%s6 + $0xe0] sm:$0xff] %v2713
  %2753 = vst [vmem:[%s6 + $0xe8] sm:$0xff] %v2714
  %2754 = vst [vmem:[%s6 + $0xf0] sm:$0xff] %v2715
  %2755 = vst [vmem:[%s6 + $0xf8] sm:$0xff] %v2716
  %2756 = vst [vmem:[%s6 + $0x100] sm:$0xff] %v2717
  %2757 = vst [vmem:[%s6 + $0x108] sm:$0xff] %v2718
  %2758 = vst [vmem:[%s6 + $0x110] sm:$0xff] %v2719
  %2759 = vst [vmem:[%s6 + $0x118] sm:$0xff] %v2720
  %2760 = vst [vmem:[%s6 + $0x120] sm:$0xff] %v2721
  %2761 = vst [vmem:[%s6 + $0x128] sm:$0xff] %v2722
  %2762 = vst [vmem:[%s6 + $0x130] sm:$0xff] %v2723
  %2763 = vst [vmem:[%s6 + $0x138] sm:$0xff] 0.0
  %2764 = vst [vmem:[%s6 + $0x140] sm:$0xff] 0.0
  %2765 = vst [vmem:[%s6 + $0x148] sm:$0xff] 0.0
  %2766 = vst [vmem:[%s6 + $0x150] sm:$0xff] 0.0
  %2767 = vst [vmem:[%s6 + $0x158] sm:$0xff] 0.0
  %2768 = vst [vmem:[%s6 + $0x160] sm:$0xff] 0.0
  %2769 = vst [vmem:[%s6 + $0x168] sm:$0xff] 0.0
  %2770 = vst [vmem:[%s6 + $0x170] sm:$0xff] 0.0
  %2771 = vst [vmem:[%s6 + $0x178] sm:$0xff] 0.0
  %2772 = vst [vmem:[%s6 + $0x180] sm:$0xff] 0.0
  %2773 = vst [vmem:[%s6 + $0x188] sm:$0xff] 0.0
  %2774 = vst [vmem:[%s6 + $0x190] sm:$0xff] 0.0
  %2775 = vst [vmem:[%s6 + $0x198] sm:$0xff] 0.0
  // Predicated region
  $region26: #{downsample_forward.7} parent=0 // pred_check
    _
  $region27: #{downsample_forward.7} parent=0 // pred_check_branch
    %2777 = sbr.rel (0) target = $region29
  $region28: #{downsample_forward.7} parent=0 // pred_region
    _
  $region29: #{downsample_forward.7} parent=0 // pred_fallthru
    _
  // Predicated region
  $region30: #{downsample_forward.7} parent=0 // pred_check
    _
  $region31: #{downsample_forward.7} parent=0 // pred_check_branch
    %2779 = sbr.rel (0) target = $region33
  $region32: #{downsample_forward.7} parent=0 // pred_region
    _
  $region33: #{downsample_forward.7} parent=0 // pred_fallthru
    _

</llo_original>
